<compile_context>
chip_gen: v7x
topology: tpu7x:2x2x1
jax: 0.10.0
libtpu: 0.0.40
codegen_flags: <defaults>
</compile_context>

<pallas_src>
import functools

import jax
import jax.numpy as jnp
from jax.experimental import pallas as pl
from jax.experimental.pallas import tpu as pltpu

EPS = 1e-5  # nn.BatchNorm2d default eps


def _round_up(x, m):
    return (x + m - 1) // m * m


# ----------------------------- Pallas kernel --------------------------------
def _basic_block_kernel(x_ref, w1_ref, b1_ref, w2_ref, b2_ref, out_ref,
                        xpad_ref, hpad_ref, *, H, W, HC, WP):
    """One image per grid step.

    x_ref    : (1, H, W, C)  f32 NHWC input (unpadded)
    w*_ref   : (3, 3*C, C)   bf16 per-ky weight strips (kx stacked along K)
    b*_ref   : (1, C)        f32 folded BN bias
    out_ref  : (1, H, W, C)
    xpad_ref : (H+2, WP, C)  bf16 scratch: SAME-padded input
    hpad_ref : (H+2, WP, C)  bf16 scratch: SAME-padded conv1 activation
    """
    C = out_ref.shape[-1]
    n_chunks = H // HC

    zero_row = jnp.zeros((WP, C), jnp.bfloat16)
    zl = jnp.zeros((HC, 1, C), jnp.bfloat16)            # left pad column
    zr = jnp.zeros((HC, WP - 1 - W, C), jnp.bfloat16)   # right pad columns

    def pad_w(v):                                        # (HC,W,C) -> (HC,WP,C)
        return jnp.concatenate([zl, v, zr], axis=1)

    # ---- zero only the pad rows (aligned full-row stores, tiny) ----
    xpad_ref[0] = zero_row
    xpad_ref[H + 1] = zero_row
    hpad_ref[0] = zero_row
    hpad_ref[H + 1] = zero_row

    # ---- in-kernel SAME padding of the input (replaces wrapper jnp.pad) ----
    for ci in range(n_chunks):                           # static, small
        r0 = ci * HC
        xi = x_ref[0, pl.ds(r0, HC), :, :].astype(jnp.bfloat16)
        xpad_ref[pl.ds(1 + r0, HC)] = pad_w(xi)          # full-width aligned store

    def conv3x3(src_ref, w_ref, b_ref, emit):
        """3x3 SAME conv as 3 wide-K (M,3C)x(3C,C) MXU matmuls per row chunk."""
        bias = b_ref[...]                                # (1, C) f32
        for ci in range(n_chunks):
            r0 = ci * HC
            acc = jnp.zeros((HC * W, C), jnp.float32)
            for ky in range(3):                          # static tap-row loop
                strip = jnp.concatenate(
                    [src_ref[pl.ds(r0 + ky, HC), pl.ds(kx, W), :]
                         .reshape(HC * W, C) for kx in range(3)],
                    axis=-1)                             # (M, 3C) bf16
                acc = acc + jnp.dot(strip, w_ref[ky],
                                    preferred_element_type=jnp.float32)
            emit(r0, acc + bias)                         # f32 epilogue

    # ---- conv1 + bn1 (folded) + relu -> re-padded bf16 scratch ----
    def emit_h(r0, y):
        h = jnp.maximum(y, 0.0).reshape(HC, W, C).astype(jnp.bfloat16)
        hpad_ref[pl.ds(1 + r0, HC)] = pad_w(h)
    conv3x3(xpad_ref, w1_ref, b1_ref, emit_h)

    # ---- conv2 + bn2 (folded) + residual + relu -> output ----
    def emit_o(r0, y):
        identity = x_ref[0, pl.ds(r0, HC), :, :].reshape(HC * W, C)  # f32, aligned
        o = jnp.maximum(y + identity, 0.0)
        out_ref[0, pl.ds(r0, HC), :, :] = o.reshape(HC, W, C).astype(out_ref.dtype)
    conv3x3(hpad_ref, w2_ref, b2_ref, emit_o)


# ----------------------------- wrappers ---------------------------------------
def basic_block_forward_nhwc(x_nhwc, params):
    """Preferred entry point: NHWC in / NHWC out, no layout HBM round trips."""
    B, H, W, C = x_nhwc.shape
    assert C % 128 == 0, "lane-dense design expects C to be a multiple of 128"
    HC = 8 if H % 8 == 0 else H                   # rows per inner chunk (M = HC*W)
    WP = _round_up(W + 2, 16)                     # padded-W scratch extent (bf16 tile)

    kernel = functools.partial(_basic_block_kernel, H=H, W=W, HC=HC, WP=WP)
    return pl.pallas_call(
        kernel,
        out_shape=jax.ShapeDtypeStruct((B, H, W, C), x_nhwc.dtype),
        grid=(B,),
        in_specs=[
            pl.BlockSpec((1, H, W, C), lambda b: (b, 0, 0, 0)),
            pl.BlockSpec((3, 3 * C, C), lambda b: (0, 0, 0)),
            pl.BlockSpec((1, C), lambda b: (0, 0)),
            pl.BlockSpec((3, 3 * C, C), lambda b: (0, 0, 0)),
            pl.BlockSpec((1, C), lambda b: (0, 0)),
        ],
        out_specs=pl.BlockSpec((1, H, W, C), lambda b: (b, 0, 0, 0)),
        scratch_shapes=[pltpu.VMEM((H + 2, WP, C), jnp.bfloat16),
                        pltpu.VMEM((H + 2, WP, C), jnp.bfloat16)],
        compiler_params=pltpu.CompilerParams(
            dimension_semantics=("parallel",)),
    )(x_nhwc, params["w1"], params["b1"], params["w2"], params["b2"])


def basic_block_forward(x_nchw, params):
    """NCHW adapter matching the PyTorch module interface."""
    x = jnp.transpose(x_nchw, (0, 2, 3, 1))
    y = basic_block_forward_nhwc(x, params)
    return jnp.transpose(y, (0, 3, 1, 2))


# ------------------- BN-folding (one-time weight transform) ------------------
def fold_conv_bn(w_oihw, gamma, beta, mean, var):
    """PyTorch conv weight (Cout,Cin,3,3) + BN -> ((3, 3*Cin, Cout) bf16, (1,Cout) f32)."""
    scale = gamma * jax.lax.rsqrt(var + EPS)                  # (Cout,)
    w = jnp.transpose(w_oihw, (2, 3, 1, 0)) * scale           # (ky, kx, Cin, Cout)
    kh, kw, cin, cout = w.shape
    w = w.reshape(kh, kw * cin, cout).astype(jnp.bfloat16)    # per-ky K-strips (kx major)
    b = (beta - mean * scale).reshape(1, -1).astype(jnp.float32)
    return w, b


# ----------------------------- pure-JAX reference ----------------------------
def _ref_forward(x_nchw, raw):
    def conv(x, w):
        return jax.lax.conv_general_dilated(
            x, w, window_strides=(1, 1), padding="SAME",
            dimension_numbers=("NCHW", "OIHW", "NCHW"),
            precision=jax.lax.Precision.HIGHEST)

    def bn(x, g, b, m, v):
        g, b, m, v = (t[None, :, None, None] for t in (g, b, m, v))
        return (x - m) * jax.lax.rsqrt(v + EPS) * g + b

    y = jax.nn.relu(bn(conv(x_nchw, raw["conv1_w"]),
                       raw["g1"], raw["be1"], raw["m1"], raw["v1"]))
    y = bn(conv(y, raw["conv2_w"]), raw["g2"], raw["be2"], raw["m2"], raw["v2"])
    return jax.nn.relu(y + x_nchw)


# ----------------------------- main ------------------------------------------
if __name__ == "__main__":
    key = jax.random.PRNGKey(0)
    B, C, H, W = 2, 128, 16, 16          # inplanes == planes, stride=1, no downsample
    ks = jax.random.split(key, 11)

    x = jax.random.normal(ks[0], (B, C, H, W), jnp.float32)

    fan_in = C * 9
    std = (2.0 / fan_in) ** 0.5          # kaiming_normal_(fan_in, relu)
    raw = dict(
        conv1_w=jax.random.normal(ks[1], (C, C, 3, 3), jnp.float32) * std,
        conv2_w=jax.random.normal(ks[2], (C, C, 3, 3), jnp.float32) * std,
        g1=1.0 + 0.1 * jax.random.normal(ks[3], (C,), jnp.float32),
        be1=0.1 * jax.random.normal(ks[4], (C,), jnp.float32),
        m1=0.1 * jax.random.normal(ks[5], (C,), jnp.float32),
        v1=1.0 + 0.1 * jax.random.uniform(ks[6], (C,), jnp.float32),
        g2=1.0 + 0.1 * jax.random.normal(ks[7], (C,), jnp.float32),
        be2=0.1 * jax.random.normal(ks[8], (C,), jnp.float32),
        m2=0.1 * jax.random.normal(ks[9], (C,), jnp.float32),
        v2=1.0 + 0.1 * jax.random.uniform(ks[10], (C,), jnp.float32),
    )

    w1, b1 = fold_conv_bn(raw["conv1_w"], raw["g1"], raw["be1"], raw["m1"], raw["v1"])
    w2, b2 = fold_conv_bn(raw["conv2_w"], raw["g2"], raw["be2"], raw["m2"], raw["v2"])
    params = dict(w1=w1, b1=b1, w2=w2, b2=b2)

    fwd = jax.jit(basic_block_forward)
    y = fwd(x, params)
    jax.block_until_ready(y)
    assert y.shape == x.shape and y.dtype == x.dtype

    y_ref = _ref_forward(x, raw)
    err = jnp.abs(y - y_ref)
    assert bool(jnp.all(jnp.isfinite(y)))
    # bf16 MXU operands with f32 accumulation: max error budget ~2-3e-2 over
    # two chained 3x3x128 convs, so 5e-2 abs/rel gives comfortable margin.
    assert bool(jnp.allclose(y, y_ref, atol=5e-2, rtol=5e-2)), \
        f"max abs err {float(jnp.max(err))}"
    assert float(jnp.mean(err)) < 5e-3, f"mean abs err {float(jnp.mean(err))}"

    print("KERNEL_OK")
</pallas_src>

<mosaic_0001>
module attributes {stable_mosaic.version = 11 : i64} {
  func.func @_basic_block_kernel(%arg0: i32, %arg1: memref<1x16x16x128xf32, #tpu.memory_space<vmem>>, %arg2: memref<3x384x128xbf16, #tpu.memory_space<vmem>>, %arg3: memref<1x128xf32, #tpu.memory_space<vmem>>, %arg4: memref<3x384x128xbf16, #tpu.memory_space<vmem>>, %arg5: memref<1x128xf32, #tpu.memory_space<vmem>>, %arg6: memref<1x16x16x128xf32, #tpu.memory_space<vmem>>, %arg7: memref<18x32x128xbf16, #tpu.memory_space<vmem>>, %arg8: memref<18x32x128xbf16, #tpu.memory_space<vmem>>) attributes {dimension_semantics = [#tpu.dimension_semantics<parallel>], iteration_bounds = array<i64: 2>, scalar_prefetch = 0 : i64, scratch_operands = 2 : i64, tpu.core_type = #tpu.core_type<tc>, window_params = [{transform_indices = @transform_0, window_bounds = array<i64: 1, 16, 16, 128>}, {pipeline_mode = #tpu.pipeline_mode<synchronous>, transform_indices = @transform_1, window_bounds = array<i64: 3, 384, 128>}, {pipeline_mode = #tpu.pipeline_mode<synchronous>, transform_indices = @transform_2, window_bounds = array<i64: 1, 128>}, {pipeline_mode = #tpu.pipeline_mode<synchronous>, transform_indices = @transform_3, window_bounds = array<i64: 3, 384, 128>}, {pipeline_mode = #tpu.pipeline_mode<synchronous>, transform_indices = @transform_4, window_bounds = array<i64: 1, 128>}, {transform_indices = @transform_5, window_bounds = array<i64: 1, 16, 16, 128>}]} {
    %cst = arith.constant 0.000000e+00 : bf16
    %0 = vector.broadcast %cst : bf16 to vector<32x128xbf16>
    %cst_0 = arith.constant 0.000000e+00 : bf16
    %1 = vector.broadcast %cst_0 : bf16 to vector<8x1x128xbf16>
    %cst_1 = arith.constant 0.000000e+00 : bf16
    %2 = vector.broadcast %cst_1 : bf16 to vector<8x15x128xbf16>
    %c0 = arith.constant 0 : index
    %c0_2 = arith.constant 0 : index
    %c0_3 = arith.constant 0 : index
    %3 = vector.load %arg7[%c0, %c0_2, %c0_3] : memref<18x32x128xbf16, #tpu.memory_space<vmem>>, vector<1x32x128xbf16>
    %4 = vector.shape_cast %3 : vector<1x32x128xbf16> to vector<32x128xbf16>
    %5 = vector.shape_cast %0 : vector<32x128xbf16> to vector<1x32x128xbf16>
    tpu.vector_store %arg7[%c0, %c0_2, %c0_3], %5 {strides = array<i32>} : memref<18x32x128xbf16, #tpu.memory_space<vmem>>, vector<1x32x128xbf16>,
    %c17 = arith.constant 17 : index
    %c0_4 = arith.constant 0 : index
    %c0_5 = arith.constant 0 : index
    %6 = vector.load %arg7[%c17, %c0_4, %c0_5] : memref<18x32x128xbf16, #tpu.memory_space<vmem>>, vector<1x32x128xbf16>
    %7 = vector.shape_cast %6 : vector<1x32x128xbf16> to vector<32x128xbf16>
    %8 = vector.shape_cast %0 : vector<32x128xbf16> to vector<1x32x128xbf16>
    tpu.vector_store %arg7[%c17, %c0_4, %c0_5], %8 {strides = array<i32>} : memref<18x32x128xbf16, #tpu.memory_space<vmem>>, vector<1x32x128xbf16>,
    %c0_6 = arith.constant 0 : index
    %c0_7 = arith.constant 0 : index
    %c0_8 = arith.constant 0 : index
    %9 = vector.load %arg8[%c0_6, %c0_7, %c0_8] : memref<18x32x128xbf16, #tpu.memory_space<vmem>>, vector<1x32x128xbf16>
    %10 = vector.shape_cast %9 : vector<1x32x128xbf16> to vector<32x128xbf16>
    %11 = vector.shape_cast %0 : vector<32x128xbf16> to vector<1x32x128xbf16>
    tpu.vector_store %arg8[%c0_6, %c0_7, %c0_8], %11 {strides = array<i32>} : memref<18x32x128xbf16, #tpu.memory_space<vmem>>, vector<1x32x128xbf16>,
    %c17_9 = arith.constant 17 : index
    %c0_10 = arith.constant 0 : index
    %c0_11 = arith.constant 0 : index
    %12 = vector.load %arg8[%c17_9, %c0_10, %c0_11] : memref<18x32x128xbf16, #tpu.memory_space<vmem>>, vector<1x32x128xbf16>
    %13 = vector.shape_cast %12 : vector<1x32x128xbf16> to vector<32x128xbf16>
    %14 = vector.shape_cast %0 : vector<32x128xbf16> to vector<1x32x128xbf16>
    tpu.vector_store %arg8[%c17_9, %c0_10, %c0_11], %14 {strides = array<i32>} : memref<18x32x128xbf16, #tpu.memory_space<vmem>>, vector<1x32x128xbf16>,
    %c0_12 = arith.constant 0 : index
    %c0_13 = arith.constant 0 : index
    %c0_14 = arith.constant 0 : index
    %c0_15 = arith.constant 0 : index
    %15 = vector.load %arg1[%c0_12, %c0_13, %c0_14, %c0_15] : memref<1x16x16x128xf32, #tpu.memory_space<vmem>>, vector<1x8x16x128xf32>
    %16 = vector.shape_cast %15 : vector<1x8x16x128xf32> to vector<8x16x128xf32>
    %17 = arith.truncf %16 : vector<8x16x128xf32> to vector<8x16x128xbf16>
    %18 = tpu.concatenate %1, %17, %2 in 1 : vector<8x1x128xbf16>, vector<8x16x128xbf16>, vector<8x15x128xbf16> -> vector<8x32x128xbf16>
    %c1 = arith.constant 1 : index
    %c0_16 = arith.constant 0 : index
    %c0_17 = arith.constant 0 : index
    %19 = vector.load %arg7[%c1, %c0_16, %c0_17] : memref<18x32x128xbf16, #tpu.memory_space<vmem>>, vector<8x32x128xbf16>
    tpu.vector_store %arg7[%c1, %c0_16, %c0_17], %18 {strides = array<i32>} : memref<18x32x128xbf16, #tpu.memory_space<vmem>>, vector<8x32x128xbf16>,
    %c0_18 = arith.constant 0 : index
    %c8 = arith.constant 8 : index
    %c0_19 = arith.constant 0 : index
    %c0_20 = arith.constant 0 : index
    %20 = vector.load %arg1[%c0_18, %c8, %c0_19, %c0_20] : memref<1x16x16x128xf32, #tpu.memory_space<vmem>>, vector<1x8x16x128xf32>
    %21 = vector.shape_cast %20 : vector<1x8x16x128xf32> to vector<8x16x128xf32>
    %22 = arith.truncf %21 : vector<8x16x128xf32> to vector<8x16x128xbf16>
    %23 = tpu.concatenate %1, %22, %2 in 1 : vector<8x1x128xbf16>, vector<8x16x128xbf16>, vector<8x15x128xbf16> -> vector<8x32x128xbf16>
    %c9 = arith.constant 9 : index
    %c0_21 = arith.constant 0 : index
    %c0_22 = arith.constant 0 : index
    %24 = vector.load %arg7[%c9, %c0_21, %c0_22] : memref<18x32x128xbf16, #tpu.memory_space<vmem>>, vector<8x32x128xbf16>
    tpu.vector_store %arg7[%c9, %c0_21, %c0_22], %23 {strides = array<i32>} : memref<18x32x128xbf16, #tpu.memory_space<vmem>>, vector<8x32x128xbf16>,
    %c0_23 = arith.constant 0 : index
    %c0_24 = arith.constant 0 : index
    %25 = vector.load %arg3[%c0_23, %c0_24] : memref<1x128xf32, #tpu.memory_space<vmem>>, vector<1x128xf32>
    %cst_25 = arith.constant 0.000000e+00 : f32
    %26 = vector.broadcast %cst_25 : f32 to vector<128x128xf32>
    %c0_26 = arith.constant 0 : index
    %c0_27 = arith.constant 0 : index
    %c0_28 = arith.constant 0 : index
    %27 = vector.load %arg7[%c0_26, %c0_27, %c0_28] : memref<18x32x128xbf16, #tpu.memory_space<vmem>>, vector<8x16x128xbf16>
    %28 = vector.shape_cast %27 : vector<8x16x128xbf16> to vector<128x128xbf16>
    %c0_29 = arith.constant 0 : index
    %c1_30 = arith.constant 1 : index
    %c0_31 = arith.constant 0 : index
    %29 = vector.load %arg7[%c0_29, %c1_30, %c0_31] : memref<18x32x128xbf16, #tpu.memory_space<vmem>>, vector<8x16x128xbf16>
    %30 = vector.shape_cast %29 : vector<8x16x128xbf16> to vector<128x128xbf16>
    %c0_32 = arith.constant 0 : index
    %c2 = arith.constant 2 : index
    %c0_33 = arith.constant 0 : index
    %31 = vector.load %arg7[%c0_32, %c2, %c0_33] : memref<18x32x128xbf16, #tpu.memory_space<vmem>>, vector<8x16x128xbf16>
    %32 = vector.shape_cast %31 : vector<8x16x128xbf16> to vector<128x128xbf16>
    %33 = tpu.concatenate %28, %30, %32 in 1 : vector<128x128xbf16>, vector<128x128xbf16>, vector<128x128xbf16> -> vector<128x384xbf16>
    %c0_34 = arith.constant 0 : index
    %c0_35 = arith.constant 0 : index
    %c0_36 = arith.constant 0 : index
    %34 = vector.load %arg2[%c0_34, %c0_35, %c0_36] : memref<3x384x128xbf16, #tpu.memory_space<vmem>>, vector<1x384x128xbf16>
    %35 = vector.shape_cast %34 : vector<1x384x128xbf16> to vector<384x128xbf16>
    %cst_37 = arith.constant dense<0.000000e+00> : vector<128x128xf32>
    %36 = tpu.matmul %33, %35, %cst_37 {dimension_numbers = #tpu.dot_dimension_numbers<[1], [0], [0], [1], [0, 0, 1, 1], [], []>} : vector<128x384xbf16>, vector<384x128xbf16>, vector<128x128xf32> -> vector<128x128xf32>
    %37 = arith.addf %26, %36 : vector<128x128xf32>
    %c1_38 = arith.constant 1 : index
    %c0_39 = arith.constant 0 : index
    %c0_40 = arith.constant 0 : index
    %38 = vector.load %arg7[%c1_38, %c0_39, %c0_40] : memref<18x32x128xbf16, #tpu.memory_space<vmem>>, vector<8x16x128xbf16>
    %39 = vector.shape_cast %38 : vector<8x16x128xbf16> to vector<128x128xbf16>
    %c1_41 = arith.constant 1 : index
    %c1_42 = arith.constant 1 : index
    %c0_43 = arith.constant 0 : index
    %40 = vector.load %arg7[%c1_41, %c1_42, %c0_43] : memref<18x32x128xbf16, #tpu.memory_space<vmem>>, vector<8x16x128xbf16>
    %41 = vector.shape_cast %40 : vector<8x16x128xbf16> to vector<128x128xbf16>
    %c1_44 = arith.constant 1 : index
    %c2_45 = arith.constant 2 : index
    %c0_46 = arith.constant 0 : index
    %42 = vector.load %arg7[%c1_44, %c2_45, %c0_46] : memref<18x32x128xbf16, #tpu.memory_space<vmem>>, vector<8x16x128xbf16>
    %43 = vector.shape_cast %42 : vector<8x16x128xbf16> to vector<128x128xbf16>
    %44 = tpu.concatenate %39, %41, %43 in 1 : vector<128x128xbf16>, vector<128x128xbf16>, vector<128x128xbf16> -> vector<128x384xbf16>
    %c1_47 = arith.constant 1 : index
    %c0_48 = arith.constant 0 : index
    %c0_49 = arith.constant 0 : index
    %45 = vector.load %arg2[%c1_47, %c0_48, %c0_49] : memref<3x384x128xbf16, #tpu.memory_space<vmem>>, vector<1x384x128xbf16>
    %46 = vector.shape_cast %45 : vector<1x384x128xbf16> to vector<384x128xbf16>
    %cst_50 = arith.constant dense<0.000000e+00> : vector<128x128xf32>
    %47 = tpu.matmul %44, %46, %cst_50 {dimension_numbers = #tpu.dot_dimension_numbers<[1], [0], [0], [1], [0, 0, 1, 1], [], []>} : vector<128x384xbf16>, vector<384x128xbf16>, vector<128x128xf32> -> vector<128x128xf32>
    %48 = arith.addf %37, %47 : vector<128x128xf32>
    %c2_51 = arith.constant 2 : index
    %c0_52 = arith.constant 0 : index
    %c0_53 = arith.constant 0 : index
    %49 = vector.load %arg7[%c2_51, %c0_52, %c0_53] : memref<18x32x128xbf16, #tpu.memory_space<vmem>>, vector<8x16x128xbf16>
    %50 = vector.shape_cast %49 : vector<8x16x128xbf16> to vector<128x128xbf16>
    %c2_54 = arith.constant 2 : index
    %c1_55 = arith.constant 1 : index
    %c0_56 = arith.constant 0 : index
    %51 = vector.load %arg7[%c2_54, %c1_55, %c0_56] : memref<18x32x128xbf16, #tpu.memory_space<vmem>>, vector<8x16x128xbf16>
    %52 = vector.shape_cast %51 : vector<8x16x128xbf16> to vector<128x128xbf16>
    %c2_57 = arith.constant 2 : index
    %c2_58 = arith.constant 2 : index
    %c0_59 = arith.constant 0 : index
    %53 = vector.load %arg7[%c2_57, %c2_58, %c0_59] : memref<18x32x128xbf16, #tpu.memory_space<vmem>>, vector<8x16x128xbf16>
    %54 = vector.shape_cast %53 : vector<8x16x128xbf16> to vector<128x128xbf16>
    %55 = tpu.concatenate %50, %52, %54 in 1 : vector<128x128xbf16>, vector<128x128xbf16>, vector<128x128xbf16> -> vector<128x384xbf16>
    %c2_60 = arith.constant 2 : index
    %c0_61 = arith.constant 0 : index
    %c0_62 = arith.constant 0 : index
    %56 = vector.load %arg2[%c2_60, %c0_61, %c0_62] : memref<3x384x128xbf16, #tpu.memory_space<vmem>>, vector<1x384x128xbf16>
    %57 = vector.shape_cast %56 : vector<1x384x128xbf16> to vector<384x128xbf16>
    %cst_63 = arith.constant dense<0.000000e+00> : vector<128x128xf32>
    %58 = tpu.matmul %55, %57, %cst_63 {dimension_numbers = #tpu.dot_dimension_numbers<[1], [0], [0], [1], [0, 0, 1, 1], [], []>} : vector<128x384xbf16>, vector<384x128xbf16>, vector<128x128xf32> -> vector<128x128xf32>
    %59 = arith.addf %48, %58 : vector<128x128xf32>
    %60 = vector.broadcast %25 : vector<1x128xf32> to vector<128x128xf32>
    %61 = arith.addf %59, %60 : vector<128x128xf32>
    %cst_64 = arith.constant 0.000000e+00 : f32
    %62 = vector.broadcast %cst_64 : f32 to vector<128x128xf32>
    %63 = arith.maximumf %61, %62 : vector<128x128xf32>
    %64 = vector.shape_cast %63 : vector<128x128xf32> to vector<8x16x128xf32>
    %65 = arith.truncf %64 : vector<8x16x128xf32> to vector<8x16x128xbf16>
    %66 = tpu.concatenate %1, %65, %2 in 1 : vector<8x1x128xbf16>, vector<8x16x128xbf16>, vector<8x15x128xbf16> -> vector<8x32x128xbf16>
    %c1_65 = arith.constant 1 : index
    %c0_66 = arith.constant 0 : index
    %c0_67 = arith.constant 0 : index
    %67 = vector.load %arg8[%c1_65, %c0_66, %c0_67] : memref<18x32x128xbf16, #tpu.memory_space<vmem>>, vector<8x32x128xbf16>
    tpu.vector_store %arg8[%c1_65, %c0_66, %c0_67], %66 {strides = array<i32>} : memref<18x32x128xbf16, #tpu.memory_space<vmem>>, vector<8x32x128xbf16>,
    %cst_68 = arith.constant 0.000000e+00 : f32
    %68 = vector.broadcast %cst_68 : f32 to vector<128x128xf32>
    %c8_69 = arith.constant 8 : index
    %c0_70 = arith.constant 0 : index
    %c0_71 = arith.constant 0 : index
    %69 = vector.load %arg7[%c8_69, %c0_70, %c0_71] : memref<18x32x128xbf16, #tpu.memory_space<vmem>>, vector<8x16x128xbf16>
    %70 = vector.shape_cast %69 : vector<8x16x128xbf16> to vector<128x128xbf16>
    %c8_72 = arith.constant 8 : index
    %c1_73 = arith.constant 1 : index
    %c0_74 = arith.constant 0 : index
    %71 = vector.load %arg7[%c8_72, %c1_73, %c0_74] : memref<18x32x128xbf16, #tpu.memory_space<vmem>>, vector<8x16x128xbf16>
    %72 = vector.shape_cast %71 : vector<8x16x128xbf16> to vector<128x128xbf16>
    %c8_75 = arith.constant 8 : index
    %c2_76 = arith.constant 2 : index
    %c0_77 = arith.constant 0 : index
    %73 = vector.load %arg7[%c8_75, %c2_76, %c0_77] : memref<18x32x128xbf16, #tpu.memory_space<vmem>>, vector<8x16x128xbf16>
    %74 = vector.shape_cast %73 : vector<8x16x128xbf16> to vector<128x128xbf16>
    %75 = tpu.concatenate %70, %72, %74 in 1 : vector<128x128xbf16>, vector<128x128xbf16>, vector<128x128xbf16> -> vector<128x384xbf16>
    %c0_78 = arith.constant 0 : index
    %c0_79 = arith.constant 0 : index
    %c0_80 = arith.constant 0 : index
    %76 = vector.load %arg2[%c0_78, %c0_79, %c0_80] : memref<3x384x128xbf16, #tpu.memory_space<vmem>>, vector<1x384x128xbf16>
    %77 = vector.shape_cast %76 : vector<1x384x128xbf16> to vector<384x128xbf16>
    %cst_81 = arith.constant dense<0.000000e+00> : vector<128x128xf32>
    %78 = tpu.matmul %75, %77, %cst_81 {dimension_numbers = #tpu.dot_dimension_numbers<[1], [0], [0], [1], [0, 0, 1, 1], [], []>} : vector<128x384xbf16>, vector<384x128xbf16>, vector<128x128xf32> -> vector<128x128xf32>
    %79 = arith.addf %68, %78 : vector<128x128xf32>
    %c9_82 = arith.constant 9 : index
    %c0_83 = arith.constant 0 : index
    %c0_84 = arith.constant 0 : index
    %80 = vector.load %arg7[%c9_82, %c0_83, %c0_84] : memref<18x32x128xbf16, #tpu.memory_space<vmem>>, vector<8x16x128xbf16>
    %81 = vector.shape_cast %80 : vector<8x16x128xbf16> to vector<128x128xbf16>
    %c9_85 = arith.constant 9 : index
    %c1_86 = arith.constant 1 : index
    %c0_87 = arith.constant 0 : index
    %82 = vector.load %arg7[%c9_85, %c1_86, %c0_87] : memref<18x32x128xbf16, #tpu.memory_space<vmem>>, vector<8x16x128xbf16>
    %83 = vector.shape_cast %82 : vector<8x16x128xbf16> to vector<128x128xbf16>
    %c9_88 = arith.constant 9 : index
    %c2_89 = arith.constant 2 : index
    %c0_90 = arith.constant 0 : index
    %84 = vector.load %arg7[%c9_88, %c2_89, %c0_90] : memref<18x32x128xbf16, #tpu.memory_space<vmem>>, vector<8x16x128xbf16>
    %85 = vector.shape_cast %84 : vector<8x16x128xbf16> to vector<128x128xbf16>
    %86 = tpu.concatenate %81, %83, %85 in 1 : vector<128x128xbf16>, vector<128x128xbf16>, vector<128x128xbf16> -> vector<128x384xbf16>
    %c1_91 = arith.constant 1 : index
    %c0_92 = arith.constant 0 : index
    %c0_93 = arith.constant 0 : index
    %87 = vector.load %arg2[%c1_91, %c0_92, %c0_93] : memref<3x384x128xbf16, #tpu.memory_space<vmem>>, vector<1x384x128xbf16>
    %88 = vector.shape_cast %87 : vector<1x384x128xbf16> to vector<384x128xbf16>
    %cst_94 = arith.constant dense<0.000000e+00> : vector<128x128xf32>
    %89 = tpu.matmul %86, %88, %cst_94 {dimension_numbers = #tpu.dot_dimension_numbers<[1], [0], [0], [1], [0, 0, 1, 1], [], []>} : vector<128x384xbf16>, vector<384x128xbf16>, vector<128x128xf32> -> vector<128x128xf32>
    %90 = arith.addf %79, %89 : vector<128x128xf32>
    %c10 = arith.constant 10 : index
    %c0_95 = arith.constant 0 : index
    %c0_96 = arith.constant 0 : index
    %91 = vector.load %arg7[%c10, %c0_95, %c0_96] : memref<18x32x128xbf16, #tpu.memory_space<vmem>>, vector<8x16x128xbf16>
    %92 = vector.shape_cast %91 : vector<8x16x128xbf16> to vector<128x128xbf16>
    %c10_97 = arith.constant 10 : index
    %c1_98 = arith.constant 1 : index
    %c0_99 = arith.constant 0 : index
    %93 = vector.load %arg7[%c10_97, %c1_98, %c0_99] : memref<18x32x128xbf16, #tpu.memory_space<vmem>>, vector<8x16x128xbf16>
    %94 = vector.shape_cast %93 : vector<8x16x128xbf16> to vector<128x128xbf16>
    %c10_100 = arith.constant 10 : index
    %c2_101 = arith.constant 2 : index
    %c0_102 = arith.constant 0 : index
    %95 = vector.load %arg7[%c10_100, %c2_101, %c0_102] : memref<18x32x128xbf16, #tpu.memory_space<vmem>>, vector<8x16x128xbf16>
    %96 = vector.shape_cast %95 : vector<8x16x128xbf16> to vector<128x128xbf16>
    %97 = tpu.concatenate %92, %94, %96 in 1 : vector<128x128xbf16>, vector<128x128xbf16>, vector<128x128xbf16> -> vector<128x384xbf16>
    %c2_103 = arith.constant 2 : index
    %c0_104 = arith.constant 0 : index
    %c0_105 = arith.constant 0 : index
    %98 = vector.load %arg2[%c2_103, %c0_104, %c0_105] : memref<3x384x128xbf16, #tpu.memory_space<vmem>>, vector<1x384x128xbf16>
    %99 = vector.shape_cast %98 : vector<1x384x128xbf16> to vector<384x128xbf16>
    %cst_106 = arith.constant dense<0.000000e+00> : vector<128x128xf32>
    %100 = tpu.matmul %97, %99, %cst_106 {dimension_numbers = #tpu.dot_dimension_numbers<[1], [0], [0], [1], [0, 0, 1, 1], [], []>} : vector<128x384xbf16>, vector<384x128xbf16>, vector<128x128xf32> -> vector<128x128xf32>
    %101 = arith.addf %90, %100 : vector<128x128xf32>
    %102 = vector.broadcast %25 : vector<1x128xf32> to vector<128x128xf32>
    %103 = arith.addf %101, %102 : vector<128x128xf32>
    %cst_107 = arith.constant 0.000000e+00 : f32
    %104 = vector.broadcast %cst_107 : f32 to vector<128x128xf32>
    %105 = arith.maximumf %103, %104 : vector<128x128xf32>
    %106 = vector.shape_cast %105 : vector<128x128xf32> to vector<8x16x128xf32>
    %107 = arith.truncf %106 : vector<8x16x128xf32> to vector<8x16x128xbf16>
    %108 = tpu.concatenate %1, %107, %2 in 1 : vector<8x1x128xbf16>, vector<8x16x128xbf16>, vector<8x15x128xbf16> -> vector<8x32x128xbf16>
    %c9_108 = arith.constant 9 : index
    %c0_109 = arith.constant 0 : index
    %c0_110 = arith.constant 0 : index
    %109 = vector.load %arg8[%c9_108, %c0_109, %c0_110] : memref<18x32x128xbf16, #tpu.memory_space<vmem>>, vector<8x32x128xbf16>
    tpu.vector_store %arg8[%c9_108, %c0_109, %c0_110], %108 {strides = array<i32>} : memref<18x32x128xbf16, #tpu.memory_space<vmem>>, vector<8x32x128xbf16>,
    %c0_111 = arith.constant 0 : index
    %c0_112 = arith.constant 0 : index
    %110 = vector.load %arg5[%c0_111, %c0_112] : memref<1x128xf32, #tpu.memory_space<vmem>>, vector<1x128xf32>
    %cst_113 = arith.constant 0.000000e+00 : f32
    %111 = vector.broadcast %cst_113 : f32 to vector<128x128xf32>
    %c0_114 = arith.constant 0 : index
    %c0_115 = arith.constant 0 : index
    %c0_116 = arith.constant 0 : index
    %112 = vector.load %arg8[%c0_114, %c0_115, %c0_116] : memref<18x32x128xbf16, #tpu.memory_space<vmem>>, vector<8x16x128xbf16>
    %113 = vector.shape_cast %112 : vector<8x16x128xbf16> to vector<128x128xbf16>
    %c0_117 = arith.constant 0 : index
    %c1_118 = arith.constant 1 : index
    %c0_119 = arith.constant 0 : index
    %114 = vector.load %arg8[%c0_117, %c1_118, %c0_119] : memref<18x32x128xbf16, #tpu.memory_space<vmem>>, vector<8x16x128xbf16>
    %115 = vector.shape_cast %114 : vector<8x16x128xbf16> to vector<128x128xbf16>
    %c0_120 = arith.constant 0 : index
    %c2_121 = arith.constant 2 : index
    %c0_122 = arith.constant 0 : index
    %116 = vector.load %arg8[%c0_120, %c2_121, %c0_122] : memref<18x32x128xbf16, #tpu.memory_space<vmem>>, vector<8x16x128xbf16>
    %117 = vector.shape_cast %116 : vector<8x16x128xbf16> to vector<128x128xbf16>
    %118 = tpu.concatenate %113, %115, %117 in 1 : vector<128x128xbf16>, vector<128x128xbf16>, vector<128x128xbf16> -> vector<128x384xbf16>
    %c0_123 = arith.constant 0 : index
    %c0_124 = arith.constant 0 : index
    %c0_125 = arith.constant 0 : index
    %119 = vector.load %arg4[%c0_123, %c0_124, %c0_125] : memref<3x384x128xbf16, #tpu.memory_space<vmem>>, vector<1x384x128xbf16>
    %120 = vector.shape_cast %119 : vector<1x384x128xbf16> to vector<384x128xbf16>
    %cst_126 = arith.constant dense<0.000000e+00> : vector<128x128xf32>
    %121 = tpu.matmul %118, %120, %cst_126 {dimension_numbers = #tpu.dot_dimension_numbers<[1], [0], [0], [1], [0, 0, 1, 1], [], []>} : vector<128x384xbf16>, vector<384x128xbf16>, vector<128x128xf32> -> vector<128x128xf32>
    %122 = arith.addf %111, %121 : vector<128x128xf32>
    %c1_127 = arith.constant 1 : index
    %c0_128 = arith.constant 0 : index
    %c0_129 = arith.constant 0 : index
    %123 = vector.load %arg8[%c1_127, %c0_128, %c0_129] : memref<18x32x128xbf16, #tpu.memory_space<vmem>>, vector<8x16x128xbf16>
    %124 = vector.shape_cast %123 : vector<8x16x128xbf16> to vector<128x128xbf16>
    %c1_130 = arith.constant 1 : index
    %c1_131 = arith.constant 1 : index
    %c0_132 = arith.constant 0 : index
    %125 = vector.load %arg8[%c1_130, %c1_131, %c0_132] : memref<18x32x128xbf16, #tpu.memory_space<vmem>>, vector<8x16x128xbf16>
    %126 = vector.shape_cast %125 : vector<8x16x128xbf16> to vector<128x128xbf16>
    %c1_133 = arith.constant 1 : index
    %c2_134 = arith.constant 2 : index
    %c0_135 = arith.constant 0 : index
    %127 = vector.load %arg8[%c1_133, %c2_134, %c0_135] : memref<18x32x128xbf16, #tpu.memory_space<vmem>>, vector<8x16x128xbf16>
    %128 = vector.shape_cast %127 : vector<8x16x128xbf16> to vector<128x128xbf16>
    %129 = tpu.concatenate %124, %126, %128 in 1 : vector<128x128xbf16>, vector<128x128xbf16>, vector<128x128xbf16> -> vector<128x384xbf16>
    %c1_136 = arith.constant 1 : index
    %c0_137 = arith.constant 0 : index
    %c0_138 = arith.constant 0 : index
    %130 = vector.load %arg4[%c1_136, %c0_137, %c0_138] : memref<3x384x128xbf16, #tpu.memory_space<vmem>>, vector<1x384x128xbf16>
    %131 = vector.shape_cast %130 : vector<1x384x128xbf16> to vector<384x128xbf16>
    %cst_139 = arith.constant dense<0.000000e+00> : vector<128x128xf32>
    %132 = tpu.matmul %129, %131, %cst_139 {dimension_numbers = #tpu.dot_dimension_numbers<[1], [0], [0], [1], [0, 0, 1, 1], [], []>} : vector<128x384xbf16>, vector<384x128xbf16>, vector<128x128xf32> -> vector<128x128xf32>
    %133 = arith.addf %122, %132 : vector<128x128xf32>
    %c2_140 = arith.constant 2 : index
    %c0_141 = arith.constant 0 : index
    %c0_142 = arith.constant 0 : index
    %134 = vector.load %arg8[%c2_140, %c0_141, %c0_142] : memref<18x32x128xbf16, #tpu.memory_space<vmem>>, vector<8x16x128xbf16>
    %135 = vector.shape_cast %134 : vector<8x16x128xbf16> to vector<128x128xbf16>
    %c2_143 = arith.constant 2 : index
    %c1_144 = arith.constant 1 : index
    %c0_145 = arith.constant 0 : index
    %136 = vector.load %arg8[%c2_143, %c1_144, %c0_145] : memref<18x32x128xbf16, #tpu.memory_space<vmem>>, vector<8x16x128xbf16>
    %137 = vector.shape_cast %136 : vector<8x16x128xbf16> to vector<128x128xbf16>
    %c2_146 = arith.constant 2 : index
    %c2_147 = arith.constant 2 : index
    %c0_148 = arith.constant 0 : index
    %138 = vector.load %arg8[%c2_146, %c2_147, %c0_148] : memref<18x32x128xbf16, #tpu.memory_space<vmem>>, vector<8x16x128xbf16>
    %139 = vector.shape_cast %138 : vector<8x16x128xbf16> to vector<128x128xbf16>
    %140 = tpu.concatenate %135, %137, %139 in 1 : vector<128x128xbf16>, vector<128x128xbf16>, vector<128x128xbf16> -> vector<128x384xbf16>
    %c2_149 = arith.constant 2 : index
    %c0_150 = arith.constant 0 : index
    %c0_151 = arith.constant 0 : index
    %141 = vector.load %arg4[%c2_149, %c0_150, %c0_151] : memref<3x384x128xbf16, #tpu.memory_space<vmem>>, vector<1x384x128xbf16>
    %142 = vector.shape_cast %141 : vector<1x384x128xbf16> to vector<384x128xbf16>
    %cst_152 = arith.constant dense<0.000000e+00> : vector<128x128xf32>
    %143 = tpu.matmul %140, %142, %cst_152 {dimension_numbers = #tpu.dot_dimension_numbers<[1], [0], [0], [1], [0, 0, 1, 1], [], []>} : vector<128x384xbf16>, vector<384x128xbf16>, vector<128x128xf32> -> vector<128x128xf32>
    %144 = arith.addf %133, %143 : vector<128x128xf32>
    %145 = vector.broadcast %110 : vector<1x128xf32> to vector<128x128xf32>
    %146 = arith.addf %144, %145 : vector<128x128xf32>
    %c0_153 = arith.constant 0 : index
    %c0_154 = arith.constant 0 : index
    %c0_155 = arith.constant 0 : index
    %c0_156 = arith.constant 0 : index
    %147 = vector.load %arg1[%c0_153, %c0_154, %c0_155, %c0_156] : memref<1x16x16x128xf32, #tpu.memory_space<vmem>>, vector<1x8x16x128xf32>
    %148 = vector.shape_cast %147 : vector<1x8x16x128xf32> to vector<8x16x128xf32>
    %149 = vector.shape_cast %148 : vector<8x16x128xf32> to vector<128x128xf32>
    %150 = arith.addf %146, %149 : vector<128x128xf32>
    %cst_157 = arith.constant 0.000000e+00 : f32
    %151 = vector.broadcast %cst_157 : f32 to vector<128x128xf32>
    %152 = arith.maximumf %150, %151 : vector<128x128xf32>
    %153 = vector.shape_cast %152 : vector<128x128xf32> to vector<8x16x128xf32>
    %c0_158 = arith.constant 0 : index
    %c0_159 = arith.constant 0 : index
    %c0_160 = arith.constant 0 : index
    %c0_161 = arith.constant 0 : index
    %154 = vector.load %arg6[%c0_158, %c0_159, %c0_160, %c0_161] : memref<1x16x16x128xf32, #tpu.memory_space<vmem>>, vector<1x8x16x128xf32>
    %155 = vector.shape_cast %154 : vector<1x8x16x128xf32> to vector<8x16x128xf32>
    %156 = vector.shape_cast %153 : vector<8x16x128xf32> to vector<1x8x16x128xf32>
    tpu.vector_store %arg6[%c0_158, %c0_159, %c0_160, %c0_161], %156 {strides = array<i32>} : memref<1x16x16x128xf32, #tpu.memory_space<vmem>>, vector<1x8x16x128xf32>,
    %cst_162 = arith.constant 0.000000e+00 : f32
    %157 = vector.broadcast %cst_162 : f32 to vector<128x128xf32>
    %c8_163 = arith.constant 8 : index
    %c0_164 = arith.constant 0 : index
    %c0_165 = arith.constant 0 : index
    %158 = vector.load %arg8[%c8_163, %c0_164, %c0_165] : memref<18x32x128xbf16, #tpu.memory_space<vmem>>, vector<8x16x128xbf16>
    %159 = vector.shape_cast %158 : vector<8x16x128xbf16> to vector<128x128xbf16>
    %c8_166 = arith.constant 8 : index
    %c1_167 = arith.constant 1 : index
    %c0_168 = arith.constant 0 : index
    %160 = vector.load %arg8[%c8_166, %c1_167, %c0_168] : memref<18x32x128xbf16, #tpu.memory_space<vmem>>, vector<8x16x128xbf16>
    %161 = vector.shape_cast %160 : vector<8x16x128xbf16> to vector<128x128xbf16>
    %c8_169 = arith.constant 8 : index
    %c2_170 = arith.constant 2 : index
    %c0_171 = arith.constant 0 : index
    %162 = vector.load %arg8[%c8_169, %c2_170, %c0_171] : memref<18x32x128xbf16, #tpu.memory_space<vmem>>, vector<8x16x128xbf16>
    %163 = vector.shape_cast %162 : vector<8x16x128xbf16> to vector<128x128xbf16>
    %164 = tpu.concatenate %159, %161, %163 in 1 : vector<128x128xbf16>, vector<128x128xbf16>, vector<128x128xbf16> -> vector<128x384xbf16>
    %c0_172 = arith.constant 0 : index
    %c0_173 = arith.constant 0 : index
    %c0_174 = arith.constant 0 : index
    %165 = vector.load %arg4[%c0_172, %c0_173, %c0_174] : memref<3x384x128xbf16, #tpu.memory_space<vmem>>, vector<1x384x128xbf16>
    %166 = vector.shape_cast %165 : vector<1x384x128xbf16> to vector<384x128xbf16>
    %cst_175 = arith.constant dense<0.000000e+00> : vector<128x128xf32>
    %167 = tpu.matmul %164, %166, %cst_175 {dimension_numbers = #tpu.dot_dimension_numbers<[1], [0], [0], [1], [0, 0, 1, 1], [], []>} : vector<128x384xbf16>, vector<384x128xbf16>, vector<128x128xf32> -> vector<128x128xf32>
    %168 = arith.addf %157, %167 : vector<128x128xf32>
    %c9_176 = arith.constant 9 : index
    %c0_177 = arith.constant 0 : index
    %c0_178 = arith.constant 0 : index
    %169 = vector.load %arg8[%c9_176, %c0_177, %c0_178] : memref<18x32x128xbf16, #tpu.memory_space<vmem>>, vector<8x16x128xbf16>
    %170 = vector.shape_cast %169 : vector<8x16x128xbf16> to vector<128x128xbf16>
    %c9_179 = arith.constant 9 : index
    %c1_180 = arith.constant 1 : index
    %c0_181 = arith.constant 0 : index
    %171 = vector.load %arg8[%c9_179, %c1_180, %c0_181] : memref<18x32x128xbf16, #tpu.memory_space<vmem>>, vector<8x16x128xbf16>
    %172 = vector.shape_cast %171 : vector<8x16x128xbf16> to vector<128x128xbf16>
    %c9_182 = arith.constant 9 : index
    %c2_183 = arith.constant 2 : index
    %c0_184 = arith.constant 0 : index
    %173 = vector.load %arg8[%c9_182, %c2_183, %c0_184] : memref<18x32x128xbf16, #tpu.memory_space<vmem>>, vector<8x16x128xbf16>
    %174 = vector.shape_cast %173 : vector<8x16x128xbf16> to vector<128x128xbf16>
    %175 = tpu.concatenate %170, %172, %174 in 1 : vector<128x128xbf16>, vector<128x128xbf16>, vector<128x128xbf16> -> vector<128x384xbf16>
    %c1_185 = arith.constant 1 : index
    %c0_186 = arith.constant 0 : index
    %c0_187 = arith.constant 0 : index
    %176 = vector.load %arg4[%c1_185, %c0_186, %c0_187] : memref<3x384x128xbf16, #tpu.memory_space<vmem>>, vector<1x384x128xbf16>
    %177 = vector.shape_cast %176 : vector<1x384x128xbf16> to vector<384x128xbf16>
    %cst_188 = arith.constant dense<0.000000e+00> : vector<128x128xf32>
    %178 = tpu.matmul %175, %177, %cst_188 {dimension_numbers = #tpu.dot_dimension_numbers<[1], [0], [0], [1], [0, 0, 1, 1], [], []>} : vector<128x384xbf16>, vector<384x128xbf16>, vector<128x128xf32> -> vector<128x128xf32>
    %179 = arith.addf %168, %178 : vector<128x128xf32>
    %c10_189 = arith.constant 10 : index
    %c0_190 = arith.constant 0 : index
    %c0_191 = arith.constant 0 : index
    %180 = vector.load %arg8[%c10_189, %c0_190, %c0_191] : memref<18x32x128xbf16, #tpu.memory_space<vmem>>, vector<8x16x128xbf16>
    %181 = vector.shape_cast %180 : vector<8x16x128xbf16> to vector<128x128xbf16>
    %c10_192 = arith.constant 10 : index
    %c1_193 = arith.constant 1 : index
    %c0_194 = arith.constant 0 : index
    %182 = vector.load %arg8[%c10_192, %c1_193, %c0_194] : memref<18x32x128xbf16, #tpu.memory_space<vmem>>, vector<8x16x128xbf16>
    %183 = vector.shape_cast %182 : vector<8x16x128xbf16> to vector<128x128xbf16>
    %c10_195 = arith.constant 10 : index
    %c2_196 = arith.constant 2 : index
    %c0_197 = arith.constant 0 : index
    %184 = vector.load %arg8[%c10_195, %c2_196, %c0_197] : memref<18x32x128xbf16, #tpu.memory_space<vmem>>, vector<8x16x128xbf16>
    %185 = vector.shape_cast %184 : vector<8x16x128xbf16> to vector<128x128xbf16>
    %186 = tpu.concatenate %181, %183, %185 in 1 : vector<128x128xbf16>, vector<128x128xbf16>, vector<128x128xbf16> -> vector<128x384xbf16>
    %c2_198 = arith.constant 2 : index
    %c0_199 = arith.constant 0 : index
    %c0_200 = arith.constant 0 : index
    %187 = vector.load %arg4[%c2_198, %c0_199, %c0_200] : memref<3x384x128xbf16, #tpu.memory_space<vmem>>, vector<1x384x128xbf16>
    %188 = vector.shape_cast %187 : vector<1x384x128xbf16> to vector<384x128xbf16>
    %cst_201 = arith.constant dense<0.000000e+00> : vector<128x128xf32>
    %189 = tpu.matmul %186, %188, %cst_201 {dimension_numbers = #tpu.dot_dimension_numbers<[1], [0], [0], [1], [0, 0, 1, 1], [], []>} : vector<128x384xbf16>, vector<384x128xbf16>, vector<128x128xf32> -> vector<128x128xf32>
    %190 = arith.addf %179, %189 : vector<128x128xf32>
    %191 = vector.broadcast %110 : vector<1x128xf32> to vector<128x128xf32>
    %192 = arith.addf %190, %191 : vector<128x128xf32>
    %c0_202 = arith.constant 0 : index
    %c8_203 = arith.constant 8 : index
    %c0_204 = arith.constant 0 : index
    %c0_205 = arith.constant 0 : index
    %193 = vector.load %arg1[%c0_202, %c8_203, %c0_204, %c0_205] : memref<1x16x16x128xf32, #tpu.memory_space<vmem>>, vector<1x8x16x128xf32>
    %194 = vector.shape_cast %193 : vector<1x8x16x128xf32> to vector<8x16x128xf32>
    %195 = vector.shape_cast %194 : vector<8x16x128xf32> to vector<128x128xf32>
    %196 = arith.addf %192, %195 : vector<128x128xf32>
    %cst_206 = arith.constant 0.000000e+00 : f32
    %197 = vector.broadcast %cst_206 : f32 to vector<128x128xf32>
    %198 = arith.maximumf %196, %197 : vector<128x128xf32>
    %199 = vector.shape_cast %198 : vector<128x128xf32> to vector<8x16x128xf32>
    %c0_207 = arith.constant 0 : index
    %c8_208 = arith.constant 8 : index
    %c0_209 = arith.constant 0 : index
    %c0_210 = arith.constant 0 : index
    %200 = vector.load %arg6[%c0_207, %c8_208, %c0_209, %c0_210] : memref<1x16x16x128xf32, #tpu.memory_space<vmem>>, vector<1x8x16x128xf32>
    %201 = vector.shape_cast %200 : vector<1x8x16x128xf32> to vector<8x16x128xf32>
    %202 = vector.shape_cast %199 : vector<8x16x128xf32> to vector<1x8x16x128xf32>
    tpu.vector_store %arg6[%c0_207, %c8_208, %c0_209, %c0_210], %202 {strides = array<i32>} : memref<1x16x16x128xf32, #tpu.memory_space<vmem>>, vector<1x8x16x128xf32>,
    return
  }
  func.func @transform_0(%arg0: i32) -> (i32, i32, i32, i32) {
    %c0_i32 = arith.constant 0 : i32
    %c0_i32_0 = arith.constant 0 : i32
    %c0_i32_1 = arith.constant 0 : i32
    %c0_i32_2 = arith.constant 0 : i32
    return %arg0, %c0_i32, %c0_i32_0, %c0_i32_1 : i32, i32, i32, i32
  }
  func.func @transform_1(%arg0: i32) -> (i32, i32, i32) {
    %c0_i32 = arith.constant 0 : i32
    %c0_i32_0 = arith.constant 0 : i32
    %c0_i32_1 = arith.constant 0 : i32
    %c0_i32_2 = arith.constant 0 : i32
    return %c0_i32, %c0_i32_0, %c0_i32_1 : i32, i32, i32
  }
  func.func @transform_2(%arg0: i32) -> (i32, i32) {
    %c0_i32 = arith.constant 0 : i32
    %c0_i32_0 = arith.constant 0 : i32
    %c0_i32_1 = arith.constant 0 : i32
    return %c0_i32, %c0_i32_0 : i32, i32
  }
  func.func @transform_3(%arg0: i32) -> (i32, i32, i32) {
    %c0_i32 = arith.constant 0 : i32
    %c0_i32_0 = arith.constant 0 : i32
    %c0_i32_1 = arith.constant 0 : i32
    %c0_i32_2 = arith.constant 0 : i32
    return %c0_i32, %c0_i32_0, %c0_i32_1 : i32, i32, i32
  }
  func.func @transform_4(%arg0: i32) -> (i32, i32) {
    %c0_i32 = arith.constant 0 : i32
    %c0_i32_0 = arith.constant 0 : i32
    %c0_i32_1 = arith.constant 0 : i32
    return %c0_i32, %c0_i32_0 : i32, i32
  }
  func.func @transform_5(%arg0: i32) -> (i32, i32, i32, i32) {
    %c0_i32 = arith.constant 0 : i32
    %c0_i32_0 = arith.constant 0 : i32
    %c0_i32_1 = arith.constant 0 : i32
    %c0_i32_2 = arith.constant 0 : i32
    return %arg0, %c0_i32, %c0_i32_0, %c0_i32_1 : i32, i32, i32, i32
  }
}

</mosaic_0001>

<llo_original>
// kernel: basic_block_forward.1
$region0: #{basic_block_forward.1}
  #allocation0 [shape = 'u32[]', space=smem, size = 0x4, offset = 0x4, fixed_abs, tag = 'smem constant byte address 0x4 - core index']
  #allocation1 [shape = 'u32[144,128]{1,0:T(1,128)}', space=vmem, size = 0x12000, scoped, tag = 'internal scratch']
  #allocation2 [shape = 'bf16[18,32,128]{2,1,0:T(16,128)(2,1)}', space=vmem, size = 0x24000, scoped, tag = 'scratch operand']
  #allocation3 [shape = 'bf16[18,32,128]{2,1,0:T(16,128)(2,1)}', space=vmem, size = 0x24000, scoped, tag = 'scratch operand']
  %s0 = inlined_call_operand.hbm [shape: f32[2,16,16,128], index: 0, kind: input, shape index: {}]
  %s1 = inlined_call_operand.hbm [shape: bf16[3,384,128], index: 1, kind: input, shape index: {}]
  %s2 = inlined_call_operand.vmem [shape: f32[1,128], index: 2, kind: input, shape index: {}]
  %s3 = inlined_call_operand.hbm [shape: bf16[3,384,128], index: 3, kind: input, shape index: {}]
  %s4 = inlined_call_operand.vmem [shape: f32[1,128], index: 4, kind: input, shape index: {}]
  %s5 = inlined_call_operand.hbm [shape: f32[2,16,16,128], index: 5, kind: output, shape index: {}]
  %s6 = sld [smem:[#allocation0]]
  $region65: #{basic_block_forward.1} parent=0
    _
  %s8 = ssub.s32 1, %s6
  %s9 = scalar_select 0, %s8, %s6
  $region1: #{basic_block_forward.1} parent=0
    #allocation4 [shape = 'u8[262144]{0}', space=vmem, size = 0x40000, scoped, tag = 'input window, operand 0']
    #allocation5 [shape = 's32[2]{0}', space=sflag, size = 0x8, scoped, tag = 'scoped memory for basic_block_forward.1']
    #allocation6 [shape = 's32[2]{0}', space=sflag, size = 0x8, scoped, tag = 'scoped memory for basic_block_forward.1']
    #allocation7 [shape = 'u8[294912]{0}', space=vmem, size = 0x48000, scoped, tag = 'input window, operand 1, single buffered']
    #allocation8 [shape = 's32[1]{0}', space=sflag, size = 0x4, scoped, tag = 'scoped memory for basic_block_forward.1']
    #allocation9 [shape = 'u8[294912]{0}', space=vmem, size = 0x48000, scoped, tag = 'input window, operand 3, single buffered']
    #allocation10 [shape = 'u8[262144]{0}', space=vmem, size = 0x40000, scoped, tag = 'output window, operand 0']
    %10 = vsyncpa [#allocation5], 0
    %s11 = scalar_lea.sflag [#allocation5], 1
    %12 = vsyncpa %s11, 0
    %13 = vsyncpa [#allocation8], 0
    %14 = vsyncpa [#allocation6], 0
    %s15 = scalar_lea.sflag [#allocation6], 1
    %16 = vsyncpa %s15, 0
    loop: start=0, step=1, limit=4
    $region2: #{basic_block_forward.1} parent=1 // loop_pre_header
      _
    $region3: #{basic_block_forward.1} parent=1 // loop_header
      %s18 = sphi 0, %s22
      %p19 = scmp.ge.s32.totalorder %s18, 4
      %s28 = sphi 0, %s30
      %s31 = sphi 0, %s28
      %s32 = sphi 0, %s31
      %s48 = sphi 0, %s32
      %s52 = sphi 0, %s52
      %s54 = sphi 0, %s52
      %s55 = sphi 0, %s54
      %s69 = sphi 0, %s55
      %s73 = sphi 0, %s73
      %s75 = sphi 0, %s73
      %s76 = sphi 0, %s75
      %s90 = sphi 0, %s76
      %s94 = sphi 0, %s94
      %s96 = sphi 0, %s94
      %s97 = sphi 0, %s96
      %s111 = sphi 0, %s97
      %s115 = sphi 0, %s115
      %s117 = sphi 0, %s115
      %s118 = sphi 0, %s117
      %s132 = sphi 0, %s118
      %s138 = sphi 0, %s140
      %s141 = sphi 0, %s138
      %s142 = sphi 0, %s141
      %s158 = sphi 0, %s142
    $region4: #{basic_block_forward.1} parent=1 // loop_header_branch
      %21 = sbr.rel (%p19) target = $region8
    $region5: #{basic_block_forward.1} parent=1 // loop_body
      %s23 = ssub.s32 %s18, 1
      %s24 = ssub.s32 %s18, 2
      %s25 = sadd.s32 %s18, 1
      %s26 = ssub.s32 %s18, %s25
      %p27 = scmp.eq.s32.totalorder %s26, 0
      %s29 = sadd.s32 %s28, 1
      %s30 = scalar_select %p27, %s28, %s29
      %p33 = pneg %p27
      %p34 = scmp.eq.s32.totalorder %s18, 1
      %p35 = por %p33, %p34
      %p36 = scmp.ne.s32.totalorder %s28, %s31
      %p37 = scmp.eq.s32.totalorder %s18, 0
      %p38 = por %p36, %p37
      %p39 = scmp.ne.s32.totalorder %s28, %s31
      %p40 = scmp.eq.s32.totalorder %s23, 1
      %p41 = por %p39, %p40
      %p42 = scmp.ne.s32.totalorder %s31, %s32
      %p43 = scmp.eq.s32.totalorder %s23, 0
      %p44 = por %p42, %p43
      %p45 = scmp.ne.s32.totalorder %s31, %s32
      %p46 = scmp.eq.s32.totalorder %s24, 1
      %p47 = por %p45, %p46
      %p49 = scmp.ne.s32.totalorder %s32, %s48
      %p50 = scmp.eq.s32.totalorder %s24, 0
      %p51 = por %p49, %p50
      %s53 = sadd.s32 %s52, 1
      %p56 = scmp.eq.s32.totalorder %s18, 1
      %p57 = scmp.ne.s32.totalorder %s52, %s54
      %p58 = scmp.eq.s32.totalorder %s18, 0
      %p59 = por %p57, %p58
      %p60 = scmp.ne.s32.totalorder %s52, %s54
      %p61 = scmp.eq.s32.totalorder %s23, 1
      %p62 = por %p60, %p61
      %p63 = scmp.ne.s32.totalorder %s54, %s55
      %p64 = scmp.eq.s32.totalorder %s23, 0
      %p65 = por %p63, %p64
      %p66 = scmp.ne.s32.totalorder %s54, %s55
      %p67 = scmp.eq.s32.totalorder %s24, 1
      %p68 = por %p66, %p67
      %p70 = scmp.ne.s32.totalorder %s55, %s69
      %p71 = scmp.eq.s32.totalorder %s24, 0
      %p72 = por %p70, %p71
      %s74 = sadd.s32 %s73, 1
      %p77 = scmp.eq.s32.totalorder %s18, 1
      %p78 = scmp.ne.s32.totalorder %s73, %s75
      %p79 = scmp.eq.s32.totalorder %s18, 0
      %p80 = por %p78, %p79
      %p81 = scmp.ne.s32.totalorder %s73, %s75
      %p82 = scmp.eq.s32.totalorder %s23, 1
      %p83 = por %p81, %p82
      %p84 = scmp.ne.s32.totalorder %s75, %s76
      %p85 = scmp.eq.s32.totalorder %s23, 0
      %p86 = por %p84, %p85
      %p87 = scmp.ne.s32.totalorder %s75, %s76
      %p88 = scmp.eq.s32.totalorder %s24, 1
      %p89 = por %p87, %p88
      %p91 = scmp.ne.s32.totalorder %s76, %s90
      %p92 = scmp.eq.s32.totalorder %s24, 0
      %p93 = por %p91, %p92
      %s95 = sadd.s32 %s94, 1
      %p98 = scmp.eq.s32.totalorder %s18, 1
      %p99 = scmp.ne.s32.totalorder %s94, %s96
      %p100 = scmp.eq.s32.totalorder %s18, 0
      %p101 = por %p99, %p100
      %p102 = scmp.ne.s32.totalorder %s94, %s96
      %p103 = scmp.eq.s32.totalorder %s23, 1
      %p104 = por %p102, %p103
      %p105 = scmp.ne.s32.totalorder %s96, %s97
      %p106 = scmp.eq.s32.totalorder %s23, 0
      %p107 = por %p105, %p106
      %p108 = scmp.ne.s32.totalorder %s96, %s97
      %p109 = scmp.eq.s32.totalorder %s24, 1
      %p110 = por %p108, %p109
      %p112 = scmp.ne.s32.totalorder %s97, %s111
      %p113 = scmp.eq.s32.totalorder %s24, 0
      %p114 = por %p112, %p113
      %s116 = sadd.s32 %s115, 1
      %p119 = scmp.eq.s32.totalorder %s18, 1
      %p120 = scmp.ne.s32.totalorder %s115, %s117
      %p121 = scmp.eq.s32.totalorder %s18, 0
      %p122 = por %p120, %p121
      %p123 = scmp.ne.s32.totalorder %s115, %s117
      %p124 = scmp.eq.s32.totalorder %s23, 1
      %p125 = por %p123, %p124
      %p126 = scmp.ne.s32.totalorder %s117, %s118
      %p127 = scmp.eq.s32.totalorder %s23, 0
      %p128 = por %p126, %p127
      %p129 = scmp.ne.s32.totalorder %s117, %s118
      %p130 = scmp.eq.s32.totalorder %s24, 1
      %p131 = por %p129, %p130
      %p133 = scmp.ne.s32.totalorder %s118, %s132
      %p134 = scmp.eq.s32.totalorder %s24, 0
      %p135 = por %p133, %p134
      %s136 = ssub.s32 %s18, %s25
      %p137 = scmp.eq.s32.totalorder %s136, 0
      %s139 = sadd.s32 %s138, 1
      %s140 = scalar_select %p137, %s138, %s139
      %p143 = pneg %p137
      %p144 = scmp.eq.s32.totalorder %s18, 1
      %p145 = por %p143, %p144
      %p146 = scmp.ne.s32.totalorder %s138, %s141
      %p147 = scmp.eq.s32.totalorder %s18, 0
      %p148 = por %p146, %p147
      %p149 = scmp.ne.s32.totalorder %s138, %s141
      %p150 = scmp.eq.s32.totalorder %s23, 1
      %p151 = por %p149, %p150
      %p152 = scmp.ne.s32.totalorder %s141, %s142
      %p153 = scmp.eq.s32.totalorder %s23, 0
      %p154 = por %p152, %p153
      %p155 = scmp.ne.s32.totalorder %s141, %s142
      %p156 = scmp.eq.s32.totalorder %s24, 1
      %p157 = por %p155, %p156
      %p159 = scmp.ne.s32.totalorder %s142, %s158
      %p160 = scmp.eq.s32.totalorder %s24, 0
      %p161 = por %p159, %p160
      %p162 = scmp.le.s32.totalorder 1, %s18
      %p163 = scmp.lt.s32.totalorder %s18, 3
      %p164 = pnand %p162, %p163
      %p165 = pneg %p164
      // Predicated region
      $region9: #{basic_block_forward.1} parent=5 // pred_check
        _
      $region10: #{basic_block_forward.1} parent=5 // pred_check_branch
        %167 = sbr.rel (%p164) target = $region12
      $region11: #{basic_block_forward.1} parent=5 // pred_region
        %s168 = ssub.s32 %s18, 1
        // Predicated region
        $region13: #{basic_block_forward.1} parent=11 // pred_check
          %p169 = pneg %p65
        $region14: #{basic_block_forward.1} parent=11 // pred_check_branch
          %171 = sbr.rel (%p169) target = $region16
        $region15: #{basic_block_forward.1} parent=11 // pred_region
          %s173 = ssub.s32 9216, 9216
          %174 = vsyncadd [#allocation8], %s173
          %s175 = sshll.u32 [#allocation7], 4
          %s176 = int_to_ptr.vmem [resolvable:$true] %s175
          %181 = dma.hbm_to_vmem [thread:$0]  %s1, 9216, %s176, [#allocation8], 64, 64, 4
        $region16: #{basic_block_forward.1} parent=11 // pred_fallthru
          _
        // Predicated region
        $region17: #{basic_block_forward.1} parent=11 // pred_check
          %p182 = pneg %p86
        $region18: #{basic_block_forward.1} parent=11 // pred_check_branch
          %184 = sbr.rel (%p182) target = $region20
        $region19: #{basic_block_forward.1} parent=11 // pred_region
          _
        $region20: #{basic_block_forward.1} parent=11 // pred_fallthru
          _
        // Predicated region
        $region21: #{basic_block_forward.1} parent=11 // pred_check
          %p185 = pneg %p107
        $region22: #{basic_block_forward.1} parent=11 // pred_check_branch
          %187 = sbr.rel (%p185) target = $region24
        $region23: #{basic_block_forward.1} parent=11 // pred_region
          %s189 = ssub.s32 9216, 9216
          %190 = vsyncadd [#allocation8], %s189
          %s191 = sshll.u32 [#allocation9], 4
          %s192 = int_to_ptr.vmem [resolvable:$true] %s191
          %197 = dma.hbm_to_vmem [thread:$0]  %s3, 9216, %s192, [#allocation8], 64, 64, 4
        $region24: #{basic_block_forward.1} parent=11 // pred_fallthru
          _
        // Predicated region
        $region25: #{basic_block_forward.1} parent=11 // pred_check
          %p198 = pneg %p128
        $region26: #{basic_block_forward.1} parent=11 // pred_check_branch
          %200 = sbr.rel (%p198) target = $region28
        $region27: #{basic_block_forward.1} parent=11 // pred_region
          _
        $region28: #{basic_block_forward.1} parent=11 // pred_fallthru
          _
      $region12: #{basic_block_forward.1} parent=5 // pred_fallthru
        _
      %p201 = scmp.lt.s32.totalorder %s18, 2
      // Predicated region
      $region29: #{basic_block_forward.1} parent=5 // pred_check
        %p202 = pneg %p201
      $region30: #{basic_block_forward.1} parent=5 // pred_check_branch
        %204 = sbr.rel (%p202) target = $region32
      $region31: #{basic_block_forward.1} parent=5 // pred_region
        // Predicated region
        $region33: #{basic_block_forward.1} parent=31 // pred_check
          %p205 = pneg %p38
        $region34: #{basic_block_forward.1} parent=31 // pred_check_branch
          %207 = sbr.rel (%p205) target = $region36
        $region35: #{basic_block_forward.1} parent=31 // pred_region
          %s208 = sand.u32 %s28, 1
          %s209 = scalar_lea.sflag [#allocation5], %s208
          %s210 = sand.u32 %s28, 1
          %s211 = smul.addr %s210, 256
          %s212 = scalar_lea.vmem [#allocation4], %s211
          %s214 = ssub.s32 4096, 4096
          %215 = vsyncadd %s209, %s214
          %s216 = smul.addr %s18, 32
          %s217 = smul.addr %s216, 128
          %s218 = scalar_lea.hbm %s0, %s217
          %s219 = sshll.u32 %s212, 4
          %s220 = int_to_ptr.vmem [resolvable:$true] %s219
          %225 = dma.hbm_to_vmem [thread:$0]  %s218, 4096, %s220, %s209, 128, 128, 8
        $region36: #{basic_block_forward.1} parent=31 // pred_fallthru
          _
      $region32: #{basic_block_forward.1} parent=5 // pred_fallthru
        _
      %p226 = scmp.le.s32.totalorder 1, %s18
      %p227 = scmp.lt.s32.totalorder %s18, 3
      %p228 = pnand %p226, %p227
      %p229 = pneg %p228
      // Predicated region
      $region37: #{basic_block_forward.1} parent=5 // pred_check
        _
      $region38: #{basic_block_forward.1} parent=5 // pred_check_branch
        %231 = sbr.rel (%p228) target = $region40
      $region39: #{basic_block_forward.1} parent=5 // pred_region
        %s232 = ssub.s32 %s18, 1
        %s233 = sand.u32 %s31, 1
        %s234 = scalar_lea.sflag [#allocation5], %s233
        %s235 = sand.u32 %s31, 1
        %s236 = smul.addr %s235, 256
        %s237 = scalar_lea.vmem [#allocation4], %s236
        // Predicated region
        $region41: #{basic_block_forward.1} parent=39 // pred_check
          %p238 = pneg %p44
        $region42: #{basic_block_forward.1} parent=39 // pred_check_branch
          %240 = sbr.rel (%p238) target = $region44
        $region43: #{basic_block_forward.1} parent=39 // pred_region
          %241 = dma.done %s234, 4096
        $region44: #{basic_block_forward.1} parent=39 // pred_fallthru
          _
        // Predicated region
        $region45: #{basic_block_forward.1} parent=39 // pred_check
          %p242 = pneg %p65
        $region46: #{basic_block_forward.1} parent=39 // pred_check_branch
          %244 = sbr.rel (%p242) target = $region48
        $region47: #{basic_block_forward.1} parent=39 // pred_region
          %245 = dma.done [#allocation8], 9216
        $region48: #{basic_block_forward.1} parent=39 // pred_fallthru
          _
        // Predicated region
        $region49: #{basic_block_forward.1} parent=39 // pred_check
          %p246 = pneg %p107
        $region50: #{basic_block_forward.1} parent=39 // pred_check_branch
          %248 = sbr.rel (%p246) target = $region52
        $region51: #{basic_block_forward.1} parent=39 // pred_region
          %249 = dma.done [#allocation8], 9216
        $region52: #{basic_block_forward.1} parent=39 // pred_fallthru
          _
        %s250 = sand.u32 %s31, 1
        %s251 = scalar_lea.sflag [#allocation5], %s250
        %s252 = sand.u32 %s31, 1
        %s253 = smul.addr %s252, 256
        %s254 = scalar_lea.vmem [#allocation4], %s253
        %p255 = pneg %p44
        %p256 = pneg %p41
        %p257 = pneg %p65
        %p258 = pneg %p62
        %p259 = pneg %p86
        %p260 = pneg %p83
        %p261 = pneg %p107
        %p262 = pneg %p104
        %p263 = pneg %p128
        %p264 = pneg %p125
        %p265 = pneg %p154
        %p266 = pneg %p151
        %s267 = sand.u32 %s141, 1
        %s268 = scalar_lea.sflag [#allocation6], %s267
        %s269 = sand.u32 %s141, 1
        %s270 = smul.addr %s269, 256
        %s271 = scalar_lea.vmem [#allocation10], %s270
        %273 = vst [vmem:[#allocation2] sm:$0xff] 0
        %274 = vst [vmem:[#allocation2 + $0x8] sm:$0xff] 0
        %s275 = scalar_lea.vmem [#allocation2], 272
        %276 = vst [vmem:[%s275] sm:$0xff] 0
        %277 = vst [vmem:[%s275 + $0x8] sm:$0xff] 0
        %278 = vst [vmem:[#allocation3] sm:$0xff] 0
        %279 = vst [vmem:[#allocation3 + $0x8] sm:$0xff] 0
        %s280 = scalar_lea.vmem [#allocation3], 272
        %281 = vst [vmem:[%s280] sm:$0xff] 0
        %282 = vst [vmem:[%s280 + $0x8] sm:$0xff] 0
        %v283 = vld [vmem:[%s237] sm:$0xff]
        %v284 = vld [vmem:[%s237 + $0x8] sm:$0xff]
        %v285 = vld [vmem:[%s237 + $0x10] sm:$0xff]
        %v286 = vld [vmem:[%s237 + $0x18] sm:$0xff]
        %v287 = vld [vmem:[%s237 + $0x20] sm:$0xff]
        %v288 = vld [vmem:[%s237 + $0x28] sm:$0xff]
        %v289 = vld [vmem:[%s237 + $0x30] sm:$0xff]
        %v290 = vld [vmem:[%s237 + $0x38] sm:$0xff]
        %v291 = vld [vmem:[%s237 + $0x40] sm:$0xff]
        %v292 = vld [vmem:[%s237 + $0x48] sm:$0xff]
        %v293 = vld [vmem:[%s237 + $0x50] sm:$0xff]
        %v294 = vld [vmem:[%s237 + $0x58] sm:$0xff]
        %v295 = vld [vmem:[%s237 + $0x60] sm:$0xff]
        %v296 = vld [vmem:[%s237 + $0x68] sm:$0xff]
        %v297 = vld [vmem:[%s237 + $0x70] sm:$0xff]
        %v298 = vld [vmem:[%s237 + $0x78] sm:$0xff]
        %v299 = vpack.c.bf16 %v284, %v283
        %v300 = vpack.c.bf16 %v286, %v285
        %v301 = vpack.c.bf16 %v288, %v287
        %v302 = vpack.c.bf16 %v290, %v289
        %v303 = vpack.c.bf16 %v292, %v291
        %v304 = vpack.c.bf16 %v294, %v293
        %v305 = vpack.c.bf16 %v296, %v295
        %v306 = vpack.c.bf16 %v298, %v297
        %v308 = vshrl.u32 %v299, 16
        %v310 = vrot.slane %v308, 7
        %v311 = vshll.u32 %v299, 16
        %v313 = vor.u32 %v310, %v311
        %v315 = vshrl.u32 %v300, 16
        %v317 = vrot.slane %v315, 7
        %v318 = vshll.u32 %v300, 16
        %v320 = vor.u32 %v317, %v318
        %v322 = vshrl.u32 %v301, 16
        %v324 = vrot.slane %v322, 7
        %v325 = vshll.u32 %v301, 16
        %v327 = vor.u32 %v324, %v325
        %v329 = vshrl.u32 %v302, 16
        %v331 = vrot.slane %v329, 7
        %v332 = vshll.u32 %v302, 16
        %v334 = vor.u32 %v331, %v332
        %v336 = vshrl.u32 %v303, 16
        %v338 = vrot.slane %v336, 7
        %v339 = vshll.u32 %v303, 16
        %v341 = vor.u32 %v338, %v339
        %v343 = vshrl.u32 %v304, 16
        %v345 = vrot.slane %v343, 7
        %v346 = vshll.u32 %v304, 16
        %v348 = vor.u32 %v345, %v346
        %v350 = vshrl.u32 %v305, 16
        %v352 = vrot.slane %v350, 7
        %v353 = vshll.u32 %v305, 16
        %v355 = vor.u32 %v352, %v353
        %v357 = vshrl.u32 %v306, 16
        %v359 = vrot.slane %v357, 7
        %v360 = vshll.u32 %v306, 16
        %v362 = vor.u32 %v359, %v360
        %vm379 = vcmask 1040384
        %vm380 = vsmask.f32 256
        %vm381 = vmand %vm379, %vm380
        %v382 = vsel %vm381, 0, %v313
        %v383 = vsel %vm381, 0, %v320
        %v384 = vsel %vm381, 0, %v327
        %v385 = vsel %vm381, 0, %v334
        %v386 = vsel %vm381, 0, %v341
        %v387 = vsel %vm381, 0, %v348
        %v388 = vsel %vm381, 0, %v355
        %v389 = vsel %vm381, 0, %v362
        %v390 = vsel %vm381, %v310, 0
        %v391 = vsel %vm381, %v317, 0
        %v392 = vsel %vm381, %v324, 0
        %v393 = vsel %vm381, %v331, 0
        %v394 = vsel %vm381, %v338, 0
        %v395 = vsel %vm381, %v345, 0
        %v396 = vsel %vm381, %v352, 0
        %v397 = vsel %vm381, %v359, 0
        %s398 = scalar_lea.vmem [#allocation2], 16
        %399 = vst [vmem:[%s398] sm:$0xff] %v382
        %400 = vst [vmem:[%s398 + $0x8] sm:$0xff] %v390
        %401 = vst [vmem:[%s398 + $0x10] sm:$0xff] %v383
        %402 = vst [vmem:[%s398 + $0x18] sm:$0xff] %v391
        %403 = vst [vmem:[%s398 + $0x20] sm:$0xff] %v384
        %404 = vst [vmem:[%s398 + $0x28] sm:$0xff] %v392
        %405 = vst [vmem:[%s398 + $0x30] sm:$0xff] %v385
        %406 = vst [vmem:[%s398 + $0x38] sm:$0xff] %v393
        %407 = vst [vmem:[%s398 + $0x40] sm:$0xff] %v386
        %408 = vst [vmem:[%s398 + $0x48] sm:$0xff] %v394
        %409 = vst [vmem:[%s398 + $0x50] sm:$0xff] %v387
        %410 = vst [vmem:[%s398 + $0x58] sm:$0xff] %v395
        %411 = vst [vmem:[%s398 + $0x60] sm:$0xff] %v388
        %412 = vst [vmem:[%s398 + $0x68] sm:$0xff] %v396
        %413 = vst [vmem:[%s398 + $0x70] sm:$0xff] %v389
        %414 = vst [vmem:[%s398 + $0x78] sm:$0xff] %v397
        %s415 = scalar_lea.vmem %s237, 128 [#allocation4]
        %v416 = vld [vmem:[%s415] sm:$0xff]
        %v417 = vld [vmem:[%s415 + $0x8] sm:$0xff]
        %v418 = vld [vmem:[%s415 + $0x10] sm:$0xff]
        %v419 = vld [vmem:[%s415 + $0x18] sm:$0xff]
        %v420 = vld [vmem:[%s415 + $0x20] sm:$0xff]
        %v421 = vld [vmem:[%s415 + $0x28] sm:$0xff]
        %v422 = vld [vmem:[%s415 + $0x30] sm:$0xff]
        %v423 = vld [vmem:[%s415 + $0x38] sm:$0xff]
        %v424 = vld [vmem:[%s415 + $0x40] sm:$0xff]
        %v425 = vld [vmem:[%s415 + $0x48] sm:$0xff]
        %v426 = vld [vmem:[%s415 + $0x50] sm:$0xff]
        %v427 = vld [vmem:[%s415 + $0x58] sm:$0xff]
        %v428 = vld [vmem:[%s415 + $0x60] sm:$0xff]
        %v429 = vld [vmem:[%s415 + $0x68] sm:$0xff]
        %v430 = vld [vmem:[%s415 + $0x70] sm:$0xff]
        %v431 = vld [vmem:[%s415 + $0x78] sm:$0xff]
        %v432 = vpack.c.bf16 %v417, %v416
        %v433 = vpack.c.bf16 %v419, %v418
        %v434 = vpack.c.bf16 %v421, %v420
        %v435 = vpack.c.bf16 %v423, %v422
        %v436 = vpack.c.bf16 %v425, %v424
        %v437 = vpack.c.bf16 %v427, %v426
        %v438 = vpack.c.bf16 %v429, %v428
        %v439 = vpack.c.bf16 %v431, %v430
        %v441 = vshrl.u32 %v432, 16
        %v443 = vrot.slane %v441, 7
        %v444 = vshll.u32 %v432, 16
        %v446 = vor.u32 %v443, %v444
        %v448 = vshrl.u32 %v433, 16
        %v450 = vrot.slane %v448, 7
        %v451 = vshll.u32 %v433, 16
        %v453 = vor.u32 %v450, %v451
        %v455 = vshrl.u32 %v434, 16
        %v457 = vrot.slane %v455, 7
        %v458 = vshll.u32 %v434, 16
        %v460 = vor.u32 %v457, %v458
        %v462 = vshrl.u32 %v435, 16
        %v464 = vrot.slane %v462, 7
        %v465 = vshll.u32 %v435, 16
        %v467 = vor.u32 %v464, %v465
        %v469 = vshrl.u32 %v436, 16
        %v471 = vrot.slane %v469, 7
        %v472 = vshll.u32 %v436, 16
        %v474 = vor.u32 %v471, %v472
        %v476 = vshrl.u32 %v437, 16
        %v478 = vrot.slane %v476, 7
        %v479 = vshll.u32 %v437, 16
        %v481 = vor.u32 %v478, %v479
        %v483 = vshrl.u32 %v438, 16
        %v485 = vrot.slane %v483, 7
        %v486 = vshll.u32 %v438, 16
        %v488 = vor.u32 %v485, %v486
        %v490 = vshrl.u32 %v439, 16
        %v492 = vrot.slane %v490, 7
        %v493 = vshll.u32 %v439, 16
        %v495 = vor.u32 %v492, %v493
        %v512 = vsel %vm381, 0, %v446
        %v513 = vsel %vm381, 0, %v453
        %v514 = vsel %vm381, 0, %v460
        %v515 = vsel %vm381, 0, %v467
        %v516 = vsel %vm381, 0, %v474
        %v517 = vsel %vm381, 0, %v481
        %v518 = vsel %vm381, 0, %v488
        %v519 = vsel %vm381, 0, %v495
        %v520 = vsel %vm381, %v443, 0
        %v521 = vsel %vm381, %v450, 0
        %v522 = vsel %vm381, %v457, 0
        %v523 = vsel %vm381, %v464, 0
        %v524 = vsel %vm381, %v471, 0
        %v525 = vsel %vm381, %v478, 0
        %v526 = vsel %vm381, %v485, 0
        %v527 = vsel %vm381, %v492, 0
        %s528 = scalar_lea.vmem [#allocation2], 144
        %529 = vst [vmem:[%s528] sm:$0xff] %v512
        %530 = vst [vmem:[%s528 + $0x8] sm:$0xff] %v520
        %531 = vst [vmem:[%s528 + $0x10] sm:$0xff] %v513
        %532 = vst [vmem:[%s528 + $0x18] sm:$0xff] %v521
        %533 = vst [vmem:[%s528 + $0x20] sm:$0xff] %v514
        %534 = vst [vmem:[%s528 + $0x28] sm:$0xff] %v522
        %535 = vst [vmem:[%s528 + $0x30] sm:$0xff] %v515
        %536 = vst [vmem:[%s528 + $0x38] sm:$0xff] %v523
        %537 = vst [vmem:[%s528 + $0x40] sm:$0xff] %v516
        %538 = vst [vmem:[%s528 + $0x48] sm:$0xff] %v524
        %539 = vst [vmem:[%s528 + $0x50] sm:$0xff] %v517
        %540 = vst [vmem:[%s528 + $0x58] sm:$0xff] %v525
        %541 = vst [vmem:[%s528 + $0x60] sm:$0xff] %v518
        %542 = vst [vmem:[%s528 + $0x68] sm:$0xff] %v526
        %543 = vst [vmem:[%s528 + $0x70] sm:$0xff] %v519
        %544 = vst [vmem:[%s528 + $0x78] sm:$0xff] %v527
        %v545 = vld [vmem:[%s2] sm:$0x1]
        %v546 = vld [vmem:[#allocation2] sm:$0xff]
        %v547 = vld [vmem:[#allocation2 + $0x10] sm:$0xff]
        %v548 = vld [vmem:[#allocation2 + $0x20] sm:$0xff]
        %v549 = vld [vmem:[#allocation2 + $0x30] sm:$0xff]
        %v550 = vld [vmem:[#allocation2 + $0x40] sm:$0xff]
        %v551 = vld [vmem:[#allocation2 + $0x50] sm:$0xff]
        %v552 = vld [vmem:[#allocation2 + $0x60] sm:$0xff]
        %v553 = vld [vmem:[#allocation2 + $0x70] sm:$0xff]
        %v554 = vld [vmem:[#allocation2 + $0x8] sm:$0x1]
        %v555 = vld [vmem:[#allocation2 + $0x18] sm:$0x1]
        %v556 = vld [vmem:[#allocation2 + $0x28] sm:$0x1]
        %v557 = vld [vmem:[#allocation2 + $0x38] sm:$0x1]
        %v558 = vld [vmem:[#allocation2 + $0x48] sm:$0x1]
        %v559 = vld [vmem:[#allocation2 + $0x58] sm:$0x1]
        %v560 = vld [vmem:[#allocation2 + $0x68] sm:$0x1]
        %v561 = vld [vmem:[#allocation2 + $0x78] sm:$0x1]
        %vm562 = vsmask.f32 7424
        %v564 = vshrl.u32 %v546, 16
        %v566 = vshll.u32 %v546, 16
        %v568 = vrot.slane %v566, 1
        %v569 = vor.u32 %v564, %v568
        %v571 = vshll.u32 %v554, 16
        %v573 = vrot.slane %v571, 1
        %v574 = vsel %vm562, %v569, %v573
        %v576 = vshrl.u32 %v547, 16
        %v578 = vshll.u32 %v547, 16
        %v580 = vrot.slane %v578, 1
        %v581 = vor.u32 %v576, %v580
        %v583 = vshll.u32 %v555, 16
        %v585 = vrot.slane %v583, 1
        %v586 = vsel %vm562, %v581, %v585
        %v588 = vshrl.u32 %v548, 16
        %v590 = vshll.u32 %v548, 16
        %v592 = vrot.slane %v590, 1
        %v593 = vor.u32 %v588, %v592
        %v595 = vshll.u32 %v556, 16
        %v597 = vrot.slane %v595, 1
        %v598 = vsel %vm562, %v593, %v597
        %v600 = vshrl.u32 %v549, 16
        %v602 = vshll.u32 %v549, 16
        %v604 = vrot.slane %v602, 1
        %v605 = vor.u32 %v600, %v604
        %v607 = vshll.u32 %v557, 16
        %v609 = vrot.slane %v607, 1
        %v610 = vsel %vm562, %v605, %v609
        %v612 = vshrl.u32 %v550, 16
        %v614 = vshll.u32 %v550, 16
        %v616 = vrot.slane %v614, 1
        %v617 = vor.u32 %v612, %v616
        %v619 = vshll.u32 %v558, 16
        %v621 = vrot.slane %v619, 1
        %v622 = vsel %vm562, %v617, %v621
        %v624 = vshrl.u32 %v551, 16
        %v626 = vshll.u32 %v551, 16
        %v628 = vrot.slane %v626, 1
        %v629 = vor.u32 %v624, %v628
        %v631 = vshll.u32 %v559, 16
        %v633 = vrot.slane %v631, 1
        %v634 = vsel %vm562, %v629, %v633
        %v636 = vshrl.u32 %v552, 16
        %v638 = vshll.u32 %v552, 16
        %v640 = vrot.slane %v638, 1
        %v641 = vor.u32 %v636, %v640
        %v643 = vshll.u32 %v560, 16
        %v645 = vrot.slane %v643, 1
        %v646 = vsel %vm562, %v641, %v645
        %v648 = vshrl.u32 %v553, 16
        %v650 = vshll.u32 %v553, 16
        %v652 = vrot.slane %v650, 1
        %v653 = vor.u32 %v648, %v652
        %v655 = vshll.u32 %v561, 16
        %v657 = vrot.slane %v655, 1
        %v658 = vsel %vm562, %v653, %v657
        %v667 = vld [vmem:[#allocation2] sm:$0xfe]
        %v668 = vld [vmem:[#allocation2 + $0x10] sm:$0xfe]
        %v669 = vld [vmem:[#allocation2 + $0x20] sm:$0xfe]
        %v670 = vld [vmem:[#allocation2 + $0x30] sm:$0xfe]
        %v671 = vld [vmem:[#allocation2 + $0x40] sm:$0xfe]
        %v672 = vld [vmem:[#allocation2 + $0x50] sm:$0xfe]
        %v673 = vld [vmem:[#allocation2 + $0x60] sm:$0xfe]
        %v674 = vld [vmem:[#allocation2 + $0x70] sm:$0xfe]
        %vm691 = vcmask 1046528
        %v692 = vrot.slane %v667, 1
        %v693 = vrot.slane %v554, 1
        %v694 = vsel %vm691, %v692, %v693
        %v695 = vrot.slane %v668, 1
        %v696 = vrot.slane %v555, 1
        %v697 = vsel %vm691, %v695, %v696
        %v698 = vrot.slane %v669, 1
        %v699 = vrot.slane %v556, 1
        %v700 = vsel %vm691, %v698, %v699
        %v701 = vrot.slane %v670, 1
        %v702 = vrot.slane %v557, 1
        %v703 = vsel %vm691, %v701, %v702
        %v704 = vrot.slane %v671, 1
        %v705 = vrot.slane %v558, 1
        %v706 = vsel %vm691, %v704, %v705
        %v707 = vrot.slane %v672, 1
        %v708 = vrot.slane %v559, 1
        %v709 = vsel %vm691, %v707, %v708
        %v710 = vrot.slane %v673, 1
        %v711 = vrot.slane %v560, 1
        %v712 = vsel %vm691, %v710, %v711
        %v713 = vrot.slane %v674, 1
        %v714 = vrot.slane %v561, 1
        %v715 = vsel %vm691, %v713, %v714
        %v724 = vld [vmem:[#allocation7] sm:$0xf]
        %v725 = vld [vmem:[#allocation7 + $0x4] sm:$0xf]
        %v726 = vld [vmem:[#allocation7 + $0x8] sm:$0xf]
        %v727 = vld [vmem:[#allocation7 + $0xc] sm:$0xf]
        %v728 = vld [vmem:[#allocation7 + $0x10] sm:$0xf]
        %v729 = vld [vmem:[#allocation7 + $0x14] sm:$0xf]
        %v730 = vld [vmem:[#allocation7 + $0x18] sm:$0xf]
        %v731 = vld [vmem:[#allocation7 + $0x1c] sm:$0xf]
        %v732 = vld [vmem:[#allocation7 + $0x20] sm:$0xf]
        %v733 = vld [vmem:[#allocation7 + $0x24] sm:$0xf]
        %v734 = vld [vmem:[#allocation7 + $0x28] sm:$0xf]
        %v735 = vld [vmem:[#allocation7 + $0x2c] sm:$0xf]
        %v736 = vld [vmem:[#allocation7 + $0x30] sm:$0xf]
        %v737 = vld [vmem:[#allocation7 + $0x34] sm:$0xf]
        %v738 = vld [vmem:[#allocation7 + $0x38] sm:$0xf]
        %v739 = vld [vmem:[#allocation7 + $0x3c] sm:$0xf]
        %v740 = vld [vmem:[#allocation7 + $0x40] sm:$0xf]
        %v741 = vld [vmem:[#allocation7 + $0x44] sm:$0xf]
        %v742 = vld [vmem:[#allocation7 + $0x48] sm:$0xf]
        %v743 = vld [vmem:[#allocation7 + $0x4c] sm:$0xf]
        %v744 = vld [vmem:[#allocation7 + $0x50] sm:$0xf]
        %v745 = vld [vmem:[#allocation7 + $0x54] sm:$0xf]
        %v746 = vld [vmem:[#allocation7 + $0x58] sm:$0xf]
        %v747 = vld [vmem:[#allocation7 + $0x5c] sm:$0xf]
        %v748 = vld [vmem:[#allocation7 + $0x60] sm:$0xf]
        %v749 = vld [vmem:[#allocation7 + $0x64] sm:$0xf]
        %v750 = vld [vmem:[#allocation7 + $0x68] sm:$0xf]
        %v751 = vld [vmem:[#allocation7 + $0x6c] sm:$0xf]
        %v752 = vld [vmem:[#allocation7 + $0x70] sm:$0xf]
        %v753 = vld [vmem:[#allocation7 + $0x74] sm:$0xf]
        %v754 = vld [vmem:[#allocation7 + $0x78] sm:$0xf]
        %v755 = vld [vmem:[#allocation7 + $0x7c] sm:$0xf]
        %v756 = vld [vmem:[#allocation7 + $0x80] sm:$0xf]
        %v757 = vld [vmem:[#allocation7 + $0x84] sm:$0xf]
        %v758 = vld [vmem:[#allocation7 + $0x88] sm:$0xf]
        %v759 = vld [vmem:[#allocation7 + $0x8c] sm:$0xf]
        %v760 = vld [vmem:[#allocation7 + $0x90] sm:$0xf]
        %v761 = vld [vmem:[#allocation7 + $0x94] sm:$0xf]
        %v762 = vld [vmem:[#allocation7 + $0x98] sm:$0xf]
        %v763 = vld [vmem:[#allocation7 + $0x9c] sm:$0xf]
        %v764 = vld [vmem:[#allocation7 + $0xa0] sm:$0xf]
        %v765 = vld [vmem:[#allocation7 + $0xa4] sm:$0xf]
        %v766 = vld [vmem:[#allocation7 + $0xa8] sm:$0xf]
        %v767 = vld [vmem:[#allocation7 + $0xac] sm:$0xf]
        %v768 = vld [vmem:[#allocation7 + $0xb0] sm:$0xf]
        %v769 = vld [vmem:[#allocation7 + $0xb4] sm:$0xf]
        %v770 = vld [vmem:[#allocation7 + $0xb8] sm:$0xf]
        %v771 = vld [vmem:[#allocation7 + $0xbc] sm:$0xf]
        %v772 = vld [vmem:[%s398] sm:$0xff]
        %v773 = vld [vmem:[%s398 + $0x10] sm:$0xff]
        %v774 = vld [vmem:[%s398 + $0x20] sm:$0xff]
        %v775 = vld [vmem:[%s398 + $0x30] sm:$0xff]
        %v776 = vld [vmem:[%s398 + $0x40] sm:$0xff]
        %v777 = vld [vmem:[%s398 + $0x50] sm:$0xff]
        %v778 = vld [vmem:[%s398 + $0x60] sm:$0xff]
        %v779 = vld [vmem:[%s398 + $0x70] sm:$0xff]
        %v780 = vld [vmem:[%s398 + $0x8] sm:$0x1]
        %v781 = vld [vmem:[%s398 + $0x18] sm:$0x1]
        %v782 = vld [vmem:[%s398 + $0x28] sm:$0x1]
        %v783 = vld [vmem:[%s398 + $0x38] sm:$0x1]
        %v784 = vld [vmem:[%s398 + $0x48] sm:$0x1]
        %v785 = vld [vmem:[%s398 + $0x58] sm:$0x1]
        %v786 = vld [vmem:[%s398 + $0x68] sm:$0x1]
        %v787 = vld [vmem:[%s398 + $0x78] sm:$0x1]
        %v789 = vshrl.u32 %v772, 16
        %v791 = vshll.u32 %v772, 16
        %v793 = vrot.slane %v791, 1
        %v794 = vor.u32 %v789, %v793
        %v796 = vshll.u32 %v780, 16
        %v798 = vrot.slane %v796, 1
        %v799 = vsel %vm562, %v794, %v798
        %v801 = vshrl.u32 %v773, 16
        %v803 = vshll.u32 %v773, 16
        %v805 = vrot.slane %v803, 1
        %v806 = vor.u32 %v801, %v805
        %v808 = vshll.u32 %v781, 16
        %v810 = vrot.slane %v808, 1
        %v811 = vsel %vm562, %v806, %v810
        %v813 = vshrl.u32 %v774, 16
        %v815 = vshll.u32 %v774, 16
        %v817 = vrot.slane %v815, 1
        %v818 = vor.u32 %v813, %v817
        %v820 = vshll.u32 %v782, 16
        %v822 = vrot.slane %v820, 1
        %v823 = vsel %vm562, %v818, %v822
        %v825 = vshrl.u32 %v775, 16
        %v827 = vshll.u32 %v775, 16
        %v829 = vrot.slane %v827, 1
        %v830 = vor.u32 %v825, %v829
        %v832 = vshll.u32 %v783, 16
        %v834 = vrot.slane %v832, 1
        %v835 = vsel %vm562, %v830, %v834
        %v837 = vshrl.u32 %v776, 16
        %v839 = vshll.u32 %v776, 16
        %v841 = vrot.slane %v839, 1
        %v842 = vor.u32 %v837, %v841
        %v844 = vshll.u32 %v784, 16
        %v846 = vrot.slane %v844, 1
        %v847 = vsel %vm562, %v842, %v846
        %v849 = vshrl.u32 %v777, 16
        %v851 = vshll.u32 %v777, 16
        %v853 = vrot.slane %v851, 1
        %v854 = vor.u32 %v849, %v853
        %v856 = vshll.u32 %v785, 16
        %v858 = vrot.slane %v856, 1
        %v859 = vsel %vm562, %v854, %v858
        %v861 = vshrl.u32 %v778, 16
        %v863 = vshll.u32 %v778, 16
        %v865 = vrot.slane %v863, 1
        %v866 = vor.u32 %v861, %v865
        %v868 = vshll.u32 %v786, 16
        %v870 = vrot.slane %v868, 1
        %v871 = vsel %vm562, %v866, %v870
        %v873 = vshrl.u32 %v779, 16
        %v875 = vshll.u32 %v779, 16
        %v877 = vrot.slane %v875, 1
        %v878 = vor.u32 %v873, %v877
        %v880 = vshll.u32 %v787, 16
        %v882 = vrot.slane %v880, 1
        %v883 = vsel %vm562, %v878, %v882
        %v892 = vld [vmem:[%s398] sm:$0xfe]
        %v893 = vld [vmem:[%s398 + $0x10] sm:$0xfe]
        %v894 = vld [vmem:[%s398 + $0x20] sm:$0xfe]
        %v895 = vld [vmem:[%s398 + $0x30] sm:$0xfe]
        %v896 = vld [vmem:[%s398 + $0x40] sm:$0xfe]
        %v897 = vld [vmem:[%s398 + $0x50] sm:$0xfe]
        %v898 = vld [vmem:[%s398 + $0x60] sm:$0xfe]
        %v899 = vld [vmem:[%s398 + $0x70] sm:$0xfe]
        %v916 = vrot.slane %v892, 1
        %v917 = vrot.slane %v780, 1
        %v918 = vsel %vm691, %v916, %v917
        %v919 = vrot.slane %v893, 1
        %v920 = vrot.slane %v781, 1
        %v921 = vsel %vm691, %v919, %v920
        %v922 = vrot.slane %v894, 1
        %v923 = vrot.slane %v782, 1
        %v924 = vsel %vm691, %v922, %v923
        %v925 = vrot.slane %v895, 1
        %v926 = vrot.slane %v783, 1
        %v927 = vsel %vm691, %v925, %v926
        %v928 = vrot.slane %v896, 1
        %v929 = vrot.slane %v784, 1
        %v930 = vsel %vm691, %v928, %v929
        %v931 = vrot.slane %v897, 1
        %v932 = vrot.slane %v785, 1
        %v933 = vsel %vm691, %v931, %v932
        %v934 = vrot.slane %v898, 1
        %v935 = vrot.slane %v786, 1
        %v936 = vsel %vm691, %v934, %v935
        %v937 = vrot.slane %v899, 1
        %v938 = vrot.slane %v787, 1
        %v939 = vsel %vm691, %v937, %v938
        %s948 = scalar_lea.vmem [#allocation7], 192
        %v949 = vld [vmem:[%s948] sm:$0xf]
        %v950 = vld [vmem:[%s948 + $0x4] sm:$0xf]
        %v951 = vld [vmem:[%s948 + $0x8] sm:$0xf]
        %v952 = vld [vmem:[%s948 + $0xc] sm:$0xf]
        %v953 = vld [vmem:[%s948 + $0x10] sm:$0xf]
        %v954 = vld [vmem:[%s948 + $0x14] sm:$0xf]
        %v955 = vld [vmem:[%s948 + $0x18] sm:$0xf]
        %v956 = vld [vmem:[%s948 + $0x1c] sm:$0xf]
        %v957 = vld [vmem:[%s948 + $0x20] sm:$0xf]
        %v958 = vld [vmem:[%s948 + $0x24] sm:$0xf]
        %v959 = vld [vmem:[%s948 + $0x28] sm:$0xf]
        %v960 = vld [vmem:[%s948 + $0x2c] sm:$0xf]
        %v961 = vld [vmem:[%s948 + $0x30] sm:$0xf]
        %v962 = vld [vmem:[%s948 + $0x34] sm:$0xf]
        %v963 = vld [vmem:[%s948 + $0x38] sm:$0xf]
        %v964 = vld [vmem:[%s948 + $0x3c] sm:$0xf]
        %v965 = vld [vmem:[%s948 + $0x40] sm:$0xf]
        %v966 = vld [vmem:[%s948 + $0x44] sm:$0xf]
        %v967 = vld [vmem:[%s948 + $0x48] sm:$0xf]
        %v968 = vld [vmem:[%s948 + $0x4c] sm:$0xf]
        %v969 = vld [vmem:[%s948 + $0x50] sm:$0xf]
        %v970 = vld [vmem:[%s948 + $0x54] sm:$0xf]
        %v971 = vld [vmem:[%s948 + $0x58] sm:$0xf]
        %v972 = vld [vmem:[%s948 + $0x5c] sm:$0xf]
        %v973 = vld [vmem:[%s948 + $0x60] sm:$0xf]
        %v974 = vld [vmem:[%s948 + $0x64] sm:$0xf]
        %v975 = vld [vmem:[%s948 + $0x68] sm:$0xf]
        %v976 = vld [vmem:[%s948 + $0x6c] sm:$0xf]
        %v977 = vld [vmem:[%s948 + $0x70] sm:$0xf]
        %v978 = vld [vmem:[%s948 + $0x74] sm:$0xf]
        %v979 = vld [vmem:[%s948 + $0x78] sm:$0xf]
        %v980 = vld [vmem:[%s948 + $0x7c] sm:$0xf]
        %v981 = vld [vmem:[%s948 + $0x80] sm:$0xf]
        %v982 = vld [vmem:[%s948 + $0x84] sm:$0xf]
        %v983 = vld [vmem:[%s948 + $0x88] sm:$0xf]
        %v984 = vld [vmem:[%s948 + $0x8c] sm:$0xf]
        %v985 = vld [vmem:[%s948 + $0x90] sm:$0xf]
        %v986 = vld [vmem:[%s948 + $0x94] sm:$0xf]
        %v987 = vld [vmem:[%s948 + $0x98] sm:$0xf]
        %v988 = vld [vmem:[%s948 + $0x9c] sm:$0xf]
        %v989 = vld [vmem:[%s948 + $0xa0] sm:$0xf]
        %v990 = vld [vmem:[%s948 + $0xa4] sm:$0xf]
        %v991 = vld [vmem:[%s948 + $0xa8] sm:$0xf]
        %v992 = vld [vmem:[%s948 + $0xac] sm:$0xf]
        %v993 = vld [vmem:[%s948 + $0xb0] sm:$0xf]
        %v994 = vld [vmem:[%s948 + $0xb4] sm:$0xf]
        %v995 = vld [vmem:[%s948 + $0xb8] sm:$0xf]
        %v996 = vld [vmem:[%s948 + $0xbc] sm:$0xf]
        %v1045 = vunpack.c.l.b16 %v949
        %v1046 = vunpack.c.l.b16 %v950
        %v1047 = vunpack.c.l.b16 %v951
        %v1048 = vunpack.c.l.b16 %v952
        %v1049 = vunpack.c.l.b16 %v953
        %v1050 = vunpack.c.l.b16 %v954
        %v1051 = vunpack.c.l.b16 %v955
        %v1052 = vunpack.c.l.b16 %v956
        %v1053 = vunpack.c.l.b16 %v957
        %v1054 = vunpack.c.l.b16 %v958
        %v1055 = vunpack.c.l.b16 %v959
        %v1056 = vunpack.c.l.b16 %v960
        %v1057 = vunpack.c.l.b16 %v961
        %v1058 = vunpack.c.l.b16 %v962
        %v1059 = vunpack.c.l.b16 %v963
        %v1060 = vunpack.c.l.b16 %v964
        %v1061 = vunpack.c.l.b16 %v965
        %v1062 = vunpack.c.l.b16 %v966
        %v1063 = vunpack.c.l.b16 %v967
        %v1064 = vunpack.c.l.b16 %v968
        %v1065 = vunpack.c.l.b16 %v969
        %v1066 = vunpack.c.l.b16 %v970
        %v1067 = vunpack.c.l.b16 %v971
        %v1068 = vunpack.c.l.b16 %v972
        %v1069 = vunpack.c.l.b16 %v973
        %v1070 = vunpack.c.l.b16 %v974
        %v1071 = vunpack.c.l.b16 %v975
        %v1072 = vunpack.c.l.b16 %v976
        %v1073 = vunpack.c.l.b16 %v977
        %v1074 = vunpack.c.l.b16 %v978
        %v1075 = vunpack.c.l.b16 %v979
        %v1076 = vunpack.c.l.b16 %v980
        %v1077 = vunpack.c.l.b16 %v981
        %v1078 = vunpack.c.l.b16 %v982
        %v1079 = vunpack.c.l.b16 %v983
        %v1080 = vunpack.c.l.b16 %v984
        %v1081 = vunpack.c.l.b16 %v985
        %v1082 = vunpack.c.l.b16 %v986
        %v1083 = vunpack.c.l.b16 %v987
        %v1084 = vunpack.c.l.b16 %v988
        %v1085 = vunpack.c.l.b16 %v989
        %v1086 = vunpack.c.l.b16 %v990
        %v1087 = vunpack.c.l.b16 %v991
        %v1088 = vunpack.c.l.b16 %v992
        %v1089 = vunpack.c.l.b16 %v993
        %v1090 = vunpack.c.l.b16 %v994
        %v1091 = vunpack.c.l.b16 %v995
        %v1092 = vunpack.c.l.b16 %v996
        %v1093 = vpack.c.b16 %v1046, %v1045
        %v1094 = vpack.c.b16 %v1048, %v1047
        %v1095 = vpack.c.b16 %v1050, %v1049
        %v1096 = vpack.c.b16 %v1052, %v1051
        %v1097 = vpack.c.b16 %v1054, %v1053
        %v1098 = vpack.c.b16 %v1056, %v1055
        %v1099 = vpack.c.b16 %v1058, %v1057
        %v1100 = vpack.c.b16 %v1060, %v1059
        %v1101 = vpack.c.b16 %v1062, %v1061
        %v1102 = vpack.c.b16 %v1064, %v1063
        %v1103 = vpack.c.b16 %v1066, %v1065
        %v1104 = vpack.c.b16 %v1068, %v1067
        %v1105 = vpack.c.b16 %v1070, %v1069
        %v1106 = vpack.c.b16 %v1072, %v1071
        %v1107 = vpack.c.b16 %v1074, %v1073
        %v1108 = vpack.c.b16 %v1076, %v1075
        %v1109 = vpack.c.b16 %v1078, %v1077
        %v1110 = vpack.c.b16 %v1080, %v1079
        %v1111 = vpack.c.b16 %v1082, %v1081
        %v1112 = vpack.c.b16 %v1084, %v1083
        %v1113 = vpack.c.b16 %v1086, %v1085
        %v1114 = vpack.c.b16 %v1088, %v1087
        %v1115 = vpack.c.b16 %v1090, %v1089
        %v1116 = vpack.c.b16 %v1092, %v1091
        %1141 = vmatprep.subr.bf16.mxu0 0
        %1142 = vmatpush1.bf16.msra.mxu0 %v1093
        %1143 = vmatprep.subr.bf16.mxu0 0
        %1144 = vmatpush1.bf16.msra.mxu0 %v1094
        %1145 = vmatprep.subr.bf16.mxu0 0
        %1146 = vmatpush1.bf16.msra.mxu0 %v1095
        %1147 = vmatprep.subr.bf16.mxu0 0
        %1148 = vmatpush1.bf16.msra.mxu0 %v1096
        %1149 = vmatprep.subr.bf16.mxu0 0
        %1150 = vmatpush1.bf16.msra.mxu0 %v1097
        %1151 = vmatprep.subr.bf16.mxu0 0
        %1152 = vmatpush1.bf16.msra.mxu0 %v1098
        %1153 = vmatprep.subr.bf16.mxu0 0
        %1154 = vmatpush1.bf16.msra.mxu0 %v1099
        %1155 = vmatprep.subr.bf16.mxu0 0
        %1156 = vmatpush1.bf16.msra.mxu0 %v1100
        %1157 = vmatprep.subr.bf16.mxu0 0
        %1158 = vmatpush1.bf16.msra.mxu0 %v1101
        %1159 = vmatprep.subr.bf16.mxu0 0
        %1160 = vmatpush1.bf16.msra.mxu0 %v1102
        %1161 = vmatprep.subr.bf16.mxu0 0
        %1162 = vmatpush1.bf16.msra.mxu0 %v1103
        %1163 = vmatprep.subr.bf16.mxu0 0
        %1164 = vmatpush1.bf16.msra.mxu0 %v1104
        %1165 = vmatprep.subr.bf16.mxu0 0
        %1166 = vmatpush1.bf16.msra.mxu0 %v1105
        %1167 = vmatprep.subr.bf16.mxu0 0
        %1168 = vmatpush1.bf16.msra.mxu0 %v1106
        %1169 = vmatprep.subr.bf16.mxu0 0
        %1170 = vmatpush1.bf16.msra.mxu0 %v1107
        %1171 = vmatprep.subr.bf16.mxu0 0
        %1172 = vmatpush1.bf16.msra.mxu0 %v1108
        %1173 = vmatprep.mubr.bf16.mxu0 %v799
        %1174 = vmatmul.mubr.bf16.gmra.mrb[0].mxu0 %v772
        %v1175 = vpop.f32.mrb[0].mxu0
        %v1176 = vadd.f32 0.0, %v1175
        %v1177 = vpop.f32.mrb[0].mxu0
        %v1178 = vpop.f32.mrb[0].mxu0
        %v1179 = vadd.f32 0.0, %v1178
        %v1180 = vpop.f32.mrb[0].mxu0
        %1181 = vmatprep.mubr.bf16.mxu0 %v811
        %1182 = vmatmul.mubr.bf16.gmra.mrb[0].mxu0 %v773
        %v1183 = vpop.f32.mrb[0].mxu0
        %v1184 = vadd.f32 0.0, %v1183
        %v1185 = vpop.f32.mrb[0].mxu0
        %v1186 = vpop.f32.mrb[0].mxu0
        %v1187 = vadd.f32 0.0, %v1186
        %v1188 = vpop.f32.mrb[0].mxu0
        %1189 = vmatprep.mubr.bf16.mxu0 %v823
        %1190 = vmatmul.mubr.bf16.gmra.mrb[0].mxu0 %v774
        %v1191 = vpop.f32.mrb[0].mxu0
        %v1192 = vadd.f32 0.0, %v1191
        %v1193 = vpop.f32.mrb[0].mxu0
        %v1194 = vpop.f32.mrb[0].mxu0
        %v1195 = vadd.f32 0.0, %v1194
        %v1196 = vpop.f32.mrb[0].mxu0
        %1197 = vmatprep.mubr.bf16.mxu0 %v835
        %1198 = vmatmul.mubr.bf16.gmra.mrb[0].mxu0 %v775
        %v1199 = vpop.f32.mrb[0].mxu0
        %v1200 = vadd.f32 0.0, %v1199
        %v1201 = vpop.f32.mrb[0].mxu0
        %v1202 = vpop.f32.mrb[0].mxu0
        %v1203 = vadd.f32 0.0, %v1202
        %v1204 = vpop.f32.mrb[0].mxu0
        %1205 = vmatprep.mubr.bf16.mxu0 %v847
        %1206 = vmatmul.mubr.bf16.gmra.mrb[0].mxu0 %v776
        %v1207 = vpop.f32.mrb[0].mxu0
        %v1208 = vadd.f32 0.0, %v1207
        %v1209 = vpop.f32.mrb[0].mxu0
        %v1210 = vpop.f32.mrb[0].mxu0
        %v1211 = vadd.f32 0.0, %v1210
        %v1212 = vpop.f32.mrb[0].mxu0
        %1213 = vmatprep.mubr.bf16.mxu0 %v859
        %1214 = vmatmul.mubr.bf16.gmra.mrb[0].mxu0 %v777
        %v1215 = vpop.f32.mrb[0].mxu0
        %v1216 = vadd.f32 0.0, %v1215
        %v1217 = vpop.f32.mrb[0].mxu0
        %v1218 = vpop.f32.mrb[0].mxu0
        %v1219 = vadd.f32 0.0, %v1218
        %v1220 = vpop.f32.mrb[0].mxu0
        %1221 = vmatprep.mubr.bf16.mxu0 %v871
        %1222 = vmatmul.mubr.bf16.gmra.mrb[0].mxu0 %v778
        %v1223 = vpop.f32.mrb[0].mxu0
        %v1224 = vadd.f32 0.0, %v1223
        %v1225 = vpop.f32.mrb[0].mxu0
        %v1226 = vpop.f32.mrb[0].mxu0
        %v1227 = vadd.f32 0.0, %v1226
        %v1228 = vpop.f32.mrb[0].mxu0
        %1229 = vmatprep.mubr.bf16.mxu0 %v883
        %1230 = vmatmul.mubr.bf16.gmra.mrb[0].mxu0 %v779
        %v1231 = vpop.f32.mrb[0].mxu0
        %v1232 = vadd.f32 0.0, %v1231
        %v1233 = vpop.f32.mrb[0].mxu0
        %v1234 = vpop.f32.mrb[0].mxu0
        %v1235 = vadd.f32 0.0, %v1234
        %v1236 = vpop.f32.mrb[0].mxu0
        %1237 = vdwg.mxu0
        %1238 = vmatprep.subr.bf16.mxu0 0
        %1239 = vmatpush1.bf16.msra.mxu0 %v1109
        %1240 = vmatprep.subr.bf16.mxu0 0
        %1241 = vmatpush1.bf16.msra.mxu0 %v1110
        %1242 = vmatprep.subr.bf16.mxu0 0
        %1243 = vmatpush1.bf16.msra.mxu0 %v1111
        %1244 = vmatprep.subr.bf16.mxu0 0
        %1245 = vmatpush1.bf16.msra.mxu0 %v1112
        %1246 = vmatprep.subr.bf16.mxu0 0
        %1247 = vmatpush1.bf16.msra.mxu0 %v1113
        %1248 = vmatprep.subr.bf16.mxu0 0
        %1249 = vmatpush1.bf16.msra.mxu0 %v1114
        %1250 = vmatprep.subr.bf16.mxu0 0
        %1251 = vmatpush1.bf16.msra.mxu0 %v1115
        %1252 = vmatprep.subr.bf16.mxu0 0
        %1253 = vmatpush1.bf16.msra.mxu0 %v1116
        %1254 = vmatprep.subr.bf16.mxu0 0
        %1255 = vmatpush1.bf16.msra.mxu0 0
        %1256 = vmatprep.subr.bf16.mxu0 0
        %1257 = vmatpush1.bf16.msra.mxu0 0
        %1258 = vmatprep.subr.bf16.mxu0 0
        %1259 = vmatpush1.bf16.msra.mxu0 0
        %1260 = vmatprep.subr.bf16.mxu0 0
        %1261 = vmatpush1.bf16.msra.mxu0 0
        %1262 = vmatprep.subr.bf16.mxu0 0
        %1263 = vmatpush1.bf16.msra.mxu0 0
        %1264 = vmatprep.subr.bf16.mxu0 0
        %1265 = vmatpush1.bf16.msra.mxu0 0
        %1266 = vmatprep.subr.bf16.mxu0 0
        %1267 = vmatpush1.bf16.msra.mxu0 0
        %1268 = vmatprep.subr.bf16.mxu0 0
        %1269 = vmatpush1.bf16.msra.mxu0 0
        %1270 = vmatprep.mubr.bf16.mxu0 0
        %1271 = vmatmul.mubr.bf16.gmra.mrb[0].mxu0 %v918
        %v1272 = vpop.f32.mrb[0].mxu0
        %v1273 = vadd.f32 %v1176, %v1272
        %v1274 = vpop.f32.mrb[0].mxu0
        %v1275 = vpop.f32.mrb[0].mxu0
        %v1276 = vadd.f32 %v1179, %v1275
        %v1277 = vpop.f32.mrb[0].mxu0
        %1278 = vmatprep.mubr.bf16.mxu0 0
        %1279 = vmatmul.mubr.bf16.gmra.mrb[0].mxu0 %v921
        %v1280 = vpop.f32.mrb[0].mxu0
        %v1281 = vadd.f32 %v1184, %v1280
        %v1282 = vpop.f32.mrb[0].mxu0
        %v1283 = vpop.f32.mrb[0].mxu0
        %v1284 = vadd.f32 %v1187, %v1283
        %v1285 = vpop.f32.mrb[0].mxu0
        %1286 = vmatprep.mubr.bf16.mxu0 0
        %1287 = vmatmul.mubr.bf16.gmra.mrb[0].mxu0 %v924
        %v1288 = vpop.f32.mrb[0].mxu0
        %v1289 = vadd.f32 %v1192, %v1288
        %v1290 = vpop.f32.mrb[0].mxu0
        %v1291 = vpop.f32.mrb[0].mxu0
        %v1292 = vadd.f32 %v1195, %v1291
        %v1293 = vpop.f32.mrb[0].mxu0
        %1294 = vmatprep.mubr.bf16.mxu0 0
        %1295 = vmatmul.mubr.bf16.gmra.mrb[0].mxu0 %v927
        %v1296 = vpop.f32.mrb[0].mxu0
        %v1297 = vadd.f32 %v1200, %v1296
        %v1298 = vpop.f32.mrb[0].mxu0
        %v1299 = vpop.f32.mrb[0].mxu0
        %v1300 = vadd.f32 %v1203, %v1299
        %v1301 = vpop.f32.mrb[0].mxu0
        %1302 = vmatprep.mubr.bf16.mxu0 0
        %1303 = vmatmul.mubr.bf16.gmra.mrb[0].mxu0 %v930
        %v1304 = vpop.f32.mrb[0].mxu0
        %v1305 = vadd.f32 %v1208, %v1304
        %v1306 = vpop.f32.mrb[0].mxu0
        %v1307 = vpop.f32.mrb[0].mxu0
        %v1308 = vadd.f32 %v1211, %v1307
        %v1309 = vpop.f32.mrb[0].mxu0
        %1310 = vmatprep.mubr.bf16.mxu0 0
        %1311 = vmatmul.mubr.bf16.gmra.mrb[0].mxu0 %v933
        %v1312 = vpop.f32.mrb[0].mxu0
        %v1313 = vadd.f32 %v1216, %v1312
        %v1314 = vpop.f32.mrb[0].mxu0
        %v1315 = vpop.f32.mrb[0].mxu0
        %v1316 = vadd.f32 %v1219, %v1315
        %v1317 = vpop.f32.mrb[0].mxu0
        %1318 = vmatprep.mubr.bf16.mxu0 0
        %1319 = vmatmul.mubr.bf16.gmra.mrb[0].mxu0 %v936
        %v1320 = vpop.f32.mrb[0].mxu0
        %v1321 = vadd.f32 %v1224, %v1320
        %v1322 = vpop.f32.mrb[0].mxu0
        %v1323 = vpop.f32.mrb[0].mxu0
        %v1324 = vadd.f32 %v1227, %v1323
        %v1325 = vpop.f32.mrb[0].mxu0
        %1326 = vmatprep.mubr.bf16.mxu0 0
        %1327 = vmatmul.mubr.bf16.gmra.mrb[0].mxu0 %v939
        %v1328 = vpop.f32.mrb[0].mxu0
        %v1329 = vadd.f32 %v1232, %v1328
        %v1330 = vpop.f32.mrb[0].mxu0
        %v1331 = vpop.f32.mrb[0].mxu0
        %v1332 = vadd.f32 %v1235, %v1331
        %v1333 = vpop.f32.mrb[0].mxu0
        %1334 = vdwg.mxu0
        %v1383 = vunpack.c.l.b16 %v724
        %v1384 = vunpack.c.l.b16 %v725
        %v1385 = vunpack.c.l.b16 %v726
        %v1386 = vunpack.c.l.b16 %v727
        %v1387 = vunpack.c.l.b16 %v728
        %v1388 = vunpack.c.l.b16 %v729
        %v1389 = vunpack.c.l.b16 %v730
        %v1390 = vunpack.c.l.b16 %v731
        %v1391 = vunpack.c.l.b16 %v732
        %v1392 = vunpack.c.l.b16 %v733
        %v1393 = vunpack.c.l.b16 %v734
        %v1394 = vunpack.c.l.b16 %v735
        %v1395 = vunpack.c.l.b16 %v736
        %v1396 = vunpack.c.l.b16 %v737
        %v1397 = vunpack.c.l.b16 %v738
        %v1398 = vunpack.c.l.b16 %v739
        %v1399 = vunpack.c.l.b16 %v740
        %v1400 = vunpack.c.l.b16 %v741
        %v1401 = vunpack.c.l.b16 %v742
        %v1402 = vunpack.c.l.b16 %v743
        %v1403 = vunpack.c.l.b16 %v744
        %v1404 = vunpack.c.l.b16 %v745
        %v1405 = vunpack.c.l.b16 %v746
        %v1406 = vunpack.c.l.b16 %v747
        %v1407 = vunpack.c.l.b16 %v748
        %v1408 = vunpack.c.l.b16 %v749
        %v1409 = vunpack.c.l.b16 %v750
        %v1410 = vunpack.c.l.b16 %v751
        %v1411 = vunpack.c.l.b16 %v752
        %v1412 = vunpack.c.l.b16 %v753
        %v1413 = vunpack.c.l.b16 %v754
        %v1414 = vunpack.c.l.b16 %v755
        %v1415 = vunpack.c.l.b16 %v756
        %v1416 = vunpack.c.l.b16 %v757
        %v1417 = vunpack.c.l.b16 %v758
        %v1418 = vunpack.c.l.b16 %v759
        %v1419 = vunpack.c.l.b16 %v760
        %v1420 = vunpack.c.l.b16 %v761
        %v1421 = vunpack.c.l.b16 %v762
        %v1422 = vunpack.c.l.b16 %v763
        %v1423 = vunpack.c.l.b16 %v764
        %v1424 = vunpack.c.l.b16 %v765
        %v1425 = vunpack.c.l.b16 %v766
        %v1426 = vunpack.c.l.b16 %v767
        %v1427 = vunpack.c.l.b16 %v768
        %v1428 = vunpack.c.l.b16 %v769
        %v1429 = vunpack.c.l.b16 %v770
        %v1430 = vunpack.c.l.b16 %v771
        %v1431 = vpack.c.b16 %v1384, %v1383
        %v1432 = vpack.c.b16 %v1386, %v1385
        %v1433 = vpack.c.b16 %v1388, %v1387
        %v1434 = vpack.c.b16 %v1390, %v1389
        %v1435 = vpack.c.b16 %v1392, %v1391
        %v1436 = vpack.c.b16 %v1394, %v1393
        %v1437 = vpack.c.b16 %v1396, %v1395
        %v1438 = vpack.c.b16 %v1398, %v1397
        %v1439 = vpack.c.b16 %v1400, %v1399
        %v1440 = vpack.c.b16 %v1402, %v1401
        %v1441 = vpack.c.b16 %v1404, %v1403
        %v1442 = vpack.c.b16 %v1406, %v1405
        %v1443 = vpack.c.b16 %v1408, %v1407
        %v1444 = vpack.c.b16 %v1410, %v1409
        %v1445 = vpack.c.b16 %v1412, %v1411
        %v1446 = vpack.c.b16 %v1414, %v1413
        %v1447 = vpack.c.b16 %v1416, %v1415
        %v1448 = vpack.c.b16 %v1418, %v1417
        %v1449 = vpack.c.b16 %v1420, %v1419
        %v1450 = vpack.c.b16 %v1422, %v1421
        %v1451 = vpack.c.b16 %v1424, %v1423
        %v1452 = vpack.c.b16 %v1426, %v1425
        %v1453 = vpack.c.b16 %v1428, %v1427
        %v1454 = vpack.c.b16 %v1430, %v1429
        %1479 = vmatprep.subr.bf16.mxu0 0
        %1480 = vmatpush1.bf16.msra.mxu0 %v1431
        %1481 = vmatprep.subr.bf16.mxu0 0
        %1482 = vmatpush1.bf16.msra.mxu0 %v1432
        %1483 = vmatprep.subr.bf16.mxu0 0
        %1484 = vmatpush1.bf16.msra.mxu0 %v1433
        %1485 = vmatprep.subr.bf16.mxu0 0
        %1486 = vmatpush1.bf16.msra.mxu0 %v1434
        %1487 = vmatprep.subr.bf16.mxu0 0
        %1488 = vmatpush1.bf16.msra.mxu0 %v1435
        %1489 = vmatprep.subr.bf16.mxu0 0
        %1490 = vmatpush1.bf16.msra.mxu0 %v1436
        %1491 = vmatprep.subr.bf16.mxu0 0
        %1492 = vmatpush1.bf16.msra.mxu0 %v1437
        %1493 = vmatprep.subr.bf16.mxu0 0
        %1494 = vmatpush1.bf16.msra.mxu0 %v1438
        %1495 = vmatprep.subr.bf16.mxu0 0
        %1496 = vmatpush1.bf16.msra.mxu0 %v1439
        %1497 = vmatprep.subr.bf16.mxu0 0
        %1498 = vmatpush1.bf16.msra.mxu0 %v1440
        %1499 = vmatprep.subr.bf16.mxu0 0
        %1500 = vmatpush1.bf16.msra.mxu0 %v1441
        %1501 = vmatprep.subr.bf16.mxu0 0
        %1502 = vmatpush1.bf16.msra.mxu0 %v1442
        %1503 = vmatprep.subr.bf16.mxu0 0
        %1504 = vmatpush1.bf16.msra.mxu0 %v1443
        %1505 = vmatprep.subr.bf16.mxu0 0
        %1506 = vmatpush1.bf16.msra.mxu0 %v1444
        %1507 = vmatprep.subr.bf16.mxu0 0
        %1508 = vmatpush1.bf16.msra.mxu0 %v1445
        %1509 = vmatprep.subr.bf16.mxu0 0
        %1510 = vmatpush1.bf16.msra.mxu0 %v1446
        %1511 = vmatprep.mubr.bf16.mxu0 %v574
        %1512 = vmatmul.mubr.bf16.gmra.mrb[0].mxu0 %v546
        %v1513 = vpop.f32.mrb[0].mxu0
        %v1514 = vadd.f32 %v1273, %v1513
        %v1515 = vpop.f32.mrb[0].mxu0
        %v1516 = vpop.f32.mrb[0].mxu0
        %v1517 = vadd.f32 %v1276, %v1516
        %v1518 = vpop.f32.mrb[0].mxu0
        %1519 = vmatprep.mubr.bf16.mxu0 %v586
        %1520 = vmatmul.mubr.bf16.gmra.mrb[0].mxu0 %v547
        %v1521 = vpop.f32.mrb[0].mxu0
        %v1522 = vadd.f32 %v1281, %v1521
        %v1523 = vpop.f32.mrb[0].mxu0
        %v1524 = vpop.f32.mrb[0].mxu0
        %v1525 = vadd.f32 %v1284, %v1524
        %v1526 = vpop.f32.mrb[0].mxu0
        %1527 = vmatprep.mubr.bf16.mxu0 %v598
        %1528 = vmatmul.mubr.bf16.gmra.mrb[0].mxu0 %v548
        %v1529 = vpop.f32.mrb[0].mxu0
        %v1530 = vadd.f32 %v1289, %v1529
        %v1531 = vpop.f32.mrb[0].mxu0
        %v1532 = vpop.f32.mrb[0].mxu0
        %v1533 = vadd.f32 %v1292, %v1532
        %v1534 = vpop.f32.mrb[0].mxu0
        %1535 = vmatprep.mubr.bf16.mxu0 %v610
        %1536 = vmatmul.mubr.bf16.gmra.mrb[0].mxu0 %v549
        %v1537 = vpop.f32.mrb[0].mxu0
        %v1538 = vadd.f32 %v1297, %v1537
        %v1539 = vpop.f32.mrb[0].mxu0
        %v1540 = vpop.f32.mrb[0].mxu0
        %v1541 = vadd.f32 %v1300, %v1540
        %v1542 = vpop.f32.mrb[0].mxu0
        %1543 = vmatprep.mubr.bf16.mxu0 %v622
        %1544 = vmatmul.mubr.bf16.gmra.mrb[0].mxu0 %v550
        %v1545 = vpop.f32.mrb[0].mxu0
        %v1546 = vadd.f32 %v1305, %v1545
        %v1547 = vpop.f32.mrb[0].mxu0
        %v1548 = vpop.f32.mrb[0].mxu0
        %v1549 = vadd.f32 %v1308, %v1548
        %v1550 = vpop.f32.mrb[0].mxu0
        %1551 = vmatprep.mubr.bf16.mxu0 %v634
        %1552 = vmatmul.mubr.bf16.gmra.mrb[0].mxu0 %v551
        %v1553 = vpop.f32.mrb[0].mxu0
        %v1554 = vadd.f32 %v1313, %v1553
        %v1555 = vpop.f32.mrb[0].mxu0
        %v1556 = vpop.f32.mrb[0].mxu0
        %v1557 = vadd.f32 %v1316, %v1556
        %v1558 = vpop.f32.mrb[0].mxu0
        %1559 = vmatprep.mubr.bf16.mxu0 %v646
        %1560 = vmatmul.mubr.bf16.gmra.mrb[0].mxu0 %v552
        %v1561 = vpop.f32.mrb[0].mxu0
        %v1562 = vadd.f32 %v1321, %v1561
        %v1563 = vpop.f32.mrb[0].mxu0
        %v1564 = vpop.f32.mrb[0].mxu0
        %v1565 = vadd.f32 %v1324, %v1564
        %v1566 = vpop.f32.mrb[0].mxu0
        %1567 = vmatprep.mubr.bf16.mxu0 %v658
        %1568 = vmatmul.mubr.bf16.gmra.mrb[0].mxu0 %v553
        %v1569 = vpop.f32.mrb[0].mxu0
        %v1570 = vadd.f32 %v1329, %v1569
        %v1571 = vpop.f32.mrb[0].mxu0
        %v1572 = vpop.f32.mrb[0].mxu0
        %v1573 = vadd.f32 %v1332, %v1572
        %v1574 = vpop.f32.mrb[0].mxu0
        %1575 = vdwg.mxu0
        %1576 = vmatprep.subr.bf16.mxu0 0
        %1577 = vmatpush1.bf16.msra.mxu0 %v1447
        %1578 = vmatprep.subr.bf16.mxu0 0
        %1579 = vmatpush1.bf16.msra.mxu0 %v1448
        %1580 = vmatprep.subr.bf16.mxu0 0
        %1581 = vmatpush1.bf16.msra.mxu0 %v1449
        %1582 = vmatprep.subr.bf16.mxu0 0
        %1583 = vmatpush1.bf16.msra.mxu0 %v1450
        %1584 = vmatprep.subr.bf16.mxu0 0
        %1585 = vmatpush1.bf16.msra.mxu0 %v1451
        %1586 = vmatprep.subr.bf16.mxu0 0
        %1587 = vmatpush1.bf16.msra.mxu0 %v1452
        %1588 = vmatprep.subr.bf16.mxu0 0
        %1589 = vmatpush1.bf16.msra.mxu0 %v1453
        %1590 = vmatprep.subr.bf16.mxu0 0
        %1591 = vmatpush1.bf16.msra.mxu0 %v1454
        %1592 = vmatprep.subr.bf16.mxu0 0
        %1593 = vmatpush1.bf16.msra.mxu0 0
        %1594 = vmatprep.subr.bf16.mxu0 0
        %1595 = vmatpush1.bf16.msra.mxu0 0
        %1596 = vmatprep.subr.bf16.mxu0 0
        %1597 = vmatpush1.bf16.msra.mxu0 0
        %1598 = vmatprep.subr.bf16.mxu0 0
        %1599 = vmatpush1.bf16.msra.mxu0 0
        %1600 = vmatprep.subr.bf16.mxu0 0
        %1601 = vmatpush1.bf16.msra.mxu0 0
        %1602 = vmatprep.subr.bf16.mxu0 0
        %1603 = vmatpush1.bf16.msra.mxu0 0
        %1604 = vmatprep.subr.bf16.mxu0 0
        %1605 = vmatpush1.bf16.msra.mxu0 0
        %1606 = vmatprep.subr.bf16.mxu0 0
        %1607 = vmatpush1.bf16.msra.mxu0 0
        %1608 = vmatprep.mubr.bf16.mxu0 0
        %1609 = vmatmul.mubr.bf16.gmra.mrb[0].mxu0 %v694
        %v1610 = vpop.f32.mrb[0].mxu0
        %v1611 = vadd.f32 %v1514, %v1610
        %v1612 = vpop.f32.mrb[0].mxu0
        %v1613 = vpop.f32.mrb[0].mxu0
        %v1614 = vadd.f32 %v1517, %v1613
        %v1615 = vpop.f32.mrb[0].mxu0
        %1616 = vmatprep.mubr.bf16.mxu0 0
        %1617 = vmatmul.mubr.bf16.gmra.mrb[0].mxu0 %v697
        %v1618 = vpop.f32.mrb[0].mxu0
        %v1619 = vadd.f32 %v1522, %v1618
        %v1620 = vpop.f32.mrb[0].mxu0
        %v1621 = vpop.f32.mrb[0].mxu0
        %v1622 = vadd.f32 %v1525, %v1621
        %v1623 = vpop.f32.mrb[0].mxu0
        %1624 = vmatprep.mubr.bf16.mxu0 0
        %1625 = vmatmul.mubr.bf16.gmra.mrb[0].mxu0 %v700
        %v1626 = vpop.f32.mrb[0].mxu0
        %v1627 = vadd.f32 %v1530, %v1626
        %v1628 = vpop.f32.mrb[0].mxu0
        %v1629 = vpop.f32.mrb[0].mxu0
        %v1630 = vadd.f32 %v1533, %v1629
        %v1631 = vpop.f32.mrb[0].mxu0
        %1632 = vmatprep.mubr.bf16.mxu0 0
        %1633 = vmatmul.mubr.bf16.gmra.mrb[0].mxu0 %v703
        %v1634 = vpop.f32.mrb[0].mxu0
        %v1635 = vadd.f32 %v1538, %v1634
        %v1636 = vpop.f32.mrb[0].mxu0
        %v1637 = vpop.f32.mrb[0].mxu0
        %v1638 = vadd.f32 %v1541, %v1637
        %v1639 = vpop.f32.mrb[0].mxu0
        %1640 = vmatprep.mubr.bf16.mxu0 0
        %1641 = vmatmul.mubr.bf16.gmra.mrb[0].mxu0 %v706
        %v1642 = vpop.f32.mrb[0].mxu0
        %v1643 = vadd.f32 %v1546, %v1642
        %v1644 = vpop.f32.mrb[0].mxu0
        %v1645 = vpop.f32.mrb[0].mxu0
        %v1646 = vadd.f32 %v1549, %v1645
        %v1647 = vpop.f32.mrb[0].mxu0
        %1648 = vmatprep.mubr.bf16.mxu0 0
        %1649 = vmatmul.mubr.bf16.gmra.mrb[0].mxu0 %v709
        %v1650 = vpop.f32.mrb[0].mxu0
        %v1651 = vadd.f32 %v1554, %v1650
        %v1652 = vpop.f32.mrb[0].mxu0
        %v1653 = vpop.f32.mrb[0].mxu0
        %v1654 = vadd.f32 %v1557, %v1653
        %v1655 = vpop.f32.mrb[0].mxu0
        %1656 = vmatprep.mubr.bf16.mxu0 0
        %1657 = vmatmul.mubr.bf16.gmra.mrb[0].mxu0 %v712
        %v1658 = vpop.f32.mrb[0].mxu0
        %v1659 = vadd.f32 %v1562, %v1658
        %v1660 = vpop.f32.mrb[0].mxu0
        %v1661 = vpop.f32.mrb[0].mxu0
        %v1662 = vadd.f32 %v1565, %v1661
        %v1663 = vpop.f32.mrb[0].mxu0
        %1664 = vmatprep.mubr.bf16.mxu0 0
        %1665 = vmatmul.mubr.bf16.gmra.mrb[0].mxu0 %v715
        %v1666 = vpop.f32.mrb[0].mxu0
        %v1667 = vadd.f32 %v1570, %v1666
        %v1668 = vpop.f32.mrb[0].mxu0
        %v1669 = vpop.f32.mrb[0].mxu0
        %v1670 = vadd.f32 %v1573, %v1669
        %v1671 = vpop.f32.mrb[0].mxu0
        %1672 = vdwg.mxu0
        %s1673 = scalar_lea.vmem [#allocation2], 32
        %v1674 = vld [vmem:[%s1673] sm:$0xff]
        %v1675 = vld [vmem:[%s1673 + $0x10] sm:$0xff]
        %v1676 = vld [vmem:[%s1673 + $0x20] sm:$0xff]
        %v1677 = vld [vmem:[%s1673 + $0x30] sm:$0xff]
        %v1678 = vld [vmem:[%s1673 + $0x40] sm:$0xff]
        %v1679 = vld [vmem:[%s1673 + $0x50] sm:$0xff]
        %v1680 = vld [vmem:[%s1673 + $0x60] sm:$0xff]
        %v1681 = vld [vmem:[%s1673 + $0x70] sm:$0xff]
        %v1682 = vld [vmem:[%s1673 + $0x8] sm:$0x1]
        %v1683 = vld [vmem:[%s1673 + $0x18] sm:$0x1]
        %v1684 = vld [vmem:[%s1673 + $0x28] sm:$0x1]
        %v1685 = vld [vmem:[%s1673 + $0x38] sm:$0x1]
        %v1686 = vld [vmem:[%s1673 + $0x48] sm:$0x1]
        %v1687 = vld [vmem:[%s1673 + $0x58] sm:$0x1]
        %v1688 = vld [vmem:[%s1673 + $0x68] sm:$0x1]
        %v1689 = vld [vmem:[%s1673 + $0x78] sm:$0x1]
        %v1691 = vshrl.u32 %v1674, 16
        %v1693 = vshll.u32 %v1674, 16
        %v1695 = vrot.slane %v1693, 1
        %v1696 = vor.u32 %v1691, %v1695
        %v1698 = vshll.u32 %v1682, 16
        %v1700 = vrot.slane %v1698, 1
        %v1701 = vsel %vm562, %v1696, %v1700
        %v1703 = vshrl.u32 %v1675, 16
        %v1705 = vshll.u32 %v1675, 16
        %v1707 = vrot.slane %v1705, 1
        %v1708 = vor.u32 %v1703, %v1707
        %v1710 = vshll.u32 %v1683, 16
        %v1712 = vrot.slane %v1710, 1
        %v1713 = vsel %vm562, %v1708, %v1712
        %v1715 = vshrl.u32 %v1676, 16
        %v1717 = vshll.u32 %v1676, 16
        %v1719 = vrot.slane %v1717, 1
        %v1720 = vor.u32 %v1715, %v1719
        %v1722 = vshll.u32 %v1684, 16
        %v1724 = vrot.slane %v1722, 1
        %v1725 = vsel %vm562, %v1720, %v1724
        %v1727 = vshrl.u32 %v1677, 16
        %v1729 = vshll.u32 %v1677, 16
        %v1731 = vrot.slane %v1729, 1
        %v1732 = vor.u32 %v1727, %v1731
        %v1734 = vshll.u32 %v1685, 16
        %v1736 = vrot.slane %v1734, 1
        %v1737 = vsel %vm562, %v1732, %v1736
        %v1739 = vshrl.u32 %v1678, 16
        %v1741 = vshll.u32 %v1678, 16
        %v1743 = vrot.slane %v1741, 1
        %v1744 = vor.u32 %v1739, %v1743
        %v1746 = vshll.u32 %v1686, 16
        %v1748 = vrot.slane %v1746, 1
        %v1749 = vsel %vm562, %v1744, %v1748
        %v1751 = vshrl.u32 %v1679, 16
        %v1753 = vshll.u32 %v1679, 16
        %v1755 = vrot.slane %v1753, 1
        %v1756 = vor.u32 %v1751, %v1755
        %v1758 = vshll.u32 %v1687, 16
        %v1760 = vrot.slane %v1758, 1
        %v1761 = vsel %vm562, %v1756, %v1760
        %v1763 = vshrl.u32 %v1680, 16
        %v1765 = vshll.u32 %v1680, 16
        %v1767 = vrot.slane %v1765, 1
        %v1768 = vor.u32 %v1763, %v1767
        %v1770 = vshll.u32 %v1688, 16
        %v1772 = vrot.slane %v1770, 1
        %v1773 = vsel %vm562, %v1768, %v1772
        %v1775 = vshrl.u32 %v1681, 16
        %v1777 = vshll.u32 %v1681, 16
        %v1779 = vrot.slane %v1777, 1
        %v1780 = vor.u32 %v1775, %v1779
        %v1782 = vshll.u32 %v1689, 16
        %v1784 = vrot.slane %v1782, 1
        %v1785 = vsel %vm562, %v1780, %v1784
        %v1794 = vld [vmem:[%s1673] sm:$0xfe]
        %v1795 = vld [vmem:[%s1673 + $0x10] sm:$0xfe]
        %v1796 = vld [vmem:[%s1673 + $0x20] sm:$0xfe]
        %v1797 = vld [vmem:[%s1673 + $0x30] sm:$0xfe]
        %v1798 = vld [vmem:[%s1673 + $0x40] sm:$0xfe]
        %v1799 = vld [vmem:[%s1673 + $0x50] sm:$0xfe]
        %v1800 = vld [vmem:[%s1673 + $0x60] sm:$0xfe]
        %v1801 = vld [vmem:[%s1673 + $0x70] sm:$0xfe]
        %v1818 = vrot.slane %v1794, 1
        %v1819 = vrot.slane %v1682, 1
        %v1820 = vsel %vm691, %v1818, %v1819
        %v1821 = vrot.slane %v1795, 1
        %v1822 = vrot.slane %v1683, 1
        %v1823 = vsel %vm691, %v1821, %v1822
        %v1824 = vrot.slane %v1796, 1
        %v1825 = vrot.slane %v1684, 1
        %v1826 = vsel %vm691, %v1824, %v1825
        %v1827 = vrot.slane %v1797, 1
        %v1828 = vrot.slane %v1685, 1
        %v1829 = vsel %vm691, %v1827, %v1828
        %v1830 = vrot.slane %v1798, 1
        %v1831 = vrot.slane %v1686, 1
        %v1832 = vsel %vm691, %v1830, %v1831
        %v1833 = vrot.slane %v1799, 1
        %v1834 = vrot.slane %v1687, 1
        %v1835 = vsel %vm691, %v1833, %v1834
        %v1836 = vrot.slane %v1800, 1
        %v1837 = vrot.slane %v1688, 1
        %v1838 = vsel %vm691, %v1836, %v1837
        %v1839 = vrot.slane %v1801, 1
        %v1840 = vrot.slane %v1689, 1
        %v1841 = vsel %vm691, %v1839, %v1840
        %s1850 = scalar_lea.vmem [#allocation7], 384
        %v1851 = vld [vmem:[%s1850] sm:$0xf]
        %v1852 = vld [vmem:[%s1850 + $0x4] sm:$0xf]
        %v1853 = vld [vmem:[%s1850 + $0x8] sm:$0xf]
        %v1854 = vld [vmem:[%s1850 + $0xc] sm:$0xf]
        %v1855 = vld [vmem:[%s1850 + $0x10] sm:$0xf]
        %v1856 = vld [vmem:[%s1850 + $0x14] sm:$0xf]
        %v1857 = vld [vmem:[%s1850 + $0x18] sm:$0xf]
        %v1858 = vld [vmem:[%s1850 + $0x1c] sm:$0xf]
        %v1859 = vld [vmem:[%s1850 + $0x20] sm:$0xf]
        %v1860 = vld [vmem:[%s1850 + $0x24] sm:$0xf]
        %v1861 = vld [vmem:[%s1850 + $0x28] sm:$0xf]
        %v1862 = vld [vmem:[%s1850 + $0x2c] sm:$0xf]
        %v1863 = vld [vmem:[%s1850 + $0x30] sm:$0xf]
        %v1864 = vld [vmem:[%s1850 + $0x34] sm:$0xf]
        %v1865 = vld [vmem:[%s1850 + $0x38] sm:$0xf]
        %v1866 = vld [vmem:[%s1850 + $0x3c] sm:$0xf]
        %v1867 = vld [vmem:[%s1850 + $0x40] sm:$0xf]
        %v1868 = vld [vmem:[%s1850 + $0x44] sm:$0xf]
        %v1869 = vld [vmem:[%s1850 + $0x48] sm:$0xf]
        %v1870 = vld [vmem:[%s1850 + $0x4c] sm:$0xf]
        %v1871 = vld [vmem:[%s1850 + $0x50] sm:$0xf]
        %v1872 = vld [vmem:[%s1850 + $0x54] sm:$0xf]
        %v1873 = vld [vmem:[%s1850 + $0x58] sm:$0xf]
        %v1874 = vld [vmem:[%s1850 + $0x5c] sm:$0xf]
        %v1875 = vld [vmem:[%s1850 + $0x60] sm:$0xf]
        %v1876 = vld [vmem:[%s1850 + $0x64] sm:$0xf]
        %v1877 = vld [vmem:[%s1850 + $0x68] sm:$0xf]
        %v1878 = vld [vmem:[%s1850 + $0x6c] sm:$0xf]
        %v1879 = vld [vmem:[%s1850 + $0x70] sm:$0xf]
        %v1880 = vld [vmem:[%s1850 + $0x74] sm:$0xf]
        %v1881 = vld [vmem:[%s1850 + $0x78] sm:$0xf]
        %v1882 = vld [vmem:[%s1850 + $0x7c] sm:$0xf]
        %v1883 = vld [vmem:[%s1850 + $0x80] sm:$0xf]
        %v1884 = vld [vmem:[%s1850 + $0x84] sm:$0xf]
        %v1885 = vld [vmem:[%s1850 + $0x88] sm:$0xf]
        %v1886 = vld [vmem:[%s1850 + $0x8c] sm:$0xf]
        %v1887 = vld [vmem:[%s1850 + $0x90] sm:$0xf]
        %v1888 = vld [vmem:[%s1850 + $0x94] sm:$0xf]
        %v1889 = vld [vmem:[%s1850 + $0x98] sm:$0xf]
        %v1890 = vld [vmem:[%s1850 + $0x9c] sm:$0xf]
        %v1891 = vld [vmem:[%s1850 + $0xa0] sm:$0xf]
        %v1892 = vld [vmem:[%s1850 + $0xa4] sm:$0xf]
        %v1893 = vld [vmem:[%s1850 + $0xa8] sm:$0xf]
        %v1894 = vld [vmem:[%s1850 + $0xac] sm:$0xf]
        %v1895 = vld [vmem:[%s1850 + $0xb0] sm:$0xf]
        %v1896 = vld [vmem:[%s1850 + $0xb4] sm:$0xf]
        %v1897 = vld [vmem:[%s1850 + $0xb8] sm:$0xf]
        %v1898 = vld [vmem:[%s1850 + $0xbc] sm:$0xf]
        %v1947 = vunpack.c.l.b16 %v1851
        %v1948 = vunpack.c.l.b16 %v1852
        %v1949 = vunpack.c.l.b16 %v1853
        %v1950 = vunpack.c.l.b16 %v1854
        %v1951 = vunpack.c.l.b16 %v1855
        %v1952 = vunpack.c.l.b16 %v1856
        %v1953 = vunpack.c.l.b16 %v1857
        %v1954 = vunpack.c.l.b16 %v1858
        %v1955 = vunpack.c.l.b16 %v1859
        %v1956 = vunpack.c.l.b16 %v1860
        %v1957 = vunpack.c.l.b16 %v1861
        %v1958 = vunpack.c.l.b16 %v1862
        %v1959 = vunpack.c.l.b16 %v1863
        %v1960 = vunpack.c.l.b16 %v1864
        %v1961 = vunpack.c.l.b16 %v1865
        %v1962 = vunpack.c.l.b16 %v1866
        %v1963 = vunpack.c.l.b16 %v1867
        %v1964 = vunpack.c.l.b16 %v1868
        %v1965 = vunpack.c.l.b16 %v1869
        %v1966 = vunpack.c.l.b16 %v1870
        %v1967 = vunpack.c.l.b16 %v1871
        %v1968 = vunpack.c.l.b16 %v1872
        %v1969 = vunpack.c.l.b16 %v1873
        %v1970 = vunpack.c.l.b16 %v1874
        %v1971 = vunpack.c.l.b16 %v1875
        %v1972 = vunpack.c.l.b16 %v1876
        %v1973 = vunpack.c.l.b16 %v1877
        %v1974 = vunpack.c.l.b16 %v1878
        %v1975 = vunpack.c.l.b16 %v1879
        %v1976 = vunpack.c.l.b16 %v1880
        %v1977 = vunpack.c.l.b16 %v1881
        %v1978 = vunpack.c.l.b16 %v1882
        %v1979 = vunpack.c.l.b16 %v1883
        %v1980 = vunpack.c.l.b16 %v1884
        %v1981 = vunpack.c.l.b16 %v1885
        %v1982 = vunpack.c.l.b16 %v1886
        %v1983 = vunpack.c.l.b16 %v1887
        %v1984 = vunpack.c.l.b16 %v1888
        %v1985 = vunpack.c.l.b16 %v1889
        %v1986 = vunpack.c.l.b16 %v1890
        %v1987 = vunpack.c.l.b16 %v1891
        %v1988 = vunpack.c.l.b16 %v1892
        %v1989 = vunpack.c.l.b16 %v1893
        %v1990 = vunpack.c.l.b16 %v1894
        %v1991 = vunpack.c.l.b16 %v1895
        %v1992 = vunpack.c.l.b16 %v1896
        %v1993 = vunpack.c.l.b16 %v1897
        %v1994 = vunpack.c.l.b16 %v1898
        %v1995 = vpack.c.b16 %v1948, %v1947
        %v1996 = vpack.c.b16 %v1950, %v1949
        %v1997 = vpack.c.b16 %v1952, %v1951
        %v1998 = vpack.c.b16 %v1954, %v1953
        %v1999 = vpack.c.b16 %v1956, %v1955
        %v2000 = vpack.c.b16 %v1958, %v1957
        %v2001 = vpack.c.b16 %v1960, %v1959
        %v2002 = vpack.c.b16 %v1962, %v1961
        %v2003 = vpack.c.b16 %v1964, %v1963
        %v2004 = vpack.c.b16 %v1966, %v1965
        %v2005 = vpack.c.b16 %v1968, %v1967
        %v2006 = vpack.c.b16 %v1970, %v1969
        %v2007 = vpack.c.b16 %v1972, %v1971
        %v2008 = vpack.c.b16 %v1974, %v1973
        %v2009 = vpack.c.b16 %v1976, %v1975
        %v2010 = vpack.c.b16 %v1978, %v1977
        %v2011 = vpack.c.b16 %v1980, %v1979
        %v2012 = vpack.c.b16 %v1982, %v1981
        %v2013 = vpack.c.b16 %v1984, %v1983
        %v2014 = vpack.c.b16 %v1986, %v1985
        %v2015 = vpack.c.b16 %v1988, %v1987
        %v2016 = vpack.c.b16 %v1990, %v1989
        %v2017 = vpack.c.b16 %v1992, %v1991
        %v2018 = vpack.c.b16 %v1994, %v1993
        %2043 = vmatprep.subr.bf16.mxu0 0
        %2044 = vmatpush1.bf16.msra.mxu0 %v1995
        %2045 = vmatprep.subr.bf16.mxu0 0
        %2046 = vmatpush1.bf16.msra.mxu0 %v1996
        %2047 = vmatprep.subr.bf16.mxu0 0
        %2048 = vmatpush1.bf16.msra.mxu0 %v1997
        %2049 = vmatprep.subr.bf16.mxu0 0
        %2050 = vmatpush1.bf16.msra.mxu0 %v1998
        %2051 = vmatprep.subr.bf16.mxu0 0
        %2052 = vmatpush1.bf16.msra.mxu0 %v1999
        %2053 = vmatprep.subr.bf16.mxu0 0
        %2054 = vmatpush1.bf16.msra.mxu0 %v2000
        %2055 = vmatprep.subr.bf16.mxu0 0
        %2056 = vmatpush1.bf16.msra.mxu0 %v2001
        %2057 = vmatprep.subr.bf16.mxu0 0
        %2058 = vmatpush1.bf16.msra.mxu0 %v2002
        %2059 = vmatprep.subr.bf16.mxu0 0
        %2060 = vmatpush1.bf16.msra.mxu0 %v2003
        %2061 = vmatprep.subr.bf16.mxu0 0
        %2062 = vmatpush1.bf16.msra.mxu0 %v2004
        %2063 = vmatprep.subr.bf16.mxu0 0
        %2064 = vmatpush1.bf16.msra.mxu0 %v2005
        %2065 = vmatprep.subr.bf16.mxu0 0
        %2066 = vmatpush1.bf16.msra.mxu0 %v2006
        %2067 = vmatprep.subr.bf16.mxu0 0
        %2068 = vmatpush1.bf16.msra.mxu0 %v2007
        %2069 = vmatprep.subr.bf16.mxu0 0
        %2070 = vmatpush1.bf16.msra.mxu0 %v2008
        %2071 = vmatprep.subr.bf16.mxu0 0
        %2072 = vmatpush1.bf16.msra.mxu0 %v2009
        %2073 = vmatprep.subr.bf16.mxu0 0
        %2074 = vmatpush1.bf16.msra.mxu0 %v2010
        %2075 = vmatprep.mubr.bf16.mxu0 %v1701
        %2076 = vmatmul.mubr.bf16.gmra.mrb[0].mxu0 %v1674
        %v2077 = vpop.f32.mrb[0].mxu0
        %v2078 = vadd.f32 0.0, %v2077
        %v2079 = vpop.f32.mrb[0].mxu0
        %v2080 = vpop.f32.mrb[0].mxu0
        %v2081 = vadd.f32 0.0, %v2080
        %v2082 = vpop.f32.mrb[0].mxu0
        %2083 = vmatprep.mubr.bf16.mxu0 %v1713
        %2084 = vmatmul.mubr.bf16.gmra.mrb[0].mxu0 %v1675
        %v2085 = vpop.f32.mrb[0].mxu0
        %v2086 = vadd.f32 0.0, %v2085
        %v2087 = vpop.f32.mrb[0].mxu0
        %v2088 = vpop.f32.mrb[0].mxu0
        %v2089 = vadd.f32 0.0, %v2088
        %v2090 = vpop.f32.mrb[0].mxu0
        %2091 = vmatprep.mubr.bf16.mxu0 %v1725
        %2092 = vmatmul.mubr.bf16.gmra.mrb[0].mxu0 %v1676
        %v2093 = vpop.f32.mrb[0].mxu0
        %v2094 = vadd.f32 0.0, %v2093
        %v2095 = vpop.f32.mrb[0].mxu0
        %v2096 = vpop.f32.mrb[0].mxu0
        %v2097 = vadd.f32 0.0, %v2096
        %v2098 = vpop.f32.mrb[0].mxu0
        %2099 = vmatprep.mubr.bf16.mxu0 %v1737
        %2100 = vmatmul.mubr.bf16.gmra.mrb[0].mxu0 %v1677
        %v2101 = vpop.f32.mrb[0].mxu0
        %v2102 = vadd.f32 0.0, %v2101
        %v2103 = vpop.f32.mrb[0].mxu0
        %v2104 = vpop.f32.mrb[0].mxu0
        %v2105 = vadd.f32 0.0, %v2104
        %v2106 = vpop.f32.mrb[0].mxu0
        %2107 = vmatprep.mubr.bf16.mxu0 %v1749
        %2108 = vmatmul.mubr.bf16.gmra.mrb[0].mxu0 %v1678
        %v2109 = vpop.f32.mrb[0].mxu0
        %v2110 = vadd.f32 0.0, %v2109
        %v2111 = vpop.f32.mrb[0].mxu0
        %v2112 = vpop.f32.mrb[0].mxu0
        %v2113 = vadd.f32 0.0, %v2112
        %v2114 = vpop.f32.mrb[0].mxu0
        %2115 = vmatprep.mubr.bf16.mxu0 %v1761
        %2116 = vmatmul.mubr.bf16.gmra.mrb[0].mxu0 %v1679
        %v2117 = vpop.f32.mrb[0].mxu0
        %v2118 = vadd.f32 0.0, %v2117
        %v2119 = vpop.f32.mrb[0].mxu0
        %v2120 = vpop.f32.mrb[0].mxu0
        %v2121 = vadd.f32 0.0, %v2120
        %v2122 = vpop.f32.mrb[0].mxu0
        %2123 = vmatprep.mubr.bf16.mxu0 %v1773
        %2124 = vmatmul.mubr.bf16.gmra.mrb[0].mxu0 %v1680
        %v2125 = vpop.f32.mrb[0].mxu0
        %v2126 = vadd.f32 0.0, %v2125
        %v2127 = vpop.f32.mrb[0].mxu0
        %v2128 = vpop.f32.mrb[0].mxu0
        %v2129 = vadd.f32 0.0, %v2128
        %v2130 = vpop.f32.mrb[0].mxu0
        %2131 = vmatprep.mubr.bf16.mxu0 %v1785
        %2132 = vmatmul.mubr.bf16.gmra.mrb[0].mxu0 %v1681
        %v2133 = vpop.f32.mrb[0].mxu0
        %v2134 = vadd.f32 0.0, %v2133
        %v2135 = vpop.f32.mrb[0].mxu0
        %v2136 = vpop.f32.mrb[0].mxu0
        %v2137 = vadd.f32 0.0, %v2136
        %v2138 = vpop.f32.mrb[0].mxu0
        %2139 = vdwg.mxu0
        %2140 = vmatprep.subr.bf16.mxu0 0
        %2141 = vmatpush1.bf16.msra.mxu0 %v2011
        %2142 = vmatprep.subr.bf16.mxu0 0
        %2143 = vmatpush1.bf16.msra.mxu0 %v2012
        %2144 = vmatprep.subr.bf16.mxu0 0
        %2145 = vmatpush1.bf16.msra.mxu0 %v2013
        %2146 = vmatprep.subr.bf16.mxu0 0
        %2147 = vmatpush1.bf16.msra.mxu0 %v2014
        %2148 = vmatprep.subr.bf16.mxu0 0
        %2149 = vmatpush1.bf16.msra.mxu0 %v2015
        %2150 = vmatprep.subr.bf16.mxu0 0
        %2151 = vmatpush1.bf16.msra.mxu0 %v2016
        %2152 = vmatprep.subr.bf16.mxu0 0
        %2153 = vmatpush1.bf16.msra.mxu0 %v2017
        %2154 = vmatprep.subr.bf16.mxu0 0
        %2155 = vmatpush1.bf16.msra.mxu0 %v2018
        %2156 = vmatprep.subr.bf16.mxu0 0
        %2157 = vmatpush1.bf16.msra.mxu0 0
        %2158 = vmatprep.subr.bf16.mxu0 0
        %2159 = vmatpush1.bf16.msra.mxu0 0
        %2160 = vmatprep.subr.bf16.mxu0 0
        %2161 = vmatpush1.bf16.msra.mxu0 0
        %2162 = vmatprep.subr.bf16.mxu0 0
        %2163 = vmatpush1.bf16.msra.mxu0 0
        %2164 = vmatprep.subr.bf16.mxu0 0
        %2165 = vmatpush1.bf16.msra.mxu0 0
        %2166 = vmatprep.subr.bf16.mxu0 0
        %2167 = vmatpush1.bf16.msra.mxu0 0
        %2168 = vmatprep.subr.bf16.mxu0 0
        %2169 = vmatpush1.bf16.msra.mxu0 0
        %2170 = vmatprep.subr.bf16.mxu0 0
        %2171 = vmatpush1.bf16.msra.mxu0 0
        %2172 = vmatprep.mubr.bf16.mxu0 0
        %2173 = vmatmul.mubr.bf16.gmra.mrb[0].mxu0 %v1820
        %v2174 = vpop.f32.mrb[0].mxu0
        %v2175 = vadd.f32 %v2078, %v2174
        %v2176 = vpop.f32.mrb[0].mxu0
        %v2177 = vpop.f32.mrb[0].mxu0
        %v2178 = vadd.f32 %v2081, %v2177
        %v2179 = vpop.f32.mrb[0].mxu0
        %2180 = vmatprep.mubr.bf16.mxu0 0
        %2181 = vmatmul.mubr.bf16.gmra.mrb[0].mxu0 %v1823
        %v2182 = vpop.f32.mrb[0].mxu0
        %v2183 = vadd.f32 %v2086, %v2182
        %v2184 = vpop.f32.mrb[0].mxu0
        %v2185 = vpop.f32.mrb[0].mxu0
        %v2186 = vadd.f32 %v2089, %v2185
        %v2187 = vpop.f32.mrb[0].mxu0
        %2188 = vmatprep.mubr.bf16.mxu0 0
        %2189 = vmatmul.mubr.bf16.gmra.mrb[0].mxu0 %v1826
        %v2190 = vpop.f32.mrb[0].mxu0
        %v2191 = vadd.f32 %v2094, %v2190
        %v2192 = vpop.f32.mrb[0].mxu0
        %v2193 = vpop.f32.mrb[0].mxu0
        %v2194 = vadd.f32 %v2097, %v2193
        %v2195 = vpop.f32.mrb[0].mxu0
        %2196 = vmatprep.mubr.bf16.mxu0 0
        %2197 = vmatmul.mubr.bf16.gmra.mrb[0].mxu0 %v1829
        %v2198 = vpop.f32.mrb[0].mxu0
        %v2199 = vadd.f32 %v2102, %v2198
        %v2200 = vpop.f32.mrb[0].mxu0
        %v2201 = vpop.f32.mrb[0].mxu0
        %v2202 = vadd.f32 %v2105, %v2201
        %v2203 = vpop.f32.mrb[0].mxu0
        %2204 = vmatprep.mubr.bf16.mxu0 0
        %2205 = vmatmul.mubr.bf16.gmra.mrb[0].mxu0 %v1832
        %v2206 = vpop.f32.mrb[0].mxu0
        %v2207 = vadd.f32 %v2110, %v2206
        %v2208 = vpop.f32.mrb[0].mxu0
        %v2209 = vpop.f32.mrb[0].mxu0
        %v2210 = vadd.f32 %v2113, %v2209
        %v2211 = vpop.f32.mrb[0].mxu0
        %2212 = vmatprep.mubr.bf16.mxu0 0
        %2213 = vmatmul.mubr.bf16.gmra.mrb[0].mxu0 %v1835
        %v2214 = vpop.f32.mrb[0].mxu0
        %v2215 = vadd.f32 %v2118, %v2214
        %v2216 = vpop.f32.mrb[0].mxu0
        %v2217 = vpop.f32.mrb[0].mxu0
        %v2218 = vadd.f32 %v2121, %v2217
        %v2219 = vpop.f32.mrb[0].mxu0
        %2220 = vmatprep.mubr.bf16.mxu0 0
        %2221 = vmatmul.mubr.bf16.gmra.mrb[0].mxu0 %v1838
        %v2222 = vpop.f32.mrb[0].mxu0
        %v2223 = vadd.f32 %v2126, %v2222
        %v2224 = vpop.f32.mrb[0].mxu0
        %v2225 = vpop.f32.mrb[0].mxu0
        %v2226 = vadd.f32 %v2129, %v2225
        %v2227 = vpop.f32.mrb[0].mxu0
        %2228 = vmatprep.mubr.bf16.mxu0 0
        %2229 = vmatmul.mubr.bf16.gmra.mrb[0].mxu0 %v1841
        %v2230 = vpop.f32.mrb[0].mxu0
        %v2231 = vadd.f32 %v2134, %v2230
        %v2232 = vpop.f32.mrb[0].mxu0
        %v2233 = vpop.f32.mrb[0].mxu0
        %v2234 = vadd.f32 %v2137, %v2233
        %v2235 = vpop.f32.mrb[0].mxu0
        %2236 = vdwg.mxu0
        %v2237 = vadd.f32 %v1611, %v2175
        %v2238 = vadd.f32 %v1614, %v2178
        %v2239 = vadd.f32 %v1619, %v2183
        %v2240 = vadd.f32 %v1622, %v2186
        %v2241 = vadd.f32 %v1627, %v2191
        %v2242 = vadd.f32 %v1630, %v2194
        %v2243 = vadd.f32 %v1635, %v2199
        %v2244 = vadd.f32 %v1638, %v2202
        %v2245 = vadd.f32 %v1643, %v2207
        %v2246 = vadd.f32 %v1646, %v2210
        %v2247 = vadd.f32 %v1651, %v2215
        %v2248 = vadd.f32 %v1654, %v2218
        %v2249 = vadd.f32 %v1659, %v2223
        %v2250 = vadd.f32 %v1662, %v2226
        %v2251 = vadd.f32 %v1667, %v2231
        %v2252 = vadd.f32 %v1670, %v2234
        %v2254 = vlaneseq
        %v2255 = vshrl.u32 %v2254, 7
        %v2256 = vsub.s32 0, %v2255
        %v2257 = vrot.slane %v545, %v2256
        %v2259 = vadd.f32 %v2237, %v2257
        %v2260 = vadd.f32 %v2238, %v2257
        %v2261 = vadd.f32 %v2239, %v2257
        %v2262 = vadd.f32 %v2240, %v2257
        %v2263 = vadd.f32 %v2241, %v2257
        %v2264 = vadd.f32 %v2242, %v2257
        %v2265 = vadd.f32 %v2243, %v2257
        %v2266 = vadd.f32 %v2244, %v2257
        %v2267 = vadd.f32 %v2245, %v2257
        %v2268 = vadd.f32 %v2246, %v2257
        %v2269 = vadd.f32 %v2247, %v2257
        %v2270 = vadd.f32 %v2248, %v2257
        %v2271 = vadd.f32 %v2249, %v2257
        %v2272 = vadd.f32 %v2250, %v2257
        %v2273 = vadd.f32 %v2251, %v2257
        %v2274 = vadd.f32 %v2252, %v2257
        %v2275 = vmax.f32 %v2259, 0.0
        %v2276 = vmax.f32 %v2260, 0.0
        %v2277 = vmax.f32 %v2261, 0.0
        %v2278 = vmax.f32 %v2262, 0.0
        %v2279 = vmax.f32 %v2263, 0.0
        %v2280 = vmax.f32 %v2264, 0.0
        %v2281 = vmax.f32 %v2265, 0.0
        %v2282 = vmax.f32 %v2266, 0.0
        %v2283 = vmax.f32 %v2267, 0.0
        %v2284 = vmax.f32 %v2268, 0.0
        %v2285 = vmax.f32 %v2269, 0.0
        %v2286 = vmax.f32 %v2270, 0.0
        %v2287 = vmax.f32 %v2271, 0.0
        %v2288 = vmax.f32 %v2272, 0.0
        %v2289 = vmax.f32 %v2273, 0.0
        %v2290 = vmax.f32 %v2274, 0.0
        %v2291 = vpack.c.bf16 %v2276, %v2275
        %v2292 = vpack.c.bf16 %v2278, %v2277
        %v2293 = vpack.c.bf16 %v2280, %v2279
        %v2294 = vpack.c.bf16 %v2282, %v2281
        %v2295 = vpack.c.bf16 %v2284, %v2283
        %v2296 = vpack.c.bf16 %v2286, %v2285
        %v2297 = vpack.c.bf16 %v2288, %v2287
        %v2298 = vpack.c.bf16 %v2290, %v2289
        %v2300 = vshrl.u32 %v2291, 16
        %v2302 = vrot.slane %v2300, 7
        %v2303 = vshll.u32 %v2291, 16
        %v2305 = vor.u32 %v2302, %v2303
        %v2307 = vshrl.u32 %v2292, 16
        %v2309 = vrot.slane %v2307, 7
        %v2310 = vshll.u32 %v2292, 16
        %v2312 = vor.u32 %v2309, %v2310
        %v2314 = vshrl.u32 %v2293, 16
        %v2316 = vrot.slane %v2314, 7
        %v2317 = vshll.u32 %v2293, 16
        %v2319 = vor.u32 %v2316, %v2317
        %v2321 = vshrl.u32 %v2294, 16
        %v2323 = vrot.slane %v2321, 7
        %v2324 = vshll.u32 %v2294, 16
        %v2326 = vor.u32 %v2323, %v2324
        %v2328 = vshrl.u32 %v2295, 16
        %v2330 = vrot.slane %v2328, 7
        %v2331 = vshll.u32 %v2295, 16
        %v2333 = vor.u32 %v2330, %v2331
        %v2335 = vshrl.u32 %v2296, 16
        %v2337 = vrot.slane %v2335, 7
        %v2338 = vshll.u32 %v2296, 16
        %v2340 = vor.u32 %v2337, %v2338
        %v2342 = vshrl.u32 %v2297, 16
        %v2344 = vrot.slane %v2342, 7
        %v2345 = vshll.u32 %v2297, 16
        %v2347 = vor.u32 %v2344, %v2345
        %v2349 = vshrl.u32 %v2298, 16
        %v2351 = vrot.slane %v2349, 7
        %v2352 = vshll.u32 %v2298, 16
        %v2354 = vor.u32 %v2351, %v2352
        %v2371 = vsel %vm381, 0, %v2305
        %v2372 = vsel %vm381, 0, %v2312
        %v2373 = vsel %vm381, 0, %v2319
        %v2374 = vsel %vm381, 0, %v2326
        %v2375 = vsel %vm381, 0, %v2333
        %v2376 = vsel %vm381, 0, %v2340
        %v2377 = vsel %vm381, 0, %v2347
        %v2378 = vsel %vm381, 0, %v2354
        %v2379 = vsel %vm381, %v2302, 0
        %v2380 = vsel %vm381, %v2309, 0
        %v2381 = vsel %vm381, %v2316, 0
        %v2382 = vsel %vm381, %v2323, 0
        %v2383 = vsel %vm381, %v2330, 0
        %v2384 = vsel %vm381, %v2337, 0
        %v2385 = vsel %vm381, %v2344, 0
        %v2386 = vsel %vm381, %v2351, 0
        %s2387 = scalar_lea.vmem [#allocation3], 16
        %2388 = vst [vmem:[%s2387] sm:$0xff] %v2371
        %2389 = vst [vmem:[%s2387 + $0x8] sm:$0xff] %v2379
        %2390 = vst [vmem:[%s2387 + $0x10] sm:$0xff] %v2372
        %2391 = vst [vmem:[%s2387 + $0x18] sm:$0xff] %v2380
        %2392 = vst [vmem:[%s2387 + $0x20] sm:$0xff] %v2373
        %2393 = vst [vmem:[%s2387 + $0x28] sm:$0xff] %v2381
        %2394 = vst [vmem:[%s2387 + $0x30] sm:$0xff] %v2374
        %2395 = vst [vmem:[%s2387 + $0x38] sm:$0xff] %v2382
        %2396 = vst [vmem:[%s2387 + $0x40] sm:$0xff] %v2375
        %2397 = vst [vmem:[%s2387 + $0x48] sm:$0xff] %v2383
        %2398 = vst [vmem:[%s2387 + $0x50] sm:$0xff] %v2376
        %2399 = vst [vmem:[%s2387 + $0x58] sm:$0xff] %v2384
        %2400 = vst [vmem:[%s2387 + $0x60] sm:$0xff] %v2377
        %2401 = vst [vmem:[%s2387 + $0x68] sm:$0xff] %v2385
        %2402 = vst [vmem:[%s2387 + $0x70] sm:$0xff] %v2378
        %2403 = vst [vmem:[%s2387 + $0x78] sm:$0xff] %v2386
        %s2404 = scalar_lea.vmem [#allocation2], 128
        %v2405 = vld [vmem:[%s2404] sm:$0xff]
        %v2406 = vld [vmem:[%s2404 + $0x10] sm:$0xff]
        %v2407 = vld [vmem:[%s2404 + $0x20] sm:$0xff]
        %v2408 = vld [vmem:[%s2404 + $0x30] sm:$0xff]
        %v2409 = vld [vmem:[%s2404 + $0x40] sm:$0xff]
        %v2410 = vld [vmem:[%s2404 + $0x50] sm:$0xff]
        %v2411 = vld [vmem:[%s2404 + $0x60] sm:$0xff]
        %v2412 = vld [vmem:[%s2404 + $0x70] sm:$0xff]
        %v2413 = vld [vmem:[%s2404 + $0x8] sm:$0x1]
        %v2414 = vld [vmem:[%s2404 + $0x18] sm:$0x1]
        %v2415 = vld [vmem:[%s2404 + $0x28] sm:$0x1]
        %v2416 = vld [vmem:[%s2404 + $0x38] sm:$0x1]
        %v2417 = vld [vmem:[%s2404 + $0x48] sm:$0x1]
        %v2418 = vld [vmem:[%s2404 + $0x58] sm:$0x1]
        %v2419 = vld [vmem:[%s2404 + $0x68] sm:$0x1]
        %v2420 = vld [vmem:[%s2404 + $0x78] sm:$0x1]
        %v2422 = vshrl.u32 %v2405, 16
        %v2424 = vshll.u32 %v2405, 16
        %v2426 = vrot.slane %v2424, 1
        %v2427 = vor.u32 %v2422, %v2426
        %v2429 = vshll.u32 %v2413, 16
        %v2431 = vrot.slane %v2429, 1
        %v2432 = vsel %vm562, %v2427, %v2431
        %v2434 = vshrl.u32 %v2406, 16
        %v2436 = vshll.u32 %v2406, 16
        %v2438 = vrot.slane %v2436, 1
        %v2439 = vor.u32 %v2434, %v2438
        %v2441 = vshll.u32 %v2414, 16
        %v2443 = vrot.slane %v2441, 1
        %v2444 = vsel %vm562, %v2439, %v2443
        %v2446 = vshrl.u32 %v2407, 16
        %v2448 = vshll.u32 %v2407, 16
        %v2450 = vrot.slane %v2448, 1
        %v2451 = vor.u32 %v2446, %v2450
        %v2453 = vshll.u32 %v2415, 16
        %v2455 = vrot.slane %v2453, 1
        %v2456 = vsel %vm562, %v2451, %v2455
        %v2458 = vshrl.u32 %v2408, 16
        %v2460 = vshll.u32 %v2408, 16
        %v2462 = vrot.slane %v2460, 1
        %v2463 = vor.u32 %v2458, %v2462
        %v2465 = vshll.u32 %v2416, 16
        %v2467 = vrot.slane %v2465, 1
        %v2468 = vsel %vm562, %v2463, %v2467
        %v2470 = vshrl.u32 %v2409, 16
        %v2472 = vshll.u32 %v2409, 16
        %v2474 = vrot.slane %v2472, 1
        %v2475 = vor.u32 %v2470, %v2474
        %v2477 = vshll.u32 %v2417, 16
        %v2479 = vrot.slane %v2477, 1
        %v2480 = vsel %vm562, %v2475, %v2479
        %v2482 = vshrl.u32 %v2410, 16
        %v2484 = vshll.u32 %v2410, 16
        %v2486 = vrot.slane %v2484, 1
        %v2487 = vor.u32 %v2482, %v2486
        %v2489 = vshll.u32 %v2418, 16
        %v2491 = vrot.slane %v2489, 1
        %v2492 = vsel %vm562, %v2487, %v2491
        %v2494 = vshrl.u32 %v2411, 16
        %v2496 = vshll.u32 %v2411, 16
        %v2498 = vrot.slane %v2496, 1
        %v2499 = vor.u32 %v2494, %v2498
        %v2501 = vshll.u32 %v2419, 16
        %v2503 = vrot.slane %v2501, 1
        %v2504 = vsel %vm562, %v2499, %v2503
        %v2506 = vshrl.u32 %v2412, 16
        %v2508 = vshll.u32 %v2412, 16
        %v2510 = vrot.slane %v2508, 1
        %v2511 = vor.u32 %v2506, %v2510
        %v2513 = vshll.u32 %v2420, 16
        %v2515 = vrot.slane %v2513, 1
        %v2516 = vsel %vm562, %v2511, %v2515
        %v2525 = vld [vmem:[%s2404] sm:$0xfe]
        %v2526 = vld [vmem:[%s2404 + $0x10] sm:$0xfe]
        %v2527 = vld [vmem:[%s2404 + $0x20] sm:$0xfe]
        %v2528 = vld [vmem:[%s2404 + $0x30] sm:$0xfe]
        %v2529 = vld [vmem:[%s2404 + $0x40] sm:$0xfe]
        %v2530 = vld [vmem:[%s2404 + $0x50] sm:$0xfe]
        %v2531 = vld [vmem:[%s2404 + $0x60] sm:$0xfe]
        %v2532 = vld [vmem:[%s2404 + $0x70] sm:$0xfe]
        %v2549 = vrot.slane %v2525, 1
        %v2550 = vrot.slane %v2413, 1
        %v2551 = vsel %vm691, %v2549, %v2550
        %v2552 = vrot.slane %v2526, 1
        %v2553 = vrot.slane %v2414, 1
        %v2554 = vsel %vm691, %v2552, %v2553
        %v2555 = vrot.slane %v2527, 1
        %v2556 = vrot.slane %v2415, 1
        %v2557 = vsel %vm691, %v2555, %v2556
        %v2558 = vrot.slane %v2528, 1
        %v2559 = vrot.slane %v2416, 1
        %v2560 = vsel %vm691, %v2558, %v2559
        %v2561 = vrot.slane %v2529, 1
        %v2562 = vrot.slane %v2417, 1
        %v2563 = vsel %vm691, %v2561, %v2562
        %v2564 = vrot.slane %v2530, 1
        %v2565 = vrot.slane %v2418, 1
        %v2566 = vsel %vm691, %v2564, %v2565
        %v2567 = vrot.slane %v2531, 1
        %v2568 = vrot.slane %v2419, 1
        %v2569 = vsel %vm691, %v2567, %v2568
        %v2570 = vrot.slane %v2532, 1
        %v2571 = vrot.slane %v2420, 1
        %v2572 = vsel %vm691, %v2570, %v2571
        %v2581 = vld [vmem:[#allocation7] sm:$0xf]
        %v2582 = vld [vmem:[#allocation7 + $0x4] sm:$0xf]
        %v2583 = vld [vmem:[#allocation7 + $0x8] sm:$0xf]
        %v2584 = vld [vmem:[#allocation7 + $0xc] sm:$0xf]
        %v2585 = vld [vmem:[#allocation7 + $0x10] sm:$0xf]
        %v2586 = vld [vmem:[#allocation7 + $0x14] sm:$0xf]
        %v2587 = vld [vmem:[#allocation7 + $0x18] sm:$0xf]
        %v2588 = vld [vmem:[#allocation7 + $0x1c] sm:$0xf]
        %v2589 = vld [vmem:[#allocation7 + $0x20] sm:$0xf]
        %v2590 = vld [vmem:[#allocation7 + $0x24] sm:$0xf]
        %v2591 = vld [vmem:[#allocation7 + $0x28] sm:$0xf]
        %v2592 = vld [vmem:[#allocation7 + $0x2c] sm:$0xf]
        %v2593 = vld [vmem:[#allocation7 + $0x30] sm:$0xf]
        %v2594 = vld [vmem:[#allocation7 + $0x34] sm:$0xf]
        %v2595 = vld [vmem:[#allocation7 + $0x38] sm:$0xf]
        %v2596 = vld [vmem:[#allocation7 + $0x3c] sm:$0xf]
        %v2597 = vld [vmem:[#allocation7 + $0x40] sm:$0xf]
        %v2598 = vld [vmem:[#allocation7 + $0x44] sm:$0xf]
        %v2599 = vld [vmem:[#allocation7 + $0x48] sm:$0xf]
        %v2600 = vld [vmem:[#allocation7 + $0x4c] sm:$0xf]
        %v2601 = vld [vmem:[#allocation7 + $0x50] sm:$0xf]
        %v2602 = vld [vmem:[#allocation7 + $0x54] sm:$0xf]
        %v2603 = vld [vmem:[#allocation7 + $0x58] sm:$0xf]
        %v2604 = vld [vmem:[#allocation7 + $0x5c] sm:$0xf]
        %v2605 = vld [vmem:[#allocation7 + $0x60] sm:$0xf]
        %v2606 = vld [vmem:[#allocation7 + $0x64] sm:$0xf]
        %v2607 = vld [vmem:[#allocation7 + $0x68] sm:$0xf]
        %v2608 = vld [vmem:[#allocation7 + $0x6c] sm:$0xf]
        %v2609 = vld [vmem:[#allocation7 + $0x70] sm:$0xf]
        %v2610 = vld [vmem:[#allocation7 + $0x74] sm:$0xf]
        %v2611 = vld [vmem:[#allocation7 + $0x78] sm:$0xf]
        %v2612 = vld [vmem:[#allocation7 + $0x7c] sm:$0xf]
        %v2613 = vld [vmem:[#allocation7 + $0x80] sm:$0xf]
        %v2614 = vld [vmem:[#allocation7 + $0x84] sm:$0xf]
        %v2615 = vld [vmem:[#allocation7 + $0x88] sm:$0xf]
        %v2616 = vld [vmem:[#allocation7 + $0x8c] sm:$0xf]
        %v2617 = vld [vmem:[#allocation7 + $0x90] sm:$0xf]
        %v2618 = vld [vmem:[#allocation7 + $0x94] sm:$0xf]
        %v2619 = vld [vmem:[#allocation7 + $0x98] sm:$0xf]
        %v2620 = vld [vmem:[#allocation7 + $0x9c] sm:$0xf]
        %v2621 = vld [vmem:[#allocation7 + $0xa0] sm:$0xf]
        %v2622 = vld [vmem:[#allocation7 + $0xa4] sm:$0xf]
        %v2623 = vld [vmem:[#allocation7 + $0xa8] sm:$0xf]
        %v2624 = vld [vmem:[#allocation7 + $0xac] sm:$0xf]
        %v2625 = vld [vmem:[#allocation7 + $0xb0] sm:$0xf]
        %v2626 = vld [vmem:[#allocation7 + $0xb4] sm:$0xf]
        %v2627 = vld [vmem:[#allocation7 + $0xb8] sm:$0xf]
        %v2628 = vld [vmem:[#allocation7 + $0xbc] sm:$0xf]
        %v2629 = vld [vmem:[%s528] sm:$0xff]
        %v2630 = vld [vmem:[%s528 + $0x10] sm:$0xff]
        %v2631 = vld [vmem:[%s528 + $0x20] sm:$0xff]
        %v2632 = vld [vmem:[%s528 + $0x30] sm:$0xff]
        %v2633 = vld [vmem:[%s528 + $0x40] sm:$0xff]
        %v2634 = vld [vmem:[%s528 + $0x50] sm:$0xff]
        %v2635 = vld [vmem:[%s528 + $0x60] sm:$0xff]
        %v2636 = vld [vmem:[%s528 + $0x70] sm:$0xff]
        %v2637 = vld [vmem:[%s528 + $0x8] sm:$0x1]
        %v2638 = vld [vmem:[%s528 + $0x18] sm:$0x1]
        %v2639 = vld [vmem:[%s528 + $0x28] sm:$0x1]
        %v2640 = vld [vmem:[%s528 + $0x38] sm:$0x1]
        %v2641 = vld [vmem:[%s528 + $0x48] sm:$0x1]
        %v2642 = vld [vmem:[%s528 + $0x58] sm:$0x1]
        %v2643 = vld [vmem:[%s528 + $0x68] sm:$0x1]
        %v2644 = vld [vmem:[%s528 + $0x78] sm:$0x1]
        %v2646 = vshrl.u32 %v2629, 16
        %v2648 = vshll.u32 %v2629, 16
        %v2650 = vrot.slane %v2648, 1
        %v2651 = vor.u32 %v2646, %v2650
        %v2653 = vshll.u32 %v2637, 16
        %v2655 = vrot.slane %v2653, 1
        %v2656 = vsel %vm562, %v2651, %v2655
        %v2658 = vshrl.u32 %v2630, 16
        %v2660 = vshll.u32 %v2630, 16
        %v2662 = vrot.slane %v2660, 1
        %v2663 = vor.u32 %v2658, %v2662
        %v2665 = vshll.u32 %v2638, 16
        %v2667 = vrot.slane %v2665, 1
        %v2668 = vsel %vm562, %v2663, %v2667
        %v2670 = vshrl.u32 %v2631, 16
        %v2672 = vshll.u32 %v2631, 16
        %v2674 = vrot.slane %v2672, 1
        %v2675 = vor.u32 %v2670, %v2674
        %v2677 = vshll.u32 %v2639, 16
        %v2679 = vrot.slane %v2677, 1
        %v2680 = vsel %vm562, %v2675, %v2679
        %v2682 = vshrl.u32 %v2632, 16
        %v2684 = vshll.u32 %v2632, 16
        %v2686 = vrot.slane %v2684, 1
        %v2687 = vor.u32 %v2682, %v2686
        %v2689 = vshll.u32 %v2640, 16
        %v2691 = vrot.slane %v2689, 1
        %v2692 = vsel %vm562, %v2687, %v2691
        %v2694 = vshrl.u32 %v2633, 16
        %v2696 = vshll.u32 %v2633, 16
        %v2698 = vrot.slane %v2696, 1
        %v2699 = vor.u32 %v2694, %v2698
        %v2701 = vshll.u32 %v2641, 16
        %v2703 = vrot.slane %v2701, 1
        %v2704 = vsel %vm562, %v2699, %v2703
        %v2706 = vshrl.u32 %v2634, 16
        %v2708 = vshll.u32 %v2634, 16
        %v2710 = vrot.slane %v2708, 1
        %v2711 = vor.u32 %v2706, %v2710
        %v2713 = vshll.u32 %v2642, 16
        %v2715 = vrot.slane %v2713, 1
        %v2716 = vsel %vm562, %v2711, %v2715
        %v2718 = vshrl.u32 %v2635, 16
        %v2720 = vshll.u32 %v2635, 16
        %v2722 = vrot.slane %v2720, 1
        %v2723 = vor.u32 %v2718, %v2722
        %v2725 = vshll.u32 %v2643, 16
        %v2727 = vrot.slane %v2725, 1
        %v2728 = vsel %vm562, %v2723, %v2727
        %v2730 = vshrl.u32 %v2636, 16
        %v2732 = vshll.u32 %v2636, 16
        %v2734 = vrot.slane %v2732, 1
        %v2735 = vor.u32 %v2730, %v2734
        %v2737 = vshll.u32 %v2644, 16
        %v2739 = vrot.slane %v2737, 1
        %v2740 = vsel %vm562, %v2735, %v2739
        %v2749 = vld [vmem:[%s528] sm:$0xfe]
        %v2750 = vld [vmem:[%s528 + $0x10] sm:$0xfe]
        %v2751 = vld [vmem:[%s528 + $0x20] sm:$0xfe]
        %v2752 = vld [vmem:[%s528 + $0x30] sm:$0xfe]
        %v2753 = vld [vmem:[%s528 + $0x40] sm:$0xfe]
        %v2754 = vld [vmem:[%s528 + $0x50] sm:$0xfe]
        %v2755 = vld [vmem:[%s528 + $0x60] sm:$0xfe]
        %v2756 = vld [vmem:[%s528 + $0x70] sm:$0xfe]
        %v2773 = vrot.slane %v2749, 1
        %v2774 = vrot.slane %v2637, 1
        %v2775 = vsel %vm691, %v2773, %v2774
        %v2776 = vrot.slane %v2750, 1
        %v2777 = vrot.slane %v2638, 1
        %v2778 = vsel %vm691, %v2776, %v2777
        %v2779 = vrot.slane %v2751, 1
        %v2780 = vrot.slane %v2639, 1
        %v2781 = vsel %vm691, %v2779, %v2780
        %v2782 = vrot.slane %v2752, 1
        %v2783 = vrot.slane %v2640, 1
        %v2784 = vsel %vm691, %v2782, %v2783
        %v2785 = vrot.slane %v2753, 1
        %v2786 = vrot.slane %v2641, 1
        %v2787 = vsel %vm691, %v2785, %v2786
        %v2788 = vrot.slane %v2754, 1
        %v2789 = vrot.slane %v2642, 1
        %v2790 = vsel %vm691, %v2788, %v2789
        %v2791 = vrot.slane %v2755, 1
        %v2792 = vrot.slane %v2643, 1
        %v2793 = vsel %vm691, %v2791, %v2792
        %v2794 = vrot.slane %v2756, 1
        %v2795 = vrot.slane %v2644, 1
        %v2796 = vsel %vm691, %v2794, %v2795
        %v2805 = vld [vmem:[%s948] sm:$0xf]
        %v2806 = vld [vmem:[%s948 + $0x4] sm:$0xf]
        %v2807 = vld [vmem:[%s948 + $0x8] sm:$0xf]
        %v2808 = vld [vmem:[%s948 + $0xc] sm:$0xf]
        %v2809 = vld [vmem:[%s948 + $0x10] sm:$0xf]
        %v2810 = vld [vmem:[%s948 + $0x14] sm:$0xf]
        %v2811 = vld [vmem:[%s948 + $0x18] sm:$0xf]
        %v2812 = vld [vmem:[%s948 + $0x1c] sm:$0xf]
        %v2813 = vld [vmem:[%s948 + $0x20] sm:$0xf]
        %v2814 = vld [vmem:[%s948 + $0x24] sm:$0xf]
        %v2815 = vld [vmem:[%s948 + $0x28] sm:$0xf]
        %v2816 = vld [vmem:[%s948 + $0x2c] sm:$0xf]
        %v2817 = vld [vmem:[%s948 + $0x30] sm:$0xf]
        %v2818 = vld [vmem:[%s948 + $0x34] sm:$0xf]
        %v2819 = vld [vmem:[%s948 + $0x38] sm:$0xf]
        %v2820 = vld [vmem:[%s948 + $0x3c] sm:$0xf]
        %v2821 = vld [vmem:[%s948 + $0x40] sm:$0xf]
        %v2822 = vld [vmem:[%s948 + $0x44] sm:$0xf]
        %v2823 = vld [vmem:[%s948 + $0x48] sm:$0xf]
        %v2824 = vld [vmem:[%s948 + $0x4c] sm:$0xf]
        %v2825 = vld [vmem:[%s948 + $0x50] sm:$0xf]
        %v2826 = vld [vmem:[%s948 + $0x54] sm:$0xf]
        %v2827 = vld [vmem:[%s948 + $0x58] sm:$0xf]
        %v2828 = vld [vmem:[%s948 + $0x5c] sm:$0xf]
        %v2829 = vld [vmem:[%s948 + $0x60] sm:$0xf]
        %v2830 = vld [vmem:[%s948 + $0x64] sm:$0xf]
        %v2831 = vld [vmem:[%s948 + $0x68] sm:$0xf]
        %v2832 = vld [vmem:[%s948 + $0x6c] sm:$0xf]
        %v2833 = vld [vmem:[%s948 + $0x70] sm:$0xf]
        %v2834 = vld [vmem:[%s948 + $0x74] sm:$0xf]
        %v2835 = vld [vmem:[%s948 + $0x78] sm:$0xf]
        %v2836 = vld [vmem:[%s948 + $0x7c] sm:$0xf]
        %v2837 = vld [vmem:[%s948 + $0x80] sm:$0xf]
        %v2838 = vld [vmem:[%s948 + $0x84] sm:$0xf]
        %v2839 = vld [vmem:[%s948 + $0x88] sm:$0xf]
        %v2840 = vld [vmem:[%s948 + $0x8c] sm:$0xf]
        %v2841 = vld [vmem:[%s948 + $0x90] sm:$0xf]
        %v2842 = vld [vmem:[%s948 + $0x94] sm:$0xf]
        %v2843 = vld [vmem:[%s948 + $0x98] sm:$0xf]
        %v2844 = vld [vmem:[%s948 + $0x9c] sm:$0xf]
        %v2845 = vld [vmem:[%s948 + $0xa0] sm:$0xf]
        %v2846 = vld [vmem:[%s948 + $0xa4] sm:$0xf]
        %v2847 = vld [vmem:[%s948 + $0xa8] sm:$0xf]
        %v2848 = vld [vmem:[%s948 + $0xac] sm:$0xf]
        %v2849 = vld [vmem:[%s948 + $0xb0] sm:$0xf]
        %v2850 = vld [vmem:[%s948 + $0xb4] sm:$0xf]
        %v2851 = vld [vmem:[%s948 + $0xb8] sm:$0xf]
        %v2852 = vld [vmem:[%s948 + $0xbc] sm:$0xf]
        %v2901 = vunpack.c.l.b16 %v2805
        %v2902 = vunpack.c.l.b16 %v2806
        %v2903 = vunpack.c.l.b16 %v2807
        %v2904 = vunpack.c.l.b16 %v2808
        %v2905 = vunpack.c.l.b16 %v2809
        %v2906 = vunpack.c.l.b16 %v2810
        %v2907 = vunpack.c.l.b16 %v2811
        %v2908 = vunpack.c.l.b16 %v2812
        %v2909 = vunpack.c.l.b16 %v2813
        %v2910 = vunpack.c.l.b16 %v2814
        %v2911 = vunpack.c.l.b16 %v2815
        %v2912 = vunpack.c.l.b16 %v2816
        %v2913 = vunpack.c.l.b16 %v2817
        %v2914 = vunpack.c.l.b16 %v2818
        %v2915 = vunpack.c.l.b16 %v2819
        %v2916 = vunpack.c.l.b16 %v2820
        %v2917 = vunpack.c.l.b16 %v2821
        %v2918 = vunpack.c.l.b16 %v2822
        %v2919 = vunpack.c.l.b16 %v2823
        %v2920 = vunpack.c.l.b16 %v2824
        %v2921 = vunpack.c.l.b16 %v2825
        %v2922 = vunpack.c.l.b16 %v2826
        %v2923 = vunpack.c.l.b16 %v2827
        %v2924 = vunpack.c.l.b16 %v2828
        %v2925 = vunpack.c.l.b16 %v2829
        %v2926 = vunpack.c.l.b16 %v2830
        %v2927 = vunpack.c.l.b16 %v2831
        %v2928 = vunpack.c.l.b16 %v2832
        %v2929 = vunpack.c.l.b16 %v2833
        %v2930 = vunpack.c.l.b16 %v2834
        %v2931 = vunpack.c.l.b16 %v2835
        %v2932 = vunpack.c.l.b16 %v2836
        %v2933 = vunpack.c.l.b16 %v2837
        %v2934 = vunpack.c.l.b16 %v2838
        %v2935 = vunpack.c.l.b16 %v2839
        %v2936 = vunpack.c.l.b16 %v2840
        %v2937 = vunpack.c.l.b16 %v2841
        %v2938 = vunpack.c.l.b16 %v2842
        %v2939 = vunpack.c.l.b16 %v2843
        %v2940 = vunpack.c.l.b16 %v2844
        %v2941 = vunpack.c.l.b16 %v2845
        %v2942 = vunpack.c.l.b16 %v2846
        %v2943 = vunpack.c.l.b16 %v2847
        %v2944 = vunpack.c.l.b16 %v2848
        %v2945 = vunpack.c.l.b16 %v2849
        %v2946 = vunpack.c.l.b16 %v2850
        %v2947 = vunpack.c.l.b16 %v2851
        %v2948 = vunpack.c.l.b16 %v2852
        %v2949 = vpack.c.b16 %v2902, %v2901
        %v2950 = vpack.c.b16 %v2904, %v2903
        %v2951 = vpack.c.b16 %v2906, %v2905
        %v2952 = vpack.c.b16 %v2908, %v2907
        %v2953 = vpack.c.b16 %v2910, %v2909
        %v2954 = vpack.c.b16 %v2912, %v2911
        %v2955 = vpack.c.b16 %v2914, %v2913
        %v2956 = vpack.c.b16 %v2916, %v2915
        %v2957 = vpack.c.b16 %v2918, %v2917
        %v2958 = vpack.c.b16 %v2920, %v2919
        %v2959 = vpack.c.b16 %v2922, %v2921
        %v2960 = vpack.c.b16 %v2924, %v2923
        %v2961 = vpack.c.b16 %v2926, %v2925
        %v2962 = vpack.c.b16 %v2928, %v2927
        %v2963 = vpack.c.b16 %v2930, %v2929
        %v2964 = vpack.c.b16 %v2932, %v2931
        %v2965 = vpack.c.b16 %v2934, %v2933
        %v2966 = vpack.c.b16 %v2936, %v2935
        %v2967 = vpack.c.b16 %v2938, %v2937
        %v2968 = vpack.c.b16 %v2940, %v2939
        %v2969 = vpack.c.b16 %v2942, %v2941
        %v2970 = vpack.c.b16 %v2944, %v2943
        %v2971 = vpack.c.b16 %v2946, %v2945
        %v2972 = vpack.c.b16 %v2948, %v2947
        %2997 = vmatprep.subr.bf16.mxu0 0
        %2998 = vmatpush1.bf16.msra.mxu0 %v2949
        %2999 = vmatprep.subr.bf16.mxu0 0
        %3000 = vmatpush1.bf16.msra.mxu0 %v2950
        %3001 = vmatprep.subr.bf16.mxu0 0
        %3002 = vmatpush1.bf16.msra.mxu0 %v2951
        %3003 = vmatprep.subr.bf16.mxu0 0
        %3004 = vmatpush1.bf16.msra.mxu0 %v2952
        %3005 = vmatprep.subr.bf16.mxu0 0
        %3006 = vmatpush1.bf16.msra.mxu0 %v2953
        %3007 = vmatprep.subr.bf16.mxu0 0
        %3008 = vmatpush1.bf16.msra.mxu0 %v2954
        %3009 = vmatprep.subr.bf16.mxu0 0
        %3010 = vmatpush1.bf16.msra.mxu0 %v2955
        %3011 = vmatprep.subr.bf16.mxu0 0
        %3012 = vmatpush1.bf16.msra.mxu0 %v2956
        %3013 = vmatprep.subr.bf16.mxu0 0
        %3014 = vmatpush1.bf16.msra.mxu0 %v2957
        %3015 = vmatprep.subr.bf16.mxu0 0
        %3016 = vmatpush1.bf16.msra.mxu0 %v2958
        %3017 = vmatprep.subr.bf16.mxu0 0
        %3018 = vmatpush1.bf16.msra.mxu0 %v2959
        %3019 = vmatprep.subr.bf16.mxu0 0
        %3020 = vmatpush1.bf16.msra.mxu0 %v2960
        %3021 = vmatprep.subr.bf16.mxu0 0
        %3022 = vmatpush1.bf16.msra.mxu0 %v2961
        %3023 = vmatprep.subr.bf16.mxu0 0
        %3024 = vmatpush1.bf16.msra.mxu0 %v2962
        %3025 = vmatprep.subr.bf16.mxu0 0
        %3026 = vmatpush1.bf16.msra.mxu0 %v2963
        %3027 = vmatprep.subr.bf16.mxu0 0
        %3028 = vmatpush1.bf16.msra.mxu0 %v2964
        %3029 = vmatprep.mubr.bf16.mxu0 %v2656
        %3030 = vmatmul.mubr.bf16.gmra.mrb[0].mxu0 %v2629
        %v3031 = vpop.f32.mrb[0].mxu0
        %v3032 = vadd.f32 0.0, %v3031
        %v3033 = vpop.f32.mrb[0].mxu0
        %v3034 = vpop.f32.mrb[0].mxu0
        %v3035 = vadd.f32 0.0, %v3034
        %v3036 = vpop.f32.mrb[0].mxu0
        %3037 = vmatprep.mubr.bf16.mxu0 %v2668
        %3038 = vmatmul.mubr.bf16.gmra.mrb[0].mxu0 %v2630
        %v3039 = vpop.f32.mrb[0].mxu0
        %v3040 = vadd.f32 0.0, %v3039
        %v3041 = vpop.f32.mrb[0].mxu0
        %v3042 = vpop.f32.mrb[0].mxu0
        %v3043 = vadd.f32 0.0, %v3042
        %v3044 = vpop.f32.mrb[0].mxu0
        %3045 = vmatprep.mubr.bf16.mxu0 %v2680
        %3046 = vmatmul.mubr.bf16.gmra.mrb[0].mxu0 %v2631
        %v3047 = vpop.f32.mrb[0].mxu0
        %v3048 = vadd.f32 0.0, %v3047
        %v3049 = vpop.f32.mrb[0].mxu0
        %v3050 = vpop.f32.mrb[0].mxu0
        %v3051 = vadd.f32 0.0, %v3050
        %v3052 = vpop.f32.mrb[0].mxu0
        %3053 = vmatprep.mubr.bf16.mxu0 %v2692
        %3054 = vmatmul.mubr.bf16.gmra.mrb[0].mxu0 %v2632
        %v3055 = vpop.f32.mrb[0].mxu0
        %v3056 = vadd.f32 0.0, %v3055
        %v3057 = vpop.f32.mrb[0].mxu0
        %v3058 = vpop.f32.mrb[0].mxu0
        %v3059 = vadd.f32 0.0, %v3058
        %v3060 = vpop.f32.mrb[0].mxu0
        %3061 = vmatprep.mubr.bf16.mxu0 %v2704
        %3062 = vmatmul.mubr.bf16.gmra.mrb[0].mxu0 %v2633
        %v3063 = vpop.f32.mrb[0].mxu0
        %v3064 = vadd.f32 0.0, %v3063
        %v3065 = vpop.f32.mrb[0].mxu0
        %v3066 = vpop.f32.mrb[0].mxu0
        %v3067 = vadd.f32 0.0, %v3066
        %v3068 = vpop.f32.mrb[0].mxu0
        %3069 = vmatprep.mubr.bf16.mxu0 %v2716
        %3070 = vmatmul.mubr.bf16.gmra.mrb[0].mxu0 %v2634
        %v3071 = vpop.f32.mrb[0].mxu0
        %v3072 = vadd.f32 0.0, %v3071
        %v3073 = vpop.f32.mrb[0].mxu0
        %v3074 = vpop.f32.mrb[0].mxu0
        %v3075 = vadd.f32 0.0, %v3074
        %v3076 = vpop.f32.mrb[0].mxu0
        %3077 = vmatprep.mubr.bf16.mxu0 %v2728
        %3078 = vmatmul.mubr.bf16.gmra.mrb[0].mxu0 %v2635
        %v3079 = vpop.f32.mrb[0].mxu0
        %v3080 = vadd.f32 0.0, %v3079
        %v3081 = vpop.f32.mrb[0].mxu0
        %v3082 = vpop.f32.mrb[0].mxu0
        %v3083 = vadd.f32 0.0, %v3082
        %v3084 = vpop.f32.mrb[0].mxu0
        %3085 = vmatprep.mubr.bf16.mxu0 %v2740
        %3086 = vmatmul.mubr.bf16.gmra.mrb[0].mxu0 %v2636
        %v3087 = vpop.f32.mrb[0].mxu0
        %v3088 = vadd.f32 0.0, %v3087
        %v3089 = vpop.f32.mrb[0].mxu0
        %v3090 = vpop.f32.mrb[0].mxu0
        %v3091 = vadd.f32 0.0, %v3090
        %v3092 = vpop.f32.mrb[0].mxu0
        %3093 = vdwg.mxu0
        %3094 = vmatprep.subr.bf16.mxu0 0
        %3095 = vmatpush1.bf16.msra.mxu0 %v2965
        %3096 = vmatprep.subr.bf16.mxu0 0
        %3097 = vmatpush1.bf16.msra.mxu0 %v2966
        %3098 = vmatprep.subr.bf16.mxu0 0
        %3099 = vmatpush1.bf16.msra.mxu0 %v2967
        %3100 = vmatprep.subr.bf16.mxu0 0
        %3101 = vmatpush1.bf16.msra.mxu0 %v2968
        %3102 = vmatprep.subr.bf16.mxu0 0
        %3103 = vmatpush1.bf16.msra.mxu0 %v2969
        %3104 = vmatprep.subr.bf16.mxu0 0
        %3105 = vmatpush1.bf16.msra.mxu0 %v2970
        %3106 = vmatprep.subr.bf16.mxu0 0
        %3107 = vmatpush1.bf16.msra.mxu0 %v2971
        %3108 = vmatprep.subr.bf16.mxu0 0
        %3109 = vmatpush1.bf16.msra.mxu0 %v2972
        %3110 = vmatprep.subr.bf16.mxu0 0
        %3111 = vmatpush1.bf16.msra.mxu0 0
        %3112 = vmatprep.subr.bf16.mxu0 0
        %3113 = vmatpush1.bf16.msra.mxu0 0
        %3114 = vmatprep.subr.bf16.mxu0 0
        %3115 = vmatpush1.bf16.msra.mxu0 0
        %3116 = vmatprep.subr.bf16.mxu0 0
        %3117 = vmatpush1.bf16.msra.mxu0 0
        %3118 = vmatprep.subr.bf16.mxu0 0
        %3119 = vmatpush1.bf16.msra.mxu0 0
        %3120 = vmatprep.subr.bf16.mxu0 0
        %3121 = vmatpush1.bf16.msra.mxu0 0
        %3122 = vmatprep.subr.bf16.mxu0 0
        %3123 = vmatpush1.bf16.msra.mxu0 0
        %3124 = vmatprep.subr.bf16.mxu0 0
        %3125 = vmatpush1.bf16.msra.mxu0 0
        %3126 = vmatprep.mubr.bf16.mxu0 0
        %3127 = vmatmul.mubr.bf16.gmra.mrb[0].mxu0 %v2775
        %v3128 = vpop.f32.mrb[0].mxu0
        %v3129 = vadd.f32 %v3032, %v3128
        %v3130 = vpop.f32.mrb[0].mxu0
        %v3131 = vpop.f32.mrb[0].mxu0
        %v3132 = vadd.f32 %v3035, %v3131
        %v3133 = vpop.f32.mrb[0].mxu0
        %3134 = vmatprep.mubr.bf16.mxu0 0
        %3135 = vmatmul.mubr.bf16.gmra.mrb[0].mxu0 %v2778
        %v3136 = vpop.f32.mrb[0].mxu0
        %v3137 = vadd.f32 %v3040, %v3136
        %v3138 = vpop.f32.mrb[0].mxu0
        %v3139 = vpop.f32.mrb[0].mxu0
        %v3140 = vadd.f32 %v3043, %v3139
        %v3141 = vpop.f32.mrb[0].mxu0
        %3142 = vmatprep.mubr.bf16.mxu0 0
        %3143 = vmatmul.mubr.bf16.gmra.mrb[0].mxu0 %v2781
        %v3144 = vpop.f32.mrb[0].mxu0
        %v3145 = vadd.f32 %v3048, %v3144
        %v3146 = vpop.f32.mrb[0].mxu0
        %v3147 = vpop.f32.mrb[0].mxu0
        %v3148 = vadd.f32 %v3051, %v3147
        %v3149 = vpop.f32.mrb[0].mxu0
        %3150 = vmatprep.mubr.bf16.mxu0 0
        %3151 = vmatmul.mubr.bf16.gmra.mrb[0].mxu0 %v2784
        %v3152 = vpop.f32.mrb[0].mxu0
        %v3153 = vadd.f32 %v3056, %v3152
        %v3154 = vpop.f32.mrb[0].mxu0
        %v3155 = vpop.f32.mrb[0].mxu0
        %v3156 = vadd.f32 %v3059, %v3155
        %v3157 = vpop.f32.mrb[0].mxu0
        %3158 = vmatprep.mubr.bf16.mxu0 0
        %3159 = vmatmul.mubr.bf16.gmra.mrb[0].mxu0 %v2787
        %v3160 = vpop.f32.mrb[0].mxu0
        %v3161 = vadd.f32 %v3064, %v3160
        %v3162 = vpop.f32.mrb[0].mxu0
        %v3163 = vpop.f32.mrb[0].mxu0
        %v3164 = vadd.f32 %v3067, %v3163
        %v3165 = vpop.f32.mrb[0].mxu0
        %3166 = vmatprep.mubr.bf16.mxu0 0
        %3167 = vmatmul.mubr.bf16.gmra.mrb[0].mxu0 %v2790
        %v3168 = vpop.f32.mrb[0].mxu0
        %v3169 = vadd.f32 %v3072, %v3168
        %v3170 = vpop.f32.mrb[0].mxu0
        %v3171 = vpop.f32.mrb[0].mxu0
        %v3172 = vadd.f32 %v3075, %v3171
        %v3173 = vpop.f32.mrb[0].mxu0
        %3174 = vmatprep.mubr.bf16.mxu0 0
        %3175 = vmatmul.mubr.bf16.gmra.mrb[0].mxu0 %v2793
        %v3176 = vpop.f32.mrb[0].mxu0
        %v3177 = vadd.f32 %v3080, %v3176
        %v3178 = vpop.f32.mrb[0].mxu0
        %v3179 = vpop.f32.mrb[0].mxu0
        %v3180 = vadd.f32 %v3083, %v3179
        %v3181 = vpop.f32.mrb[0].mxu0
        %3182 = vmatprep.mubr.bf16.mxu0 0
        %3183 = vmatmul.mubr.bf16.gmra.mrb[0].mxu0 %v2796
        %v3184 = vpop.f32.mrb[0].mxu0
        %v3185 = vadd.f32 %v3088, %v3184
        %v3186 = vpop.f32.mrb[0].mxu0
        %v3187 = vpop.f32.mrb[0].mxu0
        %v3188 = vadd.f32 %v3091, %v3187
        %v3189 = vpop.f32.mrb[0].mxu0
        %3190 = vdwg.mxu0
        %v3239 = vunpack.c.l.b16 %v2581
        %v3240 = vunpack.c.l.b16 %v2582
        %v3241 = vunpack.c.l.b16 %v2583
        %v3242 = vunpack.c.l.b16 %v2584
        %v3243 = vunpack.c.l.b16 %v2585
        %v3244 = vunpack.c.l.b16 %v2586
        %v3245 = vunpack.c.l.b16 %v2587
        %v3246 = vunpack.c.l.b16 %v2588
        %v3247 = vunpack.c.l.b16 %v2589
        %v3248 = vunpack.c.l.b16 %v2590
        %v3249 = vunpack.c.l.b16 %v2591
        %v3250 = vunpack.c.l.b16 %v2592
        %v3251 = vunpack.c.l.b16 %v2593
        %v3252 = vunpack.c.l.b16 %v2594
        %v3253 = vunpack.c.l.b16 %v2595
        %v3254 = vunpack.c.l.b16 %v2596
        %v3255 = vunpack.c.l.b16 %v2597
        %v3256 = vunpack.c.l.b16 %v2598
        %v3257 = vunpack.c.l.b16 %v2599
        %v3258 = vunpack.c.l.b16 %v2600
        %v3259 = vunpack.c.l.b16 %v2601
        %v3260 = vunpack.c.l.b16 %v2602
        %v3261 = vunpack.c.l.b16 %v2603
        %v3262 = vunpack.c.l.b16 %v2604
        %v3263 = vunpack.c.l.b16 %v2605
        %v3264 = vunpack.c.l.b16 %v2606
        %v3265 = vunpack.c.l.b16 %v2607
        %v3266 = vunpack.c.l.b16 %v2608
        %v3267 = vunpack.c.l.b16 %v2609
        %v3268 = vunpack.c.l.b16 %v2610
        %v3269 = vunpack.c.l.b16 %v2611
        %v3270 = vunpack.c.l.b16 %v2612
        %v3271 = vunpack.c.l.b16 %v2613
        %v3272 = vunpack.c.l.b16 %v2614
        %v3273 = vunpack.c.l.b16 %v2615
        %v3274 = vunpack.c.l.b16 %v2616
        %v3275 = vunpack.c.l.b16 %v2617
        %v3276 = vunpack.c.l.b16 %v2618
        %v3277 = vunpack.c.l.b16 %v2619
        %v3278 = vunpack.c.l.b16 %v2620
        %v3279 = vunpack.c.l.b16 %v2621
        %v3280 = vunpack.c.l.b16 %v2622
        %v3281 = vunpack.c.l.b16 %v2623
        %v3282 = vunpack.c.l.b16 %v2624
        %v3283 = vunpack.c.l.b16 %v2625
        %v3284 = vunpack.c.l.b16 %v2626
        %v3285 = vunpack.c.l.b16 %v2627
        %v3286 = vunpack.c.l.b16 %v2628
        %v3287 = vpack.c.b16 %v3240, %v3239
        %v3288 = vpack.c.b16 %v3242, %v3241
        %v3289 = vpack.c.b16 %v3244, %v3243
        %v3290 = vpack.c.b16 %v3246, %v3245
        %v3291 = vpack.c.b16 %v3248, %v3247
        %v3292 = vpack.c.b16 %v3250, %v3249
        %v3293 = vpack.c.b16 %v3252, %v3251
        %v3294 = vpack.c.b16 %v3254, %v3253
        %v3295 = vpack.c.b16 %v3256, %v3255
        %v3296 = vpack.c.b16 %v3258, %v3257
        %v3297 = vpack.c.b16 %v3260, %v3259
        %v3298 = vpack.c.b16 %v3262, %v3261
        %v3299 = vpack.c.b16 %v3264, %v3263
        %v3300 = vpack.c.b16 %v3266, %v3265
        %v3301 = vpack.c.b16 %v3268, %v3267
        %v3302 = vpack.c.b16 %v3270, %v3269
        %v3303 = vpack.c.b16 %v3272, %v3271
        %v3304 = vpack.c.b16 %v3274, %v3273
        %v3305 = vpack.c.b16 %v3276, %v3275
        %v3306 = vpack.c.b16 %v3278, %v3277
        %v3307 = vpack.c.b16 %v3280, %v3279
        %v3308 = vpack.c.b16 %v3282, %v3281
        %v3309 = vpack.c.b16 %v3284, %v3283
        %v3310 = vpack.c.b16 %v3286, %v3285
        %3335 = vmatprep.subr.bf16.mxu0 0
        %3336 = vmatpush1.bf16.msra.mxu0 %v3287
        %3337 = vmatprep.subr.bf16.mxu0 0
        %3338 = vmatpush1.bf16.msra.mxu0 %v3288
        %3339 = vmatprep.subr.bf16.mxu0 0
        %3340 = vmatpush1.bf16.msra.mxu0 %v3289
        %3341 = vmatprep.subr.bf16.mxu0 0
        %3342 = vmatpush1.bf16.msra.mxu0 %v3290
        %3343 = vmatprep.subr.bf16.mxu0 0
        %3344 = vmatpush1.bf16.msra.mxu0 %v3291
        %3345 = vmatprep.subr.bf16.mxu0 0
        %3346 = vmatpush1.bf16.msra.mxu0 %v3292
        %3347 = vmatprep.subr.bf16.mxu0 0
        %3348 = vmatpush1.bf16.msra.mxu0 %v3293
        %3349 = vmatprep.subr.bf16.mxu0 0
        %3350 = vmatpush1.bf16.msra.mxu0 %v3294
        %3351 = vmatprep.subr.bf16.mxu0 0
        %3352 = vmatpush1.bf16.msra.mxu0 %v3295
        %3353 = vmatprep.subr.bf16.mxu0 0
        %3354 = vmatpush1.bf16.msra.mxu0 %v3296
        %3355 = vmatprep.subr.bf16.mxu0 0
        %3356 = vmatpush1.bf16.msra.mxu0 %v3297
        %3357 = vmatprep.subr.bf16.mxu0 0
        %3358 = vmatpush1.bf16.msra.mxu0 %v3298
        %3359 = vmatprep.subr.bf16.mxu0 0
        %3360 = vmatpush1.bf16.msra.mxu0 %v3299
        %3361 = vmatprep.subr.bf16.mxu0 0
        %3362 = vmatpush1.bf16.msra.mxu0 %v3300
        %3363 = vmatprep.subr.bf16.mxu0 0
        %3364 = vmatpush1.bf16.msra.mxu0 %v3301
        %3365 = vmatprep.subr.bf16.mxu0 0
        %3366 = vmatpush1.bf16.msra.mxu0 %v3302
        %3367 = vmatprep.mubr.bf16.mxu0 %v2432
        %3368 = vmatmul.mubr.bf16.gmra.mrb[0].mxu0 %v2405
        %v3369 = vpop.f32.mrb[0].mxu0
        %v3370 = vadd.f32 %v3129, %v3369
        %v3371 = vpop.f32.mrb[0].mxu0
        %v3372 = vpop.f32.mrb[0].mxu0
        %v3373 = vadd.f32 %v3132, %v3372
        %v3374 = vpop.f32.mrb[0].mxu0
        %3375 = vmatprep.mubr.bf16.mxu0 %v2444
        %3376 = vmatmul.mubr.bf16.gmra.mrb[0].mxu0 %v2406
        %v3377 = vpop.f32.mrb[0].mxu0
        %v3378 = vadd.f32 %v3137, %v3377
        %v3379 = vpop.f32.mrb[0].mxu0
        %v3380 = vpop.f32.mrb[0].mxu0
        %v3381 = vadd.f32 %v3140, %v3380
        %v3382 = vpop.f32.mrb[0].mxu0
        %3383 = vmatprep.mubr.bf16.mxu0 %v2456
        %3384 = vmatmul.mubr.bf16.gmra.mrb[0].mxu0 %v2407
        %v3385 = vpop.f32.mrb[0].mxu0
        %v3386 = vadd.f32 %v3145, %v3385
        %v3387 = vpop.f32.mrb[0].mxu0
        %v3388 = vpop.f32.mrb[0].mxu0
        %v3389 = vadd.f32 %v3148, %v3388
        %v3390 = vpop.f32.mrb[0].mxu0
        %3391 = vmatprep.mubr.bf16.mxu0 %v2468
        %3392 = vmatmul.mubr.bf16.gmra.mrb[0].mxu0 %v2408
        %v3393 = vpop.f32.mrb[0].mxu0
        %v3394 = vadd.f32 %v3153, %v3393
        %v3395 = vpop.f32.mrb[0].mxu0
        %v3396 = vpop.f32.mrb[0].mxu0
        %v3397 = vadd.f32 %v3156, %v3396
        %v3398 = vpop.f32.mrb[0].mxu0
        %3399 = vmatprep.mubr.bf16.mxu0 %v2480
        %3400 = vmatmul.mubr.bf16.gmra.mrb[0].mxu0 %v2409
        %v3401 = vpop.f32.mrb[0].mxu0
        %v3402 = vadd.f32 %v3161, %v3401
        %v3403 = vpop.f32.mrb[0].mxu0
        %v3404 = vpop.f32.mrb[0].mxu0
        %v3405 = vadd.f32 %v3164, %v3404
        %v3406 = vpop.f32.mrb[0].mxu0
        %3407 = vmatprep.mubr.bf16.mxu0 %v2492
        %3408 = vmatmul.mubr.bf16.gmra.mrb[0].mxu0 %v2410
        %v3409 = vpop.f32.mrb[0].mxu0
        %v3410 = vadd.f32 %v3169, %v3409
        %v3411 = vpop.f32.mrb[0].mxu0
        %v3412 = vpop.f32.mrb[0].mxu0
        %v3413 = vadd.f32 %v3172, %v3412
        %v3414 = vpop.f32.mrb[0].mxu0
        %3415 = vmatprep.mubr.bf16.mxu0 %v2504
        %3416 = vmatmul.mubr.bf16.gmra.mrb[0].mxu0 %v2411
        %v3417 = vpop.f32.mrb[0].mxu0
        %v3418 = vadd.f32 %v3177, %v3417
        %v3419 = vpop.f32.mrb[0].mxu0
        %v3420 = vpop.f32.mrb[0].mxu0
        %v3421 = vadd.f32 %v3180, %v3420
        %v3422 = vpop.f32.mrb[0].mxu0
        %3423 = vmatprep.mubr.bf16.mxu0 %v2516
        %3424 = vmatmul.mubr.bf16.gmra.mrb[0].mxu0 %v2412
        %v3425 = vpop.f32.mrb[0].mxu0
        %v3426 = vadd.f32 %v3185, %v3425
        %v3427 = vpop.f32.mrb[0].mxu0
        %v3428 = vpop.f32.mrb[0].mxu0
        %v3429 = vadd.f32 %v3188, %v3428
        %v3430 = vpop.f32.mrb[0].mxu0
        %3431 = vdwg.mxu0
        %3432 = vmatprep.subr.bf16.mxu0 0
        %3433 = vmatpush1.bf16.msra.mxu0 %v3303
        %3434 = vmatprep.subr.bf16.mxu0 0
        %3435 = vmatpush1.bf16.msra.mxu0 %v3304
        %3436 = vmatprep.subr.bf16.mxu0 0
        %3437 = vmatpush1.bf16.msra.mxu0 %v3305
        %3438 = vmatprep.subr.bf16.mxu0 0
        %3439 = vmatpush1.bf16.msra.mxu0 %v3306
        %3440 = vmatprep.subr.bf16.mxu0 0
        %3441 = vmatpush1.bf16.msra.mxu0 %v3307
        %3442 = vmatprep.subr.bf16.mxu0 0
        %3443 = vmatpush1.bf16.msra.mxu0 %v3308
        %3444 = vmatprep.subr.bf16.mxu0 0
        %3445 = vmatpush1.bf16.msra.mxu0 %v3309
        %3446 = vmatprep.subr.bf16.mxu0 0
        %3447 = vmatpush1.bf16.msra.mxu0 %v3310
        %3448 = vmatprep.subr.bf16.mxu0 0
        %3449 = vmatpush1.bf16.msra.mxu0 0
        %3450 = vmatprep.subr.bf16.mxu0 0
        %3451 = vmatpush1.bf16.msra.mxu0 0
        %3452 = vmatprep.subr.bf16.mxu0 0
        %3453 = vmatpush1.bf16.msra.mxu0 0
        %3454 = vmatprep.subr.bf16.mxu0 0
        %3455 = vmatpush1.bf16.msra.mxu0 0
        %3456 = vmatprep.subr.bf16.mxu0 0
        %3457 = vmatpush1.bf16.msra.mxu0 0
        %3458 = vmatprep.subr.bf16.mxu0 0
        %3459 = vmatpush1.bf16.msra.mxu0 0
        %3460 = vmatprep.subr.bf16.mxu0 0
        %3461 = vmatpush1.bf16.msra.mxu0 0
        %3462 = vmatprep.subr.bf16.mxu0 0
        %3463 = vmatpush1.bf16.msra.mxu0 0
        %3464 = vmatprep.mubr.bf16.mxu0 0
        %3465 = vmatmul.mubr.bf16.gmra.mrb[0].mxu0 %v2551
        %v3466 = vpop.f32.mrb[0].mxu0
        %v3467 = vadd.f32 %v3370, %v3466
        %v3468 = vpop.f32.mrb[0].mxu0
        %v3469 = vpop.f32.mrb[0].mxu0
        %v3470 = vadd.f32 %v3373, %v3469
        %v3471 = vpop.f32.mrb[0].mxu0
        %3472 = vmatprep.mubr.bf16.mxu0 0
        %3473 = vmatmul.mubr.bf16.gmra.mrb[0].mxu0 %v2554
        %v3474 = vpop.f32.mrb[0].mxu0
        %v3475 = vadd.f32 %v3378, %v3474
        %v3476 = vpop.f32.mrb[0].mxu0
        %v3477 = vpop.f32.mrb[0].mxu0
        %v3478 = vadd.f32 %v3381, %v3477
        %v3479 = vpop.f32.mrb[0].mxu0
        %3480 = vmatprep.mubr.bf16.mxu0 0
        %3481 = vmatmul.mubr.bf16.gmra.mrb[0].mxu0 %v2557
        %v3482 = vpop.f32.mrb[0].mxu0
        %v3483 = vadd.f32 %v3386, %v3482
        %v3484 = vpop.f32.mrb[0].mxu0
        %v3485 = vpop.f32.mrb[0].mxu0
        %v3486 = vadd.f32 %v3389, %v3485
        %v3487 = vpop.f32.mrb[0].mxu0
        %3488 = vmatprep.mubr.bf16.mxu0 0
        %3489 = vmatmul.mubr.bf16.gmra.mrb[0].mxu0 %v2560
        %v3490 = vpop.f32.mrb[0].mxu0
        %v3491 = vadd.f32 %v3394, %v3490
        %v3492 = vpop.f32.mrb[0].mxu0
        %v3493 = vpop.f32.mrb[0].mxu0
        %v3494 = vadd.f32 %v3397, %v3493
        %v3495 = vpop.f32.mrb[0].mxu0
        %3496 = vmatprep.mubr.bf16.mxu0 0
        %3497 = vmatmul.mubr.bf16.gmra.mrb[0].mxu0 %v2563
        %v3498 = vpop.f32.mrb[0].mxu0
        %v3499 = vadd.f32 %v3402, %v3498
        %v3500 = vpop.f32.mrb[0].mxu0
        %v3501 = vpop.f32.mrb[0].mxu0
        %v3502 = vadd.f32 %v3405, %v3501
        %v3503 = vpop.f32.mrb[0].mxu0
        %3504 = vmatprep.mubr.bf16.mxu0 0
        %3505 = vmatmul.mubr.bf16.gmra.mrb[0].mxu0 %v2566
        %v3506 = vpop.f32.mrb[0].mxu0
        %v3507 = vadd.f32 %v3410, %v3506
        %v3508 = vpop.f32.mrb[0].mxu0
        %v3509 = vpop.f32.mrb[0].mxu0
        %v3510 = vadd.f32 %v3413, %v3509
        %v3511 = vpop.f32.mrb[0].mxu0
        %3512 = vmatprep.mubr.bf16.mxu0 0
        %3513 = vmatmul.mubr.bf16.gmra.mrb[0].mxu0 %v2569
        %v3514 = vpop.f32.mrb[0].mxu0
        %v3515 = vadd.f32 %v3418, %v3514
        %v3516 = vpop.f32.mrb[0].mxu0
        %v3517 = vpop.f32.mrb[0].mxu0
        %v3518 = vadd.f32 %v3421, %v3517
        %v3519 = vpop.f32.mrb[0].mxu0
        %3520 = vmatprep.mubr.bf16.mxu0 0
        %3521 = vmatmul.mubr.bf16.gmra.mrb[0].mxu0 %v2572
        %v3522 = vpop.f32.mrb[0].mxu0
        %v3523 = vadd.f32 %v3426, %v3522
        %v3524 = vpop.f32.mrb[0].mxu0
        %v3525 = vpop.f32.mrb[0].mxu0
        %v3526 = vadd.f32 %v3429, %v3525
        %v3527 = vpop.f32.mrb[0].mxu0
        %3528 = vdwg.mxu0
        %s3529 = scalar_lea.vmem [#allocation2], 160
        %v3530 = vld [vmem:[%s3529] sm:$0xff]
        %v3531 = vld [vmem:[%s3529 + $0x10] sm:$0xff]
        %v3532 = vld [vmem:[%s3529 + $0x20] sm:$0xff]
        %v3533 = vld [vmem:[%s3529 + $0x30] sm:$0xff]
        %v3534 = vld [vmem:[%s3529 + $0x40] sm:$0xff]
        %v3535 = vld [vmem:[%s3529 + $0x50] sm:$0xff]
        %v3536 = vld [vmem:[%s3529 + $0x60] sm:$0xff]
        %v3537 = vld [vmem:[%s3529 + $0x70] sm:$0xff]
        %v3538 = vld [vmem:[%s3529 + $0x8] sm:$0x1]
        %v3539 = vld [vmem:[%s3529 + $0x18] sm:$0x1]
        %v3540 = vld [vmem:[%s3529 + $0x28] sm:$0x1]
        %v3541 = vld [vmem:[%s3529 + $0x38] sm:$0x1]
        %v3542 = vld [vmem:[%s3529 + $0x48] sm:$0x1]
        %v3543 = vld [vmem:[%s3529 + $0x58] sm:$0x1]
        %v3544 = vld [vmem:[%s3529 + $0x68] sm:$0x1]
        %v3545 = vld [vmem:[%s3529 + $0x78] sm:$0x1]
        %v3547 = vshrl.u32 %v3530, 16
        %v3549 = vshll.u32 %v3530, 16
        %v3551 = vrot.slane %v3549, 1
        %v3552 = vor.u32 %v3547, %v3551
        %v3554 = vshll.u32 %v3538, 16
        %v3556 = vrot.slane %v3554, 1
        %v3557 = vsel %vm562, %v3552, %v3556
        %v3559 = vshrl.u32 %v3531, 16
        %v3561 = vshll.u32 %v3531, 16
        %v3563 = vrot.slane %v3561, 1
        %v3564 = vor.u32 %v3559, %v3563
        %v3566 = vshll.u32 %v3539, 16
        %v3568 = vrot.slane %v3566, 1
        %v3569 = vsel %vm562, %v3564, %v3568
        %v3571 = vshrl.u32 %v3532, 16
        %v3573 = vshll.u32 %v3532, 16
        %v3575 = vrot.slane %v3573, 1
        %v3576 = vor.u32 %v3571, %v3575
        %v3578 = vshll.u32 %v3540, 16
        %v3580 = vrot.slane %v3578, 1
        %v3581 = vsel %vm562, %v3576, %v3580
        %v3583 = vshrl.u32 %v3533, 16
        %v3585 = vshll.u32 %v3533, 16
        %v3587 = vrot.slane %v3585, 1
        %v3588 = vor.u32 %v3583, %v3587
        %v3590 = vshll.u32 %v3541, 16
        %v3592 = vrot.slane %v3590, 1
        %v3593 = vsel %vm562, %v3588, %v3592
        %v3595 = vshrl.u32 %v3534, 16
        %v3597 = vshll.u32 %v3534, 16
        %v3599 = vrot.slane %v3597, 1
        %v3600 = vor.u32 %v3595, %v3599
        %v3602 = vshll.u32 %v3542, 16
        %v3604 = vrot.slane %v3602, 1
        %v3605 = vsel %vm562, %v3600, %v3604
        %v3607 = vshrl.u32 %v3535, 16
        %v3609 = vshll.u32 %v3535, 16
        %v3611 = vrot.slane %v3609, 1
        %v3612 = vor.u32 %v3607, %v3611
        %v3614 = vshll.u32 %v3543, 16
        %v3616 = vrot.slane %v3614, 1
        %v3617 = vsel %vm562, %v3612, %v3616
        %v3619 = vshrl.u32 %v3536, 16
        %v3621 = vshll.u32 %v3536, 16
        %v3623 = vrot.slane %v3621, 1
        %v3624 = vor.u32 %v3619, %v3623
        %v3626 = vshll.u32 %v3544, 16
        %v3628 = vrot.slane %v3626, 1
        %v3629 = vsel %vm562, %v3624, %v3628
        %v3631 = vshrl.u32 %v3537, 16
        %v3633 = vshll.u32 %v3537, 16
        %v3635 = vrot.slane %v3633, 1
        %v3636 = vor.u32 %v3631, %v3635
        %v3638 = vshll.u32 %v3545, 16
        %v3640 = vrot.slane %v3638, 1
        %v3641 = vsel %vm562, %v3636, %v3640
        %v3650 = vld [vmem:[%s3529] sm:$0xfe]
        %v3651 = vld [vmem:[%s3529 + $0x10] sm:$0xfe]
        %v3652 = vld [vmem:[%s3529 + $0x20] sm:$0xfe]
        %v3653 = vld [vmem:[%s3529 + $0x30] sm:$0xfe]
        %v3654 = vld [vmem:[%s3529 + $0x40] sm:$0xfe]
        %v3655 = vld [vmem:[%s3529 + $0x50] sm:$0xfe]
        %v3656 = vld [vmem:[%s3529 + $0x60] sm:$0xfe]
        %v3657 = vld [vmem:[%s3529 + $0x70] sm:$0xfe]
        %v3674 = vrot.slane %v3650, 1
        %v3675 = vrot.slane %v3538, 1
        %v3676 = vsel %vm691, %v3674, %v3675
        %v3677 = vrot.slane %v3651, 1
        %v3678 = vrot.slane %v3539, 1
        %v3679 = vsel %vm691, %v3677, %v3678
        %v3680 = vrot.slane %v3652, 1
        %v3681 = vrot.slane %v3540, 1
        %v3682 = vsel %vm691, %v3680, %v3681
        %v3683 = vrot.slane %v3653, 1
        %v3684 = vrot.slane %v3541, 1
        %v3685 = vsel %vm691, %v3683, %v3684
        %v3686 = vrot.slane %v3654, 1
        %v3687 = vrot.slane %v3542, 1
        %v3688 = vsel %vm691, %v3686, %v3687
        %v3689 = vrot.slane %v3655, 1
        %v3690 = vrot.slane %v3543, 1
        %v3691 = vsel %vm691, %v3689, %v3690
        %v3692 = vrot.slane %v3656, 1
        %v3693 = vrot.slane %v3544, 1
        %v3694 = vsel %vm691, %v3692, %v3693
        %v3695 = vrot.slane %v3657, 1
        %v3696 = vrot.slane %v3545, 1
        %v3697 = vsel %vm691, %v3695, %v3696
        %v3706 = vld [vmem:[%s1850] sm:$0xf]
        %v3707 = vld [vmem:[%s1850 + $0x4] sm:$0xf]
        %v3708 = vld [vmem:[%s1850 + $0x8] sm:$0xf]
        %v3709 = vld [vmem:[%s1850 + $0xc] sm:$0xf]
        %v3710 = vld [vmem:[%s1850 + $0x10] sm:$0xf]
        %v3711 = vld [vmem:[%s1850 + $0x14] sm:$0xf]
        %v3712 = vld [vmem:[%s1850 + $0x18] sm:$0xf]
        %v3713 = vld [vmem:[%s1850 + $0x1c] sm:$0xf]
        %v3714 = vld [vmem:[%s1850 + $0x20] sm:$0xf]
        %v3715 = vld [vmem:[%s1850 + $0x24] sm:$0xf]
        %v3716 = vld [vmem:[%s1850 + $0x28] sm:$0xf]
        %v3717 = vld [vmem:[%s1850 + $0x2c] sm:$0xf]
        %v3718 = vld [vmem:[%s1850 + $0x30] sm:$0xf]
        %v3719 = vld [vmem:[%s1850 + $0x34] sm:$0xf]
        %v3720 = vld [vmem:[%s1850 + $0x38] sm:$0xf]
        %v3721 = vld [vmem:[%s1850 + $0x3c] sm:$0xf]
        %v3722 = vld [vmem:[%s1850 + $0x40] sm:$0xf]
        %v3723 = vld [vmem:[%s1850 + $0x44] sm:$0xf]
        %v3724 = vld [vmem:[%s1850 + $0x48] sm:$0xf]
        %v3725 = vld [vmem:[%s1850 + $0x4c] sm:$0xf]
        %v3726 = vld [vmem:[%s1850 + $0x50] sm:$0xf]
        %v3727 = vld [vmem:[%s1850 + $0x54] sm:$0xf]
        %v3728 = vld [vmem:[%s1850 + $0x58] sm:$0xf]
        %v3729 = vld [vmem:[%s1850 + $0x5c] sm:$0xf]
        %v3730 = vld [vmem:[%s1850 + $0x60] sm:$0xf]
        %v3731 = vld [vmem:[%s1850 + $0x64] sm:$0xf]
        %v3732 = vld [vmem:[%s1850 + $0x68] sm:$0xf]
        %v3733 = vld [vmem:[%s1850 + $0x6c] sm:$0xf]
        %v3734 = vld [vmem:[%s1850 + $0x70] sm:$0xf]
        %v3735 = vld [vmem:[%s1850 + $0x74] sm:$0xf]
        %v3736 = vld [vmem:[%s1850 + $0x78] sm:$0xf]
        %v3737 = vld [vmem:[%s1850 + $0x7c] sm:$0xf]
        %v3738 = vld [vmem:[%s1850 + $0x80] sm:$0xf]
        %v3739 = vld [vmem:[%s1850 + $0x84] sm:$0xf]
        %v3740 = vld [vmem:[%s1850 + $0x88] sm:$0xf]
        %v3741 = vld [vmem:[%s1850 + $0x8c] sm:$0xf]
        %v3742 = vld [vmem:[%s1850 + $0x90] sm:$0xf]
        %v3743 = vld [vmem:[%s1850 + $0x94] sm:$0xf]
        %v3744 = vld [vmem:[%s1850 + $0x98] sm:$0xf]
        %v3745 = vld [vmem:[%s1850 + $0x9c] sm:$0xf]
        %v3746 = vld [vmem:[%s1850 + $0xa0] sm:$0xf]
        %v3747 = vld [vmem:[%s1850 + $0xa4] sm:$0xf]
        %v3748 = vld [vmem:[%s1850 + $0xa8] sm:$0xf]
        %v3749 = vld [vmem:[%s1850 + $0xac] sm:$0xf]
        %v3750 = vld [vmem:[%s1850 + $0xb0] sm:$0xf]
        %v3751 = vld [vmem:[%s1850 + $0xb4] sm:$0xf]
        %v3752 = vld [vmem:[%s1850 + $0xb8] sm:$0xf]
        %v3753 = vld [vmem:[%s1850 + $0xbc] sm:$0xf]
        %v3802 = vunpack.c.l.b16 %v3706
        %v3803 = vunpack.c.l.b16 %v3707
        %v3804 = vunpack.c.l.b16 %v3708
        %v3805 = vunpack.c.l.b16 %v3709
        %v3806 = vunpack.c.l.b16 %v3710
        %v3807 = vunpack.c.l.b16 %v3711
        %v3808 = vunpack.c.l.b16 %v3712
        %v3809 = vunpack.c.l.b16 %v3713
        %v3810 = vunpack.c.l.b16 %v3714
        %v3811 = vunpack.c.l.b16 %v3715
        %v3812 = vunpack.c.l.b16 %v3716
        %v3813 = vunpack.c.l.b16 %v3717
        %v3814 = vunpack.c.l.b16 %v3718
        %v3815 = vunpack.c.l.b16 %v3719
        %v3816 = vunpack.c.l.b16 %v3720
        %v3817 = vunpack.c.l.b16 %v3721
        %v3818 = vunpack.c.l.b16 %v3722
        %v3819 = vunpack.c.l.b16 %v3723
        %v3820 = vunpack.c.l.b16 %v3724
        %v3821 = vunpack.c.l.b16 %v3725
        %v3822 = vunpack.c.l.b16 %v3726
        %v3823 = vunpack.c.l.b16 %v3727
        %v3824 = vunpack.c.l.b16 %v3728
        %v3825 = vunpack.c.l.b16 %v3729
        %v3826 = vunpack.c.l.b16 %v3730
        %v3827 = vunpack.c.l.b16 %v3731
        %v3828 = vunpack.c.l.b16 %v3732
        %v3829 = vunpack.c.l.b16 %v3733
        %v3830 = vunpack.c.l.b16 %v3734
        %v3831 = vunpack.c.l.b16 %v3735
        %v3832 = vunpack.c.l.b16 %v3736
        %v3833 = vunpack.c.l.b16 %v3737
        %v3834 = vunpack.c.l.b16 %v3738
        %v3835 = vunpack.c.l.b16 %v3739
        %v3836 = vunpack.c.l.b16 %v3740
        %v3837 = vunpack.c.l.b16 %v3741
        %v3838 = vunpack.c.l.b16 %v3742
        %v3839 = vunpack.c.l.b16 %v3743
        %v3840 = vunpack.c.l.b16 %v3744
        %v3841 = vunpack.c.l.b16 %v3745
        %v3842 = vunpack.c.l.b16 %v3746
        %v3843 = vunpack.c.l.b16 %v3747
        %v3844 = vunpack.c.l.b16 %v3748
        %v3845 = vunpack.c.l.b16 %v3749
        %v3846 = vunpack.c.l.b16 %v3750
        %v3847 = vunpack.c.l.b16 %v3751
        %v3848 = vunpack.c.l.b16 %v3752
        %v3849 = vunpack.c.l.b16 %v3753
        %v3850 = vpack.c.b16 %v3803, %v3802
        %v3851 = vpack.c.b16 %v3805, %v3804
        %v3852 = vpack.c.b16 %v3807, %v3806
        %v3853 = vpack.c.b16 %v3809, %v3808
        %v3854 = vpack.c.b16 %v3811, %v3810
        %v3855 = vpack.c.b16 %v3813, %v3812
        %v3856 = vpack.c.b16 %v3815, %v3814
        %v3857 = vpack.c.b16 %v3817, %v3816
        %v3858 = vpack.c.b16 %v3819, %v3818
        %v3859 = vpack.c.b16 %v3821, %v3820
        %v3860 = vpack.c.b16 %v3823, %v3822
        %v3861 = vpack.c.b16 %v3825, %v3824
        %v3862 = vpack.c.b16 %v3827, %v3826
        %v3863 = vpack.c.b16 %v3829, %v3828
        %v3864 = vpack.c.b16 %v3831, %v3830
        %v3865 = vpack.c.b16 %v3833, %v3832
        %v3866 = vpack.c.b16 %v3835, %v3834
        %v3867 = vpack.c.b16 %v3837, %v3836
        %v3868 = vpack.c.b16 %v3839, %v3838
        %v3869 = vpack.c.b16 %v3841, %v3840
        %v3870 = vpack.c.b16 %v3843, %v3842
        %v3871 = vpack.c.b16 %v3845, %v3844
        %v3872 = vpack.c.b16 %v3847, %v3846
        %v3873 = vpack.c.b16 %v3849, %v3848
        %3898 = vmatprep.subr.bf16.mxu0 0
        %3899 = vmatpush1.bf16.msra.mxu0 %v3850
        %3900 = vmatprep.subr.bf16.mxu0 0
        %3901 = vmatpush1.bf16.msra.mxu0 %v3851
        %3902 = vmatprep.subr.bf16.mxu0 0
        %3903 = vmatpush1.bf16.msra.mxu0 %v3852
        %3904 = vmatprep.subr.bf16.mxu0 0
        %3905 = vmatpush1.bf16.msra.mxu0 %v3853
        %3906 = vmatprep.subr.bf16.mxu0 0
        %3907 = vmatpush1.bf16.msra.mxu0 %v3854
        %3908 = vmatprep.subr.bf16.mxu0 0
        %3909 = vmatpush1.bf16.msra.mxu0 %v3855
        %3910 = vmatprep.subr.bf16.mxu0 0
        %3911 = vmatpush1.bf16.msra.mxu0 %v3856
        %3912 = vmatprep.subr.bf16.mxu0 0
        %3913 = vmatpush1.bf16.msra.mxu0 %v3857
        %3914 = vmatprep.subr.bf16.mxu0 0
        %3915 = vmatpush1.bf16.msra.mxu0 %v3858
        %3916 = vmatprep.subr.bf16.mxu0 0
        %3917 = vmatpush1.bf16.msra.mxu0 %v3859
        %3918 = vmatprep.subr.bf16.mxu0 0
        %3919 = vmatpush1.bf16.msra.mxu0 %v3860
        %3920 = vmatprep.subr.bf16.mxu0 0
        %3921 = vmatpush1.bf16.msra.mxu0 %v3861
        %3922 = vmatprep.subr.bf16.mxu0 0
        %3923 = vmatpush1.bf16.msra.mxu0 %v3862
        %3924 = vmatprep.subr.bf16.mxu0 0
        %3925 = vmatpush1.bf16.msra.mxu0 %v3863
        %3926 = vmatprep.subr.bf16.mxu0 0
        %3927 = vmatpush1.bf16.msra.mxu0 %v3864
        %3928 = vmatprep.subr.bf16.mxu0 0
        %3929 = vmatpush1.bf16.msra.mxu0 %v3865
        %3930 = vmatprep.mubr.bf16.mxu0 %v3557
        %3931 = vmatmul.mubr.bf16.gmra.mrb[0].mxu0 %v3530
        %v3932 = vpop.f32.mrb[0].mxu0
        %v3933 = vadd.f32 0.0, %v3932
        %v3934 = vpop.f32.mrb[0].mxu0
        %v3935 = vpop.f32.mrb[0].mxu0
        %v3936 = vadd.f32 0.0, %v3935
        %v3937 = vpop.f32.mrb[0].mxu0
        %3938 = vmatprep.mubr.bf16.mxu0 %v3569
        %3939 = vmatmul.mubr.bf16.gmra.mrb[0].mxu0 %v3531
        %v3940 = vpop.f32.mrb[0].mxu0
        %v3941 = vadd.f32 0.0, %v3940
        %v3942 = vpop.f32.mrb[0].mxu0
        %v3943 = vpop.f32.mrb[0].mxu0
        %v3944 = vadd.f32 0.0, %v3943
        %v3945 = vpop.f32.mrb[0].mxu0
        %3946 = vmatprep.mubr.bf16.mxu0 %v3581
        %3947 = vmatmul.mubr.bf16.gmra.mrb[0].mxu0 %v3532
        %v3948 = vpop.f32.mrb[0].mxu0
        %v3949 = vadd.f32 0.0, %v3948
        %v3950 = vpop.f32.mrb[0].mxu0
        %v3951 = vpop.f32.mrb[0].mxu0
        %v3952 = vadd.f32 0.0, %v3951
        %v3953 = vpop.f32.mrb[0].mxu0
        %3954 = vmatprep.mubr.bf16.mxu0 %v3593
        %3955 = vmatmul.mubr.bf16.gmra.mrb[0].mxu0 %v3533
        %v3956 = vpop.f32.mrb[0].mxu0
        %v3957 = vadd.f32 0.0, %v3956
        %v3958 = vpop.f32.mrb[0].mxu0
        %v3959 = vpop.f32.mrb[0].mxu0
        %v3960 = vadd.f32 0.0, %v3959
        %v3961 = vpop.f32.mrb[0].mxu0
        %3962 = vmatprep.mubr.bf16.mxu0 %v3605
        %3963 = vmatmul.mubr.bf16.gmra.mrb[0].mxu0 %v3534
        %v3964 = vpop.f32.mrb[0].mxu0
        %v3965 = vadd.f32 0.0, %v3964
        %v3966 = vpop.f32.mrb[0].mxu0
        %v3967 = vpop.f32.mrb[0].mxu0
        %v3968 = vadd.f32 0.0, %v3967
        %v3969 = vpop.f32.mrb[0].mxu0
        %3970 = vmatprep.mubr.bf16.mxu0 %v3617
        %3971 = vmatmul.mubr.bf16.gmra.mrb[0].mxu0 %v3535
        %v3972 = vpop.f32.mrb[0].mxu0
        %v3973 = vadd.f32 0.0, %v3972
        %v3974 = vpop.f32.mrb[0].mxu0
        %v3975 = vpop.f32.mrb[0].mxu0
        %v3976 = vadd.f32 0.0, %v3975
        %v3977 = vpop.f32.mrb[0].mxu0
        %3978 = vmatprep.mubr.bf16.mxu0 %v3629
        %3979 = vmatmul.mubr.bf16.gmra.mrb[0].mxu0 %v3536
        %v3980 = vpop.f32.mrb[0].mxu0
        %v3981 = vadd.f32 0.0, %v3980
        %v3982 = vpop.f32.mrb[0].mxu0
        %v3983 = vpop.f32.mrb[0].mxu0
        %v3984 = vadd.f32 0.0, %v3983
        %v3985 = vpop.f32.mrb[0].mxu0
        %3986 = vmatprep.mubr.bf16.mxu0 %v3641
        %3987 = vmatmul.mubr.bf16.gmra.mrb[0].mxu0 %v3537
        %v3988 = vpop.f32.mrb[0].mxu0
        %v3989 = vadd.f32 0.0, %v3988
        %v3990 = vpop.f32.mrb[0].mxu0
        %v3991 = vpop.f32.mrb[0].mxu0
        %v3992 = vadd.f32 0.0, %v3991
        %v3993 = vpop.f32.mrb[0].mxu0
        %3994 = vdwg.mxu0
        %3995 = vmatprep.subr.bf16.mxu0 0
        %3996 = vmatpush1.bf16.msra.mxu0 %v3866
        %3997 = vmatprep.subr.bf16.mxu0 0
        %3998 = vmatpush1.bf16.msra.mxu0 %v3867
        %3999 = vmatprep.subr.bf16.mxu0 0
        %4000 = vmatpush1.bf16.msra.mxu0 %v3868
        %4001 = vmatprep.subr.bf16.mxu0 0
        %4002 = vmatpush1.bf16.msra.mxu0 %v3869
        %4003 = vmatprep.subr.bf16.mxu0 0
        %4004 = vmatpush1.bf16.msra.mxu0 %v3870
        %4005 = vmatprep.subr.bf16.mxu0 0
        %4006 = vmatpush1.bf16.msra.mxu0 %v3871
        %4007 = vmatprep.subr.bf16.mxu0 0
        %4008 = vmatpush1.bf16.msra.mxu0 %v3872
        %4009 = vmatprep.subr.bf16.mxu0 0
        %4010 = vmatpush1.bf16.msra.mxu0 %v3873
        %4011 = vmatprep.subr.bf16.mxu0 0
        %4012 = vmatpush1.bf16.msra.mxu0 0
        %4013 = vmatprep.subr.bf16.mxu0 0
        %4014 = vmatpush1.bf16.msra.mxu0 0
        %4015 = vmatprep.subr.bf16.mxu0 0
        %4016 = vmatpush1.bf16.msra.mxu0 0
        %4017 = vmatprep.subr.bf16.mxu0 0
        %4018 = vmatpush1.bf16.msra.mxu0 0
        %4019 = vmatprep.subr.bf16.mxu0 0
        %4020 = vmatpush1.bf16.msra.mxu0 0
        %4021 = vmatprep.subr.bf16.mxu0 0
        %4022 = vmatpush1.bf16.msra.mxu0 0
        %4023 = vmatprep.subr.bf16.mxu0 0
        %4024 = vmatpush1.bf16.msra.mxu0 0
        %4025 = vmatprep.subr.bf16.mxu0 0
        %4026 = vmatpush1.bf16.msra.mxu0 0
        %4027 = vmatprep.mubr.bf16.mxu0 0
        %4028 = vmatmul.mubr.bf16.gmra.mrb[0].mxu0 %v3676
        %v4029 = vpop.f32.mrb[0].mxu0
        %v4030 = vadd.f32 %v3933, %v4029
        %v4031 = vpop.f32.mrb[0].mxu0
        %v4032 = vpop.f32.mrb[0].mxu0
        %v4033 = vadd.f32 %v3936, %v4032
        %v4034 = vpop.f32.mrb[0].mxu0
        %4035 = vmatprep.mubr.bf16.mxu0 0
        %4036 = vmatmul.mubr.bf16.gmra.mrb[0].mxu0 %v3679
        %v4037 = vpop.f32.mrb[0].mxu0
        %v4038 = vadd.f32 %v3941, %v4037
        %v4039 = vpop.f32.mrb[0].mxu0
        %v4040 = vpop.f32.mrb[0].mxu0
        %v4041 = vadd.f32 %v3944, %v4040
        %v4042 = vpop.f32.mrb[0].mxu0
        %4043 = vmatprep.mubr.bf16.mxu0 0
        %4044 = vmatmul.mubr.bf16.gmra.mrb[0].mxu0 %v3682
        %v4045 = vpop.f32.mrb[0].mxu0
        %v4046 = vadd.f32 %v3949, %v4045
        %v4047 = vpop.f32.mrb[0].mxu0
        %v4048 = vpop.f32.mrb[0].mxu0
        %v4049 = vadd.f32 %v3952, %v4048
        %v4050 = vpop.f32.mrb[0].mxu0
        %4051 = vmatprep.mubr.bf16.mxu0 0
        %4052 = vmatmul.mubr.bf16.gmra.mrb[0].mxu0 %v3685
        %v4053 = vpop.f32.mrb[0].mxu0
        %v4054 = vadd.f32 %v3957, %v4053
        %v4055 = vpop.f32.mrb[0].mxu0
        %v4056 = vpop.f32.mrb[0].mxu0
        %v4057 = vadd.f32 %v3960, %v4056
        %v4058 = vpop.f32.mrb[0].mxu0
        %4059 = vmatprep.mubr.bf16.mxu0 0
        %4060 = vmatmul.mubr.bf16.gmra.mrb[0].mxu0 %v3688
        %v4061 = vpop.f32.mrb[0].mxu0
        %v4062 = vadd.f32 %v3965, %v4061
        %v4063 = vpop.f32.mrb[0].mxu0
        %v4064 = vpop.f32.mrb[0].mxu0
        %v4065 = vadd.f32 %v3968, %v4064
        %v4066 = vpop.f32.mrb[0].mxu0
        %4067 = vmatprep.mubr.bf16.mxu0 0
        %4068 = vmatmul.mubr.bf16.gmra.mrb[0].mxu0 %v3691
        %v4069 = vpop.f32.mrb[0].mxu0
        %v4070 = vadd.f32 %v3973, %v4069
        %v4071 = vpop.f32.mrb[0].mxu0
        %v4072 = vpop.f32.mrb[0].mxu0
        %v4073 = vadd.f32 %v3976, %v4072
        %v4074 = vpop.f32.mrb[0].mxu0
        %4075 = vmatprep.mubr.bf16.mxu0 0
        %4076 = vmatmul.mubr.bf16.gmra.mrb[0].mxu0 %v3694
        %v4077 = vpop.f32.mrb[0].mxu0
        %v4078 = vadd.f32 %v3981, %v4077
        %v4079 = vpop.f32.mrb[0].mxu0
        %v4080 = vpop.f32.mrb[0].mxu0
        %v4081 = vadd.f32 %v3984, %v4080
        %v4082 = vpop.f32.mrb[0].mxu0
        %4083 = vmatprep.mubr.bf16.mxu0 0
        %4084 = vmatmul.mubr.bf16.gmra.mrb[0].mxu0 %v3697
        %v4085 = vpop.f32.mrb[0].mxu0
        %v4086 = vadd.f32 %v3989, %v4085
        %v4087 = vpop.f32.mrb[0].mxu0
        %v4088 = vpop.f32.mrb[0].mxu0
        %v4089 = vadd.f32 %v3992, %v4088
        %v4090 = vpop.f32.mrb[0].mxu0
        %4091 = vdwg.mxu0
        %v4092 = vadd.f32 %v3467, %v4030
        %v4093 = vadd.f32 %v3470, %v4033
        %v4094 = vadd.f32 %v3475, %v4038
        %v4095 = vadd.f32 %v3478, %v4041
        %v4096 = vadd.f32 %v3483, %v4046
        %v4097 = vadd.f32 %v3486, %v4049
        %v4098 = vadd.f32 %v3491, %v4054
        %v4099 = vadd.f32 %v3494, %v4057
        %v4100 = vadd.f32 %v3499, %v4062
        %v4101 = vadd.f32 %v3502, %v4065
        %v4102 = vadd.f32 %v3507, %v4070
        %v4103 = vadd.f32 %v3510, %v4073
        %v4104 = vadd.f32 %v3515, %v4078
        %v4105 = vadd.f32 %v3518, %v4081
        %v4106 = vadd.f32 %v3523, %v4086
        %v4107 = vadd.f32 %v3526, %v4089
        %v4108 = vadd.f32 %v4092, %v2257
        %v4109 = vadd.f32 %v4093, %v2257
        %v4110 = vadd.f32 %v4094, %v2257
        %v4111 = vadd.f32 %v4095, %v2257
        %v4112 = vadd.f32 %v4096, %v2257
        %v4113 = vadd.f32 %v4097, %v2257
        %v4114 = vadd.f32 %v4098, %v2257
        %v4115 = vadd.f32 %v4099, %v2257
        %v4116 = vadd.f32 %v4100, %v2257
        %v4117 = vadd.f32 %v4101, %v2257
        %v4118 = vadd.f32 %v4102, %v2257
        %v4119 = vadd.f32 %v4103, %v2257
        %v4120 = vadd.f32 %v4104, %v2257
        %v4121 = vadd.f32 %v4105, %v2257
        %v4122 = vadd.f32 %v4106, %v2257
        %v4123 = vadd.f32 %v4107, %v2257
        %v4124 = vmax.f32 %v4108, 0.0
        %v4125 = vmax.f32 %v4109, 0.0
        %v4126 = vmax.f32 %v4110, 0.0
        %v4127 = vmax.f32 %v4111, 0.0
        %v4128 = vmax.f32 %v4112, 0.0
        %v4129 = vmax.f32 %v4113, 0.0
        %v4130 = vmax.f32 %v4114, 0.0
        %v4131 = vmax.f32 %v4115, 0.0
        %v4132 = vmax.f32 %v4116, 0.0
        %v4133 = vmax.f32 %v4117, 0.0
        %v4134 = vmax.f32 %v4118, 0.0
        %v4135 = vmax.f32 %v4119, 0.0
        %v4136 = vmax.f32 %v4120, 0.0
        %v4137 = vmax.f32 %v4121, 0.0
        %v4138 = vmax.f32 %v4122, 0.0
        %v4139 = vmax.f32 %v4123, 0.0
        %v4140 = vpack.c.bf16 %v4125, %v4124
        %v4141 = vpack.c.bf16 %v4127, %v4126
        %v4142 = vpack.c.bf16 %v4129, %v4128
        %v4143 = vpack.c.bf16 %v4131, %v4130
        %v4144 = vpack.c.bf16 %v4133, %v4132
        %v4145 = vpack.c.bf16 %v4135, %v4134
        %v4146 = vpack.c.bf16 %v4137, %v4136
        %v4147 = vpack.c.bf16 %v4139, %v4138
        %v4149 = vshrl.u32 %v4140, 16
        %v4151 = vrot.slane %v4149, 7
        %v4152 = vshll.u32 %v4140, 16
        %v4154 = vor.u32 %v4151, %v4152
        %v4156 = vshrl.u32 %v4141, 16
        %v4158 = vrot.slane %v4156, 7
        %v4159 = vshll.u32 %v4141, 16
        %v4161 = vor.u32 %v4158, %v4159
        %v4163 = vshrl.u32 %v4142, 16
        %v4165 = vrot.slane %v4163, 7
        %v4166 = vshll.u32 %v4142, 16
        %v4168 = vor.u32 %v4165, %v4166
        %v4170 = vshrl.u32 %v4143, 16
        %v4172 = vrot.slane %v4170, 7
        %v4173 = vshll.u32 %v4143, 16
        %v4175 = vor.u32 %v4172, %v4173
        %v4177 = vshrl.u32 %v4144, 16
        %v4179 = vrot.slane %v4177, 7
        %v4180 = vshll.u32 %v4144, 16
        %v4182 = vor.u32 %v4179, %v4180
        %v4184 = vshrl.u32 %v4145, 16
        %v4186 = vrot.slane %v4184, 7
        %v4187 = vshll.u32 %v4145, 16
        %v4189 = vor.u32 %v4186, %v4187
        %v4191 = vshrl.u32 %v4146, 16
        %v4193 = vrot.slane %v4191, 7
        %v4194 = vshll.u32 %v4146, 16
        %v4196 = vor.u32 %v4193, %v4194
        %v4198 = vshrl.u32 %v4147, 16
        %v4200 = vrot.slane %v4198, 7
        %v4201 = vshll.u32 %v4147, 16
        %v4203 = vor.u32 %v4200, %v4201
        %v4220 = vsel %vm381, 0, %v4154
        %v4221 = vsel %vm381, 0, %v4161
        %v4222 = vsel %vm381, 0, %v4168
        %v4223 = vsel %vm381, 0, %v4175
        %v4224 = vsel %vm381, 0, %v4182
        %v4225 = vsel %vm381, 0, %v4189
        %v4226 = vsel %vm381, 0, %v4196
        %v4227 = vsel %vm381, 0, %v4203
        %v4228 = vsel %vm381, %v4151, 0
        %v4229 = vsel %vm381, %v4158, 0
        %v4230 = vsel %vm381, %v4165, 0
        %v4231 = vsel %vm381, %v4172, 0
        %v4232 = vsel %vm381, %v4179, 0
        %v4233 = vsel %vm381, %v4186, 0
        %v4234 = vsel %vm381, %v4193, 0
        %v4235 = vsel %vm381, %v4200, 0
        %s4236 = scalar_lea.vmem [#allocation3], 144
        %4237 = vst [vmem:[%s4236] sm:$0xff] %v4220
        %4238 = vst [vmem:[%s4236 + $0x8] sm:$0xff] %v4228
        %4239 = vst [vmem:[%s4236 + $0x10] sm:$0xff] %v4221
        %4240 = vst [vmem:[%s4236 + $0x18] sm:$0xff] %v4229
        %4241 = vst [vmem:[%s4236 + $0x20] sm:$0xff] %v4222
        %4242 = vst [vmem:[%s4236 + $0x28] sm:$0xff] %v4230
        %4243 = vst [vmem:[%s4236 + $0x30] sm:$0xff] %v4223
        %4244 = vst [vmem:[%s4236 + $0x38] sm:$0xff] %v4231
        %4245 = vst [vmem:[%s4236 + $0x40] sm:$0xff] %v4224
        %4246 = vst [vmem:[%s4236 + $0x48] sm:$0xff] %v4232
        %4247 = vst [vmem:[%s4236 + $0x50] sm:$0xff] %v4225
        %4248 = vst [vmem:[%s4236 + $0x58] sm:$0xff] %v4233
        %4249 = vst [vmem:[%s4236 + $0x60] sm:$0xff] %v4226
        %4250 = vst [vmem:[%s4236 + $0x68] sm:$0xff] %v4234
        %4251 = vst [vmem:[%s4236 + $0x70] sm:$0xff] %v4227
        %4252 = vst [vmem:[%s4236 + $0x78] sm:$0xff] %v4235
        %v4253 = vld [vmem:[%s4] sm:$0x1]
        %v4254 = vld [vmem:[#allocation3] sm:$0xff]
        %v4255 = vld [vmem:[#allocation3 + $0x10] sm:$0xff]
        %v4256 = vld [vmem:[#allocation3 + $0x20] sm:$0xff]
        %v4257 = vld [vmem:[#allocation3 + $0x30] sm:$0xff]
        %v4258 = vld [vmem:[#allocation3 + $0x40] sm:$0xff]
        %v4259 = vld [vmem:[#allocation3 + $0x50] sm:$0xff]
        %v4260 = vld [vmem:[#allocation3 + $0x60] sm:$0xff]
        %v4261 = vld [vmem:[#allocation3 + $0x70] sm:$0xff]
        %v4262 = vld [vmem:[#allocation3 + $0x8] sm:$0x1]
        %v4263 = vld [vmem:[#allocation3 + $0x18] sm:$0x1]
        %v4264 = vld [vmem:[#allocation3 + $0x28] sm:$0x1]
        %v4265 = vld [vmem:[#allocation3 + $0x38] sm:$0x1]
        %v4266 = vld [vmem:[#allocation3 + $0x48] sm:$0x1]
        %v4267 = vld [vmem:[#allocation3 + $0x58] sm:$0x1]
        %v4268 = vld [vmem:[#allocation3 + $0x68] sm:$0x1]
        %v4269 = vld [vmem:[#allocation3 + $0x78] sm:$0x1]
        %v4271 = vshrl.u32 %v4254, 16
        %v4273 = vshll.u32 %v4254, 16
        %v4275 = vrot.slane %v4273, 1
        %v4276 = vor.u32 %v4271, %v4275
        %v4278 = vshll.u32 %v4262, 16
        %v4280 = vrot.slane %v4278, 1
        %v4281 = vsel %vm562, %v4276, %v4280
        %v4283 = vshrl.u32 %v4255, 16
        %v4285 = vshll.u32 %v4255, 16
        %v4287 = vrot.slane %v4285, 1
        %v4288 = vor.u32 %v4283, %v4287
        %v4290 = vshll.u32 %v4263, 16
        %v4292 = vrot.slane %v4290, 1
        %v4293 = vsel %vm562, %v4288, %v4292
        %v4295 = vshrl.u32 %v4256, 16
        %v4297 = vshll.u32 %v4256, 16
        %v4299 = vrot.slane %v4297, 1
        %v4300 = vor.u32 %v4295, %v4299
        %v4302 = vshll.u32 %v4264, 16
        %v4304 = vrot.slane %v4302, 1
        %v4305 = vsel %vm562, %v4300, %v4304
        %v4307 = vshrl.u32 %v4257, 16
        %v4309 = vshll.u32 %v4257, 16
        %v4311 = vrot.slane %v4309, 1
        %v4312 = vor.u32 %v4307, %v4311
        %v4314 = vshll.u32 %v4265, 16
        %v4316 = vrot.slane %v4314, 1
        %v4317 = vsel %vm562, %v4312, %v4316
        %v4319 = vshrl.u32 %v4258, 16
        %v4321 = vshll.u32 %v4258, 16
        %v4323 = vrot.slane %v4321, 1
        %v4324 = vor.u32 %v4319, %v4323
        %v4326 = vshll.u32 %v4266, 16
        %v4328 = vrot.slane %v4326, 1
        %v4329 = vsel %vm562, %v4324, %v4328
        %v4331 = vshrl.u32 %v4259, 16
        %v4333 = vshll.u32 %v4259, 16
        %v4335 = vrot.slane %v4333, 1
        %v4336 = vor.u32 %v4331, %v4335
        %v4338 = vshll.u32 %v4267, 16
        %v4340 = vrot.slane %v4338, 1
        %v4341 = vsel %vm562, %v4336, %v4340
        %v4343 = vshrl.u32 %v4260, 16
        %v4345 = vshll.u32 %v4260, 16
        %v4347 = vrot.slane %v4345, 1
        %v4348 = vor.u32 %v4343, %v4347
        %v4350 = vshll.u32 %v4268, 16
        %v4352 = vrot.slane %v4350, 1
        %v4353 = vsel %vm562, %v4348, %v4352
        %v4355 = vshrl.u32 %v4261, 16
        %v4357 = vshll.u32 %v4261, 16
        %v4359 = vrot.slane %v4357, 1
        %v4360 = vor.u32 %v4355, %v4359
        %v4362 = vshll.u32 %v4269, 16
        %v4364 = vrot.slane %v4362, 1
        %v4365 = vsel %vm562, %v4360, %v4364
        %v4374 = vld [vmem:[#allocation3] sm:$0xfe]
        %v4375 = vld [vmem:[#allocation3 + $0x10] sm:$0xfe]
        %v4376 = vld [vmem:[#allocation3 + $0x20] sm:$0xfe]
        %v4377 = vld [vmem:[#allocation3 + $0x30] sm:$0xfe]
        %v4378 = vld [vmem:[#allocation3 + $0x40] sm:$0xfe]
        %v4379 = vld [vmem:[#allocation3 + $0x50] sm:$0xfe]
        %v4380 = vld [vmem:[#allocation3 + $0x60] sm:$0xfe]
        %v4381 = vld [vmem:[#allocation3 + $0x70] sm:$0xfe]
        %v4398 = vrot.slane %v4374, 1
        %v4399 = vrot.slane %v4262, 1
        %v4400 = vsel %vm691, %v4398, %v4399
        %v4401 = vrot.slane %v4375, 1
        %v4402 = vrot.slane %v4263, 1
        %v4403 = vsel %vm691, %v4401, %v4402
        %v4404 = vrot.slane %v4376, 1
        %v4405 = vrot.slane %v4264, 1
        %v4406 = vsel %vm691, %v4404, %v4405
        %v4407 = vrot.slane %v4377, 1
        %v4408 = vrot.slane %v4265, 1
        %v4409 = vsel %vm691, %v4407, %v4408
        %v4410 = vrot.slane %v4378, 1
        %v4411 = vrot.slane %v4266, 1
        %v4412 = vsel %vm691, %v4410, %v4411
        %v4413 = vrot.slane %v4379, 1
        %v4414 = vrot.slane %v4267, 1
        %v4415 = vsel %vm691, %v4413, %v4414
        %v4416 = vrot.slane %v4380, 1
        %v4417 = vrot.slane %v4268, 1
        %v4418 = vsel %vm691, %v4416, %v4417
        %v4419 = vrot.slane %v4381, 1
        %v4420 = vrot.slane %v4269, 1
        %v4421 = vsel %vm691, %v4419, %v4420
        %v4430 = vld [vmem:[#allocation9] sm:$0xf]
        %v4431 = vld [vmem:[#allocation9 + $0x4] sm:$0xf]
        %v4432 = vld [vmem:[#allocation9 + $0x8] sm:$0xf]
        %v4433 = vld [vmem:[#allocation9 + $0xc] sm:$0xf]
        %v4434 = vld [vmem:[#allocation9 + $0x10] sm:$0xf]
        %v4435 = vld [vmem:[#allocation9 + $0x14] sm:$0xf]
        %v4436 = vld [vmem:[#allocation9 + $0x18] sm:$0xf]
        %v4437 = vld [vmem:[#allocation9 + $0x1c] sm:$0xf]
        %v4438 = vld [vmem:[#allocation9 + $0x20] sm:$0xf]
        %v4439 = vld [vmem:[#allocation9 + $0x24] sm:$0xf]
        %v4440 = vld [vmem:[#allocation9 + $0x28] sm:$0xf]
        %v4441 = vld [vmem:[#allocation9 + $0x2c] sm:$0xf]
        %v4442 = vld [vmem:[#allocation9 + $0x30] sm:$0xf]
        %v4443 = vld [vmem:[#allocation9 + $0x34] sm:$0xf]
        %v4444 = vld [vmem:[#allocation9 + $0x38] sm:$0xf]
        %v4445 = vld [vmem:[#allocation9 + $0x3c] sm:$0xf]
        %v4446 = vld [vmem:[#allocation9 + $0x40] sm:$0xf]
        %v4447 = vld [vmem:[#allocation9 + $0x44] sm:$0xf]
        %v4448 = vld [vmem:[#allocation9 + $0x48] sm:$0xf]
        %v4449 = vld [vmem:[#allocation9 + $0x4c] sm:$0xf]
        %v4450 = vld [vmem:[#allocation9 + $0x50] sm:$0xf]
        %v4451 = vld [vmem:[#allocation9 + $0x54] sm:$0xf]
        %v4452 = vld [vmem:[#allocation9 + $0x58] sm:$0xf]
        %v4453 = vld [vmem:[#allocation9 + $0x5c] sm:$0xf]
        %v4454 = vld [vmem:[#allocation9 + $0x60] sm:$0xf]
        %v4455 = vld [vmem:[#allocation9 + $0x64] sm:$0xf]
        %v4456 = vld [vmem:[#allocation9 + $0x68] sm:$0xf]
        %v4457 = vld [vmem:[#allocation9 + $0x6c] sm:$0xf]
        %v4458 = vld [vmem:[#allocation9 + $0x70] sm:$0xf]
        %v4459 = vld [vmem:[#allocation9 + $0x74] sm:$0xf]
        %v4460 = vld [vmem:[#allocation9 + $0x78] sm:$0xf]
        %v4461 = vld [vmem:[#allocation9 + $0x7c] sm:$0xf]
        %v4462 = vld [vmem:[#allocation9 + $0x80] sm:$0xf]
        %v4463 = vld [vmem:[#allocation9 + $0x84] sm:$0xf]
        %v4464 = vld [vmem:[#allocation9 + $0x88] sm:$0xf]
        %v4465 = vld [vmem:[#allocation9 + $0x8c] sm:$0xf]
        %v4466 = vld [vmem:[#allocation9 + $0x90] sm:$0xf]
        %v4467 = vld [vmem:[#allocation9 + $0x94] sm:$0xf]
        %v4468 = vld [vmem:[#allocation9 + $0x98] sm:$0xf]
        %v4469 = vld [vmem:[#allocation9 + $0x9c] sm:$0xf]
        %v4470 = vld [vmem:[#allocation9 + $0xa0] sm:$0xf]
        %v4471 = vld [vmem:[#allocation9 + $0xa4] sm:$0xf]
        %v4472 = vld [vmem:[#allocation9 + $0xa8] sm:$0xf]
        %v4473 = vld [vmem:[#allocation9 + $0xac] sm:$0xf]
        %v4474 = vld [vmem:[#allocation9 + $0xb0] sm:$0xf]
        %v4475 = vld [vmem:[#allocation9 + $0xb4] sm:$0xf]
        %v4476 = vld [vmem:[#allocation9 + $0xb8] sm:$0xf]
        %v4477 = vld [vmem:[#allocation9 + $0xbc] sm:$0xf]
        %v4478 = vld [vmem:[%s2387] sm:$0xff]
        %v4479 = vld [vmem:[%s2387 + $0x10] sm:$0xff]
        %v4480 = vld [vmem:[%s2387 + $0x20] sm:$0xff]
        %v4481 = vld [vmem:[%s2387 + $0x30] sm:$0xff]
        %v4482 = vld [vmem:[%s2387 + $0x40] sm:$0xff]
        %v4483 = vld [vmem:[%s2387 + $0x50] sm:$0xff]
        %v4484 = vld [vmem:[%s2387 + $0x60] sm:$0xff]
        %v4485 = vld [vmem:[%s2387 + $0x70] sm:$0xff]
        %v4486 = vld [vmem:[%s2387 + $0x8] sm:$0x1]
        %v4487 = vld [vmem:[%s2387 + $0x18] sm:$0x1]
        %v4488 = vld [vmem:[%s2387 + $0x28] sm:$0x1]
        %v4489 = vld [vmem:[%s2387 + $0x38] sm:$0x1]
        %v4490 = vld [vmem:[%s2387 + $0x48] sm:$0x1]
        %v4491 = vld [vmem:[%s2387 + $0x58] sm:$0x1]
        %v4492 = vld [vmem:[%s2387 + $0x68] sm:$0x1]
        %v4493 = vld [vmem:[%s2387 + $0x78] sm:$0x1]
        %v4495 = vshrl.u32 %v4478, 16
        %v4497 = vshll.u32 %v4478, 16
        %v4499 = vrot.slane %v4497, 1
        %v4500 = vor.u32 %v4495, %v4499
        %v4502 = vshll.u32 %v4486, 16
        %v4504 = vrot.slane %v4502, 1
        %v4505 = vsel %vm562, %v4500, %v4504
        %v4507 = vshrl.u32 %v4479, 16
        %v4509 = vshll.u32 %v4479, 16
        %v4511 = vrot.slane %v4509, 1
        %v4512 = vor.u32 %v4507, %v4511
        %v4514 = vshll.u32 %v4487, 16
        %v4516 = vrot.slane %v4514, 1
        %v4517 = vsel %vm562, %v4512, %v4516
        %v4519 = vshrl.u32 %v4480, 16
        %v4521 = vshll.u32 %v4480, 16
        %v4523 = vrot.slane %v4521, 1
        %v4524 = vor.u32 %v4519, %v4523
        %v4526 = vshll.u32 %v4488, 16
        %v4528 = vrot.slane %v4526, 1
        %v4529 = vsel %vm562, %v4524, %v4528
        %v4531 = vshrl.u32 %v4481, 16
        %v4533 = vshll.u32 %v4481, 16
        %v4535 = vrot.slane %v4533, 1
        %v4536 = vor.u32 %v4531, %v4535
        %v4538 = vshll.u32 %v4489, 16
        %v4540 = vrot.slane %v4538, 1
        %v4541 = vsel %vm562, %v4536, %v4540
        %v4543 = vshrl.u32 %v4482, 16
        %v4545 = vshll.u32 %v4482, 16
        %v4547 = vrot.slane %v4545, 1
        %v4548 = vor.u32 %v4543, %v4547
        %v4550 = vshll.u32 %v4490, 16
        %v4552 = vrot.slane %v4550, 1
        %v4553 = vsel %vm562, %v4548, %v4552
        %v4555 = vshrl.u32 %v4483, 16
        %v4557 = vshll.u32 %v4483, 16
        %v4559 = vrot.slane %v4557, 1
        %v4560 = vor.u32 %v4555, %v4559
        %v4562 = vshll.u32 %v4491, 16
        %v4564 = vrot.slane %v4562, 1
        %v4565 = vsel %vm562, %v4560, %v4564
        %v4567 = vshrl.u32 %v4484, 16
        %v4569 = vshll.u32 %v4484, 16
        %v4571 = vrot.slane %v4569, 1
        %v4572 = vor.u32 %v4567, %v4571
        %v4574 = vshll.u32 %v4492, 16
        %v4576 = vrot.slane %v4574, 1
        %v4577 = vsel %vm562, %v4572, %v4576
        %v4579 = vshrl.u32 %v4485, 16
        %v4581 = vshll.u32 %v4485, 16
        %v4583 = vrot.slane %v4581, 1
        %v4584 = vor.u32 %v4579, %v4583
        %v4586 = vshll.u32 %v4493, 16
        %v4588 = vrot.slane %v4586, 1
        %v4589 = vsel %vm562, %v4584, %v4588
        %v4598 = vld [vmem:[%s2387] sm:$0xfe]
        %v4599 = vld [vmem:[%s2387 + $0x10] sm:$0xfe]
        %v4600 = vld [vmem:[%s2387 + $0x20] sm:$0xfe]
        %v4601 = vld [vmem:[%s2387 + $0x30] sm:$0xfe]
        %v4602 = vld [vmem:[%s2387 + $0x40] sm:$0xfe]
        %v4603 = vld [vmem:[%s2387 + $0x50] sm:$0xfe]
        %v4604 = vld [vmem:[%s2387 + $0x60] sm:$0xfe]
        %v4605 = vld [vmem:[%s2387 + $0x70] sm:$0xfe]
        %v4622 = vrot.slane %v4598, 1
        %v4623 = vrot.slane %v4486, 1
        %v4624 = vsel %vm691, %v4622, %v4623
        %v4625 = vrot.slane %v4599, 1
        %v4626 = vrot.slane %v4487, 1
        %v4627 = vsel %vm691, %v4625, %v4626
        %v4628 = vrot.slane %v4600, 1
        %v4629 = vrot.slane %v4488, 1
        %v4630 = vsel %vm691, %v4628, %v4629
        %v4631 = vrot.slane %v4601, 1
        %v4632 = vrot.slane %v4489, 1
        %v4633 = vsel %vm691, %v4631, %v4632
        %v4634 = vrot.slane %v4602, 1
        %v4635 = vrot.slane %v4490, 1
        %v4636 = vsel %vm691, %v4634, %v4635
        %v4637 = vrot.slane %v4603, 1
        %v4638 = vrot.slane %v4491, 1
        %v4639 = vsel %vm691, %v4637, %v4638
        %v4640 = vrot.slane %v4604, 1
        %v4641 = vrot.slane %v4492, 1
        %v4642 = vsel %vm691, %v4640, %v4641
        %v4643 = vrot.slane %v4605, 1
        %v4644 = vrot.slane %v4493, 1
        %v4645 = vsel %vm691, %v4643, %v4644
        %s4654 = scalar_lea.vmem [#allocation9], 192
        %v4655 = vld [vmem:[%s4654] sm:$0xf]
        %v4656 = vld [vmem:[%s4654 + $0x4] sm:$0xf]
        %v4657 = vld [vmem:[%s4654 + $0x8] sm:$0xf]
        %v4658 = vld [vmem:[%s4654 + $0xc] sm:$0xf]
        %v4659 = vld [vmem:[%s4654 + $0x10] sm:$0xf]
        %v4660 = vld [vmem:[%s4654 + $0x14] sm:$0xf]
        %v4661 = vld [vmem:[%s4654 + $0x18] sm:$0xf]
        %v4662 = vld [vmem:[%s4654 + $0x1c] sm:$0xf]
        %v4663 = vld [vmem:[%s4654 + $0x20] sm:$0xf]
        %v4664 = vld [vmem:[%s4654 + $0x24] sm:$0xf]
        %v4665 = vld [vmem:[%s4654 + $0x28] sm:$0xf]
        %v4666 = vld [vmem:[%s4654 + $0x2c] sm:$0xf]
        %v4667 = vld [vmem:[%s4654 + $0x30] sm:$0xf]
        %v4668 = vld [vmem:[%s4654 + $0x34] sm:$0xf]
        %v4669 = vld [vmem:[%s4654 + $0x38] sm:$0xf]
        %v4670 = vld [vmem:[%s4654 + $0x3c] sm:$0xf]
        %v4671 = vld [vmem:[%s4654 + $0x40] sm:$0xf]
        %v4672 = vld [vmem:[%s4654 + $0x44] sm:$0xf]
        %v4673 = vld [vmem:[%s4654 + $0x48] sm:$0xf]
        %v4674 = vld [vmem:[%s4654 + $0x4c] sm:$0xf]
        %v4675 = vld [vmem:[%s4654 + $0x50] sm:$0xf]
        %v4676 = vld [vmem:[%s4654 + $0x54] sm:$0xf]
        %v4677 = vld [vmem:[%s4654 + $0x58] sm:$0xf]
        %v4678 = vld [vmem:[%s4654 + $0x5c] sm:$0xf]
        %v4679 = vld [vmem:[%s4654 + $0x60] sm:$0xf]
        %v4680 = vld [vmem:[%s4654 + $0x64] sm:$0xf]
        %v4681 = vld [vmem:[%s4654 + $0x68] sm:$0xf]
        %v4682 = vld [vmem:[%s4654 + $0x6c] sm:$0xf]
        %v4683 = vld [vmem:[%s4654 + $0x70] sm:$0xf]
        %v4684 = vld [vmem:[%s4654 + $0x74] sm:$0xf]
        %v4685 = vld [vmem:[%s4654 + $0x78] sm:$0xf]
        %v4686 = vld [vmem:[%s4654 + $0x7c] sm:$0xf]
        %v4687 = vld [vmem:[%s4654 + $0x80] sm:$0xf]
        %v4688 = vld [vmem:[%s4654 + $0x84] sm:$0xf]
        %v4689 = vld [vmem:[%s4654 + $0x88] sm:$0xf]
        %v4690 = vld [vmem:[%s4654 + $0x8c] sm:$0xf]
        %v4691 = vld [vmem:[%s4654 + $0x90] sm:$0xf]
        %v4692 = vld [vmem:[%s4654 + $0x94] sm:$0xf]
        %v4693 = vld [vmem:[%s4654 + $0x98] sm:$0xf]
        %v4694 = vld [vmem:[%s4654 + $0x9c] sm:$0xf]
        %v4695 = vld [vmem:[%s4654 + $0xa0] sm:$0xf]
        %v4696 = vld [vmem:[%s4654 + $0xa4] sm:$0xf]
        %v4697 = vld [vmem:[%s4654 + $0xa8] sm:$0xf]
        %v4698 = vld [vmem:[%s4654 + $0xac] sm:$0xf]
        %v4699 = vld [vmem:[%s4654 + $0xb0] sm:$0xf]
        %v4700 = vld [vmem:[%s4654 + $0xb4] sm:$0xf]
        %v4701 = vld [vmem:[%s4654 + $0xb8] sm:$0xf]
        %v4702 = vld [vmem:[%s4654 + $0xbc] sm:$0xf]
        %v4751 = vunpack.c.l.b16 %v4655
        %v4752 = vunpack.c.l.b16 %v4656
        %v4753 = vunpack.c.l.b16 %v4657
        %v4754 = vunpack.c.l.b16 %v4658
        %v4755 = vunpack.c.l.b16 %v4659
        %v4756 = vunpack.c.l.b16 %v4660
        %v4757 = vunpack.c.l.b16 %v4661
        %v4758 = vunpack.c.l.b16 %v4662
        %v4759 = vunpack.c.l.b16 %v4663
        %v4760 = vunpack.c.l.b16 %v4664
        %v4761 = vunpack.c.l.b16 %v4665
        %v4762 = vunpack.c.l.b16 %v4666
        %v4763 = vunpack.c.l.b16 %v4667
        %v4764 = vunpack.c.l.b16 %v4668
        %v4765 = vunpack.c.l.b16 %v4669
        %v4766 = vunpack.c.l.b16 %v4670
        %v4767 = vunpack.c.l.b16 %v4671
        %v4768 = vunpack.c.l.b16 %v4672
        %v4769 = vunpack.c.l.b16 %v4673
        %v4770 = vunpack.c.l.b16 %v4674
        %v4771 = vunpack.c.l.b16 %v4675
        %v4772 = vunpack.c.l.b16 %v4676
        %v4773 = vunpack.c.l.b16 %v4677
        %v4774 = vunpack.c.l.b16 %v4678
        %v4775 = vunpack.c.l.b16 %v4679
        %v4776 = vunpack.c.l.b16 %v4680
        %v4777 = vunpack.c.l.b16 %v4681
        %v4778 = vunpack.c.l.b16 %v4682
        %v4779 = vunpack.c.l.b16 %v4683
        %v4780 = vunpack.c.l.b16 %v4684
        %v4781 = vunpack.c.l.b16 %v4685
        %v4782 = vunpack.c.l.b16 %v4686
        %v4783 = vunpack.c.l.b16 %v4687
        %v4784 = vunpack.c.l.b16 %v4688
        %v4785 = vunpack.c.l.b16 %v4689
        %v4786 = vunpack.c.l.b16 %v4690
        %v4787 = vunpack.c.l.b16 %v4691
        %v4788 = vunpack.c.l.b16 %v4692
        %v4789 = vunpack.c.l.b16 %v4693
        %v4790 = vunpack.c.l.b16 %v4694
        %v4791 = vunpack.c.l.b16 %v4695
        %v4792 = vunpack.c.l.b16 %v4696
        %v4793 = vunpack.c.l.b16 %v4697
        %v4794 = vunpack.c.l.b16 %v4698
        %v4795 = vunpack.c.l.b16 %v4699
        %v4796 = vunpack.c.l.b16 %v4700
        %v4797 = vunpack.c.l.b16 %v4701
        %v4798 = vunpack.c.l.b16 %v4702
        %v4799 = vpack.c.b16 %v4752, %v4751
        %v4800 = vpack.c.b16 %v4754, %v4753
        %v4801 = vpack.c.b16 %v4756, %v4755
        %v4802 = vpack.c.b16 %v4758, %v4757
        %v4803 = vpack.c.b16 %v4760, %v4759
        %v4804 = vpack.c.b16 %v4762, %v4761
        %v4805 = vpack.c.b16 %v4764, %v4763
        %v4806 = vpack.c.b16 %v4766, %v4765
        %v4807 = vpack.c.b16 %v4768, %v4767
        %v4808 = vpack.c.b16 %v4770, %v4769
        %v4809 = vpack.c.b16 %v4772, %v4771
        %v4810 = vpack.c.b16 %v4774, %v4773
        %v4811 = vpack.c.b16 %v4776, %v4775
        %v4812 = vpack.c.b16 %v4778, %v4777
        %v4813 = vpack.c.b16 %v4780, %v4779
        %v4814 = vpack.c.b16 %v4782, %v4781
        %v4815 = vpack.c.b16 %v4784, %v4783
        %v4816 = vpack.c.b16 %v4786, %v4785
        %v4817 = vpack.c.b16 %v4788, %v4787
        %v4818 = vpack.c.b16 %v4790, %v4789
        %v4819 = vpack.c.b16 %v4792, %v4791
        %v4820 = vpack.c.b16 %v4794, %v4793
        %v4821 = vpack.c.b16 %v4796, %v4795
        %v4822 = vpack.c.b16 %v4798, %v4797
        %4847 = vmatprep.subr.bf16.mxu0 0
        %4848 = vmatpush1.bf16.msra.mxu0 %v4799
        %4849 = vmatprep.subr.bf16.mxu0 0
        %4850 = vmatpush1.bf16.msra.mxu0 %v4800
        %4851 = vmatprep.subr.bf16.mxu0 0
        %4852 = vmatpush1.bf16.msra.mxu0 %v4801
        %4853 = vmatprep.subr.bf16.mxu0 0
        %4854 = vmatpush1.bf16.msra.mxu0 %v4802
        %4855 = vmatprep.subr.bf16.mxu0 0
        %4856 = vmatpush1.bf16.msra.mxu0 %v4803
        %4857 = vmatprep.subr.bf16.mxu0 0
        %4858 = vmatpush1.bf16.msra.mxu0 %v4804
        %4859 = vmatprep.subr.bf16.mxu0 0
        %4860 = vmatpush1.bf16.msra.mxu0 %v4805
        %4861 = vmatprep.subr.bf16.mxu0 0
        %4862 = vmatpush1.bf16.msra.mxu0 %v4806
        %4863 = vmatprep.subr.bf16.mxu0 0
        %4864 = vmatpush1.bf16.msra.mxu0 %v4807
        %4865 = vmatprep.subr.bf16.mxu0 0
        %4866 = vmatpush1.bf16.msra.mxu0 %v4808
        %4867 = vmatprep.subr.bf16.mxu0 0
        %4868 = vmatpush1.bf16.msra.mxu0 %v4809
        %4869 = vmatprep.subr.bf16.mxu0 0
        %4870 = vmatpush1.bf16.msra.mxu0 %v4810
        %4871 = vmatprep.subr.bf16.mxu0 0
        %4872 = vmatpush1.bf16.msra.mxu0 %v4811
        %4873 = vmatprep.subr.bf16.mxu0 0
        %4874 = vmatpush1.bf16.msra.mxu0 %v4812
        %4875 = vmatprep.subr.bf16.mxu0 0
        %4876 = vmatpush1.bf16.msra.mxu0 %v4813
        %4877 = vmatprep.subr.bf16.mxu0 0
        %4878 = vmatpush1.bf16.msra.mxu0 %v4814
        %4879 = vmatprep.mubr.bf16.mxu0 %v4505
        %4880 = vmatmul.mubr.bf16.gmra.mrb[0].mxu0 %v4478
        %v4881 = vpop.f32.mrb[0].mxu0
        %v4882 = vadd.f32 0.0, %v4881
        %v4883 = vpop.f32.mrb[0].mxu0
        %v4884 = vpop.f32.mrb[0].mxu0
        %v4885 = vadd.f32 0.0, %v4884
        %v4886 = vpop.f32.mrb[0].mxu0
        %4887 = vmatprep.mubr.bf16.mxu0 %v4517
        %4888 = vmatmul.mubr.bf16.gmra.mrb[0].mxu0 %v4479
        %v4889 = vpop.f32.mrb[0].mxu0
        %v4890 = vadd.f32 0.0, %v4889
        %v4891 = vpop.f32.mrb[0].mxu0
        %v4892 = vpop.f32.mrb[0].mxu0
        %v4893 = vadd.f32 0.0, %v4892
        %v4894 = vpop.f32.mrb[0].mxu0
        %4895 = vmatprep.mubr.bf16.mxu0 %v4529
        %4896 = vmatmul.mubr.bf16.gmra.mrb[0].mxu0 %v4480
        %v4897 = vpop.f32.mrb[0].mxu0
        %v4898 = vadd.f32 0.0, %v4897
        %v4899 = vpop.f32.mrb[0].mxu0
        %v4900 = vpop.f32.mrb[0].mxu0
        %v4901 = vadd.f32 0.0, %v4900
        %v4902 = vpop.f32.mrb[0].mxu0
        %4903 = vmatprep.mubr.bf16.mxu0 %v4541
        %4904 = vmatmul.mubr.bf16.gmra.mrb[0].mxu0 %v4481
        %v4905 = vpop.f32.mrb[0].mxu0
        %v4906 = vadd.f32 0.0, %v4905
        %v4907 = vpop.f32.mrb[0].mxu0
        %v4908 = vpop.f32.mrb[0].mxu0
        %v4909 = vadd.f32 0.0, %v4908
        %v4910 = vpop.f32.mrb[0].mxu0
        %4911 = vmatprep.mubr.bf16.mxu0 %v4553
        %4912 = vmatmul.mubr.bf16.gmra.mrb[0].mxu0 %v4482
        %v4913 = vpop.f32.mrb[0].mxu0
        %v4914 = vadd.f32 0.0, %v4913
        %v4915 = vpop.f32.mrb[0].mxu0
        %v4916 = vpop.f32.mrb[0].mxu0
        %v4917 = vadd.f32 0.0, %v4916
        %v4918 = vpop.f32.mrb[0].mxu0
        %4919 = vmatprep.mubr.bf16.mxu0 %v4565
        %4920 = vmatmul.mubr.bf16.gmra.mrb[0].mxu0 %v4483
        %v4921 = vpop.f32.mrb[0].mxu0
        %v4922 = vadd.f32 0.0, %v4921
        %v4923 = vpop.f32.mrb[0].mxu0
        %v4924 = vpop.f32.mrb[0].mxu0
        %v4925 = vadd.f32 0.0, %v4924
        %v4926 = vpop.f32.mrb[0].mxu0
        %4927 = vmatprep.mubr.bf16.mxu0 %v4577
        %4928 = vmatmul.mubr.bf16.gmra.mrb[0].mxu0 %v4484
        %v4929 = vpop.f32.mrb[0].mxu0
        %v4930 = vadd.f32 0.0, %v4929
        %v4931 = vpop.f32.mrb[0].mxu0
        %v4932 = vpop.f32.mrb[0].mxu0
        %v4933 = vadd.f32 0.0, %v4932
        %v4934 = vpop.f32.mrb[0].mxu0
        %4935 = vmatprep.mubr.bf16.mxu0 %v4589
        %4936 = vmatmul.mubr.bf16.gmra.mrb[0].mxu0 %v4485
        %v4937 = vpop.f32.mrb[0].mxu0
        %v4938 = vadd.f32 0.0, %v4937
        %v4939 = vpop.f32.mrb[0].mxu0
        %v4940 = vpop.f32.mrb[0].mxu0
        %v4941 = vadd.f32 0.0, %v4940
        %v4942 = vpop.f32.mrb[0].mxu0
        %4943 = vdwg.mxu0
        %4944 = vmatprep.subr.bf16.mxu0 0
        %4945 = vmatpush1.bf16.msra.mxu0 %v4815
        %4946 = vmatprep.subr.bf16.mxu0 0
        %4947 = vmatpush1.bf16.msra.mxu0 %v4816
        %4948 = vmatprep.subr.bf16.mxu0 0
        %4949 = vmatpush1.bf16.msra.mxu0 %v4817
        %4950 = vmatprep.subr.bf16.mxu0 0
        %4951 = vmatpush1.bf16.msra.mxu0 %v4818
        %4952 = vmatprep.subr.bf16.mxu0 0
        %4953 = vmatpush1.bf16.msra.mxu0 %v4819
        %4954 = vmatprep.subr.bf16.mxu0 0
        %4955 = vmatpush1.bf16.msra.mxu0 %v4820
        %4956 = vmatprep.subr.bf16.mxu0 0
        %4957 = vmatpush1.bf16.msra.mxu0 %v4821
        %4958 = vmatprep.subr.bf16.mxu0 0
        %4959 = vmatpush1.bf16.msra.mxu0 %v4822
        %4960 = vmatprep.subr.bf16.mxu0 0
        %4961 = vmatpush1.bf16.msra.mxu0 0
        %4962 = vmatprep.subr.bf16.mxu0 0
        %4963 = vmatpush1.bf16.msra.mxu0 0
        %4964 = vmatprep.subr.bf16.mxu0 0
        %4965 = vmatpush1.bf16.msra.mxu0 0
        %4966 = vmatprep.subr.bf16.mxu0 0
        %4967 = vmatpush1.bf16.msra.mxu0 0
        %4968 = vmatprep.subr.bf16.mxu0 0
        %4969 = vmatpush1.bf16.msra.mxu0 0
        %4970 = vmatprep.subr.bf16.mxu0 0
        %4971 = vmatpush1.bf16.msra.mxu0 0
        %4972 = vmatprep.subr.bf16.mxu0 0
        %4973 = vmatpush1.bf16.msra.mxu0 0
        %4974 = vmatprep.subr.bf16.mxu0 0
        %4975 = vmatpush1.bf16.msra.mxu0 0
        %4976 = vmatprep.mubr.bf16.mxu0 0
        %4977 = vmatmul.mubr.bf16.gmra.mrb[0].mxu0 %v4624
        %v4978 = vpop.f32.mrb[0].mxu0
        %v4979 = vadd.f32 %v4882, %v4978
        %v4980 = vpop.f32.mrb[0].mxu0
        %v4981 = vpop.f32.mrb[0].mxu0
        %v4982 = vadd.f32 %v4885, %v4981
        %v4983 = vpop.f32.mrb[0].mxu0
        %4984 = vmatprep.mubr.bf16.mxu0 0
        %4985 = vmatmul.mubr.bf16.gmra.mrb[0].mxu0 %v4627
        %v4986 = vpop.f32.mrb[0].mxu0
        %v4987 = vadd.f32 %v4890, %v4986
        %v4988 = vpop.f32.mrb[0].mxu0
        %v4989 = vpop.f32.mrb[0].mxu0
        %v4990 = vadd.f32 %v4893, %v4989
        %v4991 = vpop.f32.mrb[0].mxu0
        %4992 = vmatprep.mubr.bf16.mxu0 0
        %4993 = vmatmul.mubr.bf16.gmra.mrb[0].mxu0 %v4630
        %v4994 = vpop.f32.mrb[0].mxu0
        %v4995 = vadd.f32 %v4898, %v4994
        %v4996 = vpop.f32.mrb[0].mxu0
        %v4997 = vpop.f32.mrb[0].mxu0
        %v4998 = vadd.f32 %v4901, %v4997
        %v4999 = vpop.f32.mrb[0].mxu0
        %5000 = vmatprep.mubr.bf16.mxu0 0
        %5001 = vmatmul.mubr.bf16.gmra.mrb[0].mxu0 %v4633
        %v5002 = vpop.f32.mrb[0].mxu0
        %v5003 = vadd.f32 %v4906, %v5002
        %v5004 = vpop.f32.mrb[0].mxu0
        %v5005 = vpop.f32.mrb[0].mxu0
        %v5006 = vadd.f32 %v4909, %v5005
        %v5007 = vpop.f32.mrb[0].mxu0
        %5008 = vmatprep.mubr.bf16.mxu0 0
        %5009 = vmatmul.mubr.bf16.gmra.mrb[0].mxu0 %v4636
        %v5010 = vpop.f32.mrb[0].mxu0
        %v5011 = vadd.f32 %v4914, %v5010
        %v5012 = vpop.f32.mrb[0].mxu0
        %v5013 = vpop.f32.mrb[0].mxu0
        %v5014 = vadd.f32 %v4917, %v5013
        %v5015 = vpop.f32.mrb[0].mxu0
        %5016 = vmatprep.mubr.bf16.mxu0 0
        %5017 = vmatmul.mubr.bf16.gmra.mrb[0].mxu0 %v4639
        %v5018 = vpop.f32.mrb[0].mxu0
        %v5019 = vadd.f32 %v4922, %v5018
        %v5020 = vpop.f32.mrb[0].mxu0
        %v5021 = vpop.f32.mrb[0].mxu0
        %v5022 = vadd.f32 %v4925, %v5021
        %v5023 = vpop.f32.mrb[0].mxu0
        %5024 = vmatprep.mubr.bf16.mxu0 0
        %5025 = vmatmul.mubr.bf16.gmra.mrb[0].mxu0 %v4642
        %v5026 = vpop.f32.mrb[0].mxu0
        %v5027 = vadd.f32 %v4930, %v5026
        %v5028 = vpop.f32.mrb[0].mxu0
        %v5029 = vpop.f32.mrb[0].mxu0
        %v5030 = vadd.f32 %v4933, %v5029
        %v5031 = vpop.f32.mrb[0].mxu0
        %5032 = vmatprep.mubr.bf16.mxu0 0
        %5033 = vmatmul.mubr.bf16.gmra.mrb[0].mxu0 %v4645
        %v5034 = vpop.f32.mrb[0].mxu0
        %v5035 = vadd.f32 %v4938, %v5034
        %v5036 = vpop.f32.mrb[0].mxu0
        %v5037 = vpop.f32.mrb[0].mxu0
        %v5038 = vadd.f32 %v4941, %v5037
        %v5039 = vpop.f32.mrb[0].mxu0
        %5040 = vdwg.mxu0
        %v5089 = vunpack.c.l.b16 %v4430
        %v5090 = vunpack.c.l.b16 %v4431
        %v5091 = vunpack.c.l.b16 %v4432
        %v5092 = vunpack.c.l.b16 %v4433
        %v5093 = vunpack.c.l.b16 %v4434
        %v5094 = vunpack.c.l.b16 %v4435
        %v5095 = vunpack.c.l.b16 %v4436
        %v5096 = vunpack.c.l.b16 %v4437
        %v5097 = vunpack.c.l.b16 %v4438
        %v5098 = vunpack.c.l.b16 %v4439
        %v5099 = vunpack.c.l.b16 %v4440
        %v5100 = vunpack.c.l.b16 %v4441
        %v5101 = vunpack.c.l.b16 %v4442
        %v5102 = vunpack.c.l.b16 %v4443
        %v5103 = vunpack.c.l.b16 %v4444
        %v5104 = vunpack.c.l.b16 %v4445
        %v5105 = vunpack.c.l.b16 %v4446
        %v5106 = vunpack.c.l.b16 %v4447
        %v5107 = vunpack.c.l.b16 %v4448
        %v5108 = vunpack.c.l.b16 %v4449
        %v5109 = vunpack.c.l.b16 %v4450
        %v5110 = vunpack.c.l.b16 %v4451
        %v5111 = vunpack.c.l.b16 %v4452
        %v5112 = vunpack.c.l.b16 %v4453
        %v5113 = vunpack.c.l.b16 %v4454
        %v5114 = vunpack.c.l.b16 %v4455
        %v5115 = vunpack.c.l.b16 %v4456
        %v5116 = vunpack.c.l.b16 %v4457
        %v5117 = vunpack.c.l.b16 %v4458
        %v5118 = vunpack.c.l.b16 %v4459
        %v5119 = vunpack.c.l.b16 %v4460
        %v5120 = vunpack.c.l.b16 %v4461
        %v5121 = vunpack.c.l.b16 %v4462
        %v5122 = vunpack.c.l.b16 %v4463
        %v5123 = vunpack.c.l.b16 %v4464
        %v5124 = vunpack.c.l.b16 %v4465
        %v5125 = vunpack.c.l.b16 %v4466
        %v5126 = vunpack.c.l.b16 %v4467
        %v5127 = vunpack.c.l.b16 %v4468
        %v5128 = vunpack.c.l.b16 %v4469
        %v5129 = vunpack.c.l.b16 %v4470
        %v5130 = vunpack.c.l.b16 %v4471
        %v5131 = vunpack.c.l.b16 %v4472
        %v5132 = vunpack.c.l.b16 %v4473
        %v5133 = vunpack.c.l.b16 %v4474
        %v5134 = vunpack.c.l.b16 %v4475
        %v5135 = vunpack.c.l.b16 %v4476
        %v5136 = vunpack.c.l.b16 %v4477
        %v5137 = vpack.c.b16 %v5090, %v5089
        %v5138 = vpack.c.b16 %v5092, %v5091
        %v5139 = vpack.c.b16 %v5094, %v5093
        %v5140 = vpack.c.b16 %v5096, %v5095
        %v5141 = vpack.c.b16 %v5098, %v5097
        %v5142 = vpack.c.b16 %v5100, %v5099
        %v5143 = vpack.c.b16 %v5102, %v5101
        %v5144 = vpack.c.b16 %v5104, %v5103
        %v5145 = vpack.c.b16 %v5106, %v5105
        %v5146 = vpack.c.b16 %v5108, %v5107
        %v5147 = vpack.c.b16 %v5110, %v5109
        %v5148 = vpack.c.b16 %v5112, %v5111
        %v5149 = vpack.c.b16 %v5114, %v5113
        %v5150 = vpack.c.b16 %v5116, %v5115
        %v5151 = vpack.c.b16 %v5118, %v5117
        %v5152 = vpack.c.b16 %v5120, %v5119
        %v5153 = vpack.c.b16 %v5122, %v5121
        %v5154 = vpack.c.b16 %v5124, %v5123
        %v5155 = vpack.c.b16 %v5126, %v5125
        %v5156 = vpack.c.b16 %v5128, %v5127
        %v5157 = vpack.c.b16 %v5130, %v5129
        %v5158 = vpack.c.b16 %v5132, %v5131
        %v5159 = vpack.c.b16 %v5134, %v5133
        %v5160 = vpack.c.b16 %v5136, %v5135
        %5185 = vmatprep.subr.bf16.mxu0 0
        %5186 = vmatpush1.bf16.msra.mxu0 %v5137
        %5187 = vmatprep.subr.bf16.mxu0 0
        %5188 = vmatpush1.bf16.msra.mxu0 %v5138
        %5189 = vmatprep.subr.bf16.mxu0 0
        %5190 = vmatpush1.bf16.msra.mxu0 %v5139
        %5191 = vmatprep.subr.bf16.mxu0 0
        %5192 = vmatpush1.bf16.msra.mxu0 %v5140
        %5193 = vmatprep.subr.bf16.mxu0 0
        %5194 = vmatpush1.bf16.msra.mxu0 %v5141
        %5195 = vmatprep.subr.bf16.mxu0 0
        %5196 = vmatpush1.bf16.msra.mxu0 %v5142
        %5197 = vmatprep.subr.bf16.mxu0 0
        %5198 = vmatpush1.bf16.msra.mxu0 %v5143
        %5199 = vmatprep.subr.bf16.mxu0 0
        %5200 = vmatpush1.bf16.msra.mxu0 %v5144
        %5201 = vmatprep.subr.bf16.mxu0 0
        %5202 = vmatpush1.bf16.msra.mxu0 %v5145
        %5203 = vmatprep.subr.bf16.mxu0 0
        %5204 = vmatpush1.bf16.msra.mxu0 %v5146
        %5205 = vmatprep.subr.bf16.mxu0 0
        %5206 = vmatpush1.bf16.msra.mxu0 %v5147
        %5207 = vmatprep.subr.bf16.mxu0 0
        %5208 = vmatpush1.bf16.msra.mxu0 %v5148
        %5209 = vmatprep.subr.bf16.mxu0 0
        %5210 = vmatpush1.bf16.msra.mxu0 %v5149
        %5211 = vmatprep.subr.bf16.mxu0 0
        %5212 = vmatpush1.bf16.msra.mxu0 %v5150
        %5213 = vmatprep.subr.bf16.mxu0 0
        %5214 = vmatpush1.bf16.msra.mxu0 %v5151
        %5215 = vmatprep.subr.bf16.mxu0 0
        %5216 = vmatpush1.bf16.msra.mxu0 %v5152
        %5217 = vmatprep.mubr.bf16.mxu0 %v4281
        %5218 = vmatmul.mubr.bf16.gmra.mrb[0].mxu0 %v4254
        %v5219 = vpop.f32.mrb[0].mxu0
        %v5220 = vadd.f32 %v4979, %v5219
        %v5221 = vpop.f32.mrb[0].mxu0
        %v5222 = vpop.f32.mrb[0].mxu0
        %v5223 = vadd.f32 %v4982, %v5222
        %v5224 = vpop.f32.mrb[0].mxu0
        %5225 = vmatprep.mubr.bf16.mxu0 %v4293
        %5226 = vmatmul.mubr.bf16.gmra.mrb[0].mxu0 %v4255
        %v5227 = vpop.f32.mrb[0].mxu0
        %v5228 = vadd.f32 %v4987, %v5227
        %v5229 = vpop.f32.mrb[0].mxu0
        %v5230 = vpop.f32.mrb[0].mxu0
        %v5231 = vadd.f32 %v4990, %v5230
        %v5232 = vpop.f32.mrb[0].mxu0
        %5233 = vmatprep.mubr.bf16.mxu0 %v4305
        %5234 = vmatmul.mubr.bf16.gmra.mrb[0].mxu0 %v4256
        %v5235 = vpop.f32.mrb[0].mxu0
        %v5236 = vadd.f32 %v4995, %v5235
        %v5237 = vpop.f32.mrb[0].mxu0
        %v5238 = vpop.f32.mrb[0].mxu0
        %v5239 = vadd.f32 %v4998, %v5238
        %v5240 = vpop.f32.mrb[0].mxu0
        %5241 = vmatprep.mubr.bf16.mxu0 %v4317
        %5242 = vmatmul.mubr.bf16.gmra.mrb[0].mxu0 %v4257
        %v5243 = vpop.f32.mrb[0].mxu0
        %v5244 = vadd.f32 %v5003, %v5243
        %v5245 = vpop.f32.mrb[0].mxu0
        %v5246 = vpop.f32.mrb[0].mxu0
        %v5247 = vadd.f32 %v5006, %v5246
        %v5248 = vpop.f32.mrb[0].mxu0
        %5249 = vmatprep.mubr.bf16.mxu0 %v4329
        %5250 = vmatmul.mubr.bf16.gmra.mrb[0].mxu0 %v4258
        %v5251 = vpop.f32.mrb[0].mxu0
        %v5252 = vadd.f32 %v5011, %v5251
        %v5253 = vpop.f32.mrb[0].mxu0
        %v5254 = vpop.f32.mrb[0].mxu0
        %v5255 = vadd.f32 %v5014, %v5254
        %v5256 = vpop.f32.mrb[0].mxu0
        %5257 = vmatprep.mubr.bf16.mxu0 %v4341
        %5258 = vmatmul.mubr.bf16.gmra.mrb[0].mxu0 %v4259
        %v5259 = vpop.f32.mrb[0].mxu0
        %v5260 = vadd.f32 %v5019, %v5259
        %v5261 = vpop.f32.mrb[0].mxu0
        %v5262 = vpop.f32.mrb[0].mxu0
        %v5263 = vadd.f32 %v5022, %v5262
        %v5264 = vpop.f32.mrb[0].mxu0
        %5265 = vmatprep.mubr.bf16.mxu0 %v4353
        %5266 = vmatmul.mubr.bf16.gmra.mrb[0].mxu0 %v4260
        %v5267 = vpop.f32.mrb[0].mxu0
        %v5268 = vadd.f32 %v5027, %v5267
        %v5269 = vpop.f32.mrb[0].mxu0
        %v5270 = vpop.f32.mrb[0].mxu0
        %v5271 = vadd.f32 %v5030, %v5270
        %v5272 = vpop.f32.mrb[0].mxu0
        %5273 = vmatprep.mubr.bf16.mxu0 %v4365
        %5274 = vmatmul.mubr.bf16.gmra.mrb[0].mxu0 %v4261
        %v5275 = vpop.f32.mrb[0].mxu0
        %v5276 = vadd.f32 %v5035, %v5275
        %v5277 = vpop.f32.mrb[0].mxu0
        %v5278 = vpop.f32.mrb[0].mxu0
        %v5279 = vadd.f32 %v5038, %v5278
        %v5280 = vpop.f32.mrb[0].mxu0
        %5281 = vdwg.mxu0
        %5282 = vmatprep.subr.bf16.mxu0 0
        %5283 = vmatpush1.bf16.msra.mxu0 %v5153
        %5284 = vmatprep.subr.bf16.mxu0 0
        %5285 = vmatpush1.bf16.msra.mxu0 %v5154
        %5286 = vmatprep.subr.bf16.mxu0 0
        %5287 = vmatpush1.bf16.msra.mxu0 %v5155
        %5288 = vmatprep.subr.bf16.mxu0 0
        %5289 = vmatpush1.bf16.msra.mxu0 %v5156
        %5290 = vmatprep.subr.bf16.mxu0 0
        %5291 = vmatpush1.bf16.msra.mxu0 %v5157
        %5292 = vmatprep.subr.bf16.mxu0 0
        %5293 = vmatpush1.bf16.msra.mxu0 %v5158
        %5294 = vmatprep.subr.bf16.mxu0 0
        %5295 = vmatpush1.bf16.msra.mxu0 %v5159
        %5296 = vmatprep.subr.bf16.mxu0 0
        %5297 = vmatpush1.bf16.msra.mxu0 %v5160
        %5298 = vmatprep.subr.bf16.mxu0 0
        %5299 = vmatpush1.bf16.msra.mxu0 0
        %5300 = vmatprep.subr.bf16.mxu0 0
        %5301 = vmatpush1.bf16.msra.mxu0 0
        %5302 = vmatprep.subr.bf16.mxu0 0
        %5303 = vmatpush1.bf16.msra.mxu0 0
        %5304 = vmatprep.subr.bf16.mxu0 0
        %5305 = vmatpush1.bf16.msra.mxu0 0
        %5306 = vmatprep.subr.bf16.mxu0 0
        %5307 = vmatpush1.bf16.msra.mxu0 0
        %5308 = vmatprep.subr.bf16.mxu0 0
        %5309 = vmatpush1.bf16.msra.mxu0 0
        %5310 = vmatprep.subr.bf16.mxu0 0
        %5311 = vmatpush1.bf16.msra.mxu0 0
        %5312 = vmatprep.subr.bf16.mxu0 0
        %5313 = vmatpush1.bf16.msra.mxu0 0
        %5314 = vmatprep.mubr.bf16.mxu0 0
        %5315 = vmatmul.mubr.bf16.gmra.mrb[0].mxu0 %v4400
        %v5316 = vpop.f32.mrb[0].mxu0
        %v5317 = vadd.f32 %v5220, %v5316
        %v5318 = vpop.f32.mrb[0].mxu0
        %v5319 = vpop.f32.mrb[0].mxu0
        %v5320 = vadd.f32 %v5223, %v5319
        %v5321 = vpop.f32.mrb[0].mxu0
        %5322 = vmatprep.mubr.bf16.mxu0 0
        %5323 = vmatmul.mubr.bf16.gmra.mrb[0].mxu0 %v4403
        %v5324 = vpop.f32.mrb[0].mxu0
        %v5325 = vadd.f32 %v5228, %v5324
        %v5326 = vpop.f32.mrb[0].mxu0
        %v5327 = vpop.f32.mrb[0].mxu0
        %v5328 = vadd.f32 %v5231, %v5327
        %v5329 = vpop.f32.mrb[0].mxu0
        %5330 = vmatprep.mubr.bf16.mxu0 0
        %5331 = vmatmul.mubr.bf16.gmra.mrb[0].mxu0 %v4406
        %v5332 = vpop.f32.mrb[0].mxu0
        %v5333 = vadd.f32 %v5236, %v5332
        %v5334 = vpop.f32.mrb[0].mxu0
        %v5335 = vpop.f32.mrb[0].mxu0
        %v5336 = vadd.f32 %v5239, %v5335
        %v5337 = vpop.f32.mrb[0].mxu0
        %5338 = vmatprep.mubr.bf16.mxu0 0
        %5339 = vmatmul.mubr.bf16.gmra.mrb[0].mxu0 %v4409
        %v5340 = vpop.f32.mrb[0].mxu0
        %v5341 = vadd.f32 %v5244, %v5340
        %v5342 = vpop.f32.mrb[0].mxu0
        %v5343 = vpop.f32.mrb[0].mxu0
        %v5344 = vadd.f32 %v5247, %v5343
        %v5345 = vpop.f32.mrb[0].mxu0
        %5346 = vmatprep.mubr.bf16.mxu0 0
        %5347 = vmatmul.mubr.bf16.gmra.mrb[0].mxu0 %v4412
        %v5348 = vpop.f32.mrb[0].mxu0
        %v5349 = vadd.f32 %v5252, %v5348
        %v5350 = vpop.f32.mrb[0].mxu0
        %v5351 = vpop.f32.mrb[0].mxu0
        %v5352 = vadd.f32 %v5255, %v5351
        %v5353 = vpop.f32.mrb[0].mxu0
        %5354 = vmatprep.mubr.bf16.mxu0 0
        %5355 = vmatmul.mubr.bf16.gmra.mrb[0].mxu0 %v4415
        %v5356 = vpop.f32.mrb[0].mxu0
        %v5357 = vadd.f32 %v5260, %v5356
        %v5358 = vpop.f32.mrb[0].mxu0
        %v5359 = vpop.f32.mrb[0].mxu0
        %v5360 = vadd.f32 %v5263, %v5359
        %v5361 = vpop.f32.mrb[0].mxu0
        %5362 = vmatprep.mubr.bf16.mxu0 0
        %5363 = vmatmul.mubr.bf16.gmra.mrb[0].mxu0 %v4418
        %v5364 = vpop.f32.mrb[0].mxu0
        %v5365 = vadd.f32 %v5268, %v5364
        %v5366 = vpop.f32.mrb[0].mxu0
        %v5367 = vpop.f32.mrb[0].mxu0
        %v5368 = vadd.f32 %v5271, %v5367
        %v5369 = vpop.f32.mrb[0].mxu0
        %5370 = vmatprep.mubr.bf16.mxu0 0
        %5371 = vmatmul.mubr.bf16.gmra.mrb[0].mxu0 %v4421
        %v5372 = vpop.f32.mrb[0].mxu0
        %v5373 = vadd.f32 %v5276, %v5372
        %v5374 = vpop.f32.mrb[0].mxu0
        %v5375 = vpop.f32.mrb[0].mxu0
        %v5376 = vadd.f32 %v5279, %v5375
        %v5377 = vpop.f32.mrb[0].mxu0
        %5378 = vdwg.mxu0
        %s5379 = scalar_lea.vmem [#allocation3], 32
        %v5380 = vld [vmem:[%s5379] sm:$0xff]
        %v5381 = vld [vmem:[%s5379 + $0x10] sm:$0xff]
        %v5382 = vld [vmem:[%s5379 + $0x20] sm:$0xff]
        %v5383 = vld [vmem:[%s5379 + $0x30] sm:$0xff]
        %v5384 = vld [vmem:[%s5379 + $0x40] sm:$0xff]
        %v5385 = vld [vmem:[%s5379 + $0x50] sm:$0xff]
        %v5386 = vld [vmem:[%s5379 + $0x60] sm:$0xff]
        %v5387 = vld [vmem:[%s5379 + $0x70] sm:$0xff]
        %v5388 = vld [vmem:[%s5379 + $0x8] sm:$0x1]
        %v5389 = vld [vmem:[%s5379 + $0x18] sm:$0x1]
        %v5390 = vld [vmem:[%s5379 + $0x28] sm:$0x1]
        %v5391 = vld [vmem:[%s5379 + $0x38] sm:$0x1]
        %v5392 = vld [vmem:[%s5379 + $0x48] sm:$0x1]
        %v5393 = vld [vmem:[%s5379 + $0x58] sm:$0x1]
        %v5394 = vld [vmem:[%s5379 + $0x68] sm:$0x1]
        %v5395 = vld [vmem:[%s5379 + $0x78] sm:$0x1]
        %v5397 = vshrl.u32 %v5380, 16
        %v5399 = vshll.u32 %v5380, 16
        %v5401 = vrot.slane %v5399, 1
        %v5402 = vor.u32 %v5397, %v5401
        %v5404 = vshll.u32 %v5388, 16
        %v5406 = vrot.slane %v5404, 1
        %v5407 = vsel %vm562, %v5402, %v5406
        %v5409 = vshrl.u32 %v5381, 16
        %v5411 = vshll.u32 %v5381, 16
        %v5413 = vrot.slane %v5411, 1
        %v5414 = vor.u32 %v5409, %v5413
        %v5416 = vshll.u32 %v5389, 16
        %v5418 = vrot.slane %v5416, 1
        %v5419 = vsel %vm562, %v5414, %v5418
        %v5421 = vshrl.u32 %v5382, 16
        %v5423 = vshll.u32 %v5382, 16
        %v5425 = vrot.slane %v5423, 1
        %v5426 = vor.u32 %v5421, %v5425
        %v5428 = vshll.u32 %v5390, 16
        %v5430 = vrot.slane %v5428, 1
        %v5431 = vsel %vm562, %v5426, %v5430
        %v5433 = vshrl.u32 %v5383, 16
        %v5435 = vshll.u32 %v5383, 16
        %v5437 = vrot.slane %v5435, 1
        %v5438 = vor.u32 %v5433, %v5437
        %v5440 = vshll.u32 %v5391, 16
        %v5442 = vrot.slane %v5440, 1
        %v5443 = vsel %vm562, %v5438, %v5442
        %v5445 = vshrl.u32 %v5384, 16
        %v5447 = vshll.u32 %v5384, 16
        %v5449 = vrot.slane %v5447, 1
        %v5450 = vor.u32 %v5445, %v5449
        %v5452 = vshll.u32 %v5392, 16
        %v5454 = vrot.slane %v5452, 1
        %v5455 = vsel %vm562, %v5450, %v5454
        %v5457 = vshrl.u32 %v5385, 16
        %v5459 = vshll.u32 %v5385, 16
        %v5461 = vrot.slane %v5459, 1
        %v5462 = vor.u32 %v5457, %v5461
        %v5464 = vshll.u32 %v5393, 16
        %v5466 = vrot.slane %v5464, 1
        %v5467 = vsel %vm562, %v5462, %v5466
        %v5469 = vshrl.u32 %v5386, 16
        %v5471 = vshll.u32 %v5386, 16
        %v5473 = vrot.slane %v5471, 1
        %v5474 = vor.u32 %v5469, %v5473
        %v5476 = vshll.u32 %v5394, 16
        %v5478 = vrot.slane %v5476, 1
        %v5479 = vsel %vm562, %v5474, %v5478
        %v5481 = vshrl.u32 %v5387, 16
        %v5483 = vshll.u32 %v5387, 16
        %v5485 = vrot.slane %v5483, 1
        %v5486 = vor.u32 %v5481, %v5485
        %v5488 = vshll.u32 %v5395, 16
        %v5490 = vrot.slane %v5488, 1
        %v5491 = vsel %vm562, %v5486, %v5490
        %v5500 = vld [vmem:[%s5379] sm:$0xfe]
        %v5501 = vld [vmem:[%s5379 + $0x10] sm:$0xfe]
        %v5502 = vld [vmem:[%s5379 + $0x20] sm:$0xfe]
        %v5503 = vld [vmem:[%s5379 + $0x30] sm:$0xfe]
        %v5504 = vld [vmem:[%s5379 + $0x40] sm:$0xfe]
        %v5505 = vld [vmem:[%s5379 + $0x50] sm:$0xfe]
        %v5506 = vld [vmem:[%s5379 + $0x60] sm:$0xfe]
        %v5507 = vld [vmem:[%s5379 + $0x70] sm:$0xfe]
        %v5524 = vrot.slane %v5500, 1
        %v5525 = vrot.slane %v5388, 1
        %v5526 = vsel %vm691, %v5524, %v5525
        %v5527 = vrot.slane %v5501, 1
        %v5528 = vrot.slane %v5389, 1
        %v5529 = vsel %vm691, %v5527, %v5528
        %v5530 = vrot.slane %v5502, 1
        %v5531 = vrot.slane %v5390, 1
        %v5532 = vsel %vm691, %v5530, %v5531
        %v5533 = vrot.slane %v5503, 1
        %v5534 = vrot.slane %v5391, 1
        %v5535 = vsel %vm691, %v5533, %v5534
        %v5536 = vrot.slane %v5504, 1
        %v5537 = vrot.slane %v5392, 1
        %v5538 = vsel %vm691, %v5536, %v5537
        %v5539 = vrot.slane %v5505, 1
        %v5540 = vrot.slane %v5393, 1
        %v5541 = vsel %vm691, %v5539, %v5540
        %v5542 = vrot.slane %v5506, 1
        %v5543 = vrot.slane %v5394, 1
        %v5544 = vsel %vm691, %v5542, %v5543
        %v5545 = vrot.slane %v5507, 1
        %v5546 = vrot.slane %v5395, 1
        %v5547 = vsel %vm691, %v5545, %v5546
        %s5556 = scalar_lea.vmem [#allocation9], 384
        %v5557 = vld [vmem:[%s5556] sm:$0xf]
        %v5558 = vld [vmem:[%s5556 + $0x4] sm:$0xf]
        %v5559 = vld [vmem:[%s5556 + $0x8] sm:$0xf]
        %v5560 = vld [vmem:[%s5556 + $0xc] sm:$0xf]
        %v5561 = vld [vmem:[%s5556 + $0x10] sm:$0xf]
        %v5562 = vld [vmem:[%s5556 + $0x14] sm:$0xf]
        %v5563 = vld [vmem:[%s5556 + $0x18] sm:$0xf]
        %v5564 = vld [vmem:[%s5556 + $0x1c] sm:$0xf]
        %v5565 = vld [vmem:[%s5556 + $0x20] sm:$0xf]
        %v5566 = vld [vmem:[%s5556 + $0x24] sm:$0xf]
        %v5567 = vld [vmem:[%s5556 + $0x28] sm:$0xf]
        %v5568 = vld [vmem:[%s5556 + $0x2c] sm:$0xf]
        %v5569 = vld [vmem:[%s5556 + $0x30] sm:$0xf]
        %v5570 = vld [vmem:[%s5556 + $0x34] sm:$0xf]
        %v5571 = vld [vmem:[%s5556 + $0x38] sm:$0xf]
        %v5572 = vld [vmem:[%s5556 + $0x3c] sm:$0xf]
        %v5573 = vld [vmem:[%s5556 + $0x40] sm:$0xf]
        %v5574 = vld [vmem:[%s5556 + $0x44] sm:$0xf]
        %v5575 = vld [vmem:[%s5556 + $0x48] sm:$0xf]
        %v5576 = vld [vmem:[%s5556 + $0x4c] sm:$0xf]
        %v5577 = vld [vmem:[%s5556 + $0x50] sm:$0xf]
        %v5578 = vld [vmem:[%s5556 + $0x54] sm:$0xf]
        %v5579 = vld [vmem:[%s5556 + $0x58] sm:$0xf]
        %v5580 = vld [vmem:[%s5556 + $0x5c] sm:$0xf]
        %v5581 = vld [vmem:[%s5556 + $0x60] sm:$0xf]
        %v5582 = vld [vmem:[%s5556 + $0x64] sm:$0xf]
        %v5583 = vld [vmem:[%s5556 + $0x68] sm:$0xf]
        %v5584 = vld [vmem:[%s5556 + $0x6c] sm:$0xf]
        %v5585 = vld [vmem:[%s5556 + $0x70] sm:$0xf]
        %v5586 = vld [vmem:[%s5556 + $0x74] sm:$0xf]
        %v5587 = vld [vmem:[%s5556 + $0x78] sm:$0xf]
        %v5588 = vld [vmem:[%s5556 + $0x7c] sm:$0xf]
        %v5589 = vld [vmem:[%s5556 + $0x80] sm:$0xf]
        %v5590 = vld [vmem:[%s5556 + $0x84] sm:$0xf]
        %v5591 = vld [vmem:[%s5556 + $0x88] sm:$0xf]
        %v5592 = vld [vmem:[%s5556 + $0x8c] sm:$0xf]
        %v5593 = vld [vmem:[%s5556 + $0x90] sm:$0xf]
        %v5594 = vld [vmem:[%s5556 + $0x94] sm:$0xf]
        %v5595 = vld [vmem:[%s5556 + $0x98] sm:$0xf]
        %v5596 = vld [vmem:[%s5556 + $0x9c] sm:$0xf]
        %v5597 = vld [vmem:[%s5556 + $0xa0] sm:$0xf]
        %v5598 = vld [vmem:[%s5556 + $0xa4] sm:$0xf]
        %v5599 = vld [vmem:[%s5556 + $0xa8] sm:$0xf]
        %v5600 = vld [vmem:[%s5556 + $0xac] sm:$0xf]
        %v5601 = vld [vmem:[%s5556 + $0xb0] sm:$0xf]
        %v5602 = vld [vmem:[%s5556 + $0xb4] sm:$0xf]
        %v5603 = vld [vmem:[%s5556 + $0xb8] sm:$0xf]
        %v5604 = vld [vmem:[%s5556 + $0xbc] sm:$0xf]
        %v5653 = vunpack.c.l.b16 %v5557
        %v5654 = vunpack.c.l.b16 %v5558
        %v5655 = vunpack.c.l.b16 %v5559
        %v5656 = vunpack.c.l.b16 %v5560
        %v5657 = vunpack.c.l.b16 %v5561
        %v5658 = vunpack.c.l.b16 %v5562
        %v5659 = vunpack.c.l.b16 %v5563
        %v5660 = vunpack.c.l.b16 %v5564
        %v5661 = vunpack.c.l.b16 %v5565
        %v5662 = vunpack.c.l.b16 %v5566
        %v5663 = vunpack.c.l.b16 %v5567
        %v5664 = vunpack.c.l.b16 %v5568
        %v5665 = vunpack.c.l.b16 %v5569
        %v5666 = vunpack.c.l.b16 %v5570
        %v5667 = vunpack.c.l.b16 %v5571
        %v5668 = vunpack.c.l.b16 %v5572
        %v5669 = vunpack.c.l.b16 %v5573
        %v5670 = vunpack.c.l.b16 %v5574
        %v5671 = vunpack.c.l.b16 %v5575
        %v5672 = vunpack.c.l.b16 %v5576
        %v5673 = vunpack.c.l.b16 %v5577
        %v5674 = vunpack.c.l.b16 %v5578
        %v5675 = vunpack.c.l.b16 %v5579
        %v5676 = vunpack.c.l.b16 %v5580
        %v5677 = vunpack.c.l.b16 %v5581
        %v5678 = vunpack.c.l.b16 %v5582
        %v5679 = vunpack.c.l.b16 %v5583
        %v5680 = vunpack.c.l.b16 %v5584
        %v5681 = vunpack.c.l.b16 %v5585
        %v5682 = vunpack.c.l.b16 %v5586
        %v5683 = vunpack.c.l.b16 %v5587
        %v5684 = vunpack.c.l.b16 %v5588
        %v5685 = vunpack.c.l.b16 %v5589
        %v5686 = vunpack.c.l.b16 %v5590
        %v5687 = vunpack.c.l.b16 %v5591
        %v5688 = vunpack.c.l.b16 %v5592
        %v5689 = vunpack.c.l.b16 %v5593
        %v5690 = vunpack.c.l.b16 %v5594
        %v5691 = vunpack.c.l.b16 %v5595
        %v5692 = vunpack.c.l.b16 %v5596
        %v5693 = vunpack.c.l.b16 %v5597
        %v5694 = vunpack.c.l.b16 %v5598
        %v5695 = vunpack.c.l.b16 %v5599
        %v5696 = vunpack.c.l.b16 %v5600
        %v5697 = vunpack.c.l.b16 %v5601
        %v5698 = vunpack.c.l.b16 %v5602
        %v5699 = vunpack.c.l.b16 %v5603
        %v5700 = vunpack.c.l.b16 %v5604
        %v5701 = vpack.c.b16 %v5654, %v5653
        %v5702 = vpack.c.b16 %v5656, %v5655
        %v5703 = vpack.c.b16 %v5658, %v5657
        %v5704 = vpack.c.b16 %v5660, %v5659
        %v5705 = vpack.c.b16 %v5662, %v5661
        %v5706 = vpack.c.b16 %v5664, %v5663
        %v5707 = vpack.c.b16 %v5666, %v5665
        %v5708 = vpack.c.b16 %v5668, %v5667
        %v5709 = vpack.c.b16 %v5670, %v5669
        %v5710 = vpack.c.b16 %v5672, %v5671
        %v5711 = vpack.c.b16 %v5674, %v5673
        %v5712 = vpack.c.b16 %v5676, %v5675
        %v5713 = vpack.c.b16 %v5678, %v5677
        %v5714 = vpack.c.b16 %v5680, %v5679
        %v5715 = vpack.c.b16 %v5682, %v5681
        %v5716 = vpack.c.b16 %v5684, %v5683
        %v5717 = vpack.c.b16 %v5686, %v5685
        %v5718 = vpack.c.b16 %v5688, %v5687
        %v5719 = vpack.c.b16 %v5690, %v5689
        %v5720 = vpack.c.b16 %v5692, %v5691
        %v5721 = vpack.c.b16 %v5694, %v5693
        %v5722 = vpack.c.b16 %v5696, %v5695
        %v5723 = vpack.c.b16 %v5698, %v5697
        %v5724 = vpack.c.b16 %v5700, %v5699
        %5749 = vmatprep.subr.bf16.mxu0 0
        %5750 = vmatpush1.bf16.msra.mxu0 %v5701
        %5751 = vmatprep.subr.bf16.mxu0 0
        %5752 = vmatpush1.bf16.msra.mxu0 %v5702
        %5753 = vmatprep.subr.bf16.mxu0 0
        %5754 = vmatpush1.bf16.msra.mxu0 %v5703
        %5755 = vmatprep.subr.bf16.mxu0 0
        %5756 = vmatpush1.bf16.msra.mxu0 %v5704
        %5757 = vmatprep.subr.bf16.mxu0 0
        %5758 = vmatpush1.bf16.msra.mxu0 %v5705
        %5759 = vmatprep.subr.bf16.mxu0 0
        %5760 = vmatpush1.bf16.msra.mxu0 %v5706
        %5761 = vmatprep.subr.bf16.mxu0 0
        %5762 = vmatpush1.bf16.msra.mxu0 %v5707
        %5763 = vmatprep.subr.bf16.mxu0 0
        %5764 = vmatpush1.bf16.msra.mxu0 %v5708
        %5765 = vmatprep.subr.bf16.mxu0 0
        %5766 = vmatpush1.bf16.msra.mxu0 %v5709
        %5767 = vmatprep.subr.bf16.mxu0 0
        %5768 = vmatpush1.bf16.msra.mxu0 %v5710
        %5769 = vmatprep.subr.bf16.mxu0 0
        %5770 = vmatpush1.bf16.msra.mxu0 %v5711
        %5771 = vmatprep.subr.bf16.mxu0 0
        %5772 = vmatpush1.bf16.msra.mxu0 %v5712
        %5773 = vmatprep.subr.bf16.mxu0 0
        %5774 = vmatpush1.bf16.msra.mxu0 %v5713
        %5775 = vmatprep.subr.bf16.mxu0 0
        %5776 = vmatpush1.bf16.msra.mxu0 %v5714
        %5777 = vmatprep.subr.bf16.mxu0 0
        %5778 = vmatpush1.bf16.msra.mxu0 %v5715
        %5779 = vmatprep.subr.bf16.mxu0 0
        %5780 = vmatpush1.bf16.msra.mxu0 %v5716
        %5781 = vmatprep.mubr.bf16.mxu0 %v5407
        %5782 = vmatmul.mubr.bf16.gmra.mrb[0].mxu0 %v5380
        %v5783 = vpop.f32.mrb[0].mxu0
        %v5784 = vadd.f32 0.0, %v5783
        %v5785 = vpop.f32.mrb[0].mxu0
        %v5786 = vpop.f32.mrb[0].mxu0
        %v5787 = vadd.f32 0.0, %v5786
        %v5788 = vpop.f32.mrb[0].mxu0
        %5789 = vmatprep.mubr.bf16.mxu0 %v5419
        %5790 = vmatmul.mubr.bf16.gmra.mrb[0].mxu0 %v5381
        %v5791 = vpop.f32.mrb[0].mxu0
        %v5792 = vadd.f32 0.0, %v5791
        %v5793 = vpop.f32.mrb[0].mxu0
        %v5794 = vpop.f32.mrb[0].mxu0
        %v5795 = vadd.f32 0.0, %v5794
        %v5796 = vpop.f32.mrb[0].mxu0
        %5797 = vmatprep.mubr.bf16.mxu0 %v5431
        %5798 = vmatmul.mubr.bf16.gmra.mrb[0].mxu0 %v5382
        %v5799 = vpop.f32.mrb[0].mxu0
        %v5800 = vadd.f32 0.0, %v5799
        %v5801 = vpop.f32.mrb[0].mxu0
        %v5802 = vpop.f32.mrb[0].mxu0
        %v5803 = vadd.f32 0.0, %v5802
        %v5804 = vpop.f32.mrb[0].mxu0
        %5805 = vmatprep.mubr.bf16.mxu0 %v5443
        %5806 = vmatmul.mubr.bf16.gmra.mrb[0].mxu0 %v5383
        %v5807 = vpop.f32.mrb[0].mxu0
        %v5808 = vadd.f32 0.0, %v5807
        %v5809 = vpop.f32.mrb[0].mxu0
        %v5810 = vpop.f32.mrb[0].mxu0
        %v5811 = vadd.f32 0.0, %v5810
        %v5812 = vpop.f32.mrb[0].mxu0
        %5813 = vmatprep.mubr.bf16.mxu0 %v5455
        %5814 = vmatmul.mubr.bf16.gmra.mrb[0].mxu0 %v5384
        %v5815 = vpop.f32.mrb[0].mxu0
        %v5816 = vadd.f32 0.0, %v5815
        %v5817 = vpop.f32.mrb[0].mxu0
        %v5818 = vpop.f32.mrb[0].mxu0
        %v5819 = vadd.f32 0.0, %v5818
        %v5820 = vpop.f32.mrb[0].mxu0
        %5821 = vmatprep.mubr.bf16.mxu0 %v5467
        %5822 = vmatmul.mubr.bf16.gmra.mrb[0].mxu0 %v5385
        %v5823 = vpop.f32.mrb[0].mxu0
        %v5824 = vadd.f32 0.0, %v5823
        %v5825 = vpop.f32.mrb[0].mxu0
        %v5826 = vpop.f32.mrb[0].mxu0
        %v5827 = vadd.f32 0.0, %v5826
        %v5828 = vpop.f32.mrb[0].mxu0
        %5829 = vmatprep.mubr.bf16.mxu0 %v5479
        %5830 = vmatmul.mubr.bf16.gmra.mrb[0].mxu0 %v5386
        %v5831 = vpop.f32.mrb[0].mxu0
        %v5832 = vadd.f32 0.0, %v5831
        %v5833 = vpop.f32.mrb[0].mxu0
        %v5834 = vpop.f32.mrb[0].mxu0
        %v5835 = vadd.f32 0.0, %v5834
        %v5836 = vpop.f32.mrb[0].mxu0
        %5837 = vmatprep.mubr.bf16.mxu0 %v5491
        %5838 = vmatmul.mubr.bf16.gmra.mrb[0].mxu0 %v5387
        %v5839 = vpop.f32.mrb[0].mxu0
        %v5840 = vadd.f32 0.0, %v5839
        %v5841 = vpop.f32.mrb[0].mxu0
        %v5842 = vpop.f32.mrb[0].mxu0
        %v5843 = vadd.f32 0.0, %v5842
        %v5844 = vpop.f32.mrb[0].mxu0
        %5845 = vdwg.mxu0
        %5846 = vmatprep.subr.bf16.mxu0 0
        %5847 = vmatpush1.bf16.msra.mxu0 %v5717
        %5848 = vmatprep.subr.bf16.mxu0 0
        %5849 = vmatpush1.bf16.msra.mxu0 %v5718
        %5850 = vmatprep.subr.bf16.mxu0 0
        %5851 = vmatpush1.bf16.msra.mxu0 %v5719
        %5852 = vmatprep.subr.bf16.mxu0 0
        %5853 = vmatpush1.bf16.msra.mxu0 %v5720
        %5854 = vmatprep.subr.bf16.mxu0 0
        %5855 = vmatpush1.bf16.msra.mxu0 %v5721
        %5856 = vmatprep.subr.bf16.mxu0 0
        %5857 = vmatpush1.bf16.msra.mxu0 %v5722
        %5858 = vmatprep.subr.bf16.mxu0 0
        %5859 = vmatpush1.bf16.msra.mxu0 %v5723
        %5860 = vmatprep.subr.bf16.mxu0 0
        %5861 = vmatpush1.bf16.msra.mxu0 %v5724
        %5862 = vmatprep.subr.bf16.mxu0 0
        %5863 = vmatpush1.bf16.msra.mxu0 0
        %5864 = vmatprep.subr.bf16.mxu0 0
        %5865 = vmatpush1.bf16.msra.mxu0 0
        %5866 = vmatprep.subr.bf16.mxu0 0
        %5867 = vmatpush1.bf16.msra.mxu0 0
        %5868 = vmatprep.subr.bf16.mxu0 0
        %5869 = vmatpush1.bf16.msra.mxu0 0
        %5870 = vmatprep.subr.bf16.mxu0 0
        %5871 = vmatpush1.bf16.msra.mxu0 0
        %5872 = vmatprep.subr.bf16.mxu0 0
        %5873 = vmatpush1.bf16.msra.mxu0 0
        %5874 = vmatprep.subr.bf16.mxu0 0
        %5875 = vmatpush1.bf16.msra.mxu0 0
        %5876 = vmatprep.subr.bf16.mxu0 0
        %5877 = vmatpush1.bf16.msra.mxu0 0
        %5878 = vmatprep.mubr.bf16.mxu0 0
        %5879 = vmatmul.mubr.bf16.gmra.mrb[0].mxu0 %v5526
        %v5880 = vpop.f32.mrb[0].mxu0
        %v5881 = vadd.f32 %v5784, %v5880
        %v5882 = vpop.f32.mrb[0].mxu0
        %v5883 = vpop.f32.mrb[0].mxu0
        %v5884 = vadd.f32 %v5787, %v5883
        %v5885 = vpop.f32.mrb[0].mxu0
        %5886 = vmatprep.mubr.bf16.mxu0 0
        %5887 = vmatmul.mubr.bf16.gmra.mrb[0].mxu0 %v5529
        %v5888 = vpop.f32.mrb[0].mxu0
        %v5889 = vadd.f32 %v5792, %v5888
        %v5890 = vpop.f32.mrb[0].mxu0
        %v5891 = vpop.f32.mrb[0].mxu0
        %v5892 = vadd.f32 %v5795, %v5891
        %v5893 = vpop.f32.mrb[0].mxu0
        %5894 = vmatprep.mubr.bf16.mxu0 0
        %5895 = vmatmul.mubr.bf16.gmra.mrb[0].mxu0 %v5532
        %v5896 = vpop.f32.mrb[0].mxu0
        %v5897 = vadd.f32 %v5800, %v5896
        %v5898 = vpop.f32.mrb[0].mxu0
        %v5899 = vpop.f32.mrb[0].mxu0
        %v5900 = vadd.f32 %v5803, %v5899
        %v5901 = vpop.f32.mrb[0].mxu0
        %5902 = vmatprep.mubr.bf16.mxu0 0
        %5903 = vmatmul.mubr.bf16.gmra.mrb[0].mxu0 %v5535
        %v5904 = vpop.f32.mrb[0].mxu0
        %v5905 = vadd.f32 %v5808, %v5904
        %v5906 = vpop.f32.mrb[0].mxu0
        %v5907 = vpop.f32.mrb[0].mxu0
        %v5908 = vadd.f32 %v5811, %v5907
        %v5909 = vpop.f32.mrb[0].mxu0
        %5910 = vmatprep.mubr.bf16.mxu0 0
        %5911 = vmatmul.mubr.bf16.gmra.mrb[0].mxu0 %v5538
        %v5912 = vpop.f32.mrb[0].mxu0
        %v5913 = vadd.f32 %v5816, %v5912
        %v5914 = vpop.f32.mrb[0].mxu0
        %v5915 = vpop.f32.mrb[0].mxu0
        %v5916 = vadd.f32 %v5819, %v5915
        %v5917 = vpop.f32.mrb[0].mxu0
        %5918 = vmatprep.mubr.bf16.mxu0 0
        %5919 = vmatmul.mubr.bf16.gmra.mrb[0].mxu0 %v5541
        %v5920 = vpop.f32.mrb[0].mxu0
        %v5921 = vadd.f32 %v5824, %v5920
        %v5922 = vpop.f32.mrb[0].mxu0
        %v5923 = vpop.f32.mrb[0].mxu0
        %v5924 = vadd.f32 %v5827, %v5923
        %v5925 = vpop.f32.mrb[0].mxu0
        %5926 = vmatprep.mubr.bf16.mxu0 0
        %5927 = vmatmul.mubr.bf16.gmra.mrb[0].mxu0 %v5544
        %v5928 = vpop.f32.mrb[0].mxu0
        %v5929 = vadd.f32 %v5832, %v5928
        %v5930 = vpop.f32.mrb[0].mxu0
        %v5931 = vpop.f32.mrb[0].mxu0
        %v5932 = vadd.f32 %v5835, %v5931
        %v5933 = vpop.f32.mrb[0].mxu0
        %5934 = vmatprep.mubr.bf16.mxu0 0
        %5935 = vmatmul.mubr.bf16.gmra.mrb[0].mxu0 %v5547
        %v5936 = vpop.f32.mrb[0].mxu0
        %v5937 = vadd.f32 %v5840, %v5936
        %v5938 = vpop.f32.mrb[0].mxu0
        %v5939 = vpop.f32.mrb[0].mxu0
        %v5940 = vadd.f32 %v5843, %v5939
        %v5941 = vpop.f32.mrb[0].mxu0
        %5942 = vdwg.mxu0
        %v5943 = vadd.f32 %v5317, %v5881
        %v5944 = vadd.f32 %v5320, %v5884
        %v5945 = vadd.f32 %v5325, %v5889
        %v5946 = vadd.f32 %v5328, %v5892
        %v5947 = vadd.f32 %v5333, %v5897
        %v5948 = vadd.f32 %v5336, %v5900
        %v5949 = vadd.f32 %v5341, %v5905
        %v5950 = vadd.f32 %v5344, %v5908
        %v5951 = vadd.f32 %v5349, %v5913
        %v5952 = vadd.f32 %v5352, %v5916
        %v5953 = vadd.f32 %v5357, %v5921
        %v5954 = vadd.f32 %v5360, %v5924
        %v5955 = vadd.f32 %v5365, %v5929
        %v5956 = vadd.f32 %v5368, %v5932
        %v5957 = vadd.f32 %v5373, %v5937
        %v5958 = vadd.f32 %v5376, %v5940
        %v5960 = vlaneseq
        %v5961 = vshrl.u32 %v5960, 7
        %v5962 = vsub.s32 0, %v5961
        %v5963 = vrot.slane %v4253, %v5962
        %v5965 = vadd.f32 %v5943, %v5963
        %v5966 = vadd.f32 %v5944, %v5963
        %v5967 = vadd.f32 %v5945, %v5963
        %v5968 = vadd.f32 %v5946, %v5963
        %v5969 = vadd.f32 %v5947, %v5963
        %v5970 = vadd.f32 %v5948, %v5963
        %v5971 = vadd.f32 %v5949, %v5963
        %v5972 = vadd.f32 %v5950, %v5963
        %v5973 = vadd.f32 %v5951, %v5963
        %v5974 = vadd.f32 %v5952, %v5963
        %v5975 = vadd.f32 %v5953, %v5963
        %v5976 = vadd.f32 %v5954, %v5963
        %v5977 = vadd.f32 %v5955, %v5963
        %v5978 = vadd.f32 %v5956, %v5963
        %v5979 = vadd.f32 %v5957, %v5963
        %v5980 = vadd.f32 %v5958, %v5963
        %v5981 = vld [vmem:[%s237] sm:$0xff]
        %v5982 = vld [vmem:[%s237 + $0x8] sm:$0xff]
        %v5983 = vld [vmem:[%s237 + $0x10] sm:$0xff]
        %v5984 = vld [vmem:[%s237 + $0x18] sm:$0xff]
        %v5985 = vld [vmem:[%s237 + $0x20] sm:$0xff]
        %v5986 = vld [vmem:[%s237 + $0x28] sm:$0xff]
        %v5987 = vld [vmem:[%s237 + $0x30] sm:$0xff]
        %v5988 = vld [vmem:[%s237 + $0x38] sm:$0xff]
        %v5989 = vld [vmem:[%s237 + $0x40] sm:$0xff]
        %v5990 = vld [vmem:[%s237 + $0x48] sm:$0xff]
        %v5991 = vld [vmem:[%s237 + $0x50] sm:$0xff]
        %v5992 = vld [vmem:[%s237 + $0x58] sm:$0xff]
        %v5993 = vld [vmem:[%s237 + $0x60] sm:$0xff]
        %v5994 = vld [vmem:[%s237 + $0x68] sm:$0xff]
        %v5995 = vld [vmem:[%s237 + $0x70] sm:$0xff]
        %v5996 = vld [vmem:[%s237 + $0x78] sm:$0xff]
        %v5997 = vadd.f32 %v5965, %v5981
        %v5998 = vadd.f32 %v5966, %v5982
        %v5999 = vadd.f32 %v5967, %v5983
        %v6000 = vadd.f32 %v5968, %v5984
        %v6001 = vadd.f32 %v5969, %v5985
        %v6002 = vadd.f32 %v5970, %v5986
        %v6003 = vadd.f32 %v5971, %v5987
        %v6004 = vadd.f32 %v5972, %v5988
        %v6005 = vadd.f32 %v5973, %v5989
        %v6006 = vadd.f32 %v5974, %v5990
        %v6007 = vadd.f32 %v5975, %v5991
        %v6008 = vadd.f32 %v5976, %v5992
        %v6009 = vadd.f32 %v5977, %v5993
        %v6010 = vadd.f32 %v5978, %v5994
        %v6011 = vadd.f32 %v5979, %v5995
        %v6012 = vadd.f32 %v5980, %v5996
        %v6013 = vmax.f32 %v5997, 0.0
        %v6014 = vmax.f32 %v5998, 0.0
        %v6015 = vmax.f32 %v5999, 0.0
        %v6016 = vmax.f32 %v6000, 0.0
        %v6017 = vmax.f32 %v6001, 0.0
        %v6018 = vmax.f32 %v6002, 0.0
        %v6019 = vmax.f32 %v6003, 0.0
        %v6020 = vmax.f32 %v6004, 0.0
        %v6021 = vmax.f32 %v6005, 0.0
        %v6022 = vmax.f32 %v6006, 0.0
        %v6023 = vmax.f32 %v6007, 0.0
        %v6024 = vmax.f32 %v6008, 0.0
        %v6025 = vmax.f32 %v6009, 0.0
        %v6026 = vmax.f32 %v6010, 0.0
        %v6027 = vmax.f32 %v6011, 0.0
        %v6028 = vmax.f32 %v6012, 0.0
        %6029 = vst [vmem:[%s271] sm:$0xff] %v6013
        %6030 = vst [vmem:[%s271 + $0x8] sm:$0xff] %v6014
        %6031 = vst [vmem:[%s271 + $0x10] sm:$0xff] %v6015
        %6032 = vst [vmem:[%s271 + $0x18] sm:$0xff] %v6016
        %6033 = vst [vmem:[%s271 + $0x20] sm:$0xff] %v6017
        %6034 = vst [vmem:[%s271 + $0x28] sm:$0xff] %v6018
        %6035 = vst [vmem:[%s271 + $0x30] sm:$0xff] %v6019
        %6036 = vst [vmem:[%s271 + $0x38] sm:$0xff] %v6020
        %6037 = vst [vmem:[%s271 + $0x40] sm:$0xff] %v6021
        %6038 = vst [vmem:[%s271 + $0x48] sm:$0xff] %v6022
        %6039 = vst [vmem:[%s271 + $0x50] sm:$0xff] %v6023
        %6040 = vst [vmem:[%s271 + $0x58] sm:$0xff] %v6024
        %6041 = vst [vmem:[%s271 + $0x60] sm:$0xff] %v6025
        %6042 = vst [vmem:[%s271 + $0x68] sm:$0xff] %v6026
        %6043 = vst [vmem:[%s271 + $0x70] sm:$0xff] %v6027
        %6044 = vst [vmem:[%s271 + $0x78] sm:$0xff] %v6028
        %s6045 = scalar_lea.vmem [#allocation3], 128
        %v6046 = vld [vmem:[%s6045] sm:$0xff]
        %v6047 = vld [vmem:[%s6045 + $0x10] sm:$0xff]
        %v6048 = vld [vmem:[%s6045 + $0x20] sm:$0xff]
        %v6049 = vld [vmem:[%s6045 + $0x30] sm:$0xff]
        %v6050 = vld [vmem:[%s6045 + $0x40] sm:$0xff]
        %v6051 = vld [vmem:[%s6045 + $0x50] sm:$0xff]
        %v6052 = vld [vmem:[%s6045 + $0x60] sm:$0xff]
        %v6053 = vld [vmem:[%s6045 + $0x70] sm:$0xff]
        %v6054 = vld [vmem:[%s6045 + $0x8] sm:$0x1]
        %v6055 = vld [vmem:[%s6045 + $0x18] sm:$0x1]
        %v6056 = vld [vmem:[%s6045 + $0x28] sm:$0x1]
        %v6057 = vld [vmem:[%s6045 + $0x38] sm:$0x1]
        %v6058 = vld [vmem:[%s6045 + $0x48] sm:$0x1]
        %v6059 = vld [vmem:[%s6045 + $0x58] sm:$0x1]
        %v6060 = vld [vmem:[%s6045 + $0x68] sm:$0x1]
        %v6061 = vld [vmem:[%s6045 + $0x78] sm:$0x1]
        %v6063 = vshrl.u32 %v6046, 16
        %v6065 = vshll.u32 %v6046, 16
        %v6067 = vrot.slane %v6065, 1
        %v6068 = vor.u32 %v6063, %v6067
        %v6070 = vshll.u32 %v6054, 16
        %v6072 = vrot.slane %v6070, 1
        %v6073 = vsel %vm562, %v6068, %v6072
        %v6075 = vshrl.u32 %v6047, 16
        %v6077 = vshll.u32 %v6047, 16
        %v6079 = vrot.slane %v6077, 1
        %v6080 = vor.u32 %v6075, %v6079
        %v6082 = vshll.u32 %v6055, 16
        %v6084 = vrot.slane %v6082, 1
        %v6085 = vsel %vm562, %v6080, %v6084
        %v6087 = vshrl.u32 %v6048, 16
        %v6089 = vshll.u32 %v6048, 16
        %v6091 = vrot.slane %v6089, 1
        %v6092 = vor.u32 %v6087, %v6091
        %v6094 = vshll.u32 %v6056, 16
        %v6096 = vrot.slane %v6094, 1
        %v6097 = vsel %vm562, %v6092, %v6096
        %v6099 = vshrl.u32 %v6049, 16
        %v6101 = vshll.u32 %v6049, 16
        %v6103 = vrot.slane %v6101, 1
        %v6104 = vor.u32 %v6099, %v6103
        %v6106 = vshll.u32 %v6057, 16
        %v6108 = vrot.slane %v6106, 1
        %v6109 = vsel %vm562, %v6104, %v6108
        %v6111 = vshrl.u32 %v6050, 16
        %v6113 = vshll.u32 %v6050, 16
        %v6115 = vrot.slane %v6113, 1
        %v6116 = vor.u32 %v6111, %v6115
        %v6118 = vshll.u32 %v6058, 16
        %v6120 = vrot.slane %v6118, 1
        %v6121 = vsel %vm562, %v6116, %v6120
        %v6123 = vshrl.u32 %v6051, 16
        %v6125 = vshll.u32 %v6051, 16
        %v6127 = vrot.slane %v6125, 1
        %v6128 = vor.u32 %v6123, %v6127
        %v6130 = vshll.u32 %v6059, 16
        %v6132 = vrot.slane %v6130, 1
        %v6133 = vsel %vm562, %v6128, %v6132
        %v6135 = vshrl.u32 %v6052, 16
        %v6137 = vshll.u32 %v6052, 16
        %v6139 = vrot.slane %v6137, 1
        %v6140 = vor.u32 %v6135, %v6139
        %v6142 = vshll.u32 %v6060, 16
        %v6144 = vrot.slane %v6142, 1
        %v6145 = vsel %vm562, %v6140, %v6144
        %v6147 = vshrl.u32 %v6053, 16
        %v6149 = vshll.u32 %v6053, 16
        %v6151 = vrot.slane %v6149, 1
        %v6152 = vor.u32 %v6147, %v6151
        %v6154 = vshll.u32 %v6061, 16
        %v6156 = vrot.slane %v6154, 1
        %v6157 = vsel %vm562, %v6152, %v6156
        %v6166 = vld [vmem:[%s6045] sm:$0xfe]
        %v6167 = vld [vmem:[%s6045 + $0x10] sm:$0xfe]
        %v6168 = vld [vmem:[%s6045 + $0x20] sm:$0xfe]
        %v6169 = vld [vmem:[%s6045 + $0x30] sm:$0xfe]
        %v6170 = vld [vmem:[%s6045 + $0x40] sm:$0xfe]
        %v6171 = vld [vmem:[%s6045 + $0x50] sm:$0xfe]
        %v6172 = vld [vmem:[%s6045 + $0x60] sm:$0xfe]
        %v6173 = vld [vmem:[%s6045 + $0x70] sm:$0xfe]
        %v6190 = vrot.slane %v6166, 1
        %v6191 = vrot.slane %v6054, 1
        %v6192 = vsel %vm691, %v6190, %v6191
        %v6193 = vrot.slane %v6167, 1
        %v6194 = vrot.slane %v6055, 1
        %v6195 = vsel %vm691, %v6193, %v6194
        %v6196 = vrot.slane %v6168, 1
        %v6197 = vrot.slane %v6056, 1
        %v6198 = vsel %vm691, %v6196, %v6197
        %v6199 = vrot.slane %v6169, 1
        %v6200 = vrot.slane %v6057, 1
        %v6201 = vsel %vm691, %v6199, %v6200
        %v6202 = vrot.slane %v6170, 1
        %v6203 = vrot.slane %v6058, 1
        %v6204 = vsel %vm691, %v6202, %v6203
        %v6205 = vrot.slane %v6171, 1
        %v6206 = vrot.slane %v6059, 1
        %v6207 = vsel %vm691, %v6205, %v6206
        %v6208 = vrot.slane %v6172, 1
        %v6209 = vrot.slane %v6060, 1
        %v6210 = vsel %vm691, %v6208, %v6209
        %v6211 = vrot.slane %v6173, 1
        %v6212 = vrot.slane %v6061, 1
        %v6213 = vsel %vm691, %v6211, %v6212
        %v6222 = vld [vmem:[#allocation9] sm:$0xf]
        %v6223 = vld [vmem:[#allocation9 + $0x4] sm:$0xf]
        %v6224 = vld [vmem:[#allocation9 + $0x8] sm:$0xf]
        %v6225 = vld [vmem:[#allocation9 + $0xc] sm:$0xf]
        %v6226 = vld [vmem:[#allocation9 + $0x10] sm:$0xf]
        %v6227 = vld [vmem:[#allocation9 + $0x14] sm:$0xf]
        %v6228 = vld [vmem:[#allocation9 + $0x18] sm:$0xf]
        %v6229 = vld [vmem:[#allocation9 + $0x1c] sm:$0xf]
        %v6230 = vld [vmem:[#allocation9 + $0x20] sm:$0xf]
        %v6231 = vld [vmem:[#allocation9 + $0x24] sm:$0xf]
        %v6232 = vld [vmem:[#allocation9 + $0x28] sm:$0xf]
        %v6233 = vld [vmem:[#allocation9 + $0x2c] sm:$0xf]
        %v6234 = vld [vmem:[#allocation9 + $0x30] sm:$0xf]
        %v6235 = vld [vmem:[#allocation9 + $0x34] sm:$0xf]
        %v6236 = vld [vmem:[#allocation9 + $0x38] sm:$0xf]
        %v6237 = vld [vmem:[#allocation9 + $0x3c] sm:$0xf]
        %v6238 = vld [vmem:[#allocation9 + $0x40] sm:$0xf]
        %v6239 = vld [vmem:[#allocation9 + $0x44] sm:$0xf]
        %v6240 = vld [vmem:[#allocation9 + $0x48] sm:$0xf]
        %v6241 = vld [vmem:[#allocation9 + $0x4c] sm:$0xf]
        %v6242 = vld [vmem:[#allocation9 + $0x50] sm:$0xf]
        %v6243 = vld [vmem:[#allocation9 + $0x54] sm:$0xf]
        %v6244 = vld [vmem:[#allocation9 + $0x58] sm:$0xf]
        %v6245 = vld [vmem:[#allocation9 + $0x5c] sm:$0xf]
        %v6246 = vld [vmem:[#allocation9 + $0x60] sm:$0xf]
        %v6247 = vld [vmem:[#allocation9 + $0x64] sm:$0xf]
        %v6248 = vld [vmem:[#allocation9 + $0x68] sm:$0xf]
        %v6249 = vld [vmem:[#allocation9 + $0x6c] sm:$0xf]
        %v6250 = vld [vmem:[#allocation9 + $0x70] sm:$0xf]
        %v6251 = vld [vmem:[#allocation9 + $0x74] sm:$0xf]
        %v6252 = vld [vmem:[#allocation9 + $0x78] sm:$0xf]
        %v6253 = vld [vmem:[#allocation9 + $0x7c] sm:$0xf]
        %v6254 = vld [vmem:[#allocation9 + $0x80] sm:$0xf]
        %v6255 = vld [vmem:[#allocation9 + $0x84] sm:$0xf]
        %v6256 = vld [vmem:[#allocation9 + $0x88] sm:$0xf]
        %v6257 = vld [vmem:[#allocation9 + $0x8c] sm:$0xf]
        %v6258 = vld [vmem:[#allocation9 + $0x90] sm:$0xf]
        %v6259 = vld [vmem:[#allocation9 + $0x94] sm:$0xf]
        %v6260 = vld [vmem:[#allocation9 + $0x98] sm:$0xf]
        %v6261 = vld [vmem:[#allocation9 + $0x9c] sm:$0xf]
        %v6262 = vld [vmem:[#allocation9 + $0xa0] sm:$0xf]
        %v6263 = vld [vmem:[#allocation9 + $0xa4] sm:$0xf]
        %v6264 = vld [vmem:[#allocation9 + $0xa8] sm:$0xf]
        %v6265 = vld [vmem:[#allocation9 + $0xac] sm:$0xf]
        %v6266 = vld [vmem:[#allocation9 + $0xb0] sm:$0xf]
        %v6267 = vld [vmem:[#allocation9 + $0xb4] sm:$0xf]
        %v6268 = vld [vmem:[#allocation9 + $0xb8] sm:$0xf]
        %v6269 = vld [vmem:[#allocation9 + $0xbc] sm:$0xf]
        %v6270 = vld [vmem:[%s4236] sm:$0xff]
        %v6271 = vld [vmem:[%s4236 + $0x10] sm:$0xff]
        %v6272 = vld [vmem:[%s4236 + $0x20] sm:$0xff]
        %v6273 = vld [vmem:[%s4236 + $0x30] sm:$0xff]
        %v6274 = vld [vmem:[%s4236 + $0x40] sm:$0xff]
        %v6275 = vld [vmem:[%s4236 + $0x50] sm:$0xff]
        %v6276 = vld [vmem:[%s4236 + $0x60] sm:$0xff]
        %v6277 = vld [vmem:[%s4236 + $0x70] sm:$0xff]
        %v6278 = vld [vmem:[%s4236 + $0x8] sm:$0x1]
        %v6279 = vld [vmem:[%s4236 + $0x18] sm:$0x1]
        %v6280 = vld [vmem:[%s4236 + $0x28] sm:$0x1]
        %v6281 = vld [vmem:[%s4236 + $0x38] sm:$0x1]
        %v6282 = vld [vmem:[%s4236 + $0x48] sm:$0x1]
        %v6283 = vld [vmem:[%s4236 + $0x58] sm:$0x1]
        %v6284 = vld [vmem:[%s4236 + $0x68] sm:$0x1]
        %v6285 = vld [vmem:[%s4236 + $0x78] sm:$0x1]
        %v6287 = vshrl.u32 %v6270, 16
        %v6289 = vshll.u32 %v6270, 16
        %v6291 = vrot.slane %v6289, 1
        %v6292 = vor.u32 %v6287, %v6291
        %v6294 = vshll.u32 %v6278, 16
        %v6296 = vrot.slane %v6294, 1
        %v6297 = vsel %vm562, %v6292, %v6296
        %v6299 = vshrl.u32 %v6271, 16
        %v6301 = vshll.u32 %v6271, 16
        %v6303 = vrot.slane %v6301, 1
        %v6304 = vor.u32 %v6299, %v6303
        %v6306 = vshll.u32 %v6279, 16
        %v6308 = vrot.slane %v6306, 1
        %v6309 = vsel %vm562, %v6304, %v6308
        %v6311 = vshrl.u32 %v6272, 16
        %v6313 = vshll.u32 %v6272, 16
        %v6315 = vrot.slane %v6313, 1
        %v6316 = vor.u32 %v6311, %v6315
        %v6318 = vshll.u32 %v6280, 16
        %v6320 = vrot.slane %v6318, 1
        %v6321 = vsel %vm562, %v6316, %v6320
        %v6323 = vshrl.u32 %v6273, 16
        %v6325 = vshll.u32 %v6273, 16
        %v6327 = vrot.slane %v6325, 1
        %v6328 = vor.u32 %v6323, %v6327
        %v6330 = vshll.u32 %v6281, 16
        %v6332 = vrot.slane %v6330, 1
        %v6333 = vsel %vm562, %v6328, %v6332
        %v6335 = vshrl.u32 %v6274, 16
        %v6337 = vshll.u32 %v6274, 16
        %v6339 = vrot.slane %v6337, 1
        %v6340 = vor.u32 %v6335, %v6339
        %v6342 = vshll.u32 %v6282, 16
        %v6344 = vrot.slane %v6342, 1
        %v6345 = vsel %vm562, %v6340, %v6344
        %v6347 = vshrl.u32 %v6275, 16
        %v6349 = vshll.u32 %v6275, 16
        %v6351 = vrot.slane %v6349, 1
        %v6352 = vor.u32 %v6347, %v6351
        %v6354 = vshll.u32 %v6283, 16
        %v6356 = vrot.slane %v6354, 1
        %v6357 = vsel %vm562, %v6352, %v6356
        %v6359 = vshrl.u32 %v6276, 16
        %v6361 = vshll.u32 %v6276, 16
        %v6363 = vrot.slane %v6361, 1
        %v6364 = vor.u32 %v6359, %v6363
        %v6366 = vshll.u32 %v6284, 16
        %v6368 = vrot.slane %v6366, 1
        %v6369 = vsel %vm562, %v6364, %v6368
        %v6371 = vshrl.u32 %v6277, 16
        %v6373 = vshll.u32 %v6277, 16
        %v6375 = vrot.slane %v6373, 1
        %v6376 = vor.u32 %v6371, %v6375
        %v6378 = vshll.u32 %v6285, 16
        %v6380 = vrot.slane %v6378, 1
        %v6381 = vsel %vm562, %v6376, %v6380
        %v6390 = vld [vmem:[%s4236] sm:$0xfe]
        %v6391 = vld [vmem:[%s4236 + $0x10] sm:$0xfe]
        %v6392 = vld [vmem:[%s4236 + $0x20] sm:$0xfe]
        %v6393 = vld [vmem:[%s4236 + $0x30] sm:$0xfe]
        %v6394 = vld [vmem:[%s4236 + $0x40] sm:$0xfe]
        %v6395 = vld [vmem:[%s4236 + $0x50] sm:$0xfe]
        %v6396 = vld [vmem:[%s4236 + $0x60] sm:$0xfe]
        %v6397 = vld [vmem:[%s4236 + $0x70] sm:$0xfe]
        %v6414 = vrot.slane %v6390, 1
        %v6415 = vrot.slane %v6278, 1
        %v6416 = vsel %vm691, %v6414, %v6415
        %v6417 = vrot.slane %v6391, 1
        %v6418 = vrot.slane %v6279, 1
        %v6419 = vsel %vm691, %v6417, %v6418
        %v6420 = vrot.slane %v6392, 1
        %v6421 = vrot.slane %v6280, 1
        %v6422 = vsel %vm691, %v6420, %v6421
        %v6423 = vrot.slane %v6393, 1
        %v6424 = vrot.slane %v6281, 1
        %v6425 = vsel %vm691, %v6423, %v6424
        %v6426 = vrot.slane %v6394, 1
        %v6427 = vrot.slane %v6282, 1
        %v6428 = vsel %vm691, %v6426, %v6427
        %v6429 = vrot.slane %v6395, 1
        %v6430 = vrot.slane %v6283, 1
        %v6431 = vsel %vm691, %v6429, %v6430
        %v6432 = vrot.slane %v6396, 1
        %v6433 = vrot.slane %v6284, 1
        %v6434 = vsel %vm691, %v6432, %v6433
        %v6435 = vrot.slane %v6397, 1
        %v6436 = vrot.slane %v6285, 1
        %v6437 = vsel %vm691, %v6435, %v6436
        %v6446 = vld [vmem:[%s4654] sm:$0xf]
        %v6447 = vld [vmem:[%s4654 + $0x4] sm:$0xf]
        %v6448 = vld [vmem:[%s4654 + $0x8] sm:$0xf]
        %v6449 = vld [vmem:[%s4654 + $0xc] sm:$0xf]
        %v6450 = vld [vmem:[%s4654 + $0x10] sm:$0xf]
        %v6451 = vld [vmem:[%s4654 + $0x14] sm:$0xf]
        %v6452 = vld [vmem:[%s4654 + $0x18] sm:$0xf]
        %v6453 = vld [vmem:[%s4654 + $0x1c] sm:$0xf]
        %v6454 = vld [vmem:[%s4654 + $0x20] sm:$0xf]
        %v6455 = vld [vmem:[%s4654 + $0x24] sm:$0xf]
        %v6456 = vld [vmem:[%s4654 + $0x28] sm:$0xf]
        %v6457 = vld [vmem:[%s4654 + $0x2c] sm:$0xf]
        %v6458 = vld [vmem:[%s4654 + $0x30] sm:$0xf]
        %v6459 = vld [vmem:[%s4654 + $0x34] sm:$0xf]
        %v6460 = vld [vmem:[%s4654 + $0x38] sm:$0xf]
        %v6461 = vld [vmem:[%s4654 + $0x3c] sm:$0xf]
        %v6462 = vld [vmem:[%s4654 + $0x40] sm:$0xf]
        %v6463 = vld [vmem:[%s4654 + $0x44] sm:$0xf]
        %v6464 = vld [vmem:[%s4654 + $0x48] sm:$0xf]
        %v6465 = vld [vmem:[%s4654 + $0x4c] sm:$0xf]
        %v6466 = vld [vmem:[%s4654 + $0x50] sm:$0xf]
        %v6467 = vld [vmem:[%s4654 + $0x54] sm:$0xf]
        %v6468 = vld [vmem:[%s4654 + $0x58] sm:$0xf]
        %v6469 = vld [vmem:[%s4654 + $0x5c] sm:$0xf]
        %v6470 = vld [vmem:[%s4654 + $0x60] sm:$0xf]
        %v6471 = vld [vmem:[%s4654 + $0x64] sm:$0xf]
        %v6472 = vld [vmem:[%s4654 + $0x68] sm:$0xf]
        %v6473 = vld [vmem:[%s4654 + $0x6c] sm:$0xf]
        %v6474 = vld [vmem:[%s4654 + $0x70] sm:$0xf]
        %v6475 = vld [vmem:[%s4654 + $0x74] sm:$0xf]
        %v6476 = vld [vmem:[%s4654 + $0x78] sm:$0xf]
        %v6477 = vld [vmem:[%s4654 + $0x7c] sm:$0xf]
        %v6478 = vld [vmem:[%s4654 + $0x80] sm:$0xf]
        %v6479 = vld [vmem:[%s4654 + $0x84] sm:$0xf]
        %v6480 = vld [vmem:[%s4654 + $0x88] sm:$0xf]
        %v6481 = vld [vmem:[%s4654 + $0x8c] sm:$0xf]
        %v6482 = vld [vmem:[%s4654 + $0x90] sm:$0xf]
        %v6483 = vld [vmem:[%s4654 + $0x94] sm:$0xf]
        %v6484 = vld [vmem:[%s4654 + $0x98] sm:$0xf]
        %v6485 = vld [vmem:[%s4654 + $0x9c] sm:$0xf]
        %v6486 = vld [vmem:[%s4654 + $0xa0] sm:$0xf]
        %v6487 = vld [vmem:[%s4654 + $0xa4] sm:$0xf]
        %v6488 = vld [vmem:[%s4654 + $0xa8] sm:$0xf]
        %v6489 = vld [vmem:[%s4654 + $0xac] sm:$0xf]
        %v6490 = vld [vmem:[%s4654 + $0xb0] sm:$0xf]
        %v6491 = vld [vmem:[%s4654 + $0xb4] sm:$0xf]
        %v6492 = vld [vmem:[%s4654 + $0xb8] sm:$0xf]
        %v6493 = vld [vmem:[%s4654 + $0xbc] sm:$0xf]
        %v6542 = vunpack.c.l.b16 %v6446
        %v6543 = vunpack.c.l.b16 %v6447
        %v6544 = vunpack.c.l.b16 %v6448
        %v6545 = vunpack.c.l.b16 %v6449
        %v6546 = vunpack.c.l.b16 %v6450
        %v6547 = vunpack.c.l.b16 %v6451
        %v6548 = vunpack.c.l.b16 %v6452
        %v6549 = vunpack.c.l.b16 %v6453
        %v6550 = vunpack.c.l.b16 %v6454
        %v6551 = vunpack.c.l.b16 %v6455
        %v6552 = vunpack.c.l.b16 %v6456
        %v6553 = vunpack.c.l.b16 %v6457
        %v6554 = vunpack.c.l.b16 %v6458
        %v6555 = vunpack.c.l.b16 %v6459
        %v6556 = vunpack.c.l.b16 %v6460
        %v6557 = vunpack.c.l.b16 %v6461
        %v6558 = vunpack.c.l.b16 %v6462
        %v6559 = vunpack.c.l.b16 %v6463
        %v6560 = vunpack.c.l.b16 %v6464
        %v6561 = vunpack.c.l.b16 %v6465
        %v6562 = vunpack.c.l.b16 %v6466
        %v6563 = vunpack.c.l.b16 %v6467
        %v6564 = vunpack.c.l.b16 %v6468
        %v6565 = vunpack.c.l.b16 %v6469
        %v6566 = vunpack.c.l.b16 %v6470
        %v6567 = vunpack.c.l.b16 %v6471
        %v6568 = vunpack.c.l.b16 %v6472
        %v6569 = vunpack.c.l.b16 %v6473
        %v6570 = vunpack.c.l.b16 %v6474
        %v6571 = vunpack.c.l.b16 %v6475
        %v6572 = vunpack.c.l.b16 %v6476
        %v6573 = vunpack.c.l.b16 %v6477
        %v6574 = vunpack.c.l.b16 %v6478
        %v6575 = vunpack.c.l.b16 %v6479
        %v6576 = vunpack.c.l.b16 %v6480
        %v6577 = vunpack.c.l.b16 %v6481
        %v6578 = vunpack.c.l.b16 %v6482
        %v6579 = vunpack.c.l.b16 %v6483
        %v6580 = vunpack.c.l.b16 %v6484
        %v6581 = vunpack.c.l.b16 %v6485
        %v6582 = vunpack.c.l.b16 %v6486
        %v6583 = vunpack.c.l.b16 %v6487
        %v6584 = vunpack.c.l.b16 %v6488
        %v6585 = vunpack.c.l.b16 %v6489
        %v6586 = vunpack.c.l.b16 %v6490
        %v6587 = vunpack.c.l.b16 %v6491
        %v6588 = vunpack.c.l.b16 %v6492
        %v6589 = vunpack.c.l.b16 %v6493
        %v6590 = vpack.c.b16 %v6543, %v6542
        %v6591 = vpack.c.b16 %v6545, %v6544
        %v6592 = vpack.c.b16 %v6547, %v6546
        %v6593 = vpack.c.b16 %v6549, %v6548
        %v6594 = vpack.c.b16 %v6551, %v6550
        %v6595 = vpack.c.b16 %v6553, %v6552
        %v6596 = vpack.c.b16 %v6555, %v6554
        %v6597 = vpack.c.b16 %v6557, %v6556
        %v6598 = vpack.c.b16 %v6559, %v6558
        %v6599 = vpack.c.b16 %v6561, %v6560
        %v6600 = vpack.c.b16 %v6563, %v6562
        %v6601 = vpack.c.b16 %v6565, %v6564
        %v6602 = vpack.c.b16 %v6567, %v6566
        %v6603 = vpack.c.b16 %v6569, %v6568
        %v6604 = vpack.c.b16 %v6571, %v6570
        %v6605 = vpack.c.b16 %v6573, %v6572
        %v6606 = vpack.c.b16 %v6575, %v6574
        %v6607 = vpack.c.b16 %v6577, %v6576
        %v6608 = vpack.c.b16 %v6579, %v6578
        %v6609 = vpack.c.b16 %v6581, %v6580
        %v6610 = vpack.c.b16 %v6583, %v6582
        %v6611 = vpack.c.b16 %v6585, %v6584
        %v6612 = vpack.c.b16 %v6587, %v6586
        %v6613 = vpack.c.b16 %v6589, %v6588
        %6638 = vmatprep.subr.bf16.mxu0 0
        %6639 = vmatpush1.bf16.msra.mxu0 %v6590
        %6640 = vmatprep.subr.bf16.mxu0 0
        %6641 = vmatpush1.bf16.msra.mxu0 %v6591
        %6642 = vmatprep.subr.bf16.mxu0 0
        %6643 = vmatpush1.bf16.msra.mxu0 %v6592
        %6644 = vmatprep.subr.bf16.mxu0 0
        %6645 = vmatpush1.bf16.msra.mxu0 %v6593
        %6646 = vmatprep.subr.bf16.mxu0 0
        %6647 = vmatpush1.bf16.msra.mxu0 %v6594
        %6648 = vmatprep.subr.bf16.mxu0 0
        %6649 = vmatpush1.bf16.msra.mxu0 %v6595
        %6650 = vmatprep.subr.bf16.mxu0 0
        %6651 = vmatpush1.bf16.msra.mxu0 %v6596
        %6652 = vmatprep.subr.bf16.mxu0 0
        %6653 = vmatpush1.bf16.msra.mxu0 %v6597
        %6654 = vmatprep.subr.bf16.mxu0 0
        %6655 = vmatpush1.bf16.msra.mxu0 %v6598
        %6656 = vmatprep.subr.bf16.mxu0 0
        %6657 = vmatpush1.bf16.msra.mxu0 %v6599
        %6658 = vmatprep.subr.bf16.mxu0 0
        %6659 = vmatpush1.bf16.msra.mxu0 %v6600
        %6660 = vmatprep.subr.bf16.mxu0 0
        %6661 = vmatpush1.bf16.msra.mxu0 %v6601
        %6662 = vmatprep.subr.bf16.mxu0 0
        %6663 = vmatpush1.bf16.msra.mxu0 %v6602
        %6664 = vmatprep.subr.bf16.mxu0 0
        %6665 = vmatpush1.bf16.msra.mxu0 %v6603
        %6666 = vmatprep.subr.bf16.mxu0 0
        %6667 = vmatpush1.bf16.msra.mxu0 %v6604
        %6668 = vmatprep.subr.bf16.mxu0 0
        %6669 = vmatpush1.bf16.msra.mxu0 %v6605
        %6670 = vmatprep.mubr.bf16.mxu0 %v6297
        %6671 = vmatmul.mubr.bf16.gmra.mrb[0].mxu0 %v6270
        %v6672 = vpop.f32.mrb[0].mxu0
        %v6673 = vadd.f32 0.0, %v6672
        %v6674 = vpop.f32.mrb[0].mxu0
        %v6675 = vpop.f32.mrb[0].mxu0
        %v6676 = vadd.f32 0.0, %v6675
        %v6677 = vpop.f32.mrb[0].mxu0
        %6678 = vmatprep.mubr.bf16.mxu0 %v6309
        %6679 = vmatmul.mubr.bf16.gmra.mrb[0].mxu0 %v6271
        %v6680 = vpop.f32.mrb[0].mxu0
        %v6681 = vadd.f32 0.0, %v6680
        %v6682 = vpop.f32.mrb[0].mxu0
        %v6683 = vpop.f32.mrb[0].mxu0
        %v6684 = vadd.f32 0.0, %v6683
        %v6685 = vpop.f32.mrb[0].mxu0
        %6686 = vmatprep.mubr.bf16.mxu0 %v6321
        %6687 = vmatmul.mubr.bf16.gmra.mrb[0].mxu0 %v6272
        %v6688 = vpop.f32.mrb[0].mxu0
        %v6689 = vadd.f32 0.0, %v6688
        %v6690 = vpop.f32.mrb[0].mxu0
        %v6691 = vpop.f32.mrb[0].mxu0
        %v6692 = vadd.f32 0.0, %v6691
        %v6693 = vpop.f32.mrb[0].mxu0
        %6694 = vmatprep.mubr.bf16.mxu0 %v6333
        %6695 = vmatmul.mubr.bf16.gmra.mrb[0].mxu0 %v6273
        %v6696 = vpop.f32.mrb[0].mxu0
        %v6697 = vadd.f32 0.0, %v6696
        %v6698 = vpop.f32.mrb[0].mxu0
        %v6699 = vpop.f32.mrb[0].mxu0
        %v6700 = vadd.f32 0.0, %v6699
        %v6701 = vpop.f32.mrb[0].mxu0
        %6702 = vmatprep.mubr.bf16.mxu0 %v6345
        %6703 = vmatmul.mubr.bf16.gmra.mrb[0].mxu0 %v6274
        %v6704 = vpop.f32.mrb[0].mxu0
        %v6705 = vadd.f32 0.0, %v6704
        %v6706 = vpop.f32.mrb[0].mxu0
        %v6707 = vpop.f32.mrb[0].mxu0
        %v6708 = vadd.f32 0.0, %v6707
        %v6709 = vpop.f32.mrb[0].mxu0
        %6710 = vmatprep.mubr.bf16.mxu0 %v6357
        %6711 = vmatmul.mubr.bf16.gmra.mrb[0].mxu0 %v6275
        %v6712 = vpop.f32.mrb[0].mxu0
        %v6713 = vadd.f32 0.0, %v6712
        %v6714 = vpop.f32.mrb[0].mxu0
        %v6715 = vpop.f32.mrb[0].mxu0
        %v6716 = vadd.f32 0.0, %v6715
        %v6717 = vpop.f32.mrb[0].mxu0
        %6718 = vmatprep.mubr.bf16.mxu0 %v6369
        %6719 = vmatmul.mubr.bf16.gmra.mrb[0].mxu0 %v6276
        %v6720 = vpop.f32.mrb[0].mxu0
        %v6721 = vadd.f32 0.0, %v6720
        %v6722 = vpop.f32.mrb[0].mxu0
        %v6723 = vpop.f32.mrb[0].mxu0
        %v6724 = vadd.f32 0.0, %v6723
        %v6725 = vpop.f32.mrb[0].mxu0
        %6726 = vmatprep.mubr.bf16.mxu0 %v6381
        %6727 = vmatmul.mubr.bf16.gmra.mrb[0].mxu0 %v6277
        %v6728 = vpop.f32.mrb[0].mxu0
        %v6729 = vadd.f32 0.0, %v6728
        %v6730 = vpop.f32.mrb[0].mxu0
        %v6731 = vpop.f32.mrb[0].mxu0
        %v6732 = vadd.f32 0.0, %v6731
        %v6733 = vpop.f32.mrb[0].mxu0
        %6734 = vdwg.mxu0
        %6735 = vmatprep.subr.bf16.mxu0 0
        %6736 = vmatpush1.bf16.msra.mxu0 %v6606
        %6737 = vmatprep.subr.bf16.mxu0 0
        %6738 = vmatpush1.bf16.msra.mxu0 %v6607
        %6739 = vmatprep.subr.bf16.mxu0 0
        %6740 = vmatpush1.bf16.msra.mxu0 %v6608
        %6741 = vmatprep.subr.bf16.mxu0 0
        %6742 = vmatpush1.bf16.msra.mxu0 %v6609
        %6743 = vmatprep.subr.bf16.mxu0 0
        %6744 = vmatpush1.bf16.msra.mxu0 %v6610
        %6745 = vmatprep.subr.bf16.mxu0 0
        %6746 = vmatpush1.bf16.msra.mxu0 %v6611
        %6747 = vmatprep.subr.bf16.mxu0 0
        %6748 = vmatpush1.bf16.msra.mxu0 %v6612
        %6749 = vmatprep.subr.bf16.mxu0 0
        %6750 = vmatpush1.bf16.msra.mxu0 %v6613
        %6751 = vmatprep.subr.bf16.mxu0 0
        %6752 = vmatpush1.bf16.msra.mxu0 0
        %6753 = vmatprep.subr.bf16.mxu0 0
        %6754 = vmatpush1.bf16.msra.mxu0 0
        %6755 = vmatprep.subr.bf16.mxu0 0
        %6756 = vmatpush1.bf16.msra.mxu0 0
        %6757 = vmatprep.subr.bf16.mxu0 0
        %6758 = vmatpush1.bf16.msra.mxu0 0
        %6759 = vmatprep.subr.bf16.mxu0 0
        %6760 = vmatpush1.bf16.msra.mxu0 0
        %6761 = vmatprep.subr.bf16.mxu0 0
        %6762 = vmatpush1.bf16.msra.mxu0 0
        %6763 = vmatprep.subr.bf16.mxu0 0
        %6764 = vmatpush1.bf16.msra.mxu0 0
        %6765 = vmatprep.subr.bf16.mxu0 0
        %6766 = vmatpush1.bf16.msra.mxu0 0
        %6767 = vmatprep.mubr.bf16.mxu0 0
        %6768 = vmatmul.mubr.bf16.gmra.mrb[0].mxu0 %v6416
        %v6769 = vpop.f32.mrb[0].mxu0
        %v6770 = vadd.f32 %v6673, %v6769
        %v6771 = vpop.f32.mrb[0].mxu0
        %v6772 = vpop.f32.mrb[0].mxu0
        %v6773 = vadd.f32 %v6676, %v6772
        %v6774 = vpop.f32.mrb[0].mxu0
        %6775 = vmatprep.mubr.bf16.mxu0 0
        %6776 = vmatmul.mubr.bf16.gmra.mrb[0].mxu0 %v6419
        %v6777 = vpop.f32.mrb[0].mxu0
        %v6778 = vadd.f32 %v6681, %v6777
        %v6779 = vpop.f32.mrb[0].mxu0
        %v6780 = vpop.f32.mrb[0].mxu0
        %v6781 = vadd.f32 %v6684, %v6780
        %v6782 = vpop.f32.mrb[0].mxu0
        %6783 = vmatprep.mubr.bf16.mxu0 0
        %6784 = vmatmul.mubr.bf16.gmra.mrb[0].mxu0 %v6422
        %v6785 = vpop.f32.mrb[0].mxu0
        %v6786 = vadd.f32 %v6689, %v6785
        %v6787 = vpop.f32.mrb[0].mxu0
        %v6788 = vpop.f32.mrb[0].mxu0
        %v6789 = vadd.f32 %v6692, %v6788
        %v6790 = vpop.f32.mrb[0].mxu0
        %6791 = vmatprep.mubr.bf16.mxu0 0
        %6792 = vmatmul.mubr.bf16.gmra.mrb[0].mxu0 %v6425
        %v6793 = vpop.f32.mrb[0].mxu0
        %v6794 = vadd.f32 %v6697, %v6793
        %v6795 = vpop.f32.mrb[0].mxu0
        %v6796 = vpop.f32.mrb[0].mxu0
        %v6797 = vadd.f32 %v6700, %v6796
        %v6798 = vpop.f32.mrb[0].mxu0
        %6799 = vmatprep.mubr.bf16.mxu0 0
        %6800 = vmatmul.mubr.bf16.gmra.mrb[0].mxu0 %v6428
        %v6801 = vpop.f32.mrb[0].mxu0
        %v6802 = vadd.f32 %v6705, %v6801
        %v6803 = vpop.f32.mrb[0].mxu0
        %v6804 = vpop.f32.mrb[0].mxu0
        %v6805 = vadd.f32 %v6708, %v6804
        %v6806 = vpop.f32.mrb[0].mxu0
        %6807 = vmatprep.mubr.bf16.mxu0 0
        %6808 = vmatmul.mubr.bf16.gmra.mrb[0].mxu0 %v6431
        %v6809 = vpop.f32.mrb[0].mxu0
        %v6810 = vadd.f32 %v6713, %v6809
        %v6811 = vpop.f32.mrb[0].mxu0
        %v6812 = vpop.f32.mrb[0].mxu0
        %v6813 = vadd.f32 %v6716, %v6812
        %v6814 = vpop.f32.mrb[0].mxu0
        %6815 = vmatprep.mubr.bf16.mxu0 0
        %6816 = vmatmul.mubr.bf16.gmra.mrb[0].mxu0 %v6434
        %v6817 = vpop.f32.mrb[0].mxu0
        %v6818 = vadd.f32 %v6721, %v6817
        %v6819 = vpop.f32.mrb[0].mxu0
        %v6820 = vpop.f32.mrb[0].mxu0
        %v6821 = vadd.f32 %v6724, %v6820
        %v6822 = vpop.f32.mrb[0].mxu0
        %6823 = vmatprep.mubr.bf16.mxu0 0
        %6824 = vmatmul.mubr.bf16.gmra.mrb[0].mxu0 %v6437
        %v6825 = vpop.f32.mrb[0].mxu0
        %v6826 = vadd.f32 %v6729, %v6825
        %v6827 = vpop.f32.mrb[0].mxu0
        %v6828 = vpop.f32.mrb[0].mxu0
        %v6829 = vadd.f32 %v6732, %v6828
        %v6830 = vpop.f32.mrb[0].mxu0
        %6831 = vdwg.mxu0
        %v6880 = vunpack.c.l.b16 %v6222
        %v6881 = vunpack.c.l.b16 %v6223
        %v6882 = vunpack.c.l.b16 %v6224
        %v6883 = vunpack.c.l.b16 %v6225
        %v6884 = vunpack.c.l.b16 %v6226
        %v6885 = vunpack.c.l.b16 %v6227
        %v6886 = vunpack.c.l.b16 %v6228
        %v6887 = vunpack.c.l.b16 %v6229
        %v6888 = vunpack.c.l.b16 %v6230
        %v6889 = vunpack.c.l.b16 %v6231
        %v6890 = vunpack.c.l.b16 %v6232
        %v6891 = vunpack.c.l.b16 %v6233
        %v6892 = vunpack.c.l.b16 %v6234
        %v6893 = vunpack.c.l.b16 %v6235
        %v6894 = vunpack.c.l.b16 %v6236
        %v6895 = vunpack.c.l.b16 %v6237
        %v6896 = vunpack.c.l.b16 %v6238
        %v6897 = vunpack.c.l.b16 %v6239
        %v6898 = vunpack.c.l.b16 %v6240
        %v6899 = vunpack.c.l.b16 %v6241
        %v6900 = vunpack.c.l.b16 %v6242
        %v6901 = vunpack.c.l.b16 %v6243
        %v6902 = vunpack.c.l.b16 %v6244
        %v6903 = vunpack.c.l.b16 %v6245
        %v6904 = vunpack.c.l.b16 %v6246
        %v6905 = vunpack.c.l.b16 %v6247
        %v6906 = vunpack.c.l.b16 %v6248
        %v6907 = vunpack.c.l.b16 %v6249
        %v6908 = vunpack.c.l.b16 %v6250
        %v6909 = vunpack.c.l.b16 %v6251
        %v6910 = vunpack.c.l.b16 %v6252
        %v6911 = vunpack.c.l.b16 %v6253
        %v6912 = vunpack.c.l.b16 %v6254
        %v6913 = vunpack.c.l.b16 %v6255
        %v6914 = vunpack.c.l.b16 %v6256
        %v6915 = vunpack.c.l.b16 %v6257
        %v6916 = vunpack.c.l.b16 %v6258
        %v6917 = vunpack.c.l.b16 %v6259
        %v6918 = vunpack.c.l.b16 %v6260
        %v6919 = vunpack.c.l.b16 %v6261
        %v6920 = vunpack.c.l.b16 %v6262
        %v6921 = vunpack.c.l.b16 %v6263
        %v6922 = vunpack.c.l.b16 %v6264
        %v6923 = vunpack.c.l.b16 %v6265
        %v6924 = vunpack.c.l.b16 %v6266
        %v6925 = vunpack.c.l.b16 %v6267
        %v6926 = vunpack.c.l.b16 %v6268
        %v6927 = vunpack.c.l.b16 %v6269
        %v6928 = vpack.c.b16 %v6881, %v6880
        %v6929 = vpack.c.b16 %v6883, %v6882
        %v6930 = vpack.c.b16 %v6885, %v6884
        %v6931 = vpack.c.b16 %v6887, %v6886
        %v6932 = vpack.c.b16 %v6889, %v6888
        %v6933 = vpack.c.b16 %v6891, %v6890
        %v6934 = vpack.c.b16 %v6893, %v6892
        %v6935 = vpack.c.b16 %v6895, %v6894
        %v6936 = vpack.c.b16 %v6897, %v6896
        %v6937 = vpack.c.b16 %v6899, %v6898
        %v6938 = vpack.c.b16 %v6901, %v6900
        %v6939 = vpack.c.b16 %v6903, %v6902
        %v6940 = vpack.c.b16 %v6905, %v6904
        %v6941 = vpack.c.b16 %v6907, %v6906
        %v6942 = vpack.c.b16 %v6909, %v6908
        %v6943 = vpack.c.b16 %v6911, %v6910
        %v6944 = vpack.c.b16 %v6913, %v6912
        %v6945 = vpack.c.b16 %v6915, %v6914
        %v6946 = vpack.c.b16 %v6917, %v6916
        %v6947 = vpack.c.b16 %v6919, %v6918
        %v6948 = vpack.c.b16 %v6921, %v6920
        %v6949 = vpack.c.b16 %v6923, %v6922
        %v6950 = vpack.c.b16 %v6925, %v6924
        %v6951 = vpack.c.b16 %v6927, %v6926
        %6976 = vmatprep.subr.bf16.mxu0 0
        %6977 = vmatpush1.bf16.msra.mxu0 %v6928
        %6978 = vmatprep.subr.bf16.mxu0 0
        %6979 = vmatpush1.bf16.msra.mxu0 %v6929
        %6980 = vmatprep.subr.bf16.mxu0 0
        %6981 = vmatpush1.bf16.msra.mxu0 %v6930
        %6982 = vmatprep.subr.bf16.mxu0 0
        %6983 = vmatpush1.bf16.msra.mxu0 %v6931
        %6984 = vmatprep.subr.bf16.mxu0 0
        %6985 = vmatpush1.bf16.msra.mxu0 %v6932
        %6986 = vmatprep.subr.bf16.mxu0 0
        %6987 = vmatpush1.bf16.msra.mxu0 %v6933
        %6988 = vmatprep.subr.bf16.mxu0 0
        %6989 = vmatpush1.bf16.msra.mxu0 %v6934
        %6990 = vmatprep.subr.bf16.mxu0 0
        %6991 = vmatpush1.bf16.msra.mxu0 %v6935
        %6992 = vmatprep.subr.bf16.mxu0 0
        %6993 = vmatpush1.bf16.msra.mxu0 %v6936
        %6994 = vmatprep.subr.bf16.mxu0 0
        %6995 = vmatpush1.bf16.msra.mxu0 %v6937
        %6996 = vmatprep.subr.bf16.mxu0 0
        %6997 = vmatpush1.bf16.msra.mxu0 %v6938
        %6998 = vmatprep.subr.bf16.mxu0 0
        %6999 = vmatpush1.bf16.msra.mxu0 %v6939
        %7000 = vmatprep.subr.bf16.mxu0 0
        %7001 = vmatpush1.bf16.msra.mxu0 %v6940
        %7002 = vmatprep.subr.bf16.mxu0 0
        %7003 = vmatpush1.bf16.msra.mxu0 %v6941
        %7004 = vmatprep.subr.bf16.mxu0 0
        %7005 = vmatpush1.bf16.msra.mxu0 %v6942
        %7006 = vmatprep.subr.bf16.mxu0 0
        %7007 = vmatpush1.bf16.msra.mxu0 %v6943
        %7008 = vmatprep.mubr.bf16.mxu0 %v6073
        %7009 = vmatmul.mubr.bf16.gmra.mrb[0].mxu0 %v6046
        %v7010 = vpop.f32.mrb[0].mxu0
        %v7011 = vadd.f32 %v6770, %v7010
        %v7012 = vpop.f32.mrb[0].mxu0
        %v7013 = vpop.f32.mrb[0].mxu0
        %v7014 = vadd.f32 %v6773, %v7013
        %v7015 = vpop.f32.mrb[0].mxu0
        %7016 = vmatprep.mubr.bf16.mxu0 %v6085
        %7017 = vmatmul.mubr.bf16.gmra.mrb[0].mxu0 %v6047
        %v7018 = vpop.f32.mrb[0].mxu0
        %v7019 = vadd.f32 %v6778, %v7018
        %v7020 = vpop.f32.mrb[0].mxu0
        %v7021 = vpop.f32.mrb[0].mxu0
        %v7022 = vadd.f32 %v6781, %v7021
        %v7023 = vpop.f32.mrb[0].mxu0
        %7024 = vmatprep.mubr.bf16.mxu0 %v6097
        %7025 = vmatmul.mubr.bf16.gmra.mrb[0].mxu0 %v6048
        %v7026 = vpop.f32.mrb[0].mxu0
        %v7027 = vadd.f32 %v6786, %v7026
        %v7028 = vpop.f32.mrb[0].mxu0
        %v7029 = vpop.f32.mrb[0].mxu0
        %v7030 = vadd.f32 %v6789, %v7029
        %v7031 = vpop.f32.mrb[0].mxu0
        %7032 = vmatprep.mubr.bf16.mxu0 %v6109
        %7033 = vmatmul.mubr.bf16.gmra.mrb[0].mxu0 %v6049
        %v7034 = vpop.f32.mrb[0].mxu0
        %v7035 = vadd.f32 %v6794, %v7034
        %v7036 = vpop.f32.mrb[0].mxu0
        %v7037 = vpop.f32.mrb[0].mxu0
        %v7038 = vadd.f32 %v6797, %v7037
        %v7039 = vpop.f32.mrb[0].mxu0
        %7040 = vmatprep.mubr.bf16.mxu0 %v6121
        %7041 = vmatmul.mubr.bf16.gmra.mrb[0].mxu0 %v6050
        %v7042 = vpop.f32.mrb[0].mxu0
        %v7043 = vadd.f32 %v6802, %v7042
        %v7044 = vpop.f32.mrb[0].mxu0
        %v7045 = vpop.f32.mrb[0].mxu0
        %v7046 = vadd.f32 %v6805, %v7045
        %v7047 = vpop.f32.mrb[0].mxu0
        %7048 = vmatprep.mubr.bf16.mxu0 %v6133
        %7049 = vmatmul.mubr.bf16.gmra.mrb[0].mxu0 %v6051
        %v7050 = vpop.f32.mrb[0].mxu0
        %v7051 = vadd.f32 %v6810, %v7050
        %v7052 = vpop.f32.mrb[0].mxu0
        %v7053 = vpop.f32.mrb[0].mxu0
        %v7054 = vadd.f32 %v6813, %v7053
        %v7055 = vpop.f32.mrb[0].mxu0
        %7056 = vmatprep.mubr.bf16.mxu0 %v6145
        %7057 = vmatmul.mubr.bf16.gmra.mrb[0].mxu0 %v6052
        %v7058 = vpop.f32.mrb[0].mxu0
        %v7059 = vadd.f32 %v6818, %v7058
        %v7060 = vpop.f32.mrb[0].mxu0
        %v7061 = vpop.f32.mrb[0].mxu0
        %v7062 = vadd.f32 %v6821, %v7061
        %v7063 = vpop.f32.mrb[0].mxu0
        %7064 = vmatprep.mubr.bf16.mxu0 %v6157
        %7065 = vmatmul.mubr.bf16.gmra.mrb[0].mxu0 %v6053
        %v7066 = vpop.f32.mrb[0].mxu0
        %v7067 = vadd.f32 %v6826, %v7066
        %v7068 = vpop.f32.mrb[0].mxu0
        %v7069 = vpop.f32.mrb[0].mxu0
        %v7070 = vadd.f32 %v6829, %v7069
        %v7071 = vpop.f32.mrb[0].mxu0
        %7072 = vdwg.mxu0
        %7073 = vmatprep.subr.bf16.mxu0 0
        %7074 = vmatpush1.bf16.msra.mxu0 %v6944
        %7075 = vmatprep.subr.bf16.mxu0 0
        %7076 = vmatpush1.bf16.msra.mxu0 %v6945
        %7077 = vmatprep.subr.bf16.mxu0 0
        %7078 = vmatpush1.bf16.msra.mxu0 %v6946
        %7079 = vmatprep.subr.bf16.mxu0 0
        %7080 = vmatpush1.bf16.msra.mxu0 %v6947
        %7081 = vmatprep.subr.bf16.mxu0 0
        %7082 = vmatpush1.bf16.msra.mxu0 %v6948
        %7083 = vmatprep.subr.bf16.mxu0 0
        %7084 = vmatpush1.bf16.msra.mxu0 %v6949
        %7085 = vmatprep.subr.bf16.mxu0 0
        %7086 = vmatpush1.bf16.msra.mxu0 %v6950
        %7087 = vmatprep.subr.bf16.mxu0 0
        %7088 = vmatpush1.bf16.msra.mxu0 %v6951
        %7089 = vmatprep.subr.bf16.mxu0 0
        %7090 = vmatpush1.bf16.msra.mxu0 0
        %7091 = vmatprep.subr.bf16.mxu0 0
        %7092 = vmatpush1.bf16.msra.mxu0 0
        %7093 = vmatprep.subr.bf16.mxu0 0
        %7094 = vmatpush1.bf16.msra.mxu0 0
        %7095 = vmatprep.subr.bf16.mxu0 0
        %7096 = vmatpush1.bf16.msra.mxu0 0
        %7097 = vmatprep.subr.bf16.mxu0 0
        %7098 = vmatpush1.bf16.msra.mxu0 0
        %7099 = vmatprep.subr.bf16.mxu0 0
        %7100 = vmatpush1.bf16.msra.mxu0 0
        %7101 = vmatprep.subr.bf16.mxu0 0
        %7102 = vmatpush1.bf16.msra.mxu0 0
        %7103 = vmatprep.subr.bf16.mxu0 0
        %7104 = vmatpush1.bf16.msra.mxu0 0
        %7105 = vmatprep.mubr.bf16.mxu0 0
        %7106 = vmatmul.mubr.bf16.gmra.mrb[0].mxu0 %v6192
        %v7107 = vpop.f32.mrb[0].mxu0
        %v7108 = vadd.f32 %v7011, %v7107
        %v7109 = vpop.f32.mrb[0].mxu0
        %v7110 = vpop.f32.mrb[0].mxu0
        %v7111 = vadd.f32 %v7014, %v7110
        %v7112 = vpop.f32.mrb[0].mxu0
        %7113 = vmatprep.mubr.bf16.mxu0 0
        %7114 = vmatmul.mubr.bf16.gmra.mrb[0].mxu0 %v6195
        %v7115 = vpop.f32.mrb[0].mxu0
        %v7116 = vadd.f32 %v7019, %v7115
        %v7117 = vpop.f32.mrb[0].mxu0
        %v7118 = vpop.f32.mrb[0].mxu0
        %v7119 = vadd.f32 %v7022, %v7118
        %v7120 = vpop.f32.mrb[0].mxu0
        %7121 = vmatprep.mubr.bf16.mxu0 0
        %7122 = vmatmul.mubr.bf16.gmra.mrb[0].mxu0 %v6198
        %v7123 = vpop.f32.mrb[0].mxu0
        %v7124 = vadd.f32 %v7027, %v7123
        %v7125 = vpop.f32.mrb[0].mxu0
        %v7126 = vpop.f32.mrb[0].mxu0
        %v7127 = vadd.f32 %v7030, %v7126
        %v7128 = vpop.f32.mrb[0].mxu0
        %7129 = vmatprep.mubr.bf16.mxu0 0
        %7130 = vmatmul.mubr.bf16.gmra.mrb[0].mxu0 %v6201
        %v7131 = vpop.f32.mrb[0].mxu0
        %v7132 = vadd.f32 %v7035, %v7131
        %v7133 = vpop.f32.mrb[0].mxu0
        %v7134 = vpop.f32.mrb[0].mxu0
        %v7135 = vadd.f32 %v7038, %v7134
        %v7136 = vpop.f32.mrb[0].mxu0
        %7137 = vmatprep.mubr.bf16.mxu0 0
        %7138 = vmatmul.mubr.bf16.gmra.mrb[0].mxu0 %v6204
        %v7139 = vpop.f32.mrb[0].mxu0
        %v7140 = vadd.f32 %v7043, %v7139
        %v7141 = vpop.f32.mrb[0].mxu0
        %v7142 = vpop.f32.mrb[0].mxu0
        %v7143 = vadd.f32 %v7046, %v7142
        %v7144 = vpop.f32.mrb[0].mxu0
        %7145 = vmatprep.mubr.bf16.mxu0 0
        %7146 = vmatmul.mubr.bf16.gmra.mrb[0].mxu0 %v6207
        %v7147 = vpop.f32.mrb[0].mxu0
        %v7148 = vadd.f32 %v7051, %v7147
        %v7149 = vpop.f32.mrb[0].mxu0
        %v7150 = vpop.f32.mrb[0].mxu0
        %v7151 = vadd.f32 %v7054, %v7150
        %v7152 = vpop.f32.mrb[0].mxu0
        %7153 = vmatprep.mubr.bf16.mxu0 0
        %7154 = vmatmul.mubr.bf16.gmra.mrb[0].mxu0 %v6210
        %v7155 = vpop.f32.mrb[0].mxu0
        %v7156 = vadd.f32 %v7059, %v7155
        %v7157 = vpop.f32.mrb[0].mxu0
        %v7158 = vpop.f32.mrb[0].mxu0
        %v7159 = vadd.f32 %v7062, %v7158
        %v7160 = vpop.f32.mrb[0].mxu0
        %7161 = vmatprep.mubr.bf16.mxu0 0
        %7162 = vmatmul.mubr.bf16.gmra.mrb[0].mxu0 %v6213
        %v7163 = vpop.f32.mrb[0].mxu0
        %v7164 = vadd.f32 %v7067, %v7163
        %v7165 = vpop.f32.mrb[0].mxu0
        %v7166 = vpop.f32.mrb[0].mxu0
        %v7167 = vadd.f32 %v7070, %v7166
        %v7168 = vpop.f32.mrb[0].mxu0
        %7169 = vdwg.mxu0
        %s7170 = scalar_lea.vmem [#allocation3], 160
        %v7171 = vld [vmem:[%s7170] sm:$0xff]
        %v7172 = vld [vmem:[%s7170 + $0x10] sm:$0xff]
        %v7173 = vld [vmem:[%s7170 + $0x20] sm:$0xff]
        %v7174 = vld [vmem:[%s7170 + $0x30] sm:$0xff]
        %v7175 = vld [vmem:[%s7170 + $0x40] sm:$0xff]
        %v7176 = vld [vmem:[%s7170 + $0x50] sm:$0xff]
        %v7177 = vld [vmem:[%s7170 + $0x60] sm:$0xff]
        %v7178 = vld [vmem:[%s7170 + $0x70] sm:$0xff]
        %v7179 = vld [vmem:[%s7170 + $0x8] sm:$0x1]
        %v7180 = vld [vmem:[%s7170 + $0x18] sm:$0x1]
        %v7181 = vld [vmem:[%s7170 + $0x28] sm:$0x1]
        %v7182 = vld [vmem:[%s7170 + $0x38] sm:$0x1]
        %v7183 = vld [vmem:[%s7170 + $0x48] sm:$0x1]
        %v7184 = vld [vmem:[%s7170 + $0x58] sm:$0x1]
        %v7185 = vld [vmem:[%s7170 + $0x68] sm:$0x1]
        %v7186 = vld [vmem:[%s7170 + $0x78] sm:$0x1]
        %v7188 = vshrl.u32 %v7171, 16
        %v7190 = vshll.u32 %v7171, 16
        %v7192 = vrot.slane %v7190, 1
        %v7193 = vor.u32 %v7188, %v7192
        %v7195 = vshll.u32 %v7179, 16
        %v7197 = vrot.slane %v7195, 1
        %v7198 = vsel %vm562, %v7193, %v7197
        %v7200 = vshrl.u32 %v7172, 16
        %v7202 = vshll.u32 %v7172, 16
        %v7204 = vrot.slane %v7202, 1
        %v7205 = vor.u32 %v7200, %v7204
        %v7207 = vshll.u32 %v7180, 16
        %v7209 = vrot.slane %v7207, 1
        %v7210 = vsel %vm562, %v7205, %v7209
        %v7212 = vshrl.u32 %v7173, 16
        %v7214 = vshll.u32 %v7173, 16
        %v7216 = vrot.slane %v7214, 1
        %v7217 = vor.u32 %v7212, %v7216
        %v7219 = vshll.u32 %v7181, 16
        %v7221 = vrot.slane %v7219, 1
        %v7222 = vsel %vm562, %v7217, %v7221
        %v7224 = vshrl.u32 %v7174, 16
        %v7226 = vshll.u32 %v7174, 16
        %v7228 = vrot.slane %v7226, 1
        %v7229 = vor.u32 %v7224, %v7228
        %v7231 = vshll.u32 %v7182, 16
        %v7233 = vrot.slane %v7231, 1
        %v7234 = vsel %vm562, %v7229, %v7233
        %v7236 = vshrl.u32 %v7175, 16
        %v7238 = vshll.u32 %v7175, 16
        %v7240 = vrot.slane %v7238, 1
        %v7241 = vor.u32 %v7236, %v7240
        %v7243 = vshll.u32 %v7183, 16
        %v7245 = vrot.slane %v7243, 1
        %v7246 = vsel %vm562, %v7241, %v7245
        %v7248 = vshrl.u32 %v7176, 16
        %v7250 = vshll.u32 %v7176, 16
        %v7252 = vrot.slane %v7250, 1
        %v7253 = vor.u32 %v7248, %v7252
        %v7255 = vshll.u32 %v7184, 16
        %v7257 = vrot.slane %v7255, 1
        %v7258 = vsel %vm562, %v7253, %v7257
        %v7260 = vshrl.u32 %v7177, 16
        %v7262 = vshll.u32 %v7177, 16
        %v7264 = vrot.slane %v7262, 1
        %v7265 = vor.u32 %v7260, %v7264
        %v7267 = vshll.u32 %v7185, 16
        %v7269 = vrot.slane %v7267, 1
        %v7270 = vsel %vm562, %v7265, %v7269
        %v7272 = vshrl.u32 %v7178, 16
        %v7274 = vshll.u32 %v7178, 16
        %v7276 = vrot.slane %v7274, 1
        %v7277 = vor.u32 %v7272, %v7276
        %v7279 = vshll.u32 %v7186, 16
        %v7281 = vrot.slane %v7279, 1
        %v7282 = vsel %vm562, %v7277, %v7281
        %v7291 = vld [vmem:[%s7170] sm:$0xfe]
        %v7292 = vld [vmem:[%s7170 + $0x10] sm:$0xfe]
        %v7293 = vld [vmem:[%s7170 + $0x20] sm:$0xfe]
        %v7294 = vld [vmem:[%s7170 + $0x30] sm:$0xfe]
        %v7295 = vld [vmem:[%s7170 + $0x40] sm:$0xfe]
        %v7296 = vld [vmem:[%s7170 + $0x50] sm:$0xfe]
        %v7297 = vld [vmem:[%s7170 + $0x60] sm:$0xfe]
        %v7298 = vld [vmem:[%s7170 + $0x70] sm:$0xfe]
        %v7315 = vrot.slane %v7291, 1
        %v7316 = vrot.slane %v7179, 1
        %v7317 = vsel %vm691, %v7315, %v7316
        %v7318 = vrot.slane %v7292, 1
        %v7319 = vrot.slane %v7180, 1
        %v7320 = vsel %vm691, %v7318, %v7319
        %v7321 = vrot.slane %v7293, 1
        %v7322 = vrot.slane %v7181, 1
        %v7323 = vsel %vm691, %v7321, %v7322
        %v7324 = vrot.slane %v7294, 1
        %v7325 = vrot.slane %v7182, 1
        %v7326 = vsel %vm691, %v7324, %v7325
        %v7327 = vrot.slane %v7295, 1
        %v7328 = vrot.slane %v7183, 1
        %v7329 = vsel %vm691, %v7327, %v7328
        %v7330 = vrot.slane %v7296, 1
        %v7331 = vrot.slane %v7184, 1
        %v7332 = vsel %vm691, %v7330, %v7331
        %v7333 = vrot.slane %v7297, 1
        %v7334 = vrot.slane %v7185, 1
        %v7335 = vsel %vm691, %v7333, %v7334
        %v7336 = vrot.slane %v7298, 1
        %v7337 = vrot.slane %v7186, 1
        %v7338 = vsel %vm691, %v7336, %v7337
        %v7347 = vld [vmem:[%s5556] sm:$0xf]
        %v7348 = vld [vmem:[%s5556 + $0x4] sm:$0xf]
        %v7349 = vld [vmem:[%s5556 + $0x8] sm:$0xf]
        %v7350 = vld [vmem:[%s5556 + $0xc] sm:$0xf]
        %v7351 = vld [vmem:[%s5556 + $0x10] sm:$0xf]
        %v7352 = vld [vmem:[%s5556 + $0x14] sm:$0xf]
        %v7353 = vld [vmem:[%s5556 + $0x18] sm:$0xf]
        %v7354 = vld [vmem:[%s5556 + $0x1c] sm:$0xf]
        %v7355 = vld [vmem:[%s5556 + $0x20] sm:$0xf]
        %v7356 = vld [vmem:[%s5556 + $0x24] sm:$0xf]
        %v7357 = vld [vmem:[%s5556 + $0x28] sm:$0xf]
        %v7358 = vld [vmem:[%s5556 + $0x2c] sm:$0xf]
        %v7359 = vld [vmem:[%s5556 + $0x30] sm:$0xf]
        %v7360 = vld [vmem:[%s5556 + $0x34] sm:$0xf]
        %v7361 = vld [vmem:[%s5556 + $0x38] sm:$0xf]
        %v7362 = vld [vmem:[%s5556 + $0x3c] sm:$0xf]
        %v7363 = vld [vmem:[%s5556 + $0x40] sm:$0xf]
        %v7364 = vld [vmem:[%s5556 + $0x44] sm:$0xf]
        %v7365 = vld [vmem:[%s5556 + $0x48] sm:$0xf]
        %v7366 = vld [vmem:[%s5556 + $0x4c] sm:$0xf]
        %v7367 = vld [vmem:[%s5556 + $0x50] sm:$0xf]
        %v7368 = vld [vmem:[%s5556 + $0x54] sm:$0xf]
        %v7369 = vld [vmem:[%s5556 + $0x58] sm:$0xf]
        %v7370 = vld [vmem:[%s5556 + $0x5c] sm:$0xf]
        %v7371 = vld [vmem:[%s5556 + $0x60] sm:$0xf]
        %v7372 = vld [vmem:[%s5556 + $0x64] sm:$0xf]
        %v7373 = vld [vmem:[%s5556 + $0x68] sm:$0xf]
        %v7374 = vld [vmem:[%s5556 + $0x6c] sm:$0xf]
        %v7375 = vld [vmem:[%s5556 + $0x70] sm:$0xf]
        %v7376 = vld [vmem:[%s5556 + $0x74] sm:$0xf]
        %v7377 = vld [vmem:[%s5556 + $0x78] sm:$0xf]
        %v7378 = vld [vmem:[%s5556 + $0x7c] sm:$0xf]
        %v7379 = vld [vmem:[%s5556 + $0x80] sm:$0xf]
        %v7380 = vld [vmem:[%s5556 + $0x84] sm:$0xf]
        %v7381 = vld [vmem:[%s5556 + $0x88] sm:$0xf]
        %v7382 = vld [vmem:[%s5556 + $0x8c] sm:$0xf]
        %v7383 = vld [vmem:[%s5556 + $0x90] sm:$0xf]
        %v7384 = vld [vmem:[%s5556 + $0x94] sm:$0xf]
        %v7385 = vld [vmem:[%s5556 + $0x98] sm:$0xf]
        %v7386 = vld [vmem:[%s5556 + $0x9c] sm:$0xf]
        %v7387 = vld [vmem:[%s5556 + $0xa0] sm:$0xf]
        %v7388 = vld [vmem:[%s5556 + $0xa4] sm:$0xf]
        %v7389 = vld [vmem:[%s5556 + $0xa8] sm:$0xf]
        %v7390 = vld [vmem:[%s5556 + $0xac] sm:$0xf]
        %v7391 = vld [vmem:[%s5556 + $0xb0] sm:$0xf]
        %v7392 = vld [vmem:[%s5556 + $0xb4] sm:$0xf]
        %v7393 = vld [vmem:[%s5556 + $0xb8] sm:$0xf]
        %v7394 = vld [vmem:[%s5556 + $0xbc] sm:$0xf]
        %v7443 = vunpack.c.l.b16 %v7347
        %v7444 = vunpack.c.l.b16 %v7348
        %v7445 = vunpack.c.l.b16 %v7349
        %v7446 = vunpack.c.l.b16 %v7350
        %v7447 = vunpack.c.l.b16 %v7351
        %v7448 = vunpack.c.l.b16 %v7352
        %v7449 = vunpack.c.l.b16 %v7353
        %v7450 = vunpack.c.l.b16 %v7354
        %v7451 = vunpack.c.l.b16 %v7355
        %v7452 = vunpack.c.l.b16 %v7356
        %v7453 = vunpack.c.l.b16 %v7357
        %v7454 = vunpack.c.l.b16 %v7358
        %v7455 = vunpack.c.l.b16 %v7359
        %v7456 = vunpack.c.l.b16 %v7360
        %v7457 = vunpack.c.l.b16 %v7361
        %v7458 = vunpack.c.l.b16 %v7362
        %v7459 = vunpack.c.l.b16 %v7363
        %v7460 = vunpack.c.l.b16 %v7364
        %v7461 = vunpack.c.l.b16 %v7365
        %v7462 = vunpack.c.l.b16 %v7366
        %v7463 = vunpack.c.l.b16 %v7367
        %v7464 = vunpack.c.l.b16 %v7368
        %v7465 = vunpack.c.l.b16 %v7369
        %v7466 = vunpack.c.l.b16 %v7370
        %v7467 = vunpack.c.l.b16 %v7371
        %v7468 = vunpack.c.l.b16 %v7372
        %v7469 = vunpack.c.l.b16 %v7373
        %v7470 = vunpack.c.l.b16 %v7374
        %v7471 = vunpack.c.l.b16 %v7375
        %v7472 = vunpack.c.l.b16 %v7376
        %v7473 = vunpack.c.l.b16 %v7377
        %v7474 = vunpack.c.l.b16 %v7378
        %v7475 = vunpack.c.l.b16 %v7379
        %v7476 = vunpack.c.l.b16 %v7380
        %v7477 = vunpack.c.l.b16 %v7381
        %v7478 = vunpack.c.l.b16 %v7382
        %v7479 = vunpack.c.l.b16 %v7383
        %v7480 = vunpack.c.l.b16 %v7384
        %v7481 = vunpack.c.l.b16 %v7385
        %v7482 = vunpack.c.l.b16 %v7386
        %v7483 = vunpack.c.l.b16 %v7387
        %v7484 = vunpack.c.l.b16 %v7388
        %v7485 = vunpack.c.l.b16 %v7389
        %v7486 = vunpack.c.l.b16 %v7390
        %v7487 = vunpack.c.l.b16 %v7391
        %v7488 = vunpack.c.l.b16 %v7392
        %v7489 = vunpack.c.l.b16 %v7393
        %v7490 = vunpack.c.l.b16 %v7394
        %v7491 = vpack.c.b16 %v7444, %v7443
        %v7492 = vpack.c.b16 %v7446, %v7445
        %v7493 = vpack.c.b16 %v7448, %v7447
        %v7494 = vpack.c.b16 %v7450, %v7449
        %v7495 = vpack.c.b16 %v7452, %v7451
        %v7496 = vpack.c.b16 %v7454, %v7453
        %v7497 = vpack.c.b16 %v7456, %v7455
        %v7498 = vpack.c.b16 %v7458, %v7457
        %v7499 = vpack.c.b16 %v7460, %v7459
        %v7500 = vpack.c.b16 %v7462, %v7461
        %v7501 = vpack.c.b16 %v7464, %v7463
        %v7502 = vpack.c.b16 %v7466, %v7465
        %v7503 = vpack.c.b16 %v7468, %v7467
        %v7504 = vpack.c.b16 %v7470, %v7469
        %v7505 = vpack.c.b16 %v7472, %v7471
        %v7506 = vpack.c.b16 %v7474, %v7473
        %v7507 = vpack.c.b16 %v7476, %v7475
        %v7508 = vpack.c.b16 %v7478, %v7477
        %v7509 = vpack.c.b16 %v7480, %v7479
        %v7510 = vpack.c.b16 %v7482, %v7481
        %v7511 = vpack.c.b16 %v7484, %v7483
        %v7512 = vpack.c.b16 %v7486, %v7485
        %v7513 = vpack.c.b16 %v7488, %v7487
        %v7514 = vpack.c.b16 %v7490, %v7489
        %7539 = vmatprep.subr.bf16.mxu0 0
        %7540 = vmatpush1.bf16.msra.mxu0 %v7491
        %7541 = vmatprep.subr.bf16.mxu0 0
        %7542 = vmatpush1.bf16.msra.mxu0 %v7492
        %7543 = vmatprep.subr.bf16.mxu0 0
        %7544 = vmatpush1.bf16.msra.mxu0 %v7493
        %7545 = vmatprep.subr.bf16.mxu0 0
        %7546 = vmatpush1.bf16.msra.mxu0 %v7494
        %7547 = vmatprep.subr.bf16.mxu0 0
        %7548 = vmatpush1.bf16.msra.mxu0 %v7495
        %7549 = vmatprep.subr.bf16.mxu0 0
        %7550 = vmatpush1.bf16.msra.mxu0 %v7496
        %7551 = vmatprep.subr.bf16.mxu0 0
        %7552 = vmatpush1.bf16.msra.mxu0 %v7497
        %7553 = vmatprep.subr.bf16.mxu0 0
        %7554 = vmatpush1.bf16.msra.mxu0 %v7498
        %7555 = vmatprep.subr.bf16.mxu0 0
        %7556 = vmatpush1.bf16.msra.mxu0 %v7499
        %7557 = vmatprep.subr.bf16.mxu0 0
        %7558 = vmatpush1.bf16.msra.mxu0 %v7500
        %7559 = vmatprep.subr.bf16.mxu0 0
        %7560 = vmatpush1.bf16.msra.mxu0 %v7501
        %7561 = vmatprep.subr.bf16.mxu0 0
        %7562 = vmatpush1.bf16.msra.mxu0 %v7502
        %7563 = vmatprep.subr.bf16.mxu0 0
        %7564 = vmatpush1.bf16.msra.mxu0 %v7503
        %7565 = vmatprep.subr.bf16.mxu0 0
        %7566 = vmatpush1.bf16.msra.mxu0 %v7504
        %7567 = vmatprep.subr.bf16.mxu0 0
        %7568 = vmatpush1.bf16.msra.mxu0 %v7505
        %7569 = vmatprep.subr.bf16.mxu0 0
        %7570 = vmatpush1.bf16.msra.mxu0 %v7506
        %7571 = vmatprep.mubr.bf16.mxu0 %v7198
        %7572 = vmatmul.mubr.bf16.gmra.mrb[0].mxu0 %v7171
        %v7573 = vpop.f32.mrb[0].mxu0
        %v7574 = vadd.f32 0.0, %v7573
        %v7575 = vpop.f32.mrb[0].mxu0
        %v7576 = vpop.f32.mrb[0].mxu0
        %v7577 = vadd.f32 0.0, %v7576
        %v7578 = vpop.f32.mrb[0].mxu0
        %7579 = vmatprep.mubr.bf16.mxu0 %v7210
        %7580 = vmatmul.mubr.bf16.gmra.mrb[0].mxu0 %v7172
        %v7581 = vpop.f32.mrb[0].mxu0
        %v7582 = vadd.f32 0.0, %v7581
        %v7583 = vpop.f32.mrb[0].mxu0
        %v7584 = vpop.f32.mrb[0].mxu0
        %v7585 = vadd.f32 0.0, %v7584
        %v7586 = vpop.f32.mrb[0].mxu0
        %7587 = vmatprep.mubr.bf16.mxu0 %v7222
        %7588 = vmatmul.mubr.bf16.gmra.mrb[0].mxu0 %v7173
        %v7589 = vpop.f32.mrb[0].mxu0
        %v7590 = vadd.f32 0.0, %v7589
        %v7591 = vpop.f32.mrb[0].mxu0
        %v7592 = vpop.f32.mrb[0].mxu0
        %v7593 = vadd.f32 0.0, %v7592
        %v7594 = vpop.f32.mrb[0].mxu0
        %7595 = vmatprep.mubr.bf16.mxu0 %v7234
        %7596 = vmatmul.mubr.bf16.gmra.mrb[0].mxu0 %v7174
        %v7597 = vpop.f32.mrb[0].mxu0
        %v7598 = vadd.f32 0.0, %v7597
        %v7599 = vpop.f32.mrb[0].mxu0
        %v7600 = vpop.f32.mrb[0].mxu0
        %v7601 = vadd.f32 0.0, %v7600
        %v7602 = vpop.f32.mrb[0].mxu0
        %7603 = vmatprep.mubr.bf16.mxu0 %v7246
        %7604 = vmatmul.mubr.bf16.gmra.mrb[0].mxu0 %v7175
        %v7605 = vpop.f32.mrb[0].mxu0
        %v7606 = vadd.f32 0.0, %v7605
        %v7607 = vpop.f32.mrb[0].mxu0
        %v7608 = vpop.f32.mrb[0].mxu0
        %v7609 = vadd.f32 0.0, %v7608
        %v7610 = vpop.f32.mrb[0].mxu0
        %7611 = vmatprep.mubr.bf16.mxu0 %v7258
        %7612 = vmatmul.mubr.bf16.gmra.mrb[0].mxu0 %v7176
        %v7613 = vpop.f32.mrb[0].mxu0
        %v7614 = vadd.f32 0.0, %v7613
        %v7615 = vpop.f32.mrb[0].mxu0
        %v7616 = vpop.f32.mrb[0].mxu0
        %v7617 = vadd.f32 0.0, %v7616
        %v7618 = vpop.f32.mrb[0].mxu0
        %7619 = vmatprep.mubr.bf16.mxu0 %v7270
        %7620 = vmatmul.mubr.bf16.gmra.mrb[0].mxu0 %v7177
        %v7621 = vpop.f32.mrb[0].mxu0
        %v7622 = vadd.f32 0.0, %v7621
        %v7623 = vpop.f32.mrb[0].mxu0
        %v7624 = vpop.f32.mrb[0].mxu0
        %v7625 = vadd.f32 0.0, %v7624
        %v7626 = vpop.f32.mrb[0].mxu0
        %7627 = vmatprep.mubr.bf16.mxu0 %v7282
        %7628 = vmatmul.mubr.bf16.gmra.mrb[0].mxu0 %v7178
        %v7629 = vpop.f32.mrb[0].mxu0
        %v7630 = vadd.f32 0.0, %v7629
        %v7631 = vpop.f32.mrb[0].mxu0
        %v7632 = vpop.f32.mrb[0].mxu0
        %v7633 = vadd.f32 0.0, %v7632
        %v7634 = vpop.f32.mrb[0].mxu0
        %7635 = vdwg.mxu0
        %7636 = vmatprep.subr.bf16.mxu0 0
        %7637 = vmatpush1.bf16.msra.mxu0 %v7507
        %7638 = vmatprep.subr.bf16.mxu0 0
        %7639 = vmatpush1.bf16.msra.mxu0 %v7508
        %7640 = vmatprep.subr.bf16.mxu0 0
        %7641 = vmatpush1.bf16.msra.mxu0 %v7509
        %7642 = vmatprep.subr.bf16.mxu0 0
        %7643 = vmatpush1.bf16.msra.mxu0 %v7510
        %7644 = vmatprep.subr.bf16.mxu0 0
        %7645 = vmatpush1.bf16.msra.mxu0 %v7511
        %7646 = vmatprep.subr.bf16.mxu0 0
        %7647 = vmatpush1.bf16.msra.mxu0 %v7512
        %7648 = vmatprep.subr.bf16.mxu0 0
        %7649 = vmatpush1.bf16.msra.mxu0 %v7513
        %7650 = vmatprep.subr.bf16.mxu0 0
        %7651 = vmatpush1.bf16.msra.mxu0 %v7514
        %7652 = vmatprep.subr.bf16.mxu0 0
        %7653 = vmatpush1.bf16.msra.mxu0 0
        %7654 = vmatprep.subr.bf16.mxu0 0
        %7655 = vmatpush1.bf16.msra.mxu0 0
        %7656 = vmatprep.subr.bf16.mxu0 0
        %7657 = vmatpush1.bf16.msra.mxu0 0
        %7658 = vmatprep.subr.bf16.mxu0 0
        %7659 = vmatpush1.bf16.msra.mxu0 0
        %7660 = vmatprep.subr.bf16.mxu0 0
        %7661 = vmatpush1.bf16.msra.mxu0 0
        %7662 = vmatprep.subr.bf16.mxu0 0
        %7663 = vmatpush1.bf16.msra.mxu0 0
        %7664 = vmatprep.subr.bf16.mxu0 0
        %7665 = vmatpush1.bf16.msra.mxu0 0
        %7666 = vmatprep.subr.bf16.mxu0 0
        %7667 = vmatpush1.bf16.msra.mxu0 0
        %7668 = vmatprep.mubr.bf16.mxu0 0
        %7669 = vmatmul.mubr.bf16.gmra.mrb[0].mxu0 %v7317
        %v7670 = vpop.f32.mrb[0].mxu0
        %v7671 = vadd.f32 %v7574, %v7670
        %v7672 = vpop.f32.mrb[0].mxu0
        %v7673 = vpop.f32.mrb[0].mxu0
        %v7674 = vadd.f32 %v7577, %v7673
        %v7675 = vpop.f32.mrb[0].mxu0
        %7676 = vmatprep.mubr.bf16.mxu0 0
        %7677 = vmatmul.mubr.bf16.gmra.mrb[0].mxu0 %v7320
        %v7678 = vpop.f32.mrb[0].mxu0
        %v7679 = vadd.f32 %v7582, %v7678
        %v7680 = vpop.f32.mrb[0].mxu0
        %v7681 = vpop.f32.mrb[0].mxu0
        %v7682 = vadd.f32 %v7585, %v7681
        %v7683 = vpop.f32.mrb[0].mxu0
        %7684 = vmatprep.mubr.bf16.mxu0 0
        %7685 = vmatmul.mubr.bf16.gmra.mrb[0].mxu0 %v7323
        %v7686 = vpop.f32.mrb[0].mxu0
        %v7687 = vadd.f32 %v7590, %v7686
        %v7688 = vpop.f32.mrb[0].mxu0
        %v7689 = vpop.f32.mrb[0].mxu0
        %v7690 = vadd.f32 %v7593, %v7689
        %v7691 = vpop.f32.mrb[0].mxu0
        %7692 = vmatprep.mubr.bf16.mxu0 0
        %7693 = vmatmul.mubr.bf16.gmra.mrb[0].mxu0 %v7326
        %v7694 = vpop.f32.mrb[0].mxu0
        %v7695 = vadd.f32 %v7598, %v7694
        %v7696 = vpop.f32.mrb[0].mxu0
        %v7697 = vpop.f32.mrb[0].mxu0
        %v7698 = vadd.f32 %v7601, %v7697
        %v7699 = vpop.f32.mrb[0].mxu0
        %7700 = vmatprep.mubr.bf16.mxu0 0
        %7701 = vmatmul.mubr.bf16.gmra.mrb[0].mxu0 %v7329
        %v7702 = vpop.f32.mrb[0].mxu0
        %v7703 = vadd.f32 %v7606, %v7702
        %v7704 = vpop.f32.mrb[0].mxu0
        %v7705 = vpop.f32.mrb[0].mxu0
        %v7706 = vadd.f32 %v7609, %v7705
        %v7707 = vpop.f32.mrb[0].mxu0
        %7708 = vmatprep.mubr.bf16.mxu0 0
        %7709 = vmatmul.mubr.bf16.gmra.mrb[0].mxu0 %v7332
        %v7710 = vpop.f32.mrb[0].mxu0
        %v7711 = vadd.f32 %v7614, %v7710
        %v7712 = vpop.f32.mrb[0].mxu0
        %v7713 = vpop.f32.mrb[0].mxu0
        %v7714 = vadd.f32 %v7617, %v7713
        %v7715 = vpop.f32.mrb[0].mxu0
        %7716 = vmatprep.mubr.bf16.mxu0 0
        %7717 = vmatmul.mubr.bf16.gmra.mrb[0].mxu0 %v7335
        %v7718 = vpop.f32.mrb[0].mxu0
        %v7719 = vadd.f32 %v7622, %v7718
        %v7720 = vpop.f32.mrb[0].mxu0
        %v7721 = vpop.f32.mrb[0].mxu0
        %v7722 = vadd.f32 %v7625, %v7721
        %v7723 = vpop.f32.mrb[0].mxu0
        %7724 = vmatprep.mubr.bf16.mxu0 0
        %7725 = vmatmul.mubr.bf16.gmra.mrb[0].mxu0 %v7338
        %v7726 = vpop.f32.mrb[0].mxu0
        %v7727 = vadd.f32 %v7630, %v7726
        %v7728 = vpop.f32.mrb[0].mxu0
        %v7729 = vpop.f32.mrb[0].mxu0
        %v7730 = vadd.f32 %v7633, %v7729
        %v7731 = vpop.f32.mrb[0].mxu0
        %7732 = vdwg.mxu0
        %v7733 = vadd.f32 %v7108, %v7671
        %v7734 = vadd.f32 %v7111, %v7674
        %v7735 = vadd.f32 %v7116, %v7679
        %v7736 = vadd.f32 %v7119, %v7682
        %v7737 = vadd.f32 %v7124, %v7687
        %v7738 = vadd.f32 %v7127, %v7690
        %v7739 = vadd.f32 %v7132, %v7695
        %v7740 = vadd.f32 %v7135, %v7698
        %v7741 = vadd.f32 %v7140, %v7703
        %v7742 = vadd.f32 %v7143, %v7706
        %v7743 = vadd.f32 %v7148, %v7711
        %v7744 = vadd.f32 %v7151, %v7714
        %v7745 = vadd.f32 %v7156, %v7719
        %v7746 = vadd.f32 %v7159, %v7722
        %v7747 = vadd.f32 %v7164, %v7727
        %v7748 = vadd.f32 %v7167, %v7730
        %v7749 = vadd.f32 %v7733, %v5963
        %v7750 = vadd.f32 %v7734, %v5963
        %v7751 = vadd.f32 %v7735, %v5963
        %v7752 = vadd.f32 %v7736, %v5963
        %v7753 = vadd.f32 %v7737, %v5963
        %v7754 = vadd.f32 %v7738, %v5963
        %v7755 = vadd.f32 %v7739, %v5963
        %v7756 = vadd.f32 %v7740, %v5963
        %v7757 = vadd.f32 %v7741, %v5963
        %v7758 = vadd.f32 %v7742, %v5963
        %v7759 = vadd.f32 %v7743, %v5963
        %v7760 = vadd.f32 %v7744, %v5963
        %v7761 = vadd.f32 %v7745, %v5963
        %v7762 = vadd.f32 %v7746, %v5963
        %v7763 = vadd.f32 %v7747, %v5963
        %v7764 = vadd.f32 %v7748, %v5963
        %v7765 = vld [vmem:[%s415] sm:$0xff]
        %v7766 = vld [vmem:[%s415 + $0x8] sm:$0xff]
        %v7767 = vld [vmem:[%s415 + $0x10] sm:$0xff]
        %v7768 = vld [vmem:[%s415 + $0x18] sm:$0xff]
        %v7769 = vld [vmem:[%s415 + $0x20] sm:$0xff]
        %v7770 = vld [vmem:[%s415 + $0x28] sm:$0xff]
        %v7771 = vld [vmem:[%s415 + $0x30] sm:$0xff]
        %v7772 = vld [vmem:[%s415 + $0x38] sm:$0xff]
        %v7773 = vld [vmem:[%s415 + $0x40] sm:$0xff]
        %v7774 = vld [vmem:[%s415 + $0x48] sm:$0xff]
        %v7775 = vld [vmem:[%s415 + $0x50] sm:$0xff]
        %v7776 = vld [vmem:[%s415 + $0x58] sm:$0xff]
        %v7777 = vld [vmem:[%s415 + $0x60] sm:$0xff]
        %v7778 = vld [vmem:[%s415 + $0x68] sm:$0xff]
        %v7779 = vld [vmem:[%s415 + $0x70] sm:$0xff]
        %v7780 = vld [vmem:[%s415 + $0x78] sm:$0xff]
        %v7781 = vadd.f32 %v7749, %v7765
        %v7782 = vadd.f32 %v7750, %v7766
        %v7783 = vadd.f32 %v7751, %v7767
        %v7784 = vadd.f32 %v7752, %v7768
        %v7785 = vadd.f32 %v7753, %v7769
        %v7786 = vadd.f32 %v7754, %v7770
        %v7787 = vadd.f32 %v7755, %v7771
        %v7788 = vadd.f32 %v7756, %v7772
        %v7789 = vadd.f32 %v7757, %v7773
        %v7790 = vadd.f32 %v7758, %v7774
        %v7791 = vadd.f32 %v7759, %v7775
        %v7792 = vadd.f32 %v7760, %v7776
        %v7793 = vadd.f32 %v7761, %v7777
        %v7794 = vadd.f32 %v7762, %v7778
        %v7795 = vadd.f32 %v7763, %v7779
        %v7796 = vadd.f32 %v7764, %v7780
        %v7797 = vmax.f32 %v7781, 0.0
        %v7798 = vmax.f32 %v7782, 0.0
        %v7799 = vmax.f32 %v7783, 0.0
        %v7800 = vmax.f32 %v7784, 0.0
        %v7801 = vmax.f32 %v7785, 0.0
        %v7802 = vmax.f32 %v7786, 0.0
        %v7803 = vmax.f32 %v7787, 0.0
        %v7804 = vmax.f32 %v7788, 0.0
        %v7805 = vmax.f32 %v7789, 0.0
        %v7806 = vmax.f32 %v7790, 0.0
        %v7807 = vmax.f32 %v7791, 0.0
        %v7808 = vmax.f32 %v7792, 0.0
        %v7809 = vmax.f32 %v7793, 0.0
        %v7810 = vmax.f32 %v7794, 0.0
        %v7811 = vmax.f32 %v7795, 0.0
        %v7812 = vmax.f32 %v7796, 0.0
        %s7813 = scalar_lea.vmem %s271, 128 [#allocation10]
        %7814 = vst [vmem:[%s7813] sm:$0xff] %v7797
        %7815 = vst [vmem:[%s7813 + $0x8] sm:$0xff] %v7798
        %7816 = vst [vmem:[%s7813 + $0x10] sm:$0xff] %v7799
        %7817 = vst [vmem:[%s7813 + $0x18] sm:$0xff] %v7800
        %7818 = vst [vmem:[%s7813 + $0x20] sm:$0xff] %v7801
        %7819 = vst [vmem:[%s7813 + $0x28] sm:$0xff] %v7802
        %7820 = vst [vmem:[%s7813 + $0x30] sm:$0xff] %v7803
        %7821 = vst [vmem:[%s7813 + $0x38] sm:$0xff] %v7804
        %7822 = vst [vmem:[%s7813 + $0x40] sm:$0xff] %v7805
        %7823 = vst [vmem:[%s7813 + $0x48] sm:$0xff] %v7806
        %7824 = vst [vmem:[%s7813 + $0x50] sm:$0xff] %v7807
        %7825 = vst [vmem:[%s7813 + $0x58] sm:$0xff] %v7808
        %7826 = vst [vmem:[%s7813 + $0x60] sm:$0xff] %v7809
        %7827 = vst [vmem:[%s7813 + $0x68] sm:$0xff] %v7810
        %7828 = vst [vmem:[%s7813 + $0x70] sm:$0xff] %v7811
        %7829 = vst [vmem:[%s7813 + $0x78] sm:$0xff] %v7812
        %s7830 = sand.u32 %s141, 1
        %s7831 = scalar_lea.sflag [#allocation6], %s7830
        %s7832 = sand.u32 %s141, 1
        %s7833 = smul.addr %s7832, 256
        %s7834 = scalar_lea.vmem [#allocation10], %s7833
        // Predicated region
        $region53: #{basic_block_forward.1} parent=39 // pred_check
          %p7835 = pneg %p151
        $region54: #{basic_block_forward.1} parent=39 // pred_check_branch
          %7837 = sbr.rel (%p7835) target = $region56
        $region55: #{basic_block_forward.1} parent=39 // pred_region
          %s7839 = ssub.s32 4096, 4096
          %7840 = vsyncadd %s7831, %s7839
          %s7841 = smul.addr %s23, 32
          %s7842 = smul.addr %s7841, 128
          %s7843 = scalar_lea.hbm %s5, %s7842
          %s7844 = sshll.u32 %s7834, 4
          %s7845 = int_to_ptr.vmem [resolvable:$true] %s7844
          %7850 = dma.vmem_to_hbm [thread:$0]  %s7845, 4096, %s7843, %s7831, 128, 128, 8
        $region56: #{basic_block_forward.1} parent=39 // pred_fallthru
          _
      $region40: #{basic_block_forward.1} parent=5 // pred_fallthru
        _
      %p7851 = scmp.le.s32.totalorder 2, %s18
      // Predicated region
      $region57: #{basic_block_forward.1} parent=5 // pred_check
        %p7852 = pneg %p7851
      $region58: #{basic_block_forward.1} parent=5 // pred_check_branch
        %7854 = sbr.rel (%p7852) target = $region60
      $region59: #{basic_block_forward.1} parent=5 // pred_region
        %s7855 = ssub.s32 %s18, 2
        // Predicated region
        $region61: #{basic_block_forward.1} parent=59 // pred_check
          %p7856 = pneg %p157
        $region62: #{basic_block_forward.1} parent=59 // pred_check_branch
          %7858 = sbr.rel (%p7856) target = $region64
        $region63: #{basic_block_forward.1} parent=59 // pred_region
          %s7859 = sand.u32 %s142, 1
          %s7860 = scalar_lea.sflag [#allocation6], %s7859
          %s7861 = sand.u32 %s142, 1
          %s7862 = smul.addr %s7861, 256
          %s7863 = scalar_lea.vmem [#allocation10], %s7862
          %7864 = dma.done %s7860, 4096
        $region64: #{basic_block_forward.1} parent=59 // pred_fallthru
          _
      $region60: #{basic_block_forward.1} parent=5 // pred_fallthru
        _
    $region6: #{basic_block_forward.1} parent=1 // loop_footer
      %s22 = sadd.s32 1, %s18
    $region7: #{basic_block_forward.1} parent=1 // loop_footer_branch
      %17 = sbr.rel target = $region3
    $region8: #{basic_block_forward.1} parent=1 // loop_exit
      _
    %7865 = vsyncpa [#allocation5], 1
    %s7866 = scalar_lea.sflag [#allocation5], 1
    %7867 = vsyncpa %s7866, 1
    %7868 = vsyncpa [#allocation8], 1
    %7869 = vsyncpa [#allocation6], 1
    %s7870 = scalar_lea.sflag [#allocation6], 1
    %7871 = vsyncpa %s7870, 1

</llo_original>
